<compile_context>
chip_gen: v7x
topology: tpu7x:2x2x1
jax: 0.10.0
libtpu: 0.0.40
codegen_flags: <defaults>
</compile_context>

<pallas_src>
import functools

import jax
import jax.numpy as jnp
from jax.experimental import pallas as pl
from jax.experimental.pallas import tpu as pltpu


_VMEM_LIMIT = 32 * 1024 * 1024  # explicit scoped-VMEM budget (safe on v5e/v6e/v7x)
_SQRT_HALF = 0.7071067811865476


def _round_up(x, m):
    return (x + m - 1) // m * m


# ----------------------- in-kernel math helpers (f32) -----------------------

def _ln(x, g, b):
    # torch LayerNorm: biased variance, eps=1e-5
    mu = jnp.mean(x, axis=-1, keepdims=True)
    var = jnp.mean(jnp.square(x - mu), axis=-1, keepdims=True)
    return (x - mu) * jax.lax.rsqrt(var + 1e-5) * g + b


def _erf_approx(z):
    # TODO(synk): erf via Abramowitz&Stegun 7.1.26 polynomial (max abs err ~1.5e-7,
    # f32-exact) so exact-erf GELU can be fused in-kernel without relying on a
    # Mosaic erf lowering.
    a1, a2, a3, a4, a5 = (0.254829592, -0.284496736, 1.421413741,
                          -1.453152027, 1.061405429)
    p = 0.3275911
    az = jnp.abs(z)
    t = 1.0 / (1.0 + p * az)
    poly = ((((a5 * t + a4) * t + a3) * t + a2) * t + a1) * t
    y = 1.0 - poly * jnp.exp(-az * az)
    return jnp.where(z >= 0, y, -y)


def _gelu_exact(x):
    # nn.GELU() default = exact erf GELU
    return 0.5 * x * (1.0 + _erf_approx(x * _SQRT_HALF))


def _mha_proj(q, k, v, w_proj, n_heads, causal):
    """Multi-head attention with the head-merge fused into the output projection.

    q: (Tq, E), k/v: (Tk, E), w_proj: (E, E)  (all f32).
    Returns concat_heads(softmax(q k^T / sqrt(D)) v) @ w_proj  as (Tq, E),
    without ever materializing the head concat.
    """
    Tq, E = q.shape
    Tk = k.shape[0]
    D = E // n_heads
    scale = float(D) ** -0.5
    if causal:
        row = jax.lax.broadcasted_iota(jnp.int32, (Tq, Tk), 0)
        col = jax.lax.broadcasted_iota(jnp.int32, (Tq, Tk), 1)
        keep = row >= col
    out = None
    for h in range(n_heads):
        sl = slice(h * D, (h + 1) * D)
        qh, kh, vh = q[:, sl], k[:, sl], v[:, sl]
        # dot_general contracting on D: no transposed copy of K is materialized.
        s = jax.lax.dot_general(qh, kh, (((1,), (1,)), ((), ())),
                                preferred_element_type=jnp.float32) * scale
        if causal:
            s = jnp.where(keep, s, -jnp.inf)
        m = jnp.max(s, axis=-1, keepdims=True)
        p = jnp.exp(s - m)
        denom = jnp.sum(p, axis=-1, keepdims=True)
        p = p * pl.reciprocal(denom, approx=True)      # divide -> EUP slot
        oh = jnp.dot(p, vh, preferred_element_type=jnp.float32)       # (Tq, D)
        contrib = jnp.dot(oh, w_proj[sl, :], preferred_element_type=jnp.float32)
        out = contrib if out is None else out + contrib
    return out


# --------------------------- fused block kernels ----------------------------

def _vit_block_kernel(x_ref,
                      ln1g_ref, ln1b_ref, qkvw_ref, qkvb_ref, projw_ref, projb_ref,
                      ln2g_ref, ln2b_ref, fcw_ref, fcb_ref, fpw_ref, fpb_ref,
                      o_ref, *, n_heads):
    x = x_ref[0].astype(jnp.float32)                    # (N, E)
    E = x.shape[-1]
    # x = x + attn(norm1(x))
    h = _ln(x, ln1g_ref[...], ln1b_ref[...])
    qkv = jnp.dot(h, qkvw_ref[...], preferred_element_type=jnp.float32) + qkvb_ref[...]
    a = _mha_proj(qkv[:, :E], qkv[:, E:2 * E], qkv[:, 2 * E:],
                  projw_ref[...], n_heads, causal=False)
    x = x + a + projb_ref[...]
    # x = x + mlp(norm2(x))   (GELU fused in the epilogue of the first matmul)
    h = _ln(x, ln2g_ref[...], ln2b_ref[...])
    h = _gelu_exact(jnp.dot(h, fcw_ref[...], preferred_element_type=jnp.float32)
                    + fcb_ref[...])
    x = x + jnp.dot(h, fpw_ref[...], preferred_element_type=jnp.float32) + fpb_ref[...]
    o_ref[0] = x.astype(o_ref.dtype)


def _dec_block_kernel(x_ref, enc_ref,
                      ln1g_ref, ln1b_ref, attnw_ref, attnb_ref, aprojw_ref, aprojb_ref,
                      ln2g_ref, ln2b_ref, qw_ref, qb_ref, kvw_ref, kvb_ref,
                      cprojw_ref, cprojb_ref,
                      ln3g_ref, ln3b_ref, fcw_ref, fcb_ref, fpw_ref, fpb_ref,
                      o_ref, *, n_heads):
    x = x_ref[0].astype(jnp.float32)                    # (T, E)
    enc = enc_ref[0].astype(jnp.float32)                # (S, E)
    E = x.shape[-1]
    # x = x + Attention(ln_1(x))  (causal self-attention)
    h = _ln(x, ln1g_ref[...], ln1b_ref[...])
    qkv = jnp.dot(h, attnw_ref[...], preferred_element_type=jnp.float32) + attnb_ref[...]
    a = _mha_proj(qkv[:, :E], qkv[:, E:2 * E], qkv[:, 2 * E:],
                  aprojw_ref[...], n_heads, causal=True)
    x = x + a + aprojb_ref[...]
    # x = x + CrossAttention(ln_2(x), enc, enc)  (K/V projections fused into one matmul)
    h = _ln(x, ln2g_ref[...], ln2b_ref[...])
    qc = jnp.dot(h, qw_ref[...], preferred_element_type=jnp.float32) + qb_ref[...]
    kv = jnp.dot(enc, kvw_ref[...], preferred_element_type=jnp.float32) + kvb_ref[...]
    a = _mha_proj(qc, kv[:, :E], kv[:, E:], cprojw_ref[...], n_heads, causal=False)
    x = x + a + cprojb_ref[...]
    # x = x + MLP(ln_3(x))
    h = _ln(x, ln3g_ref[...], ln3b_ref[...])
    h = _gelu_exact(jnp.dot(h, fcw_ref[...], preferred_element_type=jnp.float32)
                    + fcb_ref[...])
    x = x + jnp.dot(h, fpw_ref[...], preferred_element_type=jnp.float32) + fpb_ref[...]
    o_ref[0] = x.astype(o_ref.dtype)


def vit_block(x, p, n_heads):
    B, N, E = x.shape
    Hm = p['fc_w'].shape[1]
    r = lambda a: a.reshape(1, -1)
    args = [
        x,
        r(p['ln1_g']), r(p['ln1_b']), p['qkv_w'], r(p['qkv_b']),
        p['proj_w'], r(p['proj_b']),
        r(p['ln2_g']), r(p['ln2_b']), p['fc_w'], r(p['fc_b']),
        p['fcproj_w'], r(p['fcproj_b']),
    ]
    in_specs = ([pl.BlockSpec((1, N, E), lambda b: (b, 0, 0))] +
                [pl.BlockSpec(a.shape, lambda b: (0, 0)) for a in args[1:]])
    return pl.pallas_call(
        functools.partial(_vit_block_kernel, n_heads=n_heads),
        out_shape=jax.ShapeDtypeStruct((B, N, E), x.dtype),
        grid=(B,),
        in_specs=in_specs,
        out_specs=pl.BlockSpec((1, N, E), lambda b: (b, 0, 0)),
        compiler_params=pltpu.CompilerParams(
            dimension_semantics=("parallel",),
            vmem_limit_bytes=_VMEM_LIMIT),
    )(*args)


def decoder_block(x, enc, p, n_heads):
    B, T, E = x.shape
    S = enc.shape[1]
    r = lambda a: a.reshape(1, -1)
    args = [
        x, enc,
        r(p['ln1_g']), r(p['ln1_b']), p['attn_w'], r(p['attn_b']),
        p['attnproj_w'], r(p['attnproj_b']),
        r(p['ln2_g']), r(p['ln2_b']), p['q_w'], r(p['q_b']),
        p['kv_w'], r(p['kv_b']), p['caproj_w'], r(p['caproj_b']),
        r(p['ln3_g']), r(p['ln3_b']), p['fc_w'], r(p['fc_b']),
        p['fcproj_w'], r(p['fcproj_b']),
    ]
    in_specs = ([pl.BlockSpec((1, T, E), lambda b: (b, 0, 0)),
                 pl.BlockSpec((1, S, E), lambda b: (b, 0, 0))] +
                [pl.BlockSpec(a.shape, lambda b: (0, 0)) for a in args[2:]])
    return pl.pallas_call(
        functools.partial(_dec_block_kernel, n_heads=n_heads),
        out_shape=jax.ShapeDtypeStruct((B, T, E), x.dtype),
        grid=(B,),
        in_specs=in_specs,
        out_specs=pl.BlockSpec((1, T, E), lambda b: (b, 0, 0)),
        compiler_params=pltpu.CompilerParams(
            dimension_semantics=("parallel",),
            vmem_limit_bytes=_VMEM_LIMIT),
    )(*args)


# -------------------- tiled matmul (patch-embed / lm_head) ------------------

def _matmul_kernel(*refs, wT, has_bias):
    if has_bias:
        x_ref, w_ref, b_ref, o_ref, acc_ref = refs
    else:
        x_ref, w_ref, o_ref, acc_ref = refs

    @pl.when(pl.program_id(2) == 0)
    def _():
        acc_ref[...] = jnp.zeros_like(acc_ref)

    dn = (((1,), (1,)), ((), ())) if wT else (((1,), (0,)), ((), ()))
    acc_ref[...] += jax.lax.dot_general(x_ref[...], w_ref[...], dn,
                                        preferred_element_type=jnp.float32)

    @pl.when(pl.program_id(2) == pl.num_programs(2) - 1)
    def _():
        res = acc_ref[...]
        if has_bias:
            res = res + b_ref[...].astype(jnp.float32)
        o_ref[...] = res.astype(o_ref.dtype)


def linear_tiled(x, w, b=None, *, wT=False, tm_max=256, tn_max=512, tk_max=512):
    """y = x @ w (+ b).  If wT, w has shape (N, K) and is contracted on K in-kernel
    (no transposed copy in HBM).  Tiled over (M, N, K) with an f32 VMEM accumulator."""
    orig = x.shape
    K = orig[-1]
    N = w.shape[0] if wT else w.shape[1]
    x2 = x.reshape(-1, K)
    M = x2.shape[0]

    # K tiling: exact divisor (multiple of 128) when possible, else zero-pad K.
    if K <= tk_max:
        tk, Kp = K, K
    else:
        tk = None
        for cand in range(tk_max - tk_max % 128, 127, -128):
            if K % cand == 0:
                tk = cand
                break
        if tk is None:
            tk = tk_max
        Kp = _round_up(K, tk)
    if Kp != K:
        x2 = jnp.pad(x2, ((0, 0), (0, Kp - K)))
        w = jnp.pad(w, ((0, 0), (0, Kp - K)) if wT else ((0, Kp - K), (0, 0)))

    tm = M if M <= tm_max else tm_max
    tn = N if N <= tn_max else tn_max
    grid = (pl.cdiv(M, tm), pl.cdiv(N, tn), Kp // tk)

    x_spec = pl.BlockSpec((tm, tk), lambda i, j, k: (i, k))
    if wT:
        w_spec = pl.BlockSpec((tn, tk), lambda i, j, k: (j, k))
    else:
        w_spec = pl.BlockSpec((tk, tn), lambda i, j, k: (k, j))
    o_spec = pl.BlockSpec((tm, tn), lambda i, j, k: (i, j))

    has_bias = b is not None
    operands = [x2, w]
    in_specs = [x_spec, w_spec]
    if has_bias:
        operands.append(b.reshape(1, N))
        in_specs.append(pl.BlockSpec((1, tn), lambda i, j, k: (0, j)))

    out = pl.pallas_call(
        functools.partial(_matmul_kernel, wT=wT, has_bias=has_bias),
        out_shape=jax.ShapeDtypeStruct((M, N), x.dtype),
        grid=grid,
        in_specs=in_specs,
        out_specs=o_spec,
        scratch_shapes=[pltpu.VMEM((tm, tn), jnp.float32)],
        compiler_params=pltpu.CompilerParams(
            dimension_semantics=("parallel", "parallel", "arbitrary"),
            vmem_limit_bytes=_VMEM_LIMIT),
    )(*operands)
    return out.reshape(*orig[:-1], N)


# ------------------------------ final LayerNorm -----------------------------

def _layernorm_kernel(x_ref, g_ref, b_ref, o_ref):
    x = x_ref[...].astype(jnp.float32)
    o_ref[...] = _ln(x, g_ref[...], b_ref[...]).astype(o_ref.dtype)


def layernorm(x, g, b, *, tm_max=256):
    orig = x.shape
    E = orig[-1]
    x2 = x.reshape(-1, E)
    M = x2.shape[0]
    tm = M if M <= tm_max else tm_max
    out = pl.pallas_call(
        _layernorm_kernel,
        out_shape=jax.ShapeDtypeStruct((M, E), x.dtype),
        grid=(pl.cdiv(M, tm),),
        in_specs=[pl.BlockSpec((tm, E), lambda i: (i, 0)),
                  pl.BlockSpec((1, E), lambda i: (0, 0)),
                  pl.BlockSpec((1, E), lambda i: (0, 0))],
        out_specs=pl.BlockSpec((tm, E), lambda i: (i, 0)),
        compiler_params=pltpu.CompilerParams(
            dimension_semantics=("parallel",),
            vmem_limit_bytes=_VMEM_LIMIT),
    )(x2, g.reshape(1, E), b.reshape(1, E))
    return out.reshape(orig)


# --------------------------------- forward ----------------------------------

def captioning_forward(params, cfg, image, input_ids):
    B, C, Himg, Wimg = image.shape
    E = cfg['embed_dim']
    P = cfg['patch_size']
    nH = cfg['num_heads']

    # --- patch_embed: Conv2d(C, E, kernel=P, stride=P) == per-patch linear ---
    x = image.reshape(B, C, Himg // P, P, Wimg // P, P)
    x = x.transpose(0, 2, 4, 1, 3, 5).reshape(B, (Himg // P) * (Wimg // P), C * P * P)
    img = linear_tiled(x, params['patch_w'], params['patch_b'])          # (B, Np, E)

    # --- _pos_embed: prepend cls token, add pos_embed (pos_drop p=0.0) ---
    cls = jnp.broadcast_to(params['cls_token'], (B, 1, E))
    img = jnp.concatenate([cls, img], axis=1) + params['pos_embed']      # (B, Np+1, E)

    # --- decoder token + positional embeddings (emb dropout = identity) ---
    # TODO(synk): embedding-table gathers stay as XLA jnp.take (scalar-prefetch
    # DMA gather not warranted at these sizes).
    T = input_ids.shape[1]
    tok = jnp.take(params['wte'], input_ids, axis=0)                     # (B, T, E)
    seq = tok + params['wpe'][:T][None]

    # --- interleaved ViT blocks / decoder blocks (one fused kernel each) ---
    for i in range(cfg['depth']):
        img = vit_block(img, params['vit_blocks'][i], nH)
        seq = decoder_block(seq, img, params['dec_blocks'][i], nH)

    seq = layernorm(seq, params['ln_f_g'], params['ln_f_b'])
    # lm_head: Linear(E, vocab, bias=False), weight tied to wte; contract on E
    # in-kernel (no materialized wte.T, no synthesized zero bias).
    logits = linear_tiled(seq, params['wte'], None, wT=True)
    # TODO(synk): optional labels -> shifted cross-entropy loss branch and
    # autoregressive generate() loop are not implemented.
    return logits


# ------------------------------ param init ----------------------------------

def init_params(key, cfg):
    E, V, S = cfg['embed_dim'], cfg['vocab_size'], cfg['seq_len']
    Hmlp = cfg['mlp_ratio'] * E
    P, C = cfg['patch_size'], cfg['in_chans']
    n_patches = (cfg['img_size'] // P) ** 2

    keys = iter(jax.random.split(key, 512))

    def nrm(shape, std=0.02):
        return jax.random.normal(next(keys), shape, jnp.float32) * std

    params = {
        'patch_w': nrm((C * P * P, E)),
        'patch_b': jnp.zeros((E,), jnp.float32),
        'cls_token': nrm((1, 1, E)),
        'pos_embed': nrm((1, n_patches + 1, E)),
        'wte': nrm((V, E)),
        'wpe': nrm((S, E)),
        'ln_f_g': jnp.ones((E,), jnp.float32),
        'ln_f_b': jnp.zeros((E,), jnp.float32),
        'vit_blocks': [],
        'dec_blocks': [],
    }
    for _ in range(cfg['depth']):
        params['vit_blocks'].append({
            'ln1_g': jnp.ones((E,)), 'ln1_b': jnp.zeros((E,)),
            'qkv_w': nrm((E, 3 * E)), 'qkv_b': jnp.zeros((3 * E,)),
            'proj_w': nrm((E, E)), 'proj_b': jnp.zeros((E,)),
            'ln2_g': jnp.ones((E,)), 'ln2_b': jnp.zeros((E,)),
            'fc_w': nrm((E, Hmlp)), 'fc_b': jnp.zeros((Hmlp,)),
            'fcproj_w': nrm((Hmlp, E)), 'fcproj_b': jnp.zeros((E,)),
        })
        # cross-attention K/V projections stored pre-concatenated as one (E, 2E)
        # weight (same math as the two separate torch Linear layers).
        params['dec_blocks'].append({
            'ln1_g': jnp.ones((E,)), 'ln1_b': jnp.zeros((E,)),
            'attn_w': nrm((E, 3 * E)), 'attn_b': jnp.zeros((3 * E,)),
            'attnproj_w': nrm((E, E)), 'attnproj_b': jnp.zeros((E,)),
            'ln2_g': jnp.ones((E,)), 'ln2_b': jnp.zeros((E,)),
            'q_w': nrm((E, E)), 'q_b': jnp.zeros((E,)),
            'kv_w': nrm((E, 2 * E)), 'kv_b': jnp.zeros((2 * E,)),
            'caproj_w': nrm((E, E)), 'caproj_b': jnp.zeros((E,)),
            'ln3_g': jnp.ones((E,)), 'ln3_b': jnp.zeros((E,)),
            'fc_w': nrm((E, Hmlp)), 'fc_b': jnp.zeros((Hmlp,)),
            'fcproj_w': nrm((Hmlp, E)), 'fcproj_b': jnp.zeros((E,)),
        })
    return params


# --------------------------------- main --------------------------------------

if __name__ == "__main__":
    cfg = dict(
        embed_dim=64, num_heads=4, seq_len=8, depth=2, vocab_size=128,
        mlp_ratio=4, patch_size=16, img_size=32, in_chans=3,
    )
    key = jax.random.PRNGKey(0)
    pkey, ikey, tkey = jax.random.split(key, 3)

    params = init_params(pkey, cfg)
    image = jax.random.normal(ikey, (2, 3, cfg['img_size'], cfg['img_size']), jnp.float32)
    input_ids = jax.random.randint(tkey, (2, cfg['seq_len']), 0, cfg['vocab_size'],
                                   dtype=jnp.int32)

    fwd = jax.jit(lambda p, im, ids: captioning_forward(p, cfg, im, ids))
    logits = fwd(params, image, input_ids)
    jax.block_until_ready(logits)
    assert logits.shape == (2, cfg['seq_len'], cfg['vocab_size'])
    assert bool(jnp.all(jnp.isfinite(logits)))
    print("KERNEL_OK")
</pallas_src>

<mosaic_0001>
module attributes {stable_mosaic.version = 11 : i64} {
  func.func @_vit_block_kernel(%arg0: i32, %arg1: memref<1x5x64xf32, #tpu.memory_space<vmem>>, %arg2: memref<1x64xf32, #tpu.memory_space<vmem>>, %arg3: memref<1x64xf32, #tpu.memory_space<vmem>>, %arg4: memref<64x192xf32, #tpu.memory_space<vmem>>, %arg5: memref<1x192xf32, #tpu.memory_space<vmem>>, %arg6: memref<64x64xf32, #tpu.memory_space<vmem>>, %arg7: memref<1x64xf32, #tpu.memory_space<vmem>>, %arg8: memref<1x64xf32, #tpu.memory_space<vmem>>, %arg9: memref<1x64xf32, #tpu.memory_space<vmem>>, %arg10: memref<64x256xf32, #tpu.memory_space<vmem>>, %arg11: memref<1x256xf32, #tpu.memory_space<vmem>>, %arg12: memref<256x64xf32, #tpu.memory_space<vmem>>, %arg13: memref<1x64xf32, #tpu.memory_space<vmem>>, %arg14: memref<1x5x64xf32, #tpu.memory_space<vmem>>) attributes {dimension_semantics = [#tpu.dimension_semantics<parallel>], iteration_bounds = array<i64: 2>, scalar_prefetch = 0 : i64, scratch_operands = 0 : i64, tpu.core_type = #tpu.core_type<tc>, window_params = [{transform_indices = @transform_0, window_bounds = array<i64: 1, 5, 64>}, {pipeline_mode = #tpu.pipeline_mode<synchronous>, transform_indices = @transform_1, window_bounds = array<i64: 1, 64>}, {pipeline_mode = #tpu.pipeline_mode<synchronous>, transform_indices = @transform_2, window_bounds = array<i64: 1, 64>}, {pipeline_mode = #tpu.pipeline_mode<synchronous>, transform_indices = @transform_3, window_bounds = array<i64: 64, 192>}, {pipeline_mode = #tpu.pipeline_mode<synchronous>, transform_indices = @transform_4, window_bounds = array<i64: 1, 192>}, {pipeline_mode = #tpu.pipeline_mode<synchronous>, transform_indices = @transform_5, window_bounds = array<i64: 64, 64>}, {pipeline_mode = #tpu.pipeline_mode<synchronous>, transform_indices = @transform_6, window_bounds = array<i64: 1, 64>}, {pipeline_mode = #tpu.pipeline_mode<synchronous>, transform_indices = @transform_7, window_bounds = array<i64: 1, 64>}, {pipeline_mode = #tpu.pipeline_mode<synchronous>, transform_indices = @transform_8, window_bounds = array<i64: 1, 64>}, {pipeline_mode = #tpu.pipeline_mode<synchronous>, transform_indices = @transform_9, window_bounds = array<i64: 64, 256>}, {pipeline_mode = #tpu.pipeline_mode<synchronous>, transform_indices = @transform_10, window_bounds = array<i64: 1, 256>}, {pipeline_mode = #tpu.pipeline_mode<synchronous>, transform_indices = @transform_11, window_bounds = array<i64: 256, 64>}, {pipeline_mode = #tpu.pipeline_mode<synchronous>, transform_indices = @transform_12, window_bounds = array<i64: 1, 64>}, {transform_indices = @transform_13, window_bounds = array<i64: 1, 5, 64>}]} {
    %c0 = arith.constant 0 : index
    %c0_0 = arith.constant 0 : index
    %c0_1 = arith.constant 0 : index
    %0 = vector.load %arg1[%c0, %c0_0, %c0_1] : memref<1x5x64xf32, #tpu.memory_space<vmem>>, vector<1x5x64xf32>
    %1 = vector.shape_cast %0 : vector<1x5x64xf32> to vector<5x64xf32>
    %c0_2 = arith.constant 0 : index
    %c0_3 = arith.constant 0 : index
    %2 = vector.load %arg2[%c0_2, %c0_3] : memref<1x64xf32, #tpu.memory_space<vmem>>, vector<1x64xf32>
    %c0_4 = arith.constant 0 : index
    %c0_5 = arith.constant 0 : index
    %3 = vector.load %arg3[%c0_4, %c0_5] : memref<1x64xf32, #tpu.memory_space<vmem>>, vector<1x64xf32>
    %cst = arith.constant dense<0.000000e+00> : vector<5xf32>
    %4 = vector.multi_reduction <add>, %1, %cst [1] : vector<5x64xf32> to vector<5xf32>
    %5 = vector.shape_cast %4 : vector<5xf32> to vector<5x1xf32>
    %cst_6 = arith.constant 6.400000e+01 : f32
    %6 = vector.broadcast %cst_6 : f32 to vector<5x1xf32>
    %7 = arith.divf %5, %6 : vector<5x1xf32>
    %8 = vector.broadcast %7 : vector<5x1xf32> to vector<5x64xf32>
    %9 = arith.subf %1, %8 : vector<5x64xf32>
    %10 = arith.mulf %9, %9 : vector<5x64xf32>
    %cst_7 = arith.constant dense<0.000000e+00> : vector<5xf32>
    %11 = vector.multi_reduction <add>, %10, %cst_7 [1] : vector<5x64xf32> to vector<5xf32>
    %12 = vector.shape_cast %11 : vector<5xf32> to vector<5x1xf32>
    %cst_8 = arith.constant 6.400000e+01 : f32
    %13 = vector.broadcast %cst_8 : f32 to vector<5x1xf32>
    %14 = arith.divf %12, %13 : vector<5x1xf32>
    %15 = vector.broadcast %7 : vector<5x1xf32> to vector<5x64xf32>
    %16 = arith.subf %1, %15 : vector<5x64xf32>
    %cst_9 = arith.constant 9.99999974E-6 : f32
    %17 = vector.broadcast %cst_9 : f32 to vector<5x1xf32>
    %18 = arith.addf %14, %17 : vector<5x1xf32>
    %19 = math.rsqrt %18 : vector<5x1xf32>
    %20 = vector.broadcast %19 : vector<5x1xf32> to vector<5x64xf32>
    %21 = arith.mulf %16, %20 : vector<5x64xf32>
    %22 = vector.broadcast %2 : vector<1x64xf32> to vector<5x64xf32>
    %23 = arith.mulf %21, %22 : vector<5x64xf32>
    %24 = vector.broadcast %3 : vector<1x64xf32> to vector<5x64xf32>
    %25 = arith.addf %23, %24 : vector<5x64xf32>
    %c0_10 = arith.constant 0 : index
    %c0_11 = arith.constant 0 : index
    %26 = vector.load %arg4[%c0_10, %c0_11] : memref<64x192xf32, #tpu.memory_space<vmem>>, vector<64x192xf32>
    %cst_12 = arith.constant dense<0.000000e+00> : vector<5x192xf32>
    %27 = tpu.matmul %25, %26, %cst_12 {dimension_numbers = #tpu.dot_dimension_numbers<[1], [0], [0], [1], [0, 0, 1, 1], [], []>} : vector<5x64xf32>, vector<64x192xf32>, vector<5x192xf32> -> vector<5x192xf32>
    %c0_13 = arith.constant 0 : index
    %c0_14 = arith.constant 0 : index
    %28 = vector.load %arg5[%c0_13, %c0_14] : memref<1x192xf32, #tpu.memory_space<vmem>>, vector<1x192xf32>
    %29 = vector.broadcast %28 : vector<1x192xf32> to vector<5x192xf32>
    %30 = arith.addf %27, %29 : vector<5x192xf32>
    %31 = vector.extract_strided_slice %30 {offsets = [0, 0], sizes = [5, 64], strides = [1, 1]} : vector<5x192xf32> to vector<5x64xf32>
    %32 = vector.extract_strided_slice %30 {offsets = [0, 64], sizes = [5, 64], strides = [1, 1]} : vector<5x192xf32> to vector<5x64xf32>
    %33 = vector.extract_strided_slice %30 {offsets = [0, 128], sizes = [5, 64], strides = [1, 1]} : vector<5x192xf32> to vector<5x64xf32>
    %c0_15 = arith.constant 0 : index
    %c0_16 = arith.constant 0 : index
    %34 = vector.load %arg6[%c0_15, %c0_16] : memref<64x64xf32, #tpu.memory_space<vmem>>, vector<64x64xf32>
    %35 = vector.extract_strided_slice %31 {offsets = [0, 0], sizes = [5, 16], strides = [1, 1]} : vector<5x64xf32> to vector<5x16xf32>
    %36 = vector.extract_strided_slice %32 {offsets = [0, 0], sizes = [5, 16], strides = [1, 1]} : vector<5x64xf32> to vector<5x16xf32>
    %37 = vector.extract_strided_slice %33 {offsets = [0, 0], sizes = [5, 16], strides = [1, 1]} : vector<5x64xf32> to vector<5x16xf32>
    %cst_17 = arith.constant dense<0.000000e+00> : vector<5x5xf32>
    %38 = tpu.matmul %35, %36, %cst_17 {dimension_numbers = #tpu.dot_dimension_numbers<[1], [1], [0], [0], [0, 0, 1, 0], [], []>} : vector<5x16xf32>, vector<5x16xf32>, vector<5x5xf32> -> vector<5x5xf32>
    %cst_18 = arith.constant 2.500000e-01 : f32
    %39 = vector.broadcast %cst_18 : f32 to vector<5x5xf32>
    %40 = arith.mulf %38, %39 : vector<5x5xf32>
    %cst_19 = arith.constant dense<0xFF800000> : vector<5xf32>
    %41 = vector.multi_reduction <maximumf>, %40, %cst_19 [1] : vector<5x5xf32> to vector<5xf32>
    %42 = vector.shape_cast %41 : vector<5xf32> to vector<5x1xf32>
    %43 = vector.broadcast %42 : vector<5x1xf32> to vector<5x5xf32>
    %44 = arith.subf %40, %43 : vector<5x5xf32>
    %45 = math.exp %44 : vector<5x5xf32>
    %cst_20 = arith.constant dense<0.000000e+00> : vector<5xf32>
    %46 = vector.multi_reduction <add>, %45, %cst_20 [1] : vector<5x5xf32> to vector<5xf32>
    %47 = vector.shape_cast %46 : vector<5xf32> to vector<5x1xf32>
    %48 = tpu.reciprocal %47 {approx = true} : vector<5x1xf32> -> vector<5x1xf32>
    %49 = vector.broadcast %48 : vector<5x1xf32> to vector<5x5xf32>
    %50 = arith.mulf %45, %49 : vector<5x5xf32>
    %cst_21 = arith.constant dense<0.000000e+00> : vector<5x16xf32>
    %51 = tpu.matmul %50, %37, %cst_21 {dimension_numbers = #tpu.dot_dimension_numbers<[1], [0], [0], [1], [0, 0, 1, 1], [], []>} : vector<5x5xf32>, vector<5x16xf32>, vector<5x16xf32> -> vector<5x16xf32>
    %52 = vector.extract_strided_slice %34 {offsets = [0, 0], sizes = [16, 64], strides = [1, 1]} : vector<64x64xf32> to vector<16x64xf32>
    %cst_22 = arith.constant dense<0.000000e+00> : vector<5x64xf32>
    %53 = tpu.matmul %51, %52, %cst_22 {dimension_numbers = #tpu.dot_dimension_numbers<[1], [0], [0], [1], [0, 0, 1, 1], [], []>} : vector<5x16xf32>, vector<16x64xf32>, vector<5x64xf32> -> vector<5x64xf32>
    %54 = vector.extract_strided_slice %31 {offsets = [0, 16], sizes = [5, 16], strides = [1, 1]} : vector<5x64xf32> to vector<5x16xf32>
    %55 = vector.extract_strided_slice %32 {offsets = [0, 16], sizes = [5, 16], strides = [1, 1]} : vector<5x64xf32> to vector<5x16xf32>
    %56 = vector.extract_strided_slice %33 {offsets = [0, 16], sizes = [5, 16], strides = [1, 1]} : vector<5x64xf32> to vector<5x16xf32>
    %cst_23 = arith.constant dense<0.000000e+00> : vector<5x5xf32>
    %57 = tpu.matmul %54, %55, %cst_23 {dimension_numbers = #tpu.dot_dimension_numbers<[1], [1], [0], [0], [0, 0, 1, 0], [], []>} : vector<5x16xf32>, vector<5x16xf32>, vector<5x5xf32> -> vector<5x5xf32>
    %cst_24 = arith.constant 2.500000e-01 : f32
    %58 = vector.broadcast %cst_24 : f32 to vector<5x5xf32>
    %59 = arith.mulf %57, %58 : vector<5x5xf32>
    %cst_25 = arith.constant dense<0xFF800000> : vector<5xf32>
    %60 = vector.multi_reduction <maximumf>, %59, %cst_25 [1] : vector<5x5xf32> to vector<5xf32>
    %61 = vector.shape_cast %60 : vector<5xf32> to vector<5x1xf32>
    %62 = vector.broadcast %61 : vector<5x1xf32> to vector<5x5xf32>
    %63 = arith.subf %59, %62 : vector<5x5xf32>
    %64 = math.exp %63 : vector<5x5xf32>
    %cst_26 = arith.constant dense<0.000000e+00> : vector<5xf32>
    %65 = vector.multi_reduction <add>, %64, %cst_26 [1] : vector<5x5xf32> to vector<5xf32>
    %66 = vector.shape_cast %65 : vector<5xf32> to vector<5x1xf32>
    %67 = tpu.reciprocal %66 {approx = true} : vector<5x1xf32> -> vector<5x1xf32>
    %68 = vector.broadcast %67 : vector<5x1xf32> to vector<5x5xf32>
    %69 = arith.mulf %64, %68 : vector<5x5xf32>
    %cst_27 = arith.constant dense<0.000000e+00> : vector<5x16xf32>
    %70 = tpu.matmul %69, %56, %cst_27 {dimension_numbers = #tpu.dot_dimension_numbers<[1], [0], [0], [1], [0, 0, 1, 1], [], []>} : vector<5x5xf32>, vector<5x16xf32>, vector<5x16xf32> -> vector<5x16xf32>
    %71 = vector.extract_strided_slice %34 {offsets = [16, 0], sizes = [16, 64], strides = [1, 1]} : vector<64x64xf32> to vector<16x64xf32>
    %cst_28 = arith.constant dense<0.000000e+00> : vector<5x64xf32>
    %72 = tpu.matmul %70, %71, %cst_28 {dimension_numbers = #tpu.dot_dimension_numbers<[1], [0], [0], [1], [0, 0, 1, 1], [], []>} : vector<5x16xf32>, vector<16x64xf32>, vector<5x64xf32> -> vector<5x64xf32>
    %73 = arith.addf %53, %72 : vector<5x64xf32>
    %74 = vector.extract_strided_slice %31 {offsets = [0, 32], sizes = [5, 16], strides = [1, 1]} : vector<5x64xf32> to vector<5x16xf32>
    %75 = vector.extract_strided_slice %32 {offsets = [0, 32], sizes = [5, 16], strides = [1, 1]} : vector<5x64xf32> to vector<5x16xf32>
    %76 = vector.extract_strided_slice %33 {offsets = [0, 32], sizes = [5, 16], strides = [1, 1]} : vector<5x64xf32> to vector<5x16xf32>
    %cst_29 = arith.constant dense<0.000000e+00> : vector<5x5xf32>
    %77 = tpu.matmul %74, %75, %cst_29 {dimension_numbers = #tpu.dot_dimension_numbers<[1], [1], [0], [0], [0, 0, 1, 0], [], []>} : vector<5x16xf32>, vector<5x16xf32>, vector<5x5xf32> -> vector<5x5xf32>
    %cst_30 = arith.constant 2.500000e-01 : f32
    %78 = vector.broadcast %cst_30 : f32 to vector<5x5xf32>
    %79 = arith.mulf %77, %78 : vector<5x5xf32>
    %cst_31 = arith.constant dense<0xFF800000> : vector<5xf32>
    %80 = vector.multi_reduction <maximumf>, %79, %cst_31 [1] : vector<5x5xf32> to vector<5xf32>
    %81 = vector.shape_cast %80 : vector<5xf32> to vector<5x1xf32>
    %82 = vector.broadcast %81 : vector<5x1xf32> to vector<5x5xf32>
    %83 = arith.subf %79, %82 : vector<5x5xf32>
    %84 = math.exp %83 : vector<5x5xf32>
    %cst_32 = arith.constant dense<0.000000e+00> : vector<5xf32>
    %85 = vector.multi_reduction <add>, %84, %cst_32 [1] : vector<5x5xf32> to vector<5xf32>
    %86 = vector.shape_cast %85 : vector<5xf32> to vector<5x1xf32>
    %87 = tpu.reciprocal %86 {approx = true} : vector<5x1xf32> -> vector<5x1xf32>
    %88 = vector.broadcast %87 : vector<5x1xf32> to vector<5x5xf32>
    %89 = arith.mulf %84, %88 : vector<5x5xf32>
    %cst_33 = arith.constant dense<0.000000e+00> : vector<5x16xf32>
    %90 = tpu.matmul %89, %76, %cst_33 {dimension_numbers = #tpu.dot_dimension_numbers<[1], [0], [0], [1], [0, 0, 1, 1], [], []>} : vector<5x5xf32>, vector<5x16xf32>, vector<5x16xf32> -> vector<5x16xf32>
    %91 = vector.extract_strided_slice %34 {offsets = [32, 0], sizes = [16, 64], strides = [1, 1]} : vector<64x64xf32> to vector<16x64xf32>
    %cst_34 = arith.constant dense<0.000000e+00> : vector<5x64xf32>
    %92 = tpu.matmul %90, %91, %cst_34 {dimension_numbers = #tpu.dot_dimension_numbers<[1], [0], [0], [1], [0, 0, 1, 1], [], []>} : vector<5x16xf32>, vector<16x64xf32>, vector<5x64xf32> -> vector<5x64xf32>
    %93 = arith.addf %73, %92 : vector<5x64xf32>
    %94 = vector.extract_strided_slice %31 {offsets = [0, 48], sizes = [5, 16], strides = [1, 1]} : vector<5x64xf32> to vector<5x16xf32>
    %95 = vector.extract_strided_slice %32 {offsets = [0, 48], sizes = [5, 16], strides = [1, 1]} : vector<5x64xf32> to vector<5x16xf32>
    %96 = vector.extract_strided_slice %33 {offsets = [0, 48], sizes = [5, 16], strides = [1, 1]} : vector<5x64xf32> to vector<5x16xf32>
    %cst_35 = arith.constant dense<0.000000e+00> : vector<5x5xf32>
    %97 = tpu.matmul %94, %95, %cst_35 {dimension_numbers = #tpu.dot_dimension_numbers<[1], [1], [0], [0], [0, 0, 1, 0], [], []>} : vector<5x16xf32>, vector<5x16xf32>, vector<5x5xf32> -> vector<5x5xf32>
    %cst_36 = arith.constant 2.500000e-01 : f32
    %98 = vector.broadcast %cst_36 : f32 to vector<5x5xf32>
    %99 = arith.mulf %97, %98 : vector<5x5xf32>
    %cst_37 = arith.constant dense<0xFF800000> : vector<5xf32>
    %100 = vector.multi_reduction <maximumf>, %99, %cst_37 [1] : vector<5x5xf32> to vector<5xf32>
    %101 = vector.shape_cast %100 : vector<5xf32> to vector<5x1xf32>
    %102 = vector.broadcast %101 : vector<5x1xf32> to vector<5x5xf32>
    %103 = arith.subf %99, %102 : vector<5x5xf32>
    %104 = math.exp %103 : vector<5x5xf32>
    %cst_38 = arith.constant dense<0.000000e+00> : vector<5xf32>
    %105 = vector.multi_reduction <add>, %104, %cst_38 [1] : vector<5x5xf32> to vector<5xf32>
    %106 = vector.shape_cast %105 : vector<5xf32> to vector<5x1xf32>
    %107 = tpu.reciprocal %106 {approx = true} : vector<5x1xf32> -> vector<5x1xf32>
    %108 = vector.broadcast %107 : vector<5x1xf32> to vector<5x5xf32>
    %109 = arith.mulf %104, %108 : vector<5x5xf32>
    %cst_39 = arith.constant dense<0.000000e+00> : vector<5x16xf32>
    %110 = tpu.matmul %109, %96, %cst_39 {dimension_numbers = #tpu.dot_dimension_numbers<[1], [0], [0], [1], [0, 0, 1, 1], [], []>} : vector<5x5xf32>, vector<5x16xf32>, vector<5x16xf32> -> vector<5x16xf32>
    %111 = vector.extract_strided_slice %34 {offsets = [48, 0], sizes = [16, 64], strides = [1, 1]} : vector<64x64xf32> to vector<16x64xf32>
    %cst_40 = arith.constant dense<0.000000e+00> : vector<5x64xf32>
    %112 = tpu.matmul %110, %111, %cst_40 {dimension_numbers = #tpu.dot_dimension_numbers<[1], [0], [0], [1], [0, 0, 1, 1], [], []>} : vector<5x16xf32>, vector<16x64xf32>, vector<5x64xf32> -> vector<5x64xf32>
    %113 = arith.addf %93, %112 : vector<5x64xf32>
    %114 = arith.addf %1, %113 : vector<5x64xf32>
    %c0_41 = arith.constant 0 : index
    %c0_42 = arith.constant 0 : index
    %115 = vector.load %arg7[%c0_41, %c0_42] : memref<1x64xf32, #tpu.memory_space<vmem>>, vector<1x64xf32>
    %116 = vector.broadcast %115 : vector<1x64xf32> to vector<5x64xf32>
    %117 = arith.addf %114, %116 : vector<5x64xf32>
    %c0_43 = arith.constant 0 : index
    %c0_44 = arith.constant 0 : index
    %118 = vector.load %arg8[%c0_43, %c0_44] : memref<1x64xf32, #tpu.memory_space<vmem>>, vector<1x64xf32>
    %c0_45 = arith.constant 0 : index
    %c0_46 = arith.constant 0 : index
    %119 = vector.load %arg9[%c0_45, %c0_46] : memref<1x64xf32, #tpu.memory_space<vmem>>, vector<1x64xf32>
    %cst_47 = arith.constant dense<0.000000e+00> : vector<5xf32>
    %120 = vector.multi_reduction <add>, %117, %cst_47 [1] : vector<5x64xf32> to vector<5xf32>
    %121 = vector.shape_cast %120 : vector<5xf32> to vector<5x1xf32>
    %cst_48 = arith.constant 6.400000e+01 : f32
    %122 = vector.broadcast %cst_48 : f32 to vector<5x1xf32>
    %123 = arith.divf %121, %122 : vector<5x1xf32>
    %124 = vector.broadcast %123 : vector<5x1xf32> to vector<5x64xf32>
    %125 = arith.subf %117, %124 : vector<5x64xf32>
    %126 = arith.mulf %125, %125 : vector<5x64xf32>
    %cst_49 = arith.constant dense<0.000000e+00> : vector<5xf32>
    %127 = vector.multi_reduction <add>, %126, %cst_49 [1] : vector<5x64xf32> to vector<5xf32>
    %128 = vector.shape_cast %127 : vector<5xf32> to vector<5x1xf32>
    %cst_50 = arith.constant 6.400000e+01 : f32
    %129 = vector.broadcast %cst_50 : f32 to vector<5x1xf32>
    %130 = arith.divf %128, %129 : vector<5x1xf32>
    %131 = vector.broadcast %123 : vector<5x1xf32> to vector<5x64xf32>
    %132 = arith.subf %117, %131 : vector<5x64xf32>
    %cst_51 = arith.constant 9.99999974E-6 : f32
    %133 = vector.broadcast %cst_51 : f32 to vector<5x1xf32>
    %134 = arith.addf %130, %133 : vector<5x1xf32>
    %135 = math.rsqrt %134 : vector<5x1xf32>
    %136 = vector.broadcast %135 : vector<5x1xf32> to vector<5x64xf32>
    %137 = arith.mulf %132, %136 : vector<5x64xf32>
    %138 = vector.broadcast %118 : vector<1x64xf32> to vector<5x64xf32>
    %139 = arith.mulf %137, %138 : vector<5x64xf32>
    %140 = vector.broadcast %119 : vector<1x64xf32> to vector<5x64xf32>
    %141 = arith.addf %139, %140 : vector<5x64xf32>
    %c0_52 = arith.constant 0 : index
    %c0_53 = arith.constant 0 : index
    %142 = vector.load %arg10[%c0_52, %c0_53] : memref<64x256xf32, #tpu.memory_space<vmem>>, vector<64x256xf32>
    %cst_54 = arith.constant dense<0.000000e+00> : vector<5x256xf32>
    %143 = tpu.matmul %141, %142, %cst_54 {dimension_numbers = #tpu.dot_dimension_numbers<[1], [0], [0], [1], [0, 0, 1, 1], [], []>} : vector<5x64xf32>, vector<64x256xf32>, vector<5x256xf32> -> vector<5x256xf32>
    %c0_55 = arith.constant 0 : index
    %c0_56 = arith.constant 0 : index
    %144 = vector.load %arg11[%c0_55, %c0_56] : memref<1x256xf32, #tpu.memory_space<vmem>>, vector<1x256xf32>
    %145 = vector.broadcast %144 : vector<1x256xf32> to vector<5x256xf32>
    %146 = arith.addf %143, %145 : vector<5x256xf32>
    %cst_57 = arith.constant 5.000000e-01 : f32
    %147 = vector.broadcast %cst_57 : f32 to vector<5x256xf32>
    %148 = arith.mulf %147, %146 : vector<5x256xf32>
    %cst_58 = arith.constant 0.707106769 : f32
    %149 = vector.broadcast %cst_58 : f32 to vector<5x256xf32>
    %150 = arith.mulf %146, %149 : vector<5x256xf32>
    %151 = math.absf %150 : vector<5x256xf32>
    %cst_59 = arith.constant 0.327591091 : f32
    %152 = vector.broadcast %cst_59 : f32 to vector<5x256xf32>
    %153 = arith.mulf %152, %151 : vector<5x256xf32>
    %cst_60 = arith.constant 1.000000e+00 : f32
    %154 = vector.broadcast %cst_60 : f32 to vector<5x256xf32>
    %155 = arith.addf %154, %153 : vector<5x256xf32>
    %cst_61 = arith.constant 1.000000e+00 : f32
    %156 = vector.broadcast %cst_61 : f32 to vector<5x256xf32>
    %157 = arith.divf %156, %155 : vector<5x256xf32>
    %cst_62 = arith.constant 1.06140542 : f32
    %158 = vector.broadcast %cst_62 : f32 to vector<5x256xf32>
    %159 = arith.mulf %158, %157 : vector<5x256xf32>
    %cst_63 = arith.constant -1.45315206 : f32
    %160 = vector.broadcast %cst_63 : f32 to vector<5x256xf32>
    %161 = arith.addf %159, %160 : vector<5x256xf32>
    %162 = arith.mulf %161, %157 : vector<5x256xf32>
    %cst_64 = arith.constant 1.42141378 : f32
    %163 = vector.broadcast %cst_64 : f32 to vector<5x256xf32>
    %164 = arith.addf %162, %163 : vector<5x256xf32>
    %165 = arith.mulf %164, %157 : vector<5x256xf32>
    %cst_65 = arith.constant -0.284496725 : f32
    %166 = vector.broadcast %cst_65 : f32 to vector<5x256xf32>
    %167 = arith.addf %165, %166 : vector<5x256xf32>
    %168 = arith.mulf %167, %157 : vector<5x256xf32>
    %cst_66 = arith.constant 0.254829586 : f32
    %169 = vector.broadcast %cst_66 : f32 to vector<5x256xf32>
    %170 = arith.addf %168, %169 : vector<5x256xf32>
    %171 = arith.mulf %170, %157 : vector<5x256xf32>
    %cst_67 = arith.constant 0.000000e+00 : f32
    %172 = vector.broadcast %cst_67 : f32 to vector<5x256xf32>
    %173 = arith.subf %172, %151 : vector<5x256xf32>
    %174 = arith.mulf %173, %151 : vector<5x256xf32>
    %175 = math.exp %174 : vector<5x256xf32>
    %176 = arith.mulf %171, %175 : vector<5x256xf32>
    %cst_68 = arith.constant 1.000000e+00 : f32
    %177 = vector.broadcast %cst_68 : f32 to vector<5x256xf32>
    %178 = arith.subf %177, %176 : vector<5x256xf32>
    %cst_69 = arith.constant 0.000000e+00 : f32
    %179 = vector.broadcast %cst_69 : f32 to vector<5x256xf32>
    %180 = arith.cmpf oge, %150, %179 : vector<5x256xf32>
    %cst_70 = arith.constant 0.000000e+00 : f32
    %181 = vector.broadcast %cst_70 : f32 to vector<5x256xf32>
    %182 = arith.subf %181, %178 : vector<5x256xf32>
    %183 = arith.select %180, %178, %182 : vector<5x256xi1>, vector<5x256xf32>
    %cst_71 = arith.constant 1.000000e+00 : f32
    %184 = vector.broadcast %cst_71 : f32 to vector<5x256xf32>
    %185 = arith.addf %184, %183 : vector<5x256xf32>
    %186 = arith.mulf %148, %185 : vector<5x256xf32>
    %c0_72 = arith.constant 0 : index
    %c0_73 = arith.constant 0 : index
    %187 = vector.load %arg12[%c0_72, %c0_73] : memref<256x64xf32, #tpu.memory_space<vmem>>, vector<256x64xf32>
    %cst_74 = arith.constant dense<0.000000e+00> : vector<5x64xf32>
    %188 = tpu.matmul %186, %187, %cst_74 {dimension_numbers = #tpu.dot_dimension_numbers<[1], [0], [0], [1], [0, 0, 1, 1], [], []>} : vector<5x256xf32>, vector<256x64xf32>, vector<5x64xf32> -> vector<5x64xf32>
    %189 = arith.addf %117, %188 : vector<5x64xf32>
    %c0_75 = arith.constant 0 : index
    %c0_76 = arith.constant 0 : index
    %190 = vector.load %arg13[%c0_75, %c0_76] : memref<1x64xf32, #tpu.memory_space<vmem>>, vector<1x64xf32>
    %191 = vector.broadcast %190 : vector<1x64xf32> to vector<5x64xf32>
    %192 = arith.addf %189, %191 : vector<5x64xf32>
    %c0_77 = arith.constant 0 : index
    %c0_78 = arith.constant 0 : index
    %c0_79 = arith.constant 0 : index
    %193 = vector.load %arg14[%c0_77, %c0_78, %c0_79] : memref<1x5x64xf32, #tpu.memory_space<vmem>>, vector<1x5x64xf32>
    %194 = vector.shape_cast %193 : vector<1x5x64xf32> to vector<5x64xf32>
    %195 = vector.shape_cast %192 : vector<5x64xf32> to vector<1x5x64xf32>
    tpu.vector_store %arg14[%c0_77, %c0_78, %c0_79], %195 {strides = array<i32>} : memref<1x5x64xf32, #tpu.memory_space<vmem>>, vector<1x5x64xf32>,
    return
  }
  func.func @transform_0(%arg0: i32) -> (i32, i32, i32) {
    %c0_i32 = arith.constant 0 : i32
    %c0_i32_0 = arith.constant 0 : i32
    %c0_i32_1 = arith.constant 0 : i32
    return %arg0, %c0_i32, %c0_i32_0 : i32, i32, i32
  }
  func.func @transform_1(%arg0: i32) -> (i32, i32) {
    %c0_i32 = arith.constant 0 : i32
    %c0_i32_0 = arith.constant 0 : i32
    %c0_i32_1 = arith.constant 0 : i32
    return %c0_i32, %c0_i32_0 : i32, i32
  }
  func.func @transform_2(%arg0: i32) -> (i32, i32) {
    %c0_i32 = arith.constant 0 : i32
    %c0_i32_0 = arith.constant 0 : i32
    %c0_i32_1 = arith.constant 0 : i32
    return %c0_i32, %c0_i32_0 : i32, i32
  }
  func.func @transform_3(%arg0: i32) -> (i32, i32) {
    %c0_i32 = arith.constant 0 : i32
    %c0_i32_0 = arith.constant 0 : i32
    %c0_i32_1 = arith.constant 0 : i32
    return %c0_i32, %c0_i32_0 : i32, i32
  }
  func.func @transform_4(%arg0: i32) -> (i32, i32) {
    %c0_i32 = arith.constant 0 : i32
    %c0_i32_0 = arith.constant 0 : i32
    %c0_i32_1 = arith.constant 0 : i32
    return %c0_i32, %c0_i32_0 : i32, i32
  }
  func.func @transform_5(%arg0: i32) -> (i32, i32) {
    %c0_i32 = arith.constant 0 : i32
    %c0_i32_0 = arith.constant 0 : i32
    %c0_i32_1 = arith.constant 0 : i32
    return %c0_i32, %c0_i32_0 : i32, i32
  }
  func.func @transform_6(%arg0: i32) -> (i32, i32) {
    %c0_i32 = arith.constant 0 : i32
    %c0_i32_0 = arith.constant 0 : i32
    %c0_i32_1 = arith.constant 0 : i32
    return %c0_i32, %c0_i32_0 : i32, i32
  }
  func.func @transform_7(%arg0: i32) -> (i32, i32) {
    %c0_i32 = arith.constant 0 : i32
    %c0_i32_0 = arith.constant 0 : i32
    %c0_i32_1 = arith.constant 0 : i32
    return %c0_i32, %c0_i32_0 : i32, i32
  }
  func.func @transform_8(%arg0: i32) -> (i32, i32) {
    %c0_i32 = arith.constant 0 : i32
    %c0_i32_0 = arith.constant 0 : i32
    %c0_i32_1 = arith.constant 0 : i32
    return %c0_i32, %c0_i32_0 : i32, i32
  }
  func.func @transform_9(%arg0: i32) -> (i32, i32) {
    %c0_i32 = arith.constant 0 : i32
    %c0_i32_0 = arith.constant 0 : i32
    %c0_i32_1 = arith.constant 0 : i32
    return %c0_i32, %c0_i32_0 : i32, i32
  }
  func.func @transform_10(%arg0: i32) -> (i32, i32) {
    %c0_i32 = arith.constant 0 : i32
    %c0_i32_0 = arith.constant 0 : i32
    %c0_i32_1 = arith.constant 0 : i32
    return %c0_i32, %c0_i32_0 : i32, i32
  }
  func.func @transform_11(%arg0: i32) -> (i32, i32) {
    %c0_i32 = arith.constant 0 : i32
    %c0_i32_0 = arith.constant 0 : i32
    %c0_i32_1 = arith.constant 0 : i32
    return %c0_i32, %c0_i32_0 : i32, i32
  }
  func.func @transform_12(%arg0: i32) -> (i32, i32) {
    %c0_i32 = arith.constant 0 : i32
    %c0_i32_0 = arith.constant 0 : i32
    %c0_i32_1 = arith.constant 0 : i32
    return %c0_i32, %c0_i32_0 : i32, i32
  }
  func.func @transform_13(%arg0: i32) -> (i32, i32, i32) {
    %c0_i32 = arith.constant 0 : i32
    %c0_i32_0 = arith.constant 0 : i32
    %c0_i32_1 = arith.constant 0 : i32
    return %arg0, %c0_i32, %c0_i32_0 : i32, i32, i32
  }
}

module attributes {stable_mosaic.version = 11 : i64} {
  func.func @_matmul_kernel(%arg0: i32, %arg1: i32, %arg2: i32, %arg3: memref<8x384xf32, #tpu.memory_space<vmem>>, %arg4: memref<384x64xf32, #tpu.memory_space<vmem>>, %arg5: memref<1x64xf32, #tpu.memory_space<vmem>>, %arg6: memref<8x64xf32, #tpu.memory_space<vmem>>, %arg7: memref<8x64xf32, #tpu.memory_space<vmem>>) attributes {dimension_semantics = [#tpu.dimension_semantics<parallel>, #tpu.dimension_semantics<parallel>, #tpu.dimension_semantics<arbitrary>], iteration_bounds = array<i64: 1, 1, 2>, scalar_prefetch = 0 : i64, scratch_operands = 1 : i64, tpu.core_type = #tpu.core_type<tc>, window_params = [{transform_indices = @transform_0, window_bounds = array<i64: 8, 384>}, {transform_indices = @transform_1, window_bounds = array<i64: 384, 64>}, {transform_indices = @transform_2, window_bounds = array<i64: 1, 64>}, {transform_indices = @transform_3, window_bounds = array<i64: 8, 64>}]} {
    %c0_i32 = arith.constant 0 : i32
    %0 = arith.cmpi eq, %arg2, %c0_i32 : i32
    %1 = arith.extui %0 : i1 to i32
    %c0_i32_0 = arith.constant 0 : i32
    %2 = arith.cmpi ne, %1, %c0_i32_0 : i32
    scf.if %2 {
      %cst_9 = arith.constant 0.000000e+00 : f32
      %12 = vector.broadcast %cst_9 : f32 to vector<8x64xf32>
      %c0_10 = arith.constant 0 : index
      %c0_11 = arith.constant 0 : index
      %13 = vector.load %arg7[%c0_10, %c0_11] : memref<8x64xf32, #tpu.memory_space<vmem>>, vector<8x64xf32>
      tpu.vector_store %arg7[%c0_10, %c0_11], %12 {strides = array<i32>} : memref<8x64xf32, #tpu.memory_space<vmem>>, vector<8x64xf32>,
    } else {
    }
    %c0 = arith.constant 0 : index
    %c0_1 = arith.constant 0 : index
    %3 = vector.load %arg7[%c0, %c0_1] : memref<8x64xf32, #tpu.memory_space<vmem>>, vector<8x64xf32>
    %c0_2 = arith.constant 0 : index
    %c0_3 = arith.constant 0 : index
    %4 = vector.load %arg3[%c0_2, %c0_3] : memref<8x384xf32, #tpu.memory_space<vmem>>, vector<8x384xf32>
    %c0_4 = arith.constant 0 : index
    %c0_5 = arith.constant 0 : index
    %5 = vector.load %arg4[%c0_4, %c0_5] : memref<384x64xf32, #tpu.memory_space<vmem>>, vector<384x64xf32>
    %cst = arith.constant dense<0.000000e+00> : vector<8x64xf32>
    %6 = tpu.matmul %4, %5, %cst {dimension_numbers = #tpu.dot_dimension_numbers<[1], [0], [0], [1], [0, 0, 1, 1], [], []>} : vector<8x384xf32>, vector<384x64xf32>, vector<8x64xf32> -> vector<8x64xf32>
    %7 = arith.addf %3, %6 : vector<8x64xf32>
    %c0_6 = arith.constant 0 : index
    %c0_7 = arith.constant 0 : index
    %8 = vector.load %arg7[%c0_6, %c0_7] : memref<8x64xf32, #tpu.memory_space<vmem>>, vector<8x64xf32>
    tpu.vector_store %arg7[%c0_6, %c0_7], %7 {strides = array<i32>} : memref<8x64xf32, #tpu.memory_space<vmem>>, vector<8x64xf32>,
    %c1_i32 = arith.constant 1 : i32
    %9 = arith.cmpi eq, %arg2, %c1_i32 : i32
    %10 = arith.extui %9 : i1 to i32
    %c0_i32_8 = arith.constant 0 : i32
    %11 = arith.cmpi ne, %10, %c0_i32_8 : i32
    scf.if %11 {
      %c0_9 = arith.constant 0 : index
      %c0_10 = arith.constant 0 : index
      %12 = vector.load %arg7[%c0_9, %c0_10] : memref<8x64xf32, #tpu.memory_space<vmem>>, vector<8x64xf32>
      %c0_11 = arith.constant 0 : index
      %c0_12 = arith.constant 0 : index
      %13 = vector.load %arg5[%c0_11, %c0_12] : memref<1x64xf32, #tpu.memory_space<vmem>>, vector<1x64xf32>
      %14 = vector.broadcast %13 : vector<1x64xf32> to vector<8x64xf32>
      %15 = arith.addf %12, %14 : vector<8x64xf32>
      %c0_13 = arith.constant 0 : index
      %c0_14 = arith.constant 0 : index
      %16 = vector.load %arg6[%c0_13, %c0_14] : memref<8x64xf32, #tpu.memory_space<vmem>>, vector<8x64xf32>
      tpu.vector_store %arg6[%c0_13, %c0_14], %15 {strides = array<i32>} : memref<8x64xf32, #tpu.memory_space<vmem>>, vector<8x64xf32>,
    } else {
    }
    return
  }
  func.func @transform_0(%arg0: i32, %arg1: i32, %arg2: i32) -> (i32, i32) {
    %c0_i32 = arith.constant 0 : i32
    return %arg0, %arg2 : i32, i32
  }
  func.func @transform_1(%arg0: i32, %arg1: i32, %arg2: i32) -> (i32, i32) {
    %c0_i32 = arith.constant 0 : i32
    return %arg2, %arg1 : i32, i32
  }
  func.func @transform_2(%arg0: i32, %arg1: i32, %arg2: i32) -> (i32, i32) {
    %c0_i32 = arith.constant 0 : i32
    %c0_i32_0 = arith.constant 0 : i32
    return %c0_i32, %arg1 : i32, i32
  }
  func.func @transform_3(%arg0: i32, %arg1: i32, %arg2: i32) -> (i32, i32) {
    %c0_i32 = arith.constant 0 : i32
    return %arg0, %arg1 : i32, i32
  }
}

module attributes {stable_mosaic.version = 11 : i64} {
  func.func @_layernorm_kernel(%arg0: i32, %arg1: memref<16x64xf32, #tpu.memory_space<vmem>>, %arg2: memref<1x64xf32, #tpu.memory_space<vmem>>, %arg3: memref<1x64xf32, #tpu.memory_space<vmem>>, %arg4: memref<16x64xf32, #tpu.memory_space<vmem>>) attributes {dimension_semantics = [#tpu.dimension_semantics<parallel>], iteration_bounds = array<i64: 1>, scalar_prefetch = 0 : i64, scratch_operands = 0 : i64, tpu.core_type = #tpu.core_type<tc>, window_params = [{transform_indices = @transform_0, window_bounds = array<i64: 16, 64>}, {pipeline_mode = #tpu.pipeline_mode<synchronous>, transform_indices = @transform_1, window_bounds = array<i64: 1, 64>}, {pipeline_mode = #tpu.pipeline_mode<synchronous>, transform_indices = @transform_2, window_bounds = array<i64: 1, 64>}, {transform_indices = @transform_3, window_bounds = array<i64: 16, 64>}]} {
    %c0 = arith.constant 0 : index
    %c0_0 = arith.constant 0 : index
    %0 = vector.load %arg1[%c0, %c0_0] : memref<16x64xf32, #tpu.memory_space<vmem>>, vector<16x64xf32>
    %c0_1 = arith.constant 0 : index
    %c0_2 = arith.constant 0 : index
    %1 = vector.load %arg2[%c0_1, %c0_2] : memref<1x64xf32, #tpu.memory_space<vmem>>, vector<1x64xf32>
    %c0_3 = arith.constant 0 : index
    %c0_4 = arith.constant 0 : index
    %2 = vector.load %arg3[%c0_3, %c0_4] : memref<1x64xf32, #tpu.memory_space<vmem>>, vector<1x64xf32>
    %cst = arith.constant dense<0.000000e+00> : vector<16xf32>
    %3 = vector.multi_reduction <add>, %0, %cst [1] : vector<16x64xf32> to vector<16xf32>
    %4 = vector.shape_cast %3 : vector<16xf32> to vector<16x1xf32>
    %cst_5 = arith.constant 6.400000e+01 : f32
    %5 = vector.broadcast %cst_5 : f32 to vector<16x1xf32>
    %6 = arith.divf %4, %5 : vector<16x1xf32>
    %7 = vector.broadcast %6 : vector<16x1xf32> to vector<16x64xf32>
    %8 = arith.subf %0, %7 : vector<16x64xf32>
    %9 = arith.mulf %8, %8 : vector<16x64xf32>
    %cst_6 = arith.constant dense<0.000000e+00> : vector<16xf32>
    %10 = vector.multi_reduction <add>, %9, %cst_6 [1] : vector<16x64xf32> to vector<16xf32>
    %11 = vector.shape_cast %10 : vector<16xf32> to vector<16x1xf32>
    %cst_7 = arith.constant 6.400000e+01 : f32
    %12 = vector.broadcast %cst_7 : f32 to vector<16x1xf32>
    %13 = arith.divf %11, %12 : vector<16x1xf32>
    %14 = vector.broadcast %6 : vector<16x1xf32> to vector<16x64xf32>
    %15 = arith.subf %0, %14 : vector<16x64xf32>
    %cst_8 = arith.constant 9.99999974E-6 : f32
    %16 = vector.broadcast %cst_8 : f32 to vector<16x1xf32>
    %17 = arith.addf %13, %16 : vector<16x1xf32>
    %18 = math.rsqrt %17 : vector<16x1xf32>
    %19 = vector.broadcast %18 : vector<16x1xf32> to vector<16x64xf32>
    %20 = arith.mulf %15, %19 : vector<16x64xf32>
    %21 = vector.broadcast %1 : vector<1x64xf32> to vector<16x64xf32>
    %22 = arith.mulf %20, %21 : vector<16x64xf32>
    %23 = vector.broadcast %2 : vector<1x64xf32> to vector<16x64xf32>
    %24 = arith.addf %22, %23 : vector<16x64xf32>
    %c0_9 = arith.constant 0 : index
    %c0_10 = arith.constant 0 : index
    %25 = vector.load %arg4[%c0_9, %c0_10] : memref<16x64xf32, #tpu.memory_space<vmem>>, vector<16x64xf32>
    tpu.vector_store %arg4[%c0_9, %c0_10], %24 {strides = array<i32>} : memref<16x64xf32, #tpu.memory_space<vmem>>, vector<16x64xf32>,
    return
  }
  func.func @transform_0(%arg0: i32) -> (i32, i32) {
    %c0_i32 = arith.constant 0 : i32
    %c0_i32_0 = arith.constant 0 : i32
    return %arg0, %c0_i32 : i32, i32
  }
  func.func @transform_1(%arg0: i32) -> (i32, i32) {
    %c0_i32 = arith.constant 0 : i32
    %c0_i32_0 = arith.constant 0 : i32
    %c0_i32_1 = arith.constant 0 : i32
    return %c0_i32, %c0_i32_0 : i32, i32
  }
  func.func @transform_2(%arg0: i32) -> (i32, i32) {
    %c0_i32 = arith.constant 0 : i32
    %c0_i32_0 = arith.constant 0 : i32
    %c0_i32_1 = arith.constant 0 : i32
    return %c0_i32, %c0_i32_0 : i32, i32
  }
  func.func @transform_3(%arg0: i32) -> (i32, i32) {
    %c0_i32 = arith.constant 0 : i32
    %c0_i32_0 = arith.constant 0 : i32
    return %arg0, %c0_i32 : i32, i32
  }
}

module attributes {stable_mosaic.version = 11 : i64} {
  func.func @_dec_block_kernel(%arg0: i32, %arg1: memref<1x8x64xf32, #tpu.memory_space<vmem>>, %arg2: memref<1x5x64xf32, #tpu.memory_space<vmem>>, %arg3: memref<1x64xf32, #tpu.memory_space<vmem>>, %arg4: memref<1x64xf32, #tpu.memory_space<vmem>>, %arg5: memref<64x192xf32, #tpu.memory_space<vmem>>, %arg6: memref<1x192xf32, #tpu.memory_space<vmem>>, %arg7: memref<64x64xf32, #tpu.memory_space<vmem>>, %arg8: memref<1x64xf32, #tpu.memory_space<vmem>>, %arg9: memref<1x64xf32, #tpu.memory_space<vmem>>, %arg10: memref<1x64xf32, #tpu.memory_space<vmem>>, %arg11: memref<64x64xf32, #tpu.memory_space<vmem>>, %arg12: memref<1x64xf32, #tpu.memory_space<vmem>>, %arg13: memref<64x128xf32, #tpu.memory_space<vmem>>, %arg14: memref<1x128xf32, #tpu.memory_space<vmem>>, %arg15: memref<64x64xf32, #tpu.memory_space<vmem>>, %arg16: memref<1x64xf32, #tpu.memory_space<vmem>>, %arg17: memref<1x64xf32, #tpu.memory_space<vmem>>, %arg18: memref<1x64xf32, #tpu.memory_space<vmem>>, %arg19: memref<64x256xf32, #tpu.memory_space<vmem>>, %arg20: memref<1x256xf32, #tpu.memory_space<vmem>>, %arg21: memref<256x64xf32, #tpu.memory_space<vmem>>, %arg22: memref<1x64xf32, #tpu.memory_space<vmem>>, %arg23: memref<1x8x64xf32, #tpu.memory_space<vmem>>) attributes {dimension_semantics = [#tpu.dimension_semantics<parallel>], iteration_bounds = array<i64: 2>, scalar_prefetch = 0 : i64, scratch_operands = 0 : i64, tpu.core_type = #tpu.core_type<tc>, window_params = [{transform_indices = @transform_0, window_bounds = array<i64: 1, 8, 64>}, {transform_indices = @transform_1, window_bounds = array<i64: 1, 5, 64>}, {pipeline_mode = #tpu.pipeline_mode<synchronous>, transform_indices = @transform_2, window_bounds = array<i64: 1, 64>}, {pipeline_mode = #tpu.pipeline_mode<synchronous>, transform_indices = @transform_3, window_bounds = array<i64: 1, 64>}, {pipeline_mode = #tpu.pipeline_mode<synchronous>, transform_indices = @transform_4, window_bounds = array<i64: 64, 192>}, {pipeline_mode = #tpu.pipeline_mode<synchronous>, transform_indices = @transform_5, window_bounds = array<i64: 1, 192>}, {pipeline_mode = #tpu.pipeline_mode<synchronous>, transform_indices = @transform_6, window_bounds = array<i64: 64, 64>}, {pipeline_mode = #tpu.pipeline_mode<synchronous>, transform_indices = @transform_7, window_bounds = array<i64: 1, 64>}, {pipeline_mode = #tpu.pipeline_mode<synchronous>, transform_indices = @transform_8, window_bounds = array<i64: 1, 64>}, {pipeline_mode = #tpu.pipeline_mode<synchronous>, transform_indices = @transform_9, window_bounds = array<i64: 1, 64>}, {pipeline_mode = #tpu.pipeline_mode<synchronous>, transform_indices = @transform_10, window_bounds = array<i64: 64, 64>}, {pipeline_mode = #tpu.pipeline_mode<synchronous>, transform_indices = @transform_11, window_bounds = array<i64: 1, 64>}, {pipeline_mode = #tpu.pipeline_mode<synchronous>, transform_indices = @transform_12, window_bounds = array<i64: 64, 128>}, {pipeline_mode = #tpu.pipeline_mode<synchronous>, transform_indices = @transform_13, window_bounds = array<i64: 1, 128>}, {pipeline_mode = #tpu.pipeline_mode<synchronous>, transform_indices = @transform_14, window_bounds = array<i64: 64, 64>}, {pipeline_mode = #tpu.pipeline_mode<synchronous>, transform_indices = @transform_15, window_bounds = array<i64: 1, 64>}, {pipeline_mode = #tpu.pipeline_mode<synchronous>, transform_indices = @transform_16, window_bounds = array<i64: 1, 64>}, {pipeline_mode = #tpu.pipeline_mode<synchronous>, transform_indices = @transform_17, window_bounds = array<i64: 1, 64>}, {pipeline_mode = #tpu.pipeline_mode<synchronous>, transform_indices = @transform_18, window_bounds = array<i64: 64, 256>}, {pipeline_mode = #tpu.pipeline_mode<synchronous>, transform_indices = @transform_19, window_bounds = array<i64: 1, 256>}, {pipeline_mode = #tpu.pipeline_mode<synchronous>, transform_indices = @transform_20, window_bounds = array<i64: 256, 64>}, {pipeline_mode = #tpu.pipeline_mode<synchronous>, transform_indices = @transform_21, window_bounds = array<i64: 1, 64>}, {transform_indices = @transform_22, window_bounds = array<i64: 1, 8, 64>}]} {
    %c0 = arith.constant 0 : index
    %c0_0 = arith.constant 0 : index
    %c0_1 = arith.constant 0 : index
    %0 = vector.load %arg1[%c0, %c0_0, %c0_1] : memref<1x8x64xf32, #tpu.memory_space<vmem>>, vector<1x8x64xf32>
    %1 = vector.shape_cast %0 : vector<1x8x64xf32> to vector<8x64xf32>
    %c0_2 = arith.constant 0 : index
    %c0_3 = arith.constant 0 : index
    %c0_4 = arith.constant 0 : index
    %2 = vector.load %arg2[%c0_2, %c0_3, %c0_4] : memref<1x5x64xf32, #tpu.memory_space<vmem>>, vector<1x5x64xf32>
    %3 = vector.shape_cast %2 : vector<1x5x64xf32> to vector<5x64xf32>
    %c0_5 = arith.constant 0 : index
    %c0_6 = arith.constant 0 : index
    %4 = vector.load %arg3[%c0_5, %c0_6] : memref<1x64xf32, #tpu.memory_space<vmem>>, vector<1x64xf32>
    %c0_7 = arith.constant 0 : index
    %c0_8 = arith.constant 0 : index
    %5 = vector.load %arg4[%c0_7, %c0_8] : memref<1x64xf32, #tpu.memory_space<vmem>>, vector<1x64xf32>
    %cst = arith.constant dense<0.000000e+00> : vector<8xf32>
    %6 = vector.multi_reduction <add>, %1, %cst [1] : vector<8x64xf32> to vector<8xf32>
    %7 = vector.shape_cast %6 : vector<8xf32> to vector<8x1xf32>
    %cst_9 = arith.constant 6.400000e+01 : f32
    %8 = vector.broadcast %cst_9 : f32 to vector<8x1xf32>
    %9 = arith.divf %7, %8 : vector<8x1xf32>
    %10 = vector.broadcast %9 : vector<8x1xf32> to vector<8x64xf32>
    %11 = arith.subf %1, %10 : vector<8x64xf32>
    %12 = arith.mulf %11, %11 : vector<8x64xf32>
    %cst_10 = arith.constant dense<0.000000e+00> : vector<8xf32>
    %13 = vector.multi_reduction <add>, %12, %cst_10 [1] : vector<8x64xf32> to vector<8xf32>
    %14 = vector.shape_cast %13 : vector<8xf32> to vector<8x1xf32>
    %cst_11 = arith.constant 6.400000e+01 : f32
    %15 = vector.broadcast %cst_11 : f32 to vector<8x1xf32>
    %16 = arith.divf %14, %15 : vector<8x1xf32>
    %17 = vector.broadcast %9 : vector<8x1xf32> to vector<8x64xf32>
    %18 = arith.subf %1, %17 : vector<8x64xf32>
    %cst_12 = arith.constant 9.99999974E-6 : f32
    %19 = vector.broadcast %cst_12 : f32 to vector<8x1xf32>
    %20 = arith.addf %16, %19 : vector<8x1xf32>
    %21 = math.rsqrt %20 : vector<8x1xf32>
    %22 = vector.broadcast %21 : vector<8x1xf32> to vector<8x64xf32>
    %23 = arith.mulf %18, %22 : vector<8x64xf32>
    %24 = vector.broadcast %4 : vector<1x64xf32> to vector<8x64xf32>
    %25 = arith.mulf %23, %24 : vector<8x64xf32>
    %26 = vector.broadcast %5 : vector<1x64xf32> to vector<8x64xf32>
    %27 = arith.addf %25, %26 : vector<8x64xf32>
    %c0_13 = arith.constant 0 : index
    %c0_14 = arith.constant 0 : index
    %28 = vector.load %arg5[%c0_13, %c0_14] : memref<64x192xf32, #tpu.memory_space<vmem>>, vector<64x192xf32>
    %cst_15 = arith.constant dense<0.000000e+00> : vector<8x192xf32>
    %29 = tpu.matmul %27, %28, %cst_15 {dimension_numbers = #tpu.dot_dimension_numbers<[1], [0], [0], [1], [0, 0, 1, 1], [], []>} : vector<8x64xf32>, vector<64x192xf32>, vector<8x192xf32> -> vector<8x192xf32>
    %c0_16 = arith.constant 0 : index
    %c0_17 = arith.constant 0 : index
    %30 = vector.load %arg6[%c0_16, %c0_17] : memref<1x192xf32, #tpu.memory_space<vmem>>, vector<1x192xf32>
    %31 = vector.broadcast %30 : vector<1x192xf32> to vector<8x192xf32>
    %32 = arith.addf %29, %31 : vector<8x192xf32>
    %33 = vector.extract_strided_slice %32 {offsets = [0, 0], sizes = [8, 64], strides = [1, 1]} : vector<8x192xf32> to vector<8x64xf32>
    %34 = vector.extract_strided_slice %32 {offsets = [0, 64], sizes = [8, 64], strides = [1, 1]} : vector<8x192xf32> to vector<8x64xf32>
    %35 = vector.extract_strided_slice %32 {offsets = [0, 128], sizes = [8, 64], strides = [1, 1]} : vector<8x192xf32> to vector<8x64xf32>
    %c0_18 = arith.constant 0 : index
    %c0_19 = arith.constant 0 : index
    %36 = vector.load %arg7[%c0_18, %c0_19] : memref<64x64xf32, #tpu.memory_space<vmem>>, vector<64x64xf32>
    %37 = tpu.iota {dimensions = array<i32: 0>} : vector<8x8xi32>
    %38 = tpu.iota {dimensions = array<i32: 1>} : vector<8x8xi32>
    %39 = arith.cmpi sge, %37, %38 : vector<8x8xi32>
    %40 = vector.extract_strided_slice %33 {offsets = [0, 0], sizes = [8, 16], strides = [1, 1]} : vector<8x64xf32> to vector<8x16xf32>
    %41 = vector.extract_strided_slice %34 {offsets = [0, 0], sizes = [8, 16], strides = [1, 1]} : vector<8x64xf32> to vector<8x16xf32>
    %42 = vector.extract_strided_slice %35 {offsets = [0, 0], sizes = [8, 16], strides = [1, 1]} : vector<8x64xf32> to vector<8x16xf32>
    %cst_20 = arith.constant dense<0.000000e+00> : vector<8x8xf32>
    %43 = tpu.matmul %40, %41, %cst_20 {dimension_numbers = #tpu.dot_dimension_numbers<[1], [1], [0], [0], [0, 0, 1, 0], [], []>} : vector<8x16xf32>, vector<8x16xf32>, vector<8x8xf32> -> vector<8x8xf32>
    %cst_21 = arith.constant 2.500000e-01 : f32
    %44 = vector.broadcast %cst_21 : f32 to vector<8x8xf32>
    %45 = arith.mulf %43, %44 : vector<8x8xf32>
    %cst_22 = arith.constant 0xFF800000 : f32
    %46 = vector.broadcast %cst_22 : f32 to vector<8x8xf32>
    %47 = arith.select %39, %45, %46 : vector<8x8xi1>, vector<8x8xf32>
    %cst_23 = arith.constant dense<0xFF800000> : vector<8xf32>
    %48 = vector.multi_reduction <maximumf>, %47, %cst_23 [1] : vector<8x8xf32> to vector<8xf32>
    %49 = vector.shape_cast %48 : vector<8xf32> to vector<8x1xf32>
    %50 = vector.broadcast %49 : vector<8x1xf32> to vector<8x8xf32>
    %51 = arith.subf %47, %50 : vector<8x8xf32>
    %52 = math.exp %51 : vector<8x8xf32>
    %cst_24 = arith.constant dense<0.000000e+00> : vector<8xf32>
    %53 = vector.multi_reduction <add>, %52, %cst_24 [1] : vector<8x8xf32> to vector<8xf32>
    %54 = vector.shape_cast %53 : vector<8xf32> to vector<8x1xf32>
    %55 = tpu.reciprocal %54 {approx = true} : vector<8x1xf32> -> vector<8x1xf32>
    %56 = vector.broadcast %55 : vector<8x1xf32> to vector<8x8xf32>
    %57 = arith.mulf %52, %56 : vector<8x8xf32>
    %cst_25 = arith.constant dense<0.000000e+00> : vector<8x16xf32>
    %58 = tpu.matmul %57, %42, %cst_25 {dimension_numbers = #tpu.dot_dimension_numbers<[1], [0], [0], [1], [0, 0, 1, 1], [], []>} : vector<8x8xf32>, vector<8x16xf32>, vector<8x16xf32> -> vector<8x16xf32>
    %59 = vector.extract_strided_slice %36 {offsets = [0, 0], sizes = [16, 64], strides = [1, 1]} : vector<64x64xf32> to vector<16x64xf32>
    %cst_26 = arith.constant dense<0.000000e+00> : vector<8x64xf32>
    %60 = tpu.matmul %58, %59, %cst_26 {dimension_numbers = #tpu.dot_dimension_numbers<[1], [0], [0], [1], [0, 0, 1, 1], [], []>} : vector<8x16xf32>, vector<16x64xf32>, vector<8x64xf32> -> vector<8x64xf32>
    %61 = vector.extract_strided_slice %33 {offsets = [0, 16], sizes = [8, 16], strides = [1, 1]} : vector<8x64xf32> to vector<8x16xf32>
    %62 = vector.extract_strided_slice %34 {offsets = [0, 16], sizes = [8, 16], strides = [1, 1]} : vector<8x64xf32> to vector<8x16xf32>
    %63 = vector.extract_strided_slice %35 {offsets = [0, 16], sizes = [8, 16], strides = [1, 1]} : vector<8x64xf32> to vector<8x16xf32>
    %cst_27 = arith.constant dense<0.000000e+00> : vector<8x8xf32>
    %64 = tpu.matmul %61, %62, %cst_27 {dimension_numbers = #tpu.dot_dimension_numbers<[1], [1], [0], [0], [0, 0, 1, 0], [], []>} : vector<8x16xf32>, vector<8x16xf32>, vector<8x8xf32> -> vector<8x8xf32>
    %cst_28 = arith.constant 2.500000e-01 : f32
    %65 = vector.broadcast %cst_28 : f32 to vector<8x8xf32>
    %66 = arith.mulf %64, %65 : vector<8x8xf32>
    %cst_29 = arith.constant 0xFF800000 : f32
    %67 = vector.broadcast %cst_29 : f32 to vector<8x8xf32>
    %68 = arith.select %39, %66, %67 : vector<8x8xi1>, vector<8x8xf32>
    %cst_30 = arith.constant dense<0xFF800000> : vector<8xf32>
    %69 = vector.multi_reduction <maximumf>, %68, %cst_30 [1] : vector<8x8xf32> to vector<8xf32>
    %70 = vector.shape_cast %69 : vector<8xf32> to vector<8x1xf32>
    %71 = vector.broadcast %70 : vector<8x1xf32> to vector<8x8xf32>
    %72 = arith.subf %68, %71 : vector<8x8xf32>
    %73 = math.exp %72 : vector<8x8xf32>
    %cst_31 = arith.constant dense<0.000000e+00> : vector<8xf32>
    %74 = vector.multi_reduction <add>, %73, %cst_31 [1] : vector<8x8xf32> to vector<8xf32>
    %75 = vector.shape_cast %74 : vector<8xf32> to vector<8x1xf32>
    %76 = tpu.reciprocal %75 {approx = true} : vector<8x1xf32> -> vector<8x1xf32>
    %77 = vector.broadcast %76 : vector<8x1xf32> to vector<8x8xf32>
    %78 = arith.mulf %73, %77 : vector<8x8xf32>
    %cst_32 = arith.constant dense<0.000000e+00> : vector<8x16xf32>
    %79 = tpu.matmul %78, %63, %cst_32 {dimension_numbers = #tpu.dot_dimension_numbers<[1], [0], [0], [1], [0, 0, 1, 1], [], []>} : vector<8x8xf32>, vector<8x16xf32>, vector<8x16xf32> -> vector<8x16xf32>
    %80 = vector.extract_strided_slice %36 {offsets = [16, 0], sizes = [16, 64], strides = [1, 1]} : vector<64x64xf32> to vector<16x64xf32>
    %cst_33 = arith.constant dense<0.000000e+00> : vector<8x64xf32>
    %81 = tpu.matmul %79, %80, %cst_33 {dimension_numbers = #tpu.dot_dimension_numbers<[1], [0], [0], [1], [0, 0, 1, 1], [], []>} : vector<8x16xf32>, vector<16x64xf32>, vector<8x64xf32> -> vector<8x64xf32>
    %82 = arith.addf %60, %81 : vector<8x64xf32>
    %83 = vector.extract_strided_slice %33 {offsets = [0, 32], sizes = [8, 16], strides = [1, 1]} : vector<8x64xf32> to vector<8x16xf32>
    %84 = vector.extract_strided_slice %34 {offsets = [0, 32], sizes = [8, 16], strides = [1, 1]} : vector<8x64xf32> to vector<8x16xf32>
    %85 = vector.extract_strided_slice %35 {offsets = [0, 32], sizes = [8, 16], strides = [1, 1]} : vector<8x64xf32> to vector<8x16xf32>
    %cst_34 = arith.constant dense<0.000000e+00> : vector<8x8xf32>
    %86 = tpu.matmul %83, %84, %cst_34 {dimension_numbers = #tpu.dot_dimension_numbers<[1], [1], [0], [0], [0, 0, 1, 0], [], []>} : vector<8x16xf32>, vector<8x16xf32>, vector<8x8xf32> -> vector<8x8xf32>
    %cst_35 = arith.constant 2.500000e-01 : f32
    %87 = vector.broadcast %cst_35 : f32 to vector<8x8xf32>
    %88 = arith.mulf %86, %87 : vector<8x8xf32>
    %cst_36 = arith.constant 0xFF800000 : f32
    %89 = vector.broadcast %cst_36 : f32 to vector<8x8xf32>
    %90 = arith.select %39, %88, %89 : vector<8x8xi1>, vector<8x8xf32>
    %cst_37 = arith.constant dense<0xFF800000> : vector<8xf32>
    %91 = vector.multi_reduction <maximumf>, %90, %cst_37 [1] : vector<8x8xf32> to vector<8xf32>
    %92 = vector.shape_cast %91 : vector<8xf32> to vector<8x1xf32>
    %93 = vector.broadcast %92 : vector<8x1xf32> to vector<8x8xf32>
    %94 = arith.subf %90, %93 : vector<8x8xf32>
    %95 = math.exp %94 : vector<8x8xf32>
    %cst_38 = arith.constant dense<0.000000e+00> : vector<8xf32>
    %96 = vector.multi_reduction <add>, %95, %cst_38 [1] : vector<8x8xf32> to vector<8xf32>
    %97 = vector.shape_cast %96 : vector<8xf32> to vector<8x1xf32>
    %98 = tpu.reciprocal %97 {approx = true} : vector<8x1xf32> -> vector<8x1xf32>
    %99 = vector.broadcast %98 : vector<8x1xf32> to vector<8x8xf32>
    %100 = arith.mulf %95, %99 : vector<8x8xf32>
    %cst_39 = arith.constant dense<0.000000e+00> : vector<8x16xf32>
    %101 = tpu.matmul %100, %85, %cst_39 {dimension_numbers = #tpu.dot_dimension_numbers<[1], [0], [0], [1], [0, 0, 1, 1], [], []>} : vector<8x8xf32>, vector<8x16xf32>, vector<8x16xf32> -> vector<8x16xf32>
    %102 = vector.extract_strided_slice %36 {offsets = [32, 0], sizes = [16, 64], strides = [1, 1]} : vector<64x64xf32> to vector<16x64xf32>
    %cst_40 = arith.constant dense<0.000000e+00> : vector<8x64xf32>
    %103 = tpu.matmul %101, %102, %cst_40 {dimension_numbers = #tpu.dot_dimension_numbers<[1], [0], [0], [1], [0, 0, 1, 1], [], []>} : vector<8x16xf32>, vector<16x64xf32>, vector<8x64xf32> -> vector<8x64xf32>
    %104 = arith.addf %82, %103 : vector<8x64xf32>
    %105 = vector.extract_strided_slice %33 {offsets = [0, 48], sizes = [8, 16], strides = [1, 1]} : vector<8x64xf32> to vector<8x16xf32>
    %106 = vector.extract_strided_slice %34 {offsets = [0, 48], sizes = [8, 16], strides = [1, 1]} : vector<8x64xf32> to vector<8x16xf32>
    %107 = vector.extract_strided_slice %35 {offsets = [0, 48], sizes = [8, 16], strides = [1, 1]} : vector<8x64xf32> to vector<8x16xf32>
    %cst_41 = arith.constant dense<0.000000e+00> : vector<8x8xf32>
    %108 = tpu.matmul %105, %106, %cst_41 {dimension_numbers = #tpu.dot_dimension_numbers<[1], [1], [0], [0], [0, 0, 1, 0], [], []>} : vector<8x16xf32>, vector<8x16xf32>, vector<8x8xf32> -> vector<8x8xf32>
    %cst_42 = arith.constant 2.500000e-01 : f32
    %109 = vector.broadcast %cst_42 : f32 to vector<8x8xf32>
    %110 = arith.mulf %108, %109 : vector<8x8xf32>
    %cst_43 = arith.constant 0xFF800000 : f32
    %111 = vector.broadcast %cst_43 : f32 to vector<8x8xf32>
    %112 = arith.select %39, %110, %111 : vector<8x8xi1>, vector<8x8xf32>
    %cst_44 = arith.constant dense<0xFF800000> : vector<8xf32>
    %113 = vector.multi_reduction <maximumf>, %112, %cst_44 [1] : vector<8x8xf32> to vector<8xf32>
    %114 = vector.shape_cast %113 : vector<8xf32> to vector<8x1xf32>
    %115 = vector.broadcast %114 : vector<8x1xf32> to vector<8x8xf32>
    %116 = arith.subf %112, %115 : vector<8x8xf32>
    %117 = math.exp %116 : vector<8x8xf32>
    %cst_45 = arith.constant dense<0.000000e+00> : vector<8xf32>
    %118 = vector.multi_reduction <add>, %117, %cst_45 [1] : vector<8x8xf32> to vector<8xf32>
    %119 = vector.shape_cast %118 : vector<8xf32> to vector<8x1xf32>
    %120 = tpu.reciprocal %119 {approx = true} : vector<8x1xf32> -> vector<8x1xf32>
    %121 = vector.broadcast %120 : vector<8x1xf32> to vector<8x8xf32>
    %122 = arith.mulf %117, %121 : vector<8x8xf32>
    %cst_46 = arith.constant dense<0.000000e+00> : vector<8x16xf32>
    %123 = tpu.matmul %122, %107, %cst_46 {dimension_numbers = #tpu.dot_dimension_numbers<[1], [0], [0], [1], [0, 0, 1, 1], [], []>} : vector<8x8xf32>, vector<8x16xf32>, vector<8x16xf32> -> vector<8x16xf32>
    %124 = vector.extract_strided_slice %36 {offsets = [48, 0], sizes = [16, 64], strides = [1, 1]} : vector<64x64xf32> to vector<16x64xf32>
    %cst_47 = arith.constant dense<0.000000e+00> : vector<8x64xf32>
    %125 = tpu.matmul %123, %124, %cst_47 {dimension_numbers = #tpu.dot_dimension_numbers<[1], [0], [0], [1], [0, 0, 1, 1], [], []>} : vector<8x16xf32>, vector<16x64xf32>, vector<8x64xf32> -> vector<8x64xf32>
    %126 = arith.addf %104, %125 : vector<8x64xf32>
    %127 = arith.addf %1, %126 : vector<8x64xf32>
    %c0_48 = arith.constant 0 : index
    %c0_49 = arith.constant 0 : index
    %128 = vector.load %arg8[%c0_48, %c0_49] : memref<1x64xf32, #tpu.memory_space<vmem>>, vector<1x64xf32>
    %129 = vector.broadcast %128 : vector<1x64xf32> to vector<8x64xf32>
    %130 = arith.addf %127, %129 : vector<8x64xf32>
    %c0_50 = arith.constant 0 : index
    %c0_51 = arith.constant 0 : index
    %131 = vector.load %arg9[%c0_50, %c0_51] : memref<1x64xf32, #tpu.memory_space<vmem>>, vector<1x64xf32>
    %c0_52 = arith.constant 0 : index
    %c0_53 = arith.constant 0 : index
    %132 = vector.load %arg10[%c0_52, %c0_53] : memref<1x64xf32, #tpu.memory_space<vmem>>, vector<1x64xf32>
    %cst_54 = arith.constant dense<0.000000e+00> : vector<8xf32>
    %133 = vector.multi_reduction <add>, %130, %cst_54 [1] : vector<8x64xf32> to vector<8xf32>
    %134 = vector.shape_cast %133 : vector<8xf32> to vector<8x1xf32>
    %cst_55 = arith.constant 6.400000e+01 : f32
    %135 = vector.broadcast %cst_55 : f32 to vector<8x1xf32>
    %136 = arith.divf %134, %135 : vector<8x1xf32>
    %137 = vector.broadcast %136 : vector<8x1xf32> to vector<8x64xf32>
    %138 = arith.subf %130, %137 : vector<8x64xf32>
    %139 = arith.mulf %138, %138 : vector<8x64xf32>
    %cst_56 = arith.constant dense<0.000000e+00> : vector<8xf32>
    %140 = vector.multi_reduction <add>, %139, %cst_56 [1] : vector<8x64xf32> to vector<8xf32>
    %141 = vector.shape_cast %140 : vector<8xf32> to vector<8x1xf32>
    %cst_57 = arith.constant 6.400000e+01 : f32
    %142 = vector.broadcast %cst_57 : f32 to vector<8x1xf32>
    %143 = arith.divf %141, %142 : vector<8x1xf32>
    %144 = vector.broadcast %136 : vector<8x1xf32> to vector<8x64xf32>
    %145 = arith.subf %130, %144 : vector<8x64xf32>
    %cst_58 = arith.constant 9.99999974E-6 : f32
    %146 = vector.broadcast %cst_58 : f32 to vector<8x1xf32>
    %147 = arith.addf %143, %146 : vector<8x1xf32>
    %148 = math.rsqrt %147 : vector<8x1xf32>
    %149 = vector.broadcast %148 : vector<8x1xf32> to vector<8x64xf32>
    %150 = arith.mulf %145, %149 : vector<8x64xf32>
    %151 = vector.broadcast %131 : vector<1x64xf32> to vector<8x64xf32>
    %152 = arith.mulf %150, %151 : vector<8x64xf32>
    %153 = vector.broadcast %132 : vector<1x64xf32> to vector<8x64xf32>
    %154 = arith.addf %152, %153 : vector<8x64xf32>
    %c0_59 = arith.constant 0 : index
    %c0_60 = arith.constant 0 : index
    %155 = vector.load %arg11[%c0_59, %c0_60] : memref<64x64xf32, #tpu.memory_space<vmem>>, vector<64x64xf32>
    %cst_61 = arith.constant dense<0.000000e+00> : vector<8x64xf32>
    %156 = tpu.matmul %154, %155, %cst_61 {dimension_numbers = #tpu.dot_dimension_numbers<[1], [0], [0], [1], [0, 0, 1, 1], [], []>} : vector<8x64xf32>, vector<64x64xf32>, vector<8x64xf32> -> vector<8x64xf32>
    %c0_62 = arith.constant 0 : index
    %c0_63 = arith.constant 0 : index
    %157 = vector.load %arg12[%c0_62, %c0_63] : memref<1x64xf32, #tpu.memory_space<vmem>>, vector<1x64xf32>
    %158 = vector.broadcast %157 : vector<1x64xf32> to vector<8x64xf32>
    %159 = arith.addf %156, %158 : vector<8x64xf32>
    %c0_64 = arith.constant 0 : index
    %c0_65 = arith.constant 0 : index
    %160 = vector.load %arg13[%c0_64, %c0_65] : memref<64x128xf32, #tpu.memory_space<vmem>>, vector<64x128xf32>
    %cst_66 = arith.constant dense<0.000000e+00> : vector<5x128xf32>
    %161 = tpu.matmul %3, %160, %cst_66 {dimension_numbers = #tpu.dot_dimension_numbers<[1], [0], [0], [1], [0, 0, 1, 1], [], []>} : vector<5x64xf32>, vector<64x128xf32>, vector<5x128xf32> -> vector<5x128xf32>
    %c0_67 = arith.constant 0 : index
    %c0_68 = arith.constant 0 : index
    %162 = vector.load %arg14[%c0_67, %c0_68] : memref<1x128xf32, #tpu.memory_space<vmem>>, vector<1x128xf32>
    %163 = vector.broadcast %162 : vector<1x128xf32> to vector<5x128xf32>
    %164 = arith.addf %161, %163 : vector<5x128xf32>
    %165 = vector.extract_strided_slice %164 {offsets = [0, 0], sizes = [5, 64], strides = [1, 1]} : vector<5x128xf32> to vector<5x64xf32>
    %166 = vector.extract_strided_slice %164 {offsets = [0, 64], sizes = [5, 64], strides = [1, 1]} : vector<5x128xf32> to vector<5x64xf32>
    %c0_69 = arith.constant 0 : index
    %c0_70 = arith.constant 0 : index
    %167 = vector.load %arg15[%c0_69, %c0_70] : memref<64x64xf32, #tpu.memory_space<vmem>>, vector<64x64xf32>
    %168 = vector.extract_strided_slice %159 {offsets = [0, 0], sizes = [8, 16], strides = [1, 1]} : vector<8x64xf32> to vector<8x16xf32>
    %169 = vector.extract_strided_slice %165 {offsets = [0, 0], sizes = [5, 16], strides = [1, 1]} : vector<5x64xf32> to vector<5x16xf32>
    %170 = vector.extract_strided_slice %166 {offsets = [0, 0], sizes = [5, 16], strides = [1, 1]} : vector<5x64xf32> to vector<5x16xf32>
    %cst_71 = arith.constant dense<0.000000e+00> : vector<8x5xf32>
    %171 = tpu.matmul %168, %169, %cst_71 {dimension_numbers = #tpu.dot_dimension_numbers<[1], [1], [0], [0], [0, 0, 1, 0], [], []>} : vector<8x16xf32>, vector<5x16xf32>, vector<8x5xf32> -> vector<8x5xf32>
    %cst_72 = arith.constant 2.500000e-01 : f32
    %172 = vector.broadcast %cst_72 : f32 to vector<8x5xf32>
    %173 = arith.mulf %171, %172 : vector<8x5xf32>
    %cst_73 = arith.constant dense<0xFF800000> : vector<8xf32>
    %174 = vector.multi_reduction <maximumf>, %173, %cst_73 [1] : vector<8x5xf32> to vector<8xf32>
    %175 = vector.shape_cast %174 : vector<8xf32> to vector<8x1xf32>
    %176 = vector.broadcast %175 : vector<8x1xf32> to vector<8x5xf32>
    %177 = arith.subf %173, %176 : vector<8x5xf32>
    %178 = math.exp %177 : vector<8x5xf32>
    %cst_74 = arith.constant dense<0.000000e+00> : vector<8xf32>
    %179 = vector.multi_reduction <add>, %178, %cst_74 [1] : vector<8x5xf32> to vector<8xf32>
    %180 = vector.shape_cast %179 : vector<8xf32> to vector<8x1xf32>
    %181 = tpu.reciprocal %180 {approx = true} : vector<8x1xf32> -> vector<8x1xf32>
    %182 = vector.broadcast %181 : vector<8x1xf32> to vector<8x5xf32>
    %183 = arith.mulf %178, %182 : vector<8x5xf32>
    %cst_75 = arith.constant dense<0.000000e+00> : vector<8x16xf32>
    %184 = tpu.matmul %183, %170, %cst_75 {dimension_numbers = #tpu.dot_dimension_numbers<[1], [0], [0], [1], [0, 0, 1, 1], [], []>} : vector<8x5xf32>, vector<5x16xf32>, vector<8x16xf32> -> vector<8x16xf32>
    %185 = vector.extract_strided_slice %167 {offsets = [0, 0], sizes = [16, 64], strides = [1, 1]} : vector<64x64xf32> to vector<16x64xf32>
    %cst_76 = arith.constant dense<0.000000e+00> : vector<8x64xf32>
    %186 = tpu.matmul %184, %185, %cst_76 {dimension_numbers = #tpu.dot_dimension_numbers<[1], [0], [0], [1], [0, 0, 1, 1], [], []>} : vector<8x16xf32>, vector<16x64xf32>, vector<8x64xf32> -> vector<8x64xf32>
    %187 = vector.extract_strided_slice %159 {offsets = [0, 16], sizes = [8, 16], strides = [1, 1]} : vector<8x64xf32> to vector<8x16xf32>
    %188 = vector.extract_strided_slice %165 {offsets = [0, 16], sizes = [5, 16], strides = [1, 1]} : vector<5x64xf32> to vector<5x16xf32>
    %189 = vector.extract_strided_slice %166 {offsets = [0, 16], sizes = [5, 16], strides = [1, 1]} : vector<5x64xf32> to vector<5x16xf32>
    %cst_77 = arith.constant dense<0.000000e+00> : vector<8x5xf32>
    %190 = tpu.matmul %187, %188, %cst_77 {dimension_numbers = #tpu.dot_dimension_numbers<[1], [1], [0], [0], [0, 0, 1, 0], [], []>} : vector<8x16xf32>, vector<5x16xf32>, vector<8x5xf32> -> vector<8x5xf32>
    %cst_78 = arith.constant 2.500000e-01 : f32
    %191 = vector.broadcast %cst_78 : f32 to vector<8x5xf32>
    %192 = arith.mulf %190, %191 : vector<8x5xf32>
    %cst_79 = arith.constant dense<0xFF800000> : vector<8xf32>
    %193 = vector.multi_reduction <maximumf>, %192, %cst_79 [1] : vector<8x5xf32> to vector<8xf32>
    %194 = vector.shape_cast %193 : vector<8xf32> to vector<8x1xf32>
    %195 = vector.broadcast %194 : vector<8x1xf32> to vector<8x5xf32>
    %196 = arith.subf %192, %195 : vector<8x5xf32>
    %197 = math.exp %196 : vector<8x5xf32>
    %cst_80 = arith.constant dense<0.000000e+00> : vector<8xf32>
    %198 = vector.multi_reduction <add>, %197, %cst_80 [1] : vector<8x5xf32> to vector<8xf32>
    %199 = vector.shape_cast %198 : vector<8xf32> to vector<8x1xf32>
    %200 = tpu.reciprocal %199 {approx = true} : vector<8x1xf32> -> vector<8x1xf32>
    %201 = vector.broadcast %200 : vector<8x1xf32> to vector<8x5xf32>
    %202 = arith.mulf %197, %201 : vector<8x5xf32>
    %cst_81 = arith.constant dense<0.000000e+00> : vector<8x16xf32>
    %203 = tpu.matmul %202, %189, %cst_81 {dimension_numbers = #tpu.dot_dimension_numbers<[1], [0], [0], [1], [0, 0, 1, 1], [], []>} : vector<8x5xf32>, vector<5x16xf32>, vector<8x16xf32> -> vector<8x16xf32>
    %204 = vector.extract_strided_slice %167 {offsets = [16, 0], sizes = [16, 64], strides = [1, 1]} : vector<64x64xf32> to vector<16x64xf32>
    %cst_82 = arith.constant dense<0.000000e+00> : vector<8x64xf32>
    %205 = tpu.matmul %203, %204, %cst_82 {dimension_numbers = #tpu.dot_dimension_numbers<[1], [0], [0], [1], [0, 0, 1, 1], [], []>} : vector<8x16xf32>, vector<16x64xf32>, vector<8x64xf32> -> vector<8x64xf32>
    %206 = arith.addf %186, %205 : vector<8x64xf32>
    %207 = vector.extract_strided_slice %159 {offsets = [0, 32], sizes = [8, 16], strides = [1, 1]} : vector<8x64xf32> to vector<8x16xf32>
    %208 = vector.extract_strided_slice %165 {offsets = [0, 32], sizes = [5, 16], strides = [1, 1]} : vector<5x64xf32> to vector<5x16xf32>
    %209 = vector.extract_strided_slice %166 {offsets = [0, 32], sizes = [5, 16], strides = [1, 1]} : vector<5x64xf32> to vector<5x16xf32>
    %cst_83 = arith.constant dense<0.000000e+00> : vector<8x5xf32>
    %210 = tpu.matmul %207, %208, %cst_83 {dimension_numbers = #tpu.dot_dimension_numbers<[1], [1], [0], [0], [0, 0, 1, 0], [], []>} : vector<8x16xf32>, vector<5x16xf32>, vector<8x5xf32> -> vector<8x5xf32>
    %cst_84 = arith.constant 2.500000e-01 : f32
    %211 = vector.broadcast %cst_84 : f32 to vector<8x5xf32>
    %212 = arith.mulf %210, %211 : vector<8x5xf32>
    %cst_85 = arith.constant dense<0xFF800000> : vector<8xf32>
    %213 = vector.multi_reduction <maximumf>, %212, %cst_85 [1] : vector<8x5xf32> to vector<8xf32>
    %214 = vector.shape_cast %213 : vector<8xf32> to vector<8x1xf32>
    %215 = vector.broadcast %214 : vector<8x1xf32> to vector<8x5xf32>
    %216 = arith.subf %212, %215 : vector<8x5xf32>
    %217 = math.exp %216 : vector<8x5xf32>
    %cst_86 = arith.constant dense<0.000000e+00> : vector<8xf32>
    %218 = vector.multi_reduction <add>, %217, %cst_86 [1] : vector<8x5xf32> to vector<8xf32>
    %219 = vector.shape_cast %218 : vector<8xf32> to vector<8x1xf32>
    %220 = tpu.reciprocal %219 {approx = true} : vector<8x1xf32> -> vector<8x1xf32>
    %221 = vector.broadcast %220 : vector<8x1xf32> to vector<8x5xf32>
    %222 = arith.mulf %217, %221 : vector<8x5xf32>
    %cst_87 = arith.constant dense<0.000000e+00> : vector<8x16xf32>
    %223 = tpu.matmul %222, %209, %cst_87 {dimension_numbers = #tpu.dot_dimension_numbers<[1], [0], [0], [1], [0, 0, 1, 1], [], []>} : vector<8x5xf32>, vector<5x16xf32>, vector<8x16xf32> -> vector<8x16xf32>
    %224 = vector.extract_strided_slice %167 {offsets = [32, 0], sizes = [16, 64], strides = [1, 1]} : vector<64x64xf32> to vector<16x64xf32>
    %cst_88 = arith.constant dense<0.000000e+00> : vector<8x64xf32>
    %225 = tpu.matmul %223, %224, %cst_88 {dimension_numbers = #tpu.dot_dimension_numbers<[1], [0], [0], [1], [0, 0, 1, 1], [], []>} : vector<8x16xf32>, vector<16x64xf32>, vector<8x64xf32> -> vector<8x64xf32>
    %226 = arith.addf %206, %225 : vector<8x64xf32>
    %227 = vector.extract_strided_slice %159 {offsets = [0, 48], sizes = [8, 16], strides = [1, 1]} : vector<8x64xf32> to vector<8x16xf32>
    %228 = vector.extract_strided_slice %165 {offsets = [0, 48], sizes = [5, 16], strides = [1, 1]} : vector<5x64xf32> to vector<5x16xf32>
    %229 = vector.extract_strided_slice %166 {offsets = [0, 48], sizes = [5, 16], strides = [1, 1]} : vector<5x64xf32> to vector<5x16xf32>
    %cst_89 = arith.constant dense<0.000000e+00> : vector<8x5xf32>
    %230 = tpu.matmul %227, %228, %cst_89 {dimension_numbers = #tpu.dot_dimension_numbers<[1], [1], [0], [0], [0, 0, 1, 0], [], []>} : vector<8x16xf32>, vector<5x16xf32>, vector<8x5xf32> -> vector<8x5xf32>
    %cst_90 = arith.constant 2.500000e-01 : f32
    %231 = vector.broadcast %cst_90 : f32 to vector<8x5xf32>
    %232 = arith.mulf %230, %231 : vector<8x5xf32>
    %cst_91 = arith.constant dense<0xFF800000> : vector<8xf32>
    %233 = vector.multi_reduction <maximumf>, %232, %cst_91 [1] : vector<8x5xf32> to vector<8xf32>
    %234 = vector.shape_cast %233 : vector<8xf32> to vector<8x1xf32>
    %235 = vector.broadcast %234 : vector<8x1xf32> to vector<8x5xf32>
    %236 = arith.subf %232, %235 : vector<8x5xf32>
    %237 = math.exp %236 : vector<8x5xf32>
    %cst_92 = arith.constant dense<0.000000e+00> : vector<8xf32>
    %238 = vector.multi_reduction <add>, %237, %cst_92 [1] : vector<8x5xf32> to vector<8xf32>
    %239 = vector.shape_cast %238 : vector<8xf32> to vector<8x1xf32>
    %240 = tpu.reciprocal %239 {approx = true} : vector<8x1xf32> -> vector<8x1xf32>
    %241 = vector.broadcast %240 : vector<8x1xf32> to vector<8x5xf32>
    %242 = arith.mulf %237, %241 : vector<8x5xf32>
    %cst_93 = arith.constant dense<0.000000e+00> : vector<8x16xf32>
    %243 = tpu.matmul %242, %229, %cst_93 {dimension_numbers = #tpu.dot_dimension_numbers<[1], [0], [0], [1], [0, 0, 1, 1], [], []>} : vector<8x5xf32>, vector<5x16xf32>, vector<8x16xf32> -> vector<8x16xf32>
    %244 = vector.extract_strided_slice %167 {offsets = [48, 0], sizes = [16, 64], strides = [1, 1]} : vector<64x64xf32> to vector<16x64xf32>
    %cst_94 = arith.constant dense<0.000000e+00> : vector<8x64xf32>
    %245 = tpu.matmul %243, %244, %cst_94 {dimension_numbers = #tpu.dot_dimension_numbers<[1], [0], [0], [1], [0, 0, 1, 1], [], []>} : vector<8x16xf32>, vector<16x64xf32>, vector<8x64xf32> -> vector<8x64xf32>
    %246 = arith.addf %226, %245 : vector<8x64xf32>
    %247 = arith.addf %130, %246 : vector<8x64xf32>
    %c0_95 = arith.constant 0 : index
    %c0_96 = arith.constant 0 : index
    %248 = vector.load %arg16[%c0_95, %c0_96] : memref<1x64xf32, #tpu.memory_space<vmem>>, vector<1x64xf32>
    %249 = vector.broadcast %248 : vector<1x64xf32> to vector<8x64xf32>
    %250 = arith.addf %247, %249 : vector<8x64xf32>
    %c0_97 = arith.constant 0 : index
    %c0_98 = arith.constant 0 : index
    %251 = vector.load %arg17[%c0_97, %c0_98] : memref<1x64xf32, #tpu.memory_space<vmem>>, vector<1x64xf32>
    %c0_99 = arith.constant 0 : index
    %c0_100 = arith.constant 0 : index
    %252 = vector.load %arg18[%c0_99, %c0_100] : memref<1x64xf32, #tpu.memory_space<vmem>>, vector<1x64xf32>
    %cst_101 = arith.constant dense<0.000000e+00> : vector<8xf32>
    %253 = vector.multi_reduction <add>, %250, %cst_101 [1] : vector<8x64xf32> to vector<8xf32>
    %254 = vector.shape_cast %253 : vector<8xf32> to vector<8x1xf32>
    %cst_102 = arith.constant 6.400000e+01 : f32
    %255 = vector.broadcast %cst_102 : f32 to vector<8x1xf32>
    %256 = arith.divf %254, %255 : vector<8x1xf32>
    %257 = vector.broadcast %256 : vector<8x1xf32> to vector<8x64xf32>
    %258 = arith.subf %250, %257 : vector<8x64xf32>
    %259 = arith.mulf %258, %258 : vector<8x64xf32>
    %cst_103 = arith.constant dense<0.000000e+00> : vector<8xf32>
    %260 = vector.multi_reduction <add>, %259, %cst_103 [1] : vector<8x64xf32> to vector<8xf32>
    %261 = vector.shape_cast %260 : vector<8xf32> to vector<8x1xf32>
    %cst_104 = arith.constant 6.400000e+01 : f32
    %262 = vector.broadcast %cst_104 : f32 to vector<8x1xf32>
    %263 = arith.divf %261, %262 : vector<8x1xf32>
    %264 = vector.broadcast %256 : vector<8x1xf32> to vector<8x64xf32>
    %265 = arith.subf %250, %264 : vector<8x64xf32>
    %cst_105 = arith.constant 9.99999974E-6 : f32
    %266 = vector.broadcast %cst_105 : f32 to vector<8x1xf32>
    %267 = arith.addf %263, %266 : vector<8x1xf32>
    %268 = math.rsqrt %267 : vector<8x1xf32>
    %269 = vector.broadcast %268 : vector<8x1xf32> to vector<8x64xf32>
    %270 = arith.mulf %265, %269 : vector<8x64xf32>
    %271 = vector.broadcast %251 : vector<1x64xf32> to vector<8x64xf32>
    %272 = arith.mulf %270, %271 : vector<8x64xf32>
    %273 = vector.broadcast %252 : vector<1x64xf32> to vector<8x64xf32>
    %274 = arith.addf %272, %273 : vector<8x64xf32>
    %c0_106 = arith.constant 0 : index
    %c0_107 = arith.constant 0 : index
    %275 = vector.load %arg19[%c0_106, %c0_107] : memref<64x256xf32, #tpu.memory_space<vmem>>, vector<64x256xf32>
    %cst_108 = arith.constant dense<0.000000e+00> : vector<8x256xf32>
    %276 = tpu.matmul %274, %275, %cst_108 {dimension_numbers = #tpu.dot_dimension_numbers<[1], [0], [0], [1], [0, 0, 1, 1], [], []>} : vector<8x64xf32>, vector<64x256xf32>, vector<8x256xf32> -> vector<8x256xf32>
    %c0_109 = arith.constant 0 : index
    %c0_110 = arith.constant 0 : index
    %277 = vector.load %arg20[%c0_109, %c0_110] : memref<1x256xf32, #tpu.memory_space<vmem>>, vector<1x256xf32>
    %278 = vector.broadcast %277 : vector<1x256xf32> to vector<8x256xf32>
    %279 = arith.addf %276, %278 : vector<8x256xf32>
    %cst_111 = arith.constant 5.000000e-01 : f32
    %280 = vector.broadcast %cst_111 : f32 to vector<8x256xf32>
    %281 = arith.mulf %280, %279 : vector<8x256xf32>
    %cst_112 = arith.constant 0.707106769 : f32
    %282 = vector.broadcast %cst_112 : f32 to vector<8x256xf32>
    %283 = arith.mulf %279, %282 : vector<8x256xf32>
    %284 = math.absf %283 : vector<8x256xf32>
    %cst_113 = arith.constant 0.327591091 : f32
    %285 = vector.broadcast %cst_113 : f32 to vector<8x256xf32>
    %286 = arith.mulf %285, %284 : vector<8x256xf32>
    %cst_114 = arith.constant 1.000000e+00 : f32
    %287 = vector.broadcast %cst_114 : f32 to vector<8x256xf32>
    %288 = arith.addf %287, %286 : vector<8x256xf32>
    %cst_115 = arith.constant 1.000000e+00 : f32
    %289 = vector.broadcast %cst_115 : f32 to vector<8x256xf32>
    %290 = arith.divf %289, %288 : vector<8x256xf32>
    %cst_116 = arith.constant 1.06140542 : f32
    %291 = vector.broadcast %cst_116 : f32 to vector<8x256xf32>
    %292 = arith.mulf %291, %290 : vector<8x256xf32>
    %cst_117 = arith.constant -1.45315206 : f32
    %293 = vector.broadcast %cst_117 : f32 to vector<8x256xf32>
    %294 = arith.addf %292, %293 : vector<8x256xf32>
    %295 = arith.mulf %294, %290 : vector<8x256xf32>
    %cst_118 = arith.constant 1.42141378 : f32
    %296 = vector.broadcast %cst_118 : f32 to vector<8x256xf32>
    %297 = arith.addf %295, %296 : vector<8x256xf32>
    %298 = arith.mulf %297, %290 : vector<8x256xf32>
    %cst_119 = arith.constant -0.284496725 : f32
    %299 = vector.broadcast %cst_119 : f32 to vector<8x256xf32>
    %300 = arith.addf %298, %299 : vector<8x256xf32>
    %301 = arith.mulf %300, %290 : vector<8x256xf32>
    %cst_120 = arith.constant 0.254829586 : f32
    %302 = vector.broadcast %cst_120 : f32 to vector<8x256xf32>
    %303 = arith.addf %301, %302 : vector<8x256xf32>
    %304 = arith.mulf %303, %290 : vector<8x256xf32>
    %cst_121 = arith.constant 0.000000e+00 : f32
    %305 = vector.broadcast %cst_121 : f32 to vector<8x256xf32>
    %306 = arith.subf %305, %284 : vector<8x256xf32>
    %307 = arith.mulf %306, %284 : vector<8x256xf32>
    %308 = math.exp %307 : vector<8x256xf32>
    %309 = arith.mulf %304, %308 : vector<8x256xf32>
    %cst_122 = arith.constant 1.000000e+00 : f32
    %310 = vector.broadcast %cst_122 : f32 to vector<8x256xf32>
    %311 = arith.subf %310, %309 : vector<8x256xf32>
    %cst_123 = arith.constant 0.000000e+00 : f32
    %312 = vector.broadcast %cst_123 : f32 to vector<8x256xf32>
    %313 = arith.cmpf oge, %283, %312 : vector<8x256xf32>
    %cst_124 = arith.constant 0.000000e+00 : f32
    %314 = vector.broadcast %cst_124 : f32 to vector<8x256xf32>
    %315 = arith.subf %314, %311 : vector<8x256xf32>
    %316 = arith.select %313, %311, %315 : vector<8x256xi1>, vector<8x256xf32>
    %cst_125 = arith.constant 1.000000e+00 : f32
    %317 = vector.broadcast %cst_125 : f32 to vector<8x256xf32>
    %318 = arith.addf %317, %316 : vector<8x256xf32>
    %319 = arith.mulf %281, %318 : vector<8x256xf32>
    %c0_126 = arith.constant 0 : index
    %c0_127 = arith.constant 0 : index
    %320 = vector.load %arg21[%c0_126, %c0_127] : memref<256x64xf32, #tpu.memory_space<vmem>>, vector<256x64xf32>
    %cst_128 = arith.constant dense<0.000000e+00> : vector<8x64xf32>
    %321 = tpu.matmul %319, %320, %cst_128 {dimension_numbers = #tpu.dot_dimension_numbers<[1], [0], [0], [1], [0, 0, 1, 1], [], []>} : vector<8x256xf32>, vector<256x64xf32>, vector<8x64xf32> -> vector<8x64xf32>
    %322 = arith.addf %250, %321 : vector<8x64xf32>
    %c0_129 = arith.constant 0 : index
    %c0_130 = arith.constant 0 : index
    %323 = vector.load %arg22[%c0_129, %c0_130] : memref<1x64xf32, #tpu.memory_space<vmem>>, vector<1x64xf32>
    %324 = vector.broadcast %323 : vector<1x64xf32> to vector<8x64xf32>
    %325 = arith.addf %322, %324 : vector<8x64xf32>
    %c0_131 = arith.constant 0 : index
    %c0_132 = arith.constant 0 : index
    %c0_133 = arith.constant 0 : index
    %326 = vector.load %arg23[%c0_131, %c0_132, %c0_133] : memref<1x8x64xf32, #tpu.memory_space<vmem>>, vector<1x8x64xf32>
    %327 = vector.shape_cast %326 : vector<1x8x64xf32> to vector<8x64xf32>
    %328 = vector.shape_cast %325 : vector<8x64xf32> to vector<1x8x64xf32>
    tpu.vector_store %arg23[%c0_131, %c0_132, %c0_133], %328 {strides = array<i32>} : memref<1x8x64xf32, #tpu.memory_space<vmem>>, vector<1x8x64xf32>,
    return
  }
  func.func @transform_0(%arg0: i32) -> (i32, i32, i32) {
    %c0_i32 = arith.constant 0 : i32
    %c0_i32_0 = arith.constant 0 : i32
    %c0_i32_1 = arith.constant 0 : i32
    return %arg0, %c0_i32, %c0_i32_0 : i32, i32, i32
  }
  func.func @transform_1(%arg0: i32) -> (i32, i32, i32) {
    %c0_i32 = arith.constant 0 : i32
    %c0_i32_0 = arith.constant 0 : i32
    %c0_i32_1 = arith.constant 0 : i32
    return %arg0, %c0_i32, %c0_i32_0 : i32, i32, i32
  }
  func.func @transform_2(%arg0: i32) -> (i32, i32) {
    %c0_i32 = arith.constant 0 : i32
    %c0_i32_0 = arith.constant 0 : i32
    %c0_i32_1 = arith.constant 0 : i32
    return %c0_i32, %c0_i32_0 : i32, i32
  }
  func.func @transform_3(%arg0: i32) -> (i32, i32) {
    %c0_i32 = arith.constant 0 : i32
    %c0_i32_0 = arith.constant 0 : i32
    %c0_i32_1 = arith.constant 0 : i32
    return %c0_i32, %c0_i32_0 : i32, i32
  }
  func.func @transform_4(%arg0: i32) -> (i32, i32) {
    %c0_i32 = arith.constant 0 : i32
    %c0_i32_0 = arith.constant 0 : i32
    %c0_i32_1 = arith.constant 0 : i32
    return %c0_i32, %c0_i32_0 : i32, i32
  }
  func.func @transform_5(%arg0: i32) -> (i32, i32) {
    %c0_i32 = arith.constant 0 : i32
    %c0_i32_0 = arith.constant 0 : i32
    %c0_i32_1 = arith.constant 0 : i32
    return %c0_i32, %c0_i32_0 : i32, i32
  }
  func.func @transform_6(%arg0: i32) -> (i32, i32) {
    %c0_i32 = arith.constant 0 : i32
    %c0_i32_0 = arith.constant 0 : i32
    %c0_i32_1 = arith.constant 0 : i32
    return %c0_i32, %c0_i32_0 : i32, i32
  }
  func.func @transform_7(%arg0: i32) -> (i32, i32) {
    %c0_i32 = arith.constant 0 : i32
    %c0_i32_0 = arith.constant 0 : i32
    %c0_i32_1 = arith.constant 0 : i32
    return %c0_i32, %c0_i32_0 : i32, i32
  }
  func.func @transform_8(%arg0: i32) -> (i32, i32) {
    %c0_i32 = arith.constant 0 : i32
    %c0_i32_0 = arith.constant 0 : i32
    %c0_i32_1 = arith.constant 0 : i32
    return %c0_i32, %c0_i32_0 : i32, i32
  }
  func.func @transform_9(%arg0: i32) -> (i32, i32) {
    %c0_i32 = arith.constant 0 : i32
    %c0_i32_0 = arith.constant 0 : i32
    %c0_i32_1 = arith.constant 0 : i32
    return %c0_i32, %c0_i32_0 : i32, i32
  }
  func.func @transform_10(%arg0: i32) -> (i32, i32) {
    %c0_i32 = arith.constant 0 : i32
    %c0_i32_0 = arith.constant 0 : i32
    %c0_i32_1 = arith.constant 0 : i32
    return %c0_i32, %c0_i32_0 : i32, i32
  }
  func.func @transform_11(%arg0: i32) -> (i32, i32) {
    %c0_i32 = arith.constant 0 : i32
    %c0_i32_0 = arith.constant 0 : i32
    %c0_i32_1 = arith.constant 0 : i32
    return %c0_i32, %c0_i32_0 : i32, i32
  }
  func.func @transform_12(%arg0: i32) -> (i32, i32) {
    %c0_i32 = arith.constant 0 : i32
    %c0_i32_0 = arith.constant 0 : i32
    %c0_i32_1 = arith.constant 0 : i32
    return %c0_i32, %c0_i32_0 : i32, i32
  }
  func.func @transform_13(%arg0: i32) -> (i32, i32) {
    %c0_i32 = arith.constant 0 : i32
    %c0_i32_0 = arith.constant 0 : i32
    %c0_i32_1 = arith.constant 0 : i32
    return %c0_i32, %c0_i32_0 : i32, i32
  }
  func.func @transform_14(%arg0: i32) -> (i32, i32) {
    %c0_i32 = arith.constant 0 : i32
    %c0_i32_0 = arith.constant 0 : i32
    %c0_i32_1 = arith.constant 0 : i32
    return %c0_i32, %c0_i32_0 : i32, i32
  }
  func.func @transform_15(%arg0: i32) -> (i32, i32) {
    %c0_i32 = arith.constant 0 : i32
    %c0_i32_0 = arith.constant 0 : i32
    %c0_i32_1 = arith.constant 0 : i32
    return %c0_i32, %c0_i32_0 : i32, i32
  }
  func.func @transform_16(%arg0: i32) -> (i32, i32) {
    %c0_i32 = arith.constant 0 : i32
    %c0_i32_0 = arith.constant 0 : i32
    %c0_i32_1 = arith.constant 0 : i32
    return %c0_i32, %c0_i32_0 : i32, i32
  }
  func.func @transform_17(%arg0: i32) -> (i32, i32) {
    %c0_i32 = arith.constant 0 : i32
    %c0_i32_0 = arith.constant 0 : i32
    %c0_i32_1 = arith.constant 0 : i32
    return %c0_i32, %c0_i32_0 : i32, i32
  }
  func.func @transform_18(%arg0: i32) -> (i32, i32) {
    %c0_i32 = arith.constant 0 : i32
    %c0_i32_0 = arith.constant 0 : i32
    %c0_i32_1 = arith.constant 0 : i32
    return %c0_i32, %c0_i32_0 : i32, i32
  }
  func.func @transform_19(%arg0: i32) -> (i32, i32) {
    %c0_i32 = arith.constant 0 : i32
    %c0_i32_0 = arith.constant 0 : i32
    %c0_i32_1 = arith.constant 0 : i32
    return %c0_i32, %c0_i32_0 : i32, i32
  }
  func.func @transform_20(%arg0: i32) -> (i32, i32) {
    %c0_i32 = arith.constant 0 : i32
    %c0_i32_0 = arith.constant 0 : i32
    %c0_i32_1 = arith.constant 0 : i32
    return %c0_i32, %c0_i32_0 : i32, i32
  }
  func.func @transform_21(%arg0: i32) -> (i32, i32) {
    %c0_i32 = arith.constant 0 : i32
    %c0_i32_0 = arith.constant 0 : i32
    %c0_i32_1 = arith.constant 0 : i32
    return %c0_i32, %c0_i32_0 : i32, i32
  }
  func.func @transform_22(%arg0: i32) -> (i32, i32, i32) {
    %c0_i32 = arith.constant 0 : i32
    %c0_i32_0 = arith.constant 0 : i32
    %c0_i32_1 = arith.constant 0 : i32
    return %arg0, %c0_i32, %c0_i32_0 : i32, i32, i32
  }
}

module attributes {stable_mosaic.version = 11 : i64} {
  func.func @_matmul_kernel(%arg0: i32, %arg1: i32, %arg2: i32, %arg3: memref<16x64xf32, #tpu.memory_space<vmem>>, %arg4: memref<128x64xf32, #tpu.memory_space<vmem>>, %arg5: memref<16x128xf32, #tpu.memory_space<vmem>>, %arg6: memref<16x128xf32, #tpu.memory_space<vmem>>) attributes {dimension_semantics = [#tpu.dimension_semantics<parallel>, #tpu.dimension_semantics<parallel>, #tpu.dimension_semantics<arbitrary>], iteration_bounds = array<i64: 1, 1, 1>, scalar_prefetch = 0 : i64, scratch_operands = 1 : i64, tpu.core_type = #tpu.core_type<tc>, window_params = [{transform_indices = @transform_0, window_bounds = array<i64: 16, 64>}, {transform_indices = @transform_1, window_bounds = array<i64: 128, 64>}, {transform_indices = @transform_2, window_bounds = array<i64: 16, 128>}]} {
    %c0_i32 = arith.constant 0 : i32
    %0 = arith.cmpi eq, %arg2, %c0_i32 : i32
    %1 = arith.extui %0 : i1 to i32
    %c0_i32_0 = arith.constant 0 : i32
    %2 = arith.cmpi ne, %1, %c0_i32_0 : i32
    scf.if %2 {
      %cst_10 = arith.constant 0.000000e+00 : f32
      %12 = vector.broadcast %cst_10 : f32 to vector<16x128xf32>
      %c0_11 = arith.constant 0 : index
      %c0_12 = arith.constant 0 : index
      %13 = vector.load %arg6[%c0_11, %c0_12] : memref<16x128xf32, #tpu.memory_space<vmem>>, vector<16x128xf32>
      tpu.vector_store %arg6[%c0_11, %c0_12], %12 {strides = array<i32>} : memref<16x128xf32, #tpu.memory_space<vmem>>, vector<16x128xf32>,
    } else {
    }
    %c0 = arith.constant 0 : index
    %c0_1 = arith.constant 0 : index
    %3 = vector.load %arg6[%c0, %c0_1] : memref<16x128xf32, #tpu.memory_space<vmem>>, vector<16x128xf32>
    %c0_2 = arith.constant 0 : index
    %c0_3 = arith.constant 0 : index
    %4 = vector.load %arg3[%c0_2, %c0_3] : memref<16x64xf32, #tpu.memory_space<vmem>>, vector<16x64xf32>
    %c0_4 = arith.constant 0 : index
    %c0_5 = arith.constant 0 : index
    %5 = vector.load %arg4[%c0_4, %c0_5] : memref<128x64xf32, #tpu.memory_space<vmem>>, vector<128x64xf32>
    %cst = arith.constant dense<0.000000e+00> : vector<16x128xf32>
    %6 = tpu.matmul %4, %5, %cst {dimension_numbers = #tpu.dot_dimension_numbers<[1], [1], [0], [0], [0, 0, 1, 0], [], []>} : vector<16x64xf32>, vector<128x64xf32>, vector<16x128xf32> -> vector<16x128xf32>
    %7 = arith.addf %3, %6 : vector<16x128xf32>
    %c0_6 = arith.constant 0 : index
    %c0_7 = arith.constant 0 : index
    %8 = vector.load %arg6[%c0_6, %c0_7] : memref<16x128xf32, #tpu.memory_space<vmem>>, vector<16x128xf32>
    tpu.vector_store %arg6[%c0_6, %c0_7], %7 {strides = array<i32>} : memref<16x128xf32, #tpu.memory_space<vmem>>, vector<16x128xf32>,
    %c0_i32_8 = arith.constant 0 : i32
    %9 = arith.cmpi eq, %arg2, %c0_i32_8 : i32
    %10 = arith.extui %9 : i1 to i32
    %c0_i32_9 = arith.constant 0 : i32
    %11 = arith.cmpi ne, %10, %c0_i32_9 : i32
    scf.if %11 {
      %c0_10 = arith.constant 0 : index
      %c0_11 = arith.constant 0 : index
      %12 = vector.load %arg6[%c0_10, %c0_11] : memref<16x128xf32, #tpu.memory_space<vmem>>, vector<16x128xf32>
      %c0_12 = arith.constant 0 : index
      %c0_13 = arith.constant 0 : index
      %13 = vector.load %arg5[%c0_12, %c0_13] : memref<16x128xf32, #tpu.memory_space<vmem>>, vector<16x128xf32>
      tpu.vector_store %arg5[%c0_12, %c0_13], %12 {strides = array<i32>} : memref<16x128xf32, #tpu.memory_space<vmem>>, vector<16x128xf32>,
    } else {
    }
    return
  }
  func.func @transform_0(%arg0: i32, %arg1: i32, %arg2: i32) -> (i32, i32) {
    %c0_i32 = arith.constant 0 : i32
    return %arg0, %arg2 : i32, i32
  }
  func.func @transform_1(%arg0: i32, %arg1: i32, %arg2: i32) -> (i32, i32) {
    %c0_i32 = arith.constant 0 : i32
    return %arg1, %arg2 : i32, i32
  }
  func.func @transform_2(%arg0: i32, %arg1: i32, %arg2: i32) -> (i32, i32) {
    %c0_i32 = arith.constant 0 : i32
    return %arg0, %arg1 : i32, i32
  }
}

</mosaic_0001>

<llo_original>
// kernel: _lambda_.7
$region0: #{_lambda_.7}
  #allocation0 [shape = 'u32[]', space=smem, size = 0x4, offset = 0x4, fixed_abs, tag = 'smem constant byte address 0x4 - core index']
  #allocation1 [shape = 'u32[144,128]{1,0:T(1,128)}', space=vmem, size = 0x12000, scoped, tag = 'internal scratch']
  #allocation2 [shape = 'f32[8,64]{1,0:T(8,128)}', space=vmem, size = 0x1000, scoped, tag = 'scratch operand']
  %s0 = inlined_call_operand.vmem [shape: f32[8,768], index: 0, kind: input, shape index: {}]
  %s1 = inlined_call_operand.vmem [shape: f32[768,64], index: 1, kind: input, shape index: {}]
  %s2 = inlined_call_operand.vmem [shape: f32[1,64], index: 2, kind: input, shape index: {}]
  %s3 = inlined_call_operand.vmem [shape: f32[8,64], index: 3, kind: output, shape index: {}]
  %s4 = sld [smem:[#allocation0]]
  $region53: #{_lambda_.7} parent=0
    _
  %s6 = ssub.s32 1, %s4
  %s7 = scalar_select 0, %s6, %s4
  loop: start=0, step=1, limit=4
  $region2: #{_lambda_.7} parent=0 // loop_pre_header
    _
  $region3: #{_lambda_.7} parent=0 // loop_header
    %s9 = sphi 0, %s13
    %p10 = scmp.ge.s32.totalorder %s9, 4
    %s16 = sphi 0, %s35
    %s17 = sphi 0, %s31
    %s18 = sphi 0, %s27
    %s19 = sphi 0, %s16
    %s20 = sphi 0, %s17
    %s21 = sphi 0, %s18
    %s22 = sphi 0, %s19
    %s23 = sphi 0, %s20
    %s24 = sphi 0, %s21
    %s40 = sphi 0, %s42
    %s43 = sphi 0, %s40
    %s44 = sphi 0, %s43
    %s60 = sphi 0, %s44
    %s68 = sphi 0, %s70
    %s71 = sphi 0, %s68
    %s72 = sphi 0, %s71
    %s88 = sphi 0, %s72
    %s94 = sphi 0, %s96
    %s97 = sphi 0, %s94
    %s98 = sphi 0, %s97
    %s114 = sphi 0, %s98
    %s122 = sphi 0, %s124
    %s125 = sphi 0, %s122
    %s126 = sphi 0, %s125
    %s142 = sphi 0, %s126
  $region4: #{_lambda_.7} parent=0 // loop_header_branch
    %12 = sbr.rel (%p10) target = $region8
  $region5: #{_lambda_.7} parent=0 // loop_body
    %s14 = ssub.s32 %s9, 1
    %s15 = ssub.s32 %s9, 2
    %s25 = sadd.s32 1, %s18
    %p26 = scmp.ge.s32.totalorder %s25, 2
    %s27 = scalar_select %p26, 0, %s25
    %s28 = sadd.s32 1, %s17
    %s29 = scalar_select %p26, %s28, %s17
    %p30 = scmp.ge.s32.totalorder %s29, 1
    %s31 = scalar_select %p30, 0, %s29
    %s32 = sadd.s32 1, %s16
    %s33 = scalar_select %p30, %s32, %s16
    %p34 = scmp.ge.s32.totalorder %s33, 1
    %s35 = scalar_select %p34, 0, %s33
    %s36 = ssub.s32 %s16, %s35
    %s37 = ssub.s32 %s18, %s27
    %s38 = sor.u32 %s36, %s37
    %p39 = scmp.eq.s32.totalorder %s38, 0
    %s41 = sadd.s32 %s40, 1
    %s42 = scalar_select %p39, %s40, %s41
    %p45 = pneg %p39
    %p46 = scmp.eq.s32.totalorder %s9, 1
    %p47 = por %p45, %p46
    %p48 = scmp.ne.s32.totalorder %s40, %s43
    %p49 = scmp.eq.s32.totalorder %s9, 0
    %p50 = por %p48, %p49
    %p51 = scmp.ne.s32.totalorder %s40, %s43
    %p52 = scmp.eq.s32.totalorder %s14, 1
    %p53 = por %p51, %p52
    %p54 = scmp.ne.s32.totalorder %s43, %s44
    %p55 = scmp.eq.s32.totalorder %s14, 0
    %p56 = por %p54, %p55
    %p57 = scmp.ne.s32.totalorder %s43, %s44
    %p58 = scmp.eq.s32.totalorder %s15, 1
    %p59 = por %p57, %p58
    %p61 = scmp.ne.s32.totalorder %s44, %s60
    %p62 = scmp.eq.s32.totalorder %s15, 0
    %p63 = por %p61, %p62
    %s64 = ssub.s32 %s18, %s27
    %s65 = ssub.s32 %s17, %s31
    %s66 = sor.u32 %s64, %s65
    %p67 = scmp.eq.s32.totalorder %s66, 0
    %s69 = sadd.s32 %s68, 1
    %s70 = scalar_select %p67, %s68, %s69
    %p73 = pneg %p67
    %p74 = scmp.eq.s32.totalorder %s9, 1
    %p75 = por %p73, %p74
    %p76 = scmp.ne.s32.totalorder %s68, %s71
    %p77 = scmp.eq.s32.totalorder %s9, 0
    %p78 = por %p76, %p77
    %p79 = scmp.ne.s32.totalorder %s68, %s71
    %p80 = scmp.eq.s32.totalorder %s14, 1
    %p81 = por %p79, %p80
    %p82 = scmp.ne.s32.totalorder %s71, %s72
    %p83 = scmp.eq.s32.totalorder %s14, 0
    %p84 = por %p82, %p83
    %p85 = scmp.ne.s32.totalorder %s71, %s72
    %p86 = scmp.eq.s32.totalorder %s15, 1
    %p87 = por %p85, %p86
    %p89 = scmp.ne.s32.totalorder %s72, %s88
    %p90 = scmp.eq.s32.totalorder %s15, 0
    %p91 = por %p89, %p90
    %s92 = ssub.s32 %s17, %s31
    %p93 = scmp.eq.s32.totalorder %s92, 0
    %s95 = sadd.s32 %s94, 1
    %s96 = scalar_select %p93, %s94, %s95
    %p99 = pneg %p93
    %p100 = scmp.eq.s32.totalorder %s9, 1
    %p101 = por %p99, %p100
    %p102 = scmp.ne.s32.totalorder %s94, %s97
    %p103 = scmp.eq.s32.totalorder %s9, 0
    %p104 = por %p102, %p103
    %p105 = scmp.ne.s32.totalorder %s94, %s97
    %p106 = scmp.eq.s32.totalorder %s14, 1
    %p107 = por %p105, %p106
    %p108 = scmp.ne.s32.totalorder %s97, %s98
    %p109 = scmp.eq.s32.totalorder %s14, 0
    %p110 = por %p108, %p109
    %p111 = scmp.ne.s32.totalorder %s97, %s98
    %p112 = scmp.eq.s32.totalorder %s15, 1
    %p113 = por %p111, %p112
    %p115 = scmp.ne.s32.totalorder %s98, %s114
    %p116 = scmp.eq.s32.totalorder %s15, 0
    %p117 = por %p115, %p116
    %s118 = ssub.s32 %s16, %s35
    %s119 = ssub.s32 %s17, %s31
    %s120 = sor.u32 %s118, %s119
    %p121 = scmp.eq.s32.totalorder %s120, 0
    %s123 = sadd.s32 %s122, 1
    %s124 = scalar_select %p121, %s122, %s123
    %p127 = pneg %p121
    %p128 = scmp.eq.s32.totalorder %s9, 1
    %p129 = por %p127, %p128
    %p130 = scmp.ne.s32.totalorder %s122, %s125
    %p131 = scmp.eq.s32.totalorder %s9, 0
    %p132 = por %p130, %p131
    %p133 = scmp.ne.s32.totalorder %s122, %s125
    %p134 = scmp.eq.s32.totalorder %s14, 1
    %p135 = por %p133, %p134
    %p136 = scmp.ne.s32.totalorder %s125, %s126
    %p137 = scmp.eq.s32.totalorder %s14, 0
    %p138 = por %p136, %p137
    %p139 = scmp.ne.s32.totalorder %s125, %s126
    %p140 = scmp.eq.s32.totalorder %s15, 1
    %p141 = por %p139, %p140
    %p143 = scmp.ne.s32.totalorder %s126, %s142
    %p144 = scmp.eq.s32.totalorder %s15, 0
    %p145 = por %p143, %p144
    %p146 = scmp.le.s32.totalorder 1, %s9
    %p147 = scmp.lt.s32.totalorder %s9, 3
    %p148 = pnand %p146, %p147
    %p149 = pneg %p148
    // Predicated region
    $region9: #{_lambda_.7} parent=5 // pred_check
      _
    $region10: #{_lambda_.7} parent=5 // pred_check_branch
      %151 = sbr.rel (%p148) target = $region12
    $region11: #{_lambda_.7} parent=5 // pred_region
      %s152 = ssub.s32 %s9, 1
      // Predicated region
      $region13: #{_lambda_.7} parent=11 // pred_check
        %p153 = pneg %p110
      $region14: #{_lambda_.7} parent=11 // pred_check_branch
        %155 = sbr.rel (%p153) target = $region16
      $region15: #{_lambda_.7} parent=11 // pred_region
        %p156 = scmp.lt.s32.totalorder %s20, 0
        %s157 = scalar_select %p156, %s20, 0
        %s158 = scalar_lea.vmem %s2, %s157
      $region16: #{_lambda_.7} parent=11 // pred_fallthru
        _
    $region12: #{_lambda_.7} parent=5 // pred_fallthru
      _
    %p159 = scmp.lt.s32.totalorder %s9, 2
    // Predicated region
    $region17: #{_lambda_.7} parent=5 // pred_check
      %p160 = pneg %p159
    $region18: #{_lambda_.7} parent=5 // pred_check_branch
      %162 = sbr.rel (%p160) target = $region20
    $region19: #{_lambda_.7} parent=5 // pred_region
      // Predicated region
      $region21: #{_lambda_.7} parent=19 // pred_check
        %p163 = pneg %p50
      $region22: #{_lambda_.7} parent=19 // pred_check_branch
        %165 = sbr.rel (%p163) target = $region24
      $region23: #{_lambda_.7} parent=19 // pred_region
        %s166 = smul.u32 3, %s18
        %p167 = scmp.lt.s32.totalorder %s16, 0
        %s168 = scalar_select %p167, %s16, 0
        %p169 = scmp.lt.s32.totalorder %s166, 5
        %s170 = scalar_select %p169, %s166, 5
        %s171 = smul.addr %s168, 6
        %s172 = sadd.s32 %s170, %s171
        %s173 = smul.addr %s172, 8
        %s174 = scalar_lea.vmem %s0, %s173
        %s175 = smul.u32 3, %s18
      $region24: #{_lambda_.7} parent=19 // pred_fallthru
        _
      // Predicated region
      $region25: #{_lambda_.7} parent=19 // pred_check
        %p176 = pneg %p78
      $region26: #{_lambda_.7} parent=19 // pred_check_branch
        %178 = sbr.rel (%p176) target = $region28
      $region27: #{_lambda_.7} parent=19 // pred_region
        %s179 = smul.u32 48, %s18
        %p180 = scmp.lt.s32.totalorder %s179, 95
        %s181 = scalar_select %p180, %s179, 95
        %p182 = scmp.lt.s32.totalorder %s17, 0
        %s183 = scalar_select %p182, %s17, 0
        %s184 = sadd.s32 %s183, %s181
        %s185 = smul.addr %s184, 8
        %s186 = scalar_lea.vmem %s1, %s185
        %s187 = smul.u32 48, %s18
      $region28: #{_lambda_.7} parent=19 // pred_fallthru
        _
    $region20: #{_lambda_.7} parent=5 // pred_fallthru
      _
    %p188 = scmp.le.s32.totalorder 1, %s9
    %p189 = scmp.lt.s32.totalorder %s9, 3
    %p190 = pnand %p188, %p189
    %p191 = pneg %p190
    // Predicated region
    $region29: #{_lambda_.7} parent=5 // pred_check
      _
    $region30: #{_lambda_.7} parent=5 // pred_check_branch
      %193 = sbr.rel (%p190) target = $region32
    $region31: #{_lambda_.7} parent=5 // pred_region
      %s194 = ssub.s32 %s9, 1
      %s195 = smul.u32 3, %s21
      %p196 = scmp.lt.s32.totalorder %s19, 0
      %s197 = scalar_select %p196, %s19, 0
      %p198 = scmp.lt.s32.totalorder %s195, 5
      %s199 = scalar_select %p198, %s195, 5
      %s200 = smul.addr %s197, 6
      %s201 = sadd.s32 %s199, %s200
      %s202 = smul.addr %s201, 8
      %s203 = scalar_lea.vmem %s0, %s202
      %p204 = pneg %p56
      %p205 = pneg %p53
      %s206 = smul.u32 48, %s21
      %p207 = scmp.lt.s32.totalorder %s206, 95
      %s208 = scalar_select %p207, %s206, 95
      %p209 = scmp.lt.s32.totalorder %s20, 0
      %s210 = scalar_select %p209, %s20, 0
      %s211 = sadd.s32 %s210, %s208
      %s212 = smul.addr %s211, 8
      %s213 = scalar_lea.vmem %s1, %s212
      %p214 = pneg %p84
      %p215 = pneg %p81
      %p216 = scmp.lt.s32.totalorder %s20, 0
      %s217 = scalar_select %p216, %s20, 0
      %s218 = scalar_lea.vmem %s2, %s217
      %p219 = pneg %p110
      %p220 = pneg %p107
      %p221 = pneg %p138
      %p222 = pneg %p135
      %p223 = scmp.lt.s32.totalorder %s19, 0
      %s224 = scalar_select %p223, %s19, 0
      %p225 = scmp.lt.s32.totalorder %s20, 0
      %s226 = scalar_select %p225, %s20, 0
      %s227 = sadd.s32 %s226, %s224
      %s228 = smul.addr %s227, 8
      %s229 = scalar_lea.vmem %s3, %s228
      %s230 = smul.u32 3, %s21
      %p231 = scmp.lt.s32.totalorder %s19, 0
      %s232 = scalar_select %p231, %s19, 0
      %p233 = scmp.lt.s32.totalorder %s230, 5
      %s234 = scalar_select %p233, %s230, 5
      %s235 = smul.addr %s232, 6
      %s236 = sadd.s32 %s234, %s235
      %s237 = smul.addr %s236, 8
      %s238 = scalar_lea.vmem %s0, %s237
      %s239 = smul.u32 3, %s21
      %s240 = smul.u32 48, %s21
      %p241 = scmp.lt.s32.totalorder %s240, 95
      %s242 = scalar_select %p241, %s240, 95
      %p243 = scmp.lt.s32.totalorder %s20, 0
      %s244 = scalar_select %p243, %s20, 0
      %s245 = sadd.s32 %s244, %s242
      %s246 = smul.addr %s245, 8
      %s247 = scalar_lea.vmem %s1, %s246
      %s248 = smul.u32 48, %s21
      %p249 = scmp.lt.s32.totalorder %s20, 0
      %s250 = scalar_select %p249, %s20, 0
      %s251 = scalar_lea.vmem %s2, %s250
      %p252 = scmp.lt.s32.totalorder %s19, 0
      %s253 = scalar_select %p252, %s19, 0
      %p254 = scmp.lt.s32.totalorder %s20, 0
      %s255 = scalar_select %p254, %s20, 0
      %s256 = sadd.s32 %s255, %s253
      %s257 = smul.addr %s256, 8
      %s258 = scalar_lea.vmem %s3, %s257
      %p259 = scmp.eq.s32.totalorder %s21, 0
      // Predicated region
      $region33: #{_lambda_.7} parent=31 // pred_check
        %p260 = pneg %p259
      $region34: #{_lambda_.7} parent=31 // pred_check_branch
        %262 = sbr.rel (%p260) target = $region36
      $region35: #{_lambda_.7} parent=31 // pred_region
        %vm263 = vcmask 523264
        %264 = vst.msk [vmem:[#allocation2] sm:$0xff] %vm263, 0.0
      $region36: #{_lambda_.7} parent=31 // pred_fallthru
        _
      %v265 = vld [vmem:[#allocation2] sm:$0xff]
      %v266 = vld [vmem:[%s238] sm:$0xff]
      %v267 = vld [vmem:[%s238 + $0x8] sm:$0xff]
      %v268 = vld [vmem:[%s238 + $0x10] sm:$0xff]
      %v269 = vld [vmem:[%s247] sm:$0xff]
      %v270 = vld [vmem:[%s247 + $0x8] sm:$0xff]
      %v271 = vld [vmem:[%s247 + $0x10] sm:$0xff]
      %v272 = vld [vmem:[%s247 + $0x18] sm:$0xff]
      %v273 = vld [vmem:[%s247 + $0x20] sm:$0xff]
      %v274 = vld [vmem:[%s247 + $0x28] sm:$0xff]
      %v275 = vld [vmem:[%s247 + $0x30] sm:$0xff]
      %v276 = vld [vmem:[%s247 + $0x38] sm:$0xff]
      %v277 = vld [vmem:[%s247 + $0x40] sm:$0xff]
      %v278 = vld [vmem:[%s247 + $0x48] sm:$0xff]
      %v279 = vld [vmem:[%s247 + $0x50] sm:$0xff]
      %v280 = vld [vmem:[%s247 + $0x58] sm:$0xff]
      %v281 = vld [vmem:[%s247 + $0x60] sm:$0xff]
      %v282 = vld [vmem:[%s247 + $0x68] sm:$0xff]
      %v283 = vld [vmem:[%s247 + $0x70] sm:$0xff]
      %v284 = vld [vmem:[%s247 + $0x78] sm:$0xff]
      %v285 = vld [vmem:[%s247 + $0x80] sm:$0xff]
      %v286 = vld [vmem:[%s247 + $0x88] sm:$0xff]
      %v287 = vld [vmem:[%s247 + $0x90] sm:$0xff]
      %v288 = vld [vmem:[%s247 + $0x98] sm:$0xff]
      %v289 = vld [vmem:[%s247 + $0xa0] sm:$0xff]
      %v290 = vld [vmem:[%s247 + $0xa8] sm:$0xff]
      %v291 = vld [vmem:[%s247 + $0xb0] sm:$0xff]
      %v292 = vld [vmem:[%s247 + $0xb8] sm:$0xff]
      %v293 = vld [vmem:[%s247 + $0xc0] sm:$0xff]
      %v294 = vld [vmem:[%s247 + $0xc8] sm:$0xff]
      %v295 = vld [vmem:[%s247 + $0xd0] sm:$0xff]
      %v296 = vld [vmem:[%s247 + $0xd8] sm:$0xff]
      %v297 = vld [vmem:[%s247 + $0xe0] sm:$0xff]
      %v298 = vld [vmem:[%s247 + $0xe8] sm:$0xff]
      %v299 = vld [vmem:[%s247 + $0xf0] sm:$0xff]
      %v300 = vld [vmem:[%s247 + $0xf8] sm:$0xff]
      %v301 = vld [vmem:[%s247 + $0x100] sm:$0xff]
      %v302 = vld [vmem:[%s247 + $0x108] sm:$0xff]
      %v303 = vld [vmem:[%s247 + $0x110] sm:$0xff]
      %v304 = vld [vmem:[%s247 + $0x118] sm:$0xff]
      %v305 = vld [vmem:[%s247 + $0x120] sm:$0xff]
      %v306 = vld [vmem:[%s247 + $0x128] sm:$0xff]
      %v307 = vld [vmem:[%s247 + $0x130] sm:$0xff]
      %v308 = vld [vmem:[%s247 + $0x138] sm:$0xff]
      %v309 = vld [vmem:[%s247 + $0x140] sm:$0xff]
      %v310 = vld [vmem:[%s247 + $0x148] sm:$0xff]
      %v311 = vld [vmem:[%s247 + $0x150] sm:$0xff]
      %v312 = vld [vmem:[%s247 + $0x158] sm:$0xff]
      %v313 = vld [vmem:[%s247 + $0x160] sm:$0xff]
      %v314 = vld [vmem:[%s247 + $0x168] sm:$0xff]
      %v315 = vld [vmem:[%s247 + $0x170] sm:$0xff]
      %v316 = vld [vmem:[%s247 + $0x178] sm:$0xff]
      %317 = vmatprep.subr.mxu0 0.0
      %318 = vmatpush1.msra.mxu0 %v269
      %319 = vmatprep.subr.mxu0 0.0
      %320 = vmatpush1.msra.mxu0 %v270
      %321 = vmatprep.subr.mxu0 0.0
      %322 = vmatpush1.msra.mxu0 %v271
      %323 = vmatprep.subr.mxu0 0.0
      %324 = vmatpush1.msra.mxu0 %v272
      %325 = vmatprep.subr.mxu0 0.0
      %326 = vmatpush1.msra.mxu0 %v273
      %327 = vmatprep.subr.mxu0 0.0
      %328 = vmatpush1.msra.mxu0 %v274
      %329 = vmatprep.subr.mxu0 0.0
      %330 = vmatpush1.msra.mxu0 %v275
      %331 = vmatprep.subr.mxu0 0.0
      %332 = vmatpush1.msra.mxu0 %v276
      %333 = vmatprep.subr.mxu0 0.0
      %334 = vmatpush1.msra.mxu0 %v277
      %335 = vmatprep.subr.mxu0 0.0
      %336 = vmatpush1.msra.mxu0 %v278
      %337 = vmatprep.subr.mxu0 0.0
      %338 = vmatpush1.msra.mxu0 %v279
      %339 = vmatprep.subr.mxu0 0.0
      %340 = vmatpush1.msra.mxu0 %v280
      %341 = vmatprep.subr.mxu0 0.0
      %342 = vmatpush1.msra.mxu0 %v281
      %343 = vmatprep.subr.mxu0 0.0
      %344 = vmatpush1.msra.mxu0 %v282
      %345 = vmatprep.subr.mxu0 0.0
      %346 = vmatpush1.msra.mxu0 %v283
      %347 = vmatprep.subr.mxu0 0.0
      %348 = vmatpush1.msra.mxu0 %v284
      %349 = vmatprep.subr.mxu0 0.0
      %350 = vmatpush1.msra.mxu0 %v285
      %351 = vmatprep.subr.mxu0 0.0
      %352 = vmatpush1.msra.mxu0 %v286
      %353 = vmatprep.subr.mxu0 0.0
      %354 = vmatpush1.msra.mxu0 %v287
      %355 = vmatprep.subr.mxu0 0.0
      %356 = vmatpush1.msra.mxu0 %v288
      %357 = vmatprep.subr.mxu0 0.0
      %358 = vmatpush1.msra.mxu0 %v289
      %359 = vmatprep.subr.mxu0 0.0
      %360 = vmatpush1.msra.mxu0 %v290
      %361 = vmatprep.subr.mxu0 0.0
      %362 = vmatpush1.msra.mxu0 %v291
      %363 = vmatprep.subr.mxu0 0.0
      %364 = vmatpush1.msra.mxu0 %v292
      %365 = vmatprep.subr.mxu0 0.0
      %366 = vmatpush1.msra.mxu0 %v293
      %367 = vmatprep.subr.mxu0 0.0
      %368 = vmatpush1.msra.mxu0 %v294
      %369 = vmatprep.subr.mxu0 0.0
      %370 = vmatpush1.msra.mxu0 %v295
      %371 = vmatprep.subr.mxu0 0.0
      %372 = vmatpush1.msra.mxu0 %v296
      %373 = vmatprep.subr.mxu0 0.0
      %374 = vmatpush1.msra.mxu0 %v297
      %375 = vmatprep.subr.mxu0 0.0
      %376 = vmatpush1.msra.mxu0 %v298
      %377 = vmatprep.subr.mxu0 0.0
      %378 = vmatpush1.msra.mxu0 %v299
      %379 = vmatprep.subr.mxu0 0.0
      %380 = vmatpush1.msra.mxu0 %v300
      %381 = vmatprep.mubr.f32.mxu0 %v267
      %382 = vmatmul.mubr.f32.gmra.mrb[0].mxu0 %v266
      %v383 = vpop.f32.mrb[0].mxu0
      %v384 = vadd.f32 0.0, %v383
      %v385 = vpop.f32.mrb[0].mxu0
      %386 = vdwg.mxu0
      %387 = vmatprep.subr.mxu0 0.0
      %388 = vmatpush1.msra.mxu0 %v301
      %389 = vmatprep.subr.mxu0 0.0
      %390 = vmatpush1.msra.mxu0 %v302
      %391 = vmatprep.subr.mxu0 0.0
      %392 = vmatpush1.msra.mxu0 %v303
      %393 = vmatprep.subr.mxu0 0.0
      %394 = vmatpush1.msra.mxu0 %v304
      %395 = vmatprep.subr.mxu0 0.0
      %396 = vmatpush1.msra.mxu0 %v305
      %397 = vmatprep.subr.mxu0 0.0
      %398 = vmatpush1.msra.mxu0 %v306
      %399 = vmatprep.subr.mxu0 0.0
      %400 = vmatpush1.msra.mxu0 %v307
      %401 = vmatprep.subr.mxu0 0.0
      %402 = vmatpush1.msra.mxu0 %v308
      %403 = vmatprep.subr.mxu0 0.0
      %404 = vmatpush1.msra.mxu0 %v309
      %405 = vmatprep.subr.mxu0 0.0
      %406 = vmatpush1.msra.mxu0 %v310
      %407 = vmatprep.subr.mxu0 0.0
      %408 = vmatpush1.msra.mxu0 %v311
      %409 = vmatprep.subr.mxu0 0.0
      %410 = vmatpush1.msra.mxu0 %v312
      %411 = vmatprep.subr.mxu0 0.0
      %412 = vmatpush1.msra.mxu0 %v313
      %413 = vmatprep.subr.mxu0 0.0
      %414 = vmatpush1.msra.mxu0 %v314
      %415 = vmatprep.subr.mxu0 0.0
      %416 = vmatpush1.msra.mxu0 %v315
      %417 = vmatprep.subr.mxu0 0.0
      %418 = vmatpush1.msra.mxu0 %v316
      %419 = vmatprep.subr.mxu0 0.0
      %420 = vmatpush1.msra.mxu0 0.0
      %421 = vmatprep.subr.mxu0 0.0
      %422 = vmatpush1.msra.mxu0 0.0
      %423 = vmatprep.subr.mxu0 0.0
      %424 = vmatpush1.msra.mxu0 0.0
      %425 = vmatprep.subr.mxu0 0.0
      %426 = vmatpush1.msra.mxu0 0.0
      %427 = vmatprep.subr.mxu0 0.0
      %428 = vmatpush1.msra.mxu0 0.0
      %429 = vmatprep.subr.mxu0 0.0
      %430 = vmatpush1.msra.mxu0 0.0
      %431 = vmatprep.subr.mxu0 0.0
      %432 = vmatpush1.msra.mxu0 0.0
      %433 = vmatprep.subr.mxu0 0.0
      %434 = vmatpush1.msra.mxu0 0.0
      %435 = vmatprep.subr.mxu0 0.0
      %436 = vmatpush1.msra.mxu0 0.0
      %437 = vmatprep.subr.mxu0 0.0
      %438 = vmatpush1.msra.mxu0 0.0
      %439 = vmatprep.subr.mxu0 0.0
      %440 = vmatpush1.msra.mxu0 0.0
      %441 = vmatprep.subr.mxu0 0.0
      %442 = vmatpush1.msra.mxu0 0.0
      %443 = vmatprep.subr.mxu0 0.0
      %444 = vmatpush1.msra.mxu0 0.0
      %445 = vmatprep.subr.mxu0 0.0
      %446 = vmatpush1.msra.mxu0 0.0
      %447 = vmatprep.subr.mxu0 0.0
      %448 = vmatpush1.msra.mxu0 0.0
      %449 = vmatprep.subr.mxu0 0.0
      %450 = vmatpush1.msra.mxu0 0.0
      %451 = vmatprep.mubr.f32.mxu0 0.0
      %452 = vmatmul.mubr.f32.gmra.mrb[0].mxu0 %v268
      %v453 = vpop.f32.mrb[0].mxu0
      %v454 = vadd.f32 %v384, %v453
      %v455 = vpop.f32.mrb[0].mxu0
      %456 = vdwg.mxu0
      %v457 = vadd.f32 %v265, %v454
      %vm458 = vcmask 523264
      %459 = vst.msk [vmem:[#allocation2] sm:$0xff] %vm458, %v457
      %p460 = scmp.eq.s32.totalorder %s21, 1
      // Predicated region
      $region37: #{_lambda_.7} parent=31 // pred_check
        %p461 = pneg %p460
      $region38: #{_lambda_.7} parent=31 // pred_check_branch
        %463 = sbr.rel (%p461) target = $region40
      $region39: #{_lambda_.7} parent=31 // pred_region
        %v464 = vld [vmem:[#allocation2] sm:$0xff]
        %v465 = vld [vmem:[%s251] sm:$0x1]
        %v467 = vlaneseq
        %v468 = vshrl.u32 %v467, 7
        %v469 = vsub.s32 0, %v468
        %v470 = vrot.slane %v465, %v469
        %v472 = vadd.f32 %v464, %v470
        %473 = vst.msk [vmem:[%s258] sm:$0xff] %vm458, %v472
      $region40: #{_lambda_.7} parent=31 // pred_fallthru
        _
      %p474 = scmp.lt.s32.totalorder %s19, 0
      %s475 = scalar_select %p474, %s19, 0
      %p476 = scmp.lt.s32.totalorder %s20, 0
      %s477 = scalar_select %p476, %s20, 0
      %s478 = sadd.s32 %s477, %s475
      %s479 = smul.addr %s478, 8
      %s480 = scalar_lea.vmem %s3, %s479
      // Predicated region
      $region41: #{_lambda_.7} parent=31 // pred_check
        %p481 = pneg %p135
      $region42: #{_lambda_.7} parent=31 // pred_check_branch
        %483 = sbr.rel (%p481) target = $region44
      $region43: #{_lambda_.7} parent=31 // pred_region
        _
      $region44: #{_lambda_.7} parent=31 // pred_fallthru
        _
      // Predicated region
      $region45: #{_lambda_.7} parent=31 // pred_check
        %p484 = pneg %p135
      $region46: #{_lambda_.7} parent=31 // pred_check_branch
        %486 = sbr.rel (%p484) target = $region48
      $region47: #{_lambda_.7} parent=31 // pred_region
        %p487 = scmp.lt.s32.totalorder %s19, 0
        %s488 = scalar_select %p487, %s19, 0
        %p489 = scmp.lt.s32.totalorder %s20, 0
        %s490 = scalar_select %p489, %s20, 0
        %s491 = sadd.s32 %s490, %s488
        %s492 = smul.addr %s491, 8
        %s493 = scalar_lea.vmem %s3, %s492
      $region48: #{_lambda_.7} parent=31 // pred_fallthru
        _
    $region32: #{_lambda_.7} parent=5 // pred_fallthru
      _
    %p494 = scmp.le.s32.totalorder 2, %s9
    // Predicated region
    $region49: #{_lambda_.7} parent=5 // pred_check
      %p495 = pneg %p494
    $region50: #{_lambda_.7} parent=5 // pred_check_branch
      %497 = sbr.rel (%p495) target = $region52
    $region51: #{_lambda_.7} parent=5 // pred_region
      %s498 = ssub.s32 %s9, 2
    $region52: #{_lambda_.7} parent=5 // pred_fallthru
      _
  $region6: #{_lambda_.7} parent=0 // loop_footer
    %s13 = sadd.s32 1, %s9
  $region7: #{_lambda_.7} parent=0 // loop_footer_branch
    %8 = sbr.rel target = $region3
  $region8: #{_lambda_.7} parent=0 // loop_exit
    _

// kernel: _lambda_.12
$region0: #{_lambda_.12}
  #allocation0 [shape = 'u32[]', space=smem, size = 0x4, offset = 0x4, fixed_abs, tag = 'smem constant byte address 0x4 - core index']
  #allocation1 [shape = 'u32[144,128]{1,0:T(1,128)}', space=vmem, size = 0x12000, scoped, tag = 'internal scratch']
  %s0 = inlined_call_operand.vmem [shape: f32[16,64], index: 0, kind: input, shape index: {}]
  %s1 = inlined_call_operand.vmem [shape: f32[1,64], index: 1, kind: input, shape index: {}]
  %s2 = inlined_call_operand.vmem [shape: f32[1,64], index: 2, kind: input, shape index: {}]
  %s3 = inlined_call_operand.vmem [shape: f32[16,64], index: 3, kind: output, shape index: {}]
  %s4 = sld [smem:[#allocation0]]
  $region22: #{_lambda_.12} parent=0
    _
  %s6 = ssub.s32 1, %s4
  %s7 = scalar_select 0, %s6, %s4
  // Predicated region
  $region2: #{_lambda_.12} parent=0 // pred_check
    _
  $region3: #{_lambda_.12} parent=0 // pred_check_branch
    %9 = sbr.rel (0) target = $region5
  $region4: #{_lambda_.12} parent=0 // pred_region
    _
  $region5: #{_lambda_.12} parent=0 // pred_fallthru
    _
  // Predicated region
  $region6: #{_lambda_.12} parent=0 // pred_check
    _
  $region7: #{_lambda_.12} parent=0 // pred_check_branch
    %11 = sbr.rel (0) target = $region9
  $region8: #{_lambda_.12} parent=0 // pred_region
    _
  $region9: #{_lambda_.12} parent=0 // pred_fallthru
    _
  // Predicated region
  $region10: #{_lambda_.12} parent=0 // pred_check
    _
  $region11: #{_lambda_.12} parent=0 // pred_check_branch
    %13 = sbr.rel (0) target = $region13
  $region12: #{_lambda_.12} parent=0 // pred_region
    _
  $region13: #{_lambda_.12} parent=0 // pred_fallthru
    _
  %v14 = vld [vmem:[%s0] sm:$0xff]
  %v15 = vld [vmem:[%s0 + $0x8] sm:$0xff]
  %v16 = vld [vmem:[%s1] sm:$0x1]
  %v17 = vld [vmem:[%s2] sm:$0x1]
  %vm18 = vcmask 523264
  %v19 = vsel %vm18, %v14, 0.0
  %20 = vadd.xlane.f32.xlu0 %v19
  %v21 = vpop.xlane.xlu0 %20
  %v22 = vsel %vm18, %v15, 0.0
  %23 = vadd.xlane.f32.xlu0 %v22
  %v24 = vpop.xlane.xlu0 %23
  %v25 = vrcp.pop 64.0
  %v26 = vmul.f32 %v21, %v25
  %v27 = vmul.f32 %v24, %v25
  %v28 = vsub.f32 %v14, %v26
  %v29 = vsub.f32 %v15, %v27
  %v30 = vmul.f32 %v28, %v28
  %v31 = vmul.f32 %v29, %v29
  %v32 = vsel %vm18, %v30, 0.0
  %33 = vadd.xlane.f32.xlu0 %v32
  %v34 = vpop.xlane.xlu0 %33
  %v35 = vsel %vm18, %v31, 0.0
  %36 = vadd.xlane.f32.xlu0 %v35
  %v37 = vpop.xlane.xlu0 %36
  %v38 = vmul.f32 %v34, %v25
  %v39 = vmul.f32 %v37, %v25
  %v40 = vadd.f32 %v38, 1e-05
  %v41 = vadd.f32 %v39, 1e-05
  %v42 = vrsqrt.pop %v40
  %v43 = vrsqrt.pop %v41
  %v44 = vmul.f32 %v28, %v42
  %v45 = vmul.f32 %v29, %v43
  %v47 = vlaneseq
  %v48 = vshrl.u32 %v47, 7
  %v49 = vsub.s32 0, %v48
  %v50 = vrot.slane %v16, %v49
  %v52 = vmul.f32 %v44, %v50
  %v53 = vmul.f32 %v45, %v50
  %v55 = vlaneseq
  %v56 = vshrl.u32 %v55, 7
  %v57 = vsub.s32 0, %v56
  %v58 = vrot.slane %v17, %v57
  %v60 = vadd.f32 %v52, %v58
  %v61 = vadd.f32 %v53, %v58
  %62 = vst.msk [vmem:[%s3] sm:$0xff] %vm18, %v60
  %63 = vst.msk [vmem:[%s3 + $0x8] sm:$0xff] %vm18, %v61
  // Predicated region
  $region14: #{_lambda_.12} parent=0 // pred_check
    _
  $region15: #{_lambda_.12} parent=0 // pred_check_branch
    %65 = sbr.rel (0) target = $region17
  $region16: #{_lambda_.12} parent=0 // pred_region
    _
  $region17: #{_lambda_.12} parent=0 // pred_fallthru
    _
  // Predicated region
  $region18: #{_lambda_.12} parent=0 // pred_check
    _
  $region19: #{_lambda_.12} parent=0 // pred_check_branch
    %67 = sbr.rel (0) target = $region21
  $region20: #{_lambda_.12} parent=0 // pred_region
    _
  $region21: #{_lambda_.12} parent=0 // pred_fallthru
    _

// kernel: _lambda_.8
$region0: #{_lambda_.8}
  #allocation0 [shape = 'u32[]', space=smem, size = 0x4, offset = 0x4, fixed_abs, tag = 'smem constant byte address 0x4 - core index']
  #allocation1 [shape = 'u32[144,128]{1,0:T(1,128)}', space=vmem, size = 0x12000, scoped, tag = 'internal scratch']
  %s0 = inlined_call_operand.vmem [shape: f32[2,5,64], index: 0, kind: input, shape index: {}]
  %s1 = inlined_call_operand.vmem [shape: f32[1,64], index: 1, kind: input, shape index: {}]
  %s2 = inlined_call_operand.vmem [shape: f32[1,64], index: 2, kind: input, shape index: {}]
  %s3 = inlined_call_operand.vmem [shape: f32[64,192], index: 3, kind: input, shape index: {}]
  %s4 = inlined_call_operand.vmem [shape: f32[1,192], index: 4, kind: input, shape index: {}]
  %s5 = inlined_call_operand.vmem [shape: f32[64,64], index: 5, kind: input, shape index: {}]
  %s6 = inlined_call_operand.vmem [shape: f32[1,64], index: 6, kind: input, shape index: {}]
  %s7 = inlined_call_operand.vmem [shape: f32[1,64], index: 7, kind: input, shape index: {}]
  %s8 = inlined_call_operand.vmem [shape: f32[1,64], index: 8, kind: input, shape index: {}]
  %s9 = inlined_call_operand.vmem [shape: f32[64,256], index: 9, kind: input, shape index: {}]
  %s10 = inlined_call_operand.vmem [shape: f32[1,256], index: 10, kind: input, shape index: {}]
  %s11 = inlined_call_operand.vmem [shape: f32[256,64], index: 11, kind: input, shape index: {}]
  %s12 = inlined_call_operand.vmem [shape: f32[1,64], index: 12, kind: input, shape index: {}]
  %s13 = inlined_call_operand.vmem [shape: f32[2,5,64], index: 13, kind: output, shape index: {}]
  %s14 = sld [smem:[#allocation0]]
  $region85: #{_lambda_.8} parent=0
    _
  %s16 = ssub.s32 1, %s14
  %s17 = scalar_select 0, %s16, %s14
  loop: start=0, step=1, limit=4
  $region2: #{_lambda_.8} parent=0 // loop_pre_header
    _
  $region3: #{_lambda_.8} parent=0 // loop_header
    %s19 = sphi 0, %s23
    %p20 = scmp.ge.s32.totalorder %s19, 4
    %s29 = sphi 0, %s31
    %s32 = sphi 0, %s29
    %s33 = sphi 0, %s32
    %s49 = sphi 0, %s33
    %s53 = sphi 0, %s53
    %s55 = sphi 0, %s53
    %s56 = sphi 0, %s55
    %s70 = sphi 0, %s56
    %s74 = sphi 0, %s74
    %s76 = sphi 0, %s74
    %s77 = sphi 0, %s76
    %s91 = sphi 0, %s77
    %s95 = sphi 0, %s95
    %s97 = sphi 0, %s95
    %s98 = sphi 0, %s97
    %s112 = sphi 0, %s98
    %s116 = sphi 0, %s116
    %s118 = sphi 0, %s116
    %s119 = sphi 0, %s118
    %s133 = sphi 0, %s119
    %s137 = sphi 0, %s137
    %s139 = sphi 0, %s137
    %s140 = sphi 0, %s139
    %s154 = sphi 0, %s140
    %s158 = sphi 0, %s158
    %s160 = sphi 0, %s158
    %s161 = sphi 0, %s160
    %s175 = sphi 0, %s161
    %s179 = sphi 0, %s179
    %s181 = sphi 0, %s179
    %s182 = sphi 0, %s181
    %s196 = sphi 0, %s182
    %s200 = sphi 0, %s200
    %s202 = sphi 0, %s200
    %s203 = sphi 0, %s202
    %s217 = sphi 0, %s203
    %s221 = sphi 0, %s221
    %s223 = sphi 0, %s221
    %s224 = sphi 0, %s223
    %s238 = sphi 0, %s224
    %s242 = sphi 0, %s242
    %s244 = sphi 0, %s242
    %s245 = sphi 0, %s244
    %s259 = sphi 0, %s245
    %s263 = sphi 0, %s263
    %s265 = sphi 0, %s263
    %s266 = sphi 0, %s265
    %s280 = sphi 0, %s266
    %s284 = sphi 0, %s284
    %s286 = sphi 0, %s284
    %s287 = sphi 0, %s286
    %s301 = sphi 0, %s287
    %s307 = sphi 0, %s309
    %s310 = sphi 0, %s307
    %s311 = sphi 0, %s310
    %s327 = sphi 0, %s311
  $region4: #{_lambda_.8} parent=0 // loop_header_branch
    %22 = sbr.rel (%p20) target = $region8
  $region5: #{_lambda_.8} parent=0 // loop_body
    %s24 = ssub.s32 %s19, 1
    %s25 = ssub.s32 %s19, 2
    %s26 = sadd.s32 %s19, 1
    %s27 = ssub.s32 %s19, %s26
    %p28 = scmp.eq.s32.totalorder %s27, 0
    %s30 = sadd.s32 %s29, 1
    %s31 = scalar_select %p28, %s29, %s30
    %p34 = pneg %p28
    %p35 = scmp.eq.s32.totalorder %s19, 1
    %p36 = por %p34, %p35
    %p37 = scmp.ne.s32.totalorder %s29, %s32
    %p38 = scmp.eq.s32.totalorder %s19, 0
    %p39 = por %p37, %p38
    %p40 = scmp.ne.s32.totalorder %s29, %s32
    %p41 = scmp.eq.s32.totalorder %s24, 1
    %p42 = por %p40, %p41
    %p43 = scmp.ne.s32.totalorder %s32, %s33
    %p44 = scmp.eq.s32.totalorder %s24, 0
    %p45 = por %p43, %p44
    %p46 = scmp.ne.s32.totalorder %s32, %s33
    %p47 = scmp.eq.s32.totalorder %s25, 1
    %p48 = por %p46, %p47
    %p50 = scmp.ne.s32.totalorder %s33, %s49
    %p51 = scmp.eq.s32.totalorder %s25, 0
    %p52 = por %p50, %p51
    %s54 = sadd.s32 %s53, 1
    %p57 = scmp.eq.s32.totalorder %s19, 1
    %p58 = scmp.ne.s32.totalorder %s53, %s55
    %p59 = scmp.eq.s32.totalorder %s19, 0
    %p60 = por %p58, %p59
    %p61 = scmp.ne.s32.totalorder %s53, %s55
    %p62 = scmp.eq.s32.totalorder %s24, 1
    %p63 = por %p61, %p62
    %p64 = scmp.ne.s32.totalorder %s55, %s56
    %p65 = scmp.eq.s32.totalorder %s24, 0
    %p66 = por %p64, %p65
    %p67 = scmp.ne.s32.totalorder %s55, %s56
    %p68 = scmp.eq.s32.totalorder %s25, 1
    %p69 = por %p67, %p68
    %p71 = scmp.ne.s32.totalorder %s56, %s70
    %p72 = scmp.eq.s32.totalorder %s25, 0
    %p73 = por %p71, %p72
    %s75 = sadd.s32 %s74, 1
    %p78 = scmp.eq.s32.totalorder %s19, 1
    %p79 = scmp.ne.s32.totalorder %s74, %s76
    %p80 = scmp.eq.s32.totalorder %s19, 0
    %p81 = por %p79, %p80
    %p82 = scmp.ne.s32.totalorder %s74, %s76
    %p83 = scmp.eq.s32.totalorder %s24, 1
    %p84 = por %p82, %p83
    %p85 = scmp.ne.s32.totalorder %s76, %s77
    %p86 = scmp.eq.s32.totalorder %s24, 0
    %p87 = por %p85, %p86
    %p88 = scmp.ne.s32.totalorder %s76, %s77
    %p89 = scmp.eq.s32.totalorder %s25, 1
    %p90 = por %p88, %p89
    %p92 = scmp.ne.s32.totalorder %s77, %s91
    %p93 = scmp.eq.s32.totalorder %s25, 0
    %p94 = por %p92, %p93
    %s96 = sadd.s32 %s95, 1
    %p99 = scmp.eq.s32.totalorder %s19, 1
    %p100 = scmp.ne.s32.totalorder %s95, %s97
    %p101 = scmp.eq.s32.totalorder %s19, 0
    %p102 = por %p100, %p101
    %p103 = scmp.ne.s32.totalorder %s95, %s97
    %p104 = scmp.eq.s32.totalorder %s24, 1
    %p105 = por %p103, %p104
    %p106 = scmp.ne.s32.totalorder %s97, %s98
    %p107 = scmp.eq.s32.totalorder %s24, 0
    %p108 = por %p106, %p107
    %p109 = scmp.ne.s32.totalorder %s97, %s98
    %p110 = scmp.eq.s32.totalorder %s25, 1
    %p111 = por %p109, %p110
    %p113 = scmp.ne.s32.totalorder %s98, %s112
    %p114 = scmp.eq.s32.totalorder %s25, 0
    %p115 = por %p113, %p114
    %s117 = sadd.s32 %s116, 1
    %p120 = scmp.eq.s32.totalorder %s19, 1
    %p121 = scmp.ne.s32.totalorder %s116, %s118
    %p122 = scmp.eq.s32.totalorder %s19, 0
    %p123 = por %p121, %p122
    %p124 = scmp.ne.s32.totalorder %s116, %s118
    %p125 = scmp.eq.s32.totalorder %s24, 1
    %p126 = por %p124, %p125
    %p127 = scmp.ne.s32.totalorder %s118, %s119
    %p128 = scmp.eq.s32.totalorder %s24, 0
    %p129 = por %p127, %p128
    %p130 = scmp.ne.s32.totalorder %s118, %s119
    %p131 = scmp.eq.s32.totalorder %s25, 1
    %p132 = por %p130, %p131
    %p134 = scmp.ne.s32.totalorder %s119, %s133
    %p135 = scmp.eq.s32.totalorder %s25, 0
    %p136 = por %p134, %p135
    %s138 = sadd.s32 %s137, 1
    %p141 = scmp.eq.s32.totalorder %s19, 1
    %p142 = scmp.ne.s32.totalorder %s137, %s139
    %p143 = scmp.eq.s32.totalorder %s19, 0
    %p144 = por %p142, %p143
    %p145 = scmp.ne.s32.totalorder %s137, %s139
    %p146 = scmp.eq.s32.totalorder %s24, 1
    %p147 = por %p145, %p146
    %p148 = scmp.ne.s32.totalorder %s139, %s140
    %p149 = scmp.eq.s32.totalorder %s24, 0
    %p150 = por %p148, %p149
    %p151 = scmp.ne.s32.totalorder %s139, %s140
    %p152 = scmp.eq.s32.totalorder %s25, 1
    %p153 = por %p151, %p152
    %p155 = scmp.ne.s32.totalorder %s140, %s154
    %p156 = scmp.eq.s32.totalorder %s25, 0
    %p157 = por %p155, %p156
    %s159 = sadd.s32 %s158, 1
    %p162 = scmp.eq.s32.totalorder %s19, 1
    %p163 = scmp.ne.s32.totalorder %s158, %s160
    %p164 = scmp.eq.s32.totalorder %s19, 0
    %p165 = por %p163, %p164
    %p166 = scmp.ne.s32.totalorder %s158, %s160
    %p167 = scmp.eq.s32.totalorder %s24, 1
    %p168 = por %p166, %p167
    %p169 = scmp.ne.s32.totalorder %s160, %s161
    %p170 = scmp.eq.s32.totalorder %s24, 0
    %p171 = por %p169, %p170
    %p172 = scmp.ne.s32.totalorder %s160, %s161
    %p173 = scmp.eq.s32.totalorder %s25, 1
    %p174 = por %p172, %p173
    %p176 = scmp.ne.s32.totalorder %s161, %s175
    %p177 = scmp.eq.s32.totalorder %s25, 0
    %p178 = por %p176, %p177
    %s180 = sadd.s32 %s179, 1
    %p183 = scmp.eq.s32.totalorder %s19, 1
    %p184 = scmp.ne.s32.totalorder %s179, %s181
    %p185 = scmp.eq.s32.totalorder %s19, 0
    %p186 = por %p184, %p185
    %p187 = scmp.ne.s32.totalorder %s179, %s181
    %p188 = scmp.eq.s32.totalorder %s24, 1
    %p189 = por %p187, %p188
    %p190 = scmp.ne.s32.totalorder %s181, %s182
    %p191 = scmp.eq.s32.totalorder %s24, 0
    %p192 = por %p190, %p191
    %p193 = scmp.ne.s32.totalorder %s181, %s182
    %p194 = scmp.eq.s32.totalorder %s25, 1
    %p195 = por %p193, %p194
    %p197 = scmp.ne.s32.totalorder %s182, %s196
    %p198 = scmp.eq.s32.totalorder %s25, 0
    %p199 = por %p197, %p198
    %s201 = sadd.s32 %s200, 1
    %p204 = scmp.eq.s32.totalorder %s19, 1
    %p205 = scmp.ne.s32.totalorder %s200, %s202
    %p206 = scmp.eq.s32.totalorder %s19, 0
    %p207 = por %p205, %p206
    %p208 = scmp.ne.s32.totalorder %s200, %s202
    %p209 = scmp.eq.s32.totalorder %s24, 1
    %p210 = por %p208, %p209
    %p211 = scmp.ne.s32.totalorder %s202, %s203
    %p212 = scmp.eq.s32.totalorder %s24, 0
    %p213 = por %p211, %p212
    %p214 = scmp.ne.s32.totalorder %s202, %s203
    %p215 = scmp.eq.s32.totalorder %s25, 1
    %p216 = por %p214, %p215
    %p218 = scmp.ne.s32.totalorder %s203, %s217
    %p219 = scmp.eq.s32.totalorder %s25, 0
    %p220 = por %p218, %p219
    %s222 = sadd.s32 %s221, 1
    %p225 = scmp.eq.s32.totalorder %s19, 1
    %p226 = scmp.ne.s32.totalorder %s221, %s223
    %p227 = scmp.eq.s32.totalorder %s19, 0
    %p228 = por %p226, %p227
    %p229 = scmp.ne.s32.totalorder %s221, %s223
    %p230 = scmp.eq.s32.totalorder %s24, 1
    %p231 = por %p229, %p230
    %p232 = scmp.ne.s32.totalorder %s223, %s224
    %p233 = scmp.eq.s32.totalorder %s24, 0
    %p234 = por %p232, %p233
    %p235 = scmp.ne.s32.totalorder %s223, %s224
    %p236 = scmp.eq.s32.totalorder %s25, 1
    %p237 = por %p235, %p236
    %p239 = scmp.ne.s32.totalorder %s224, %s238
    %p240 = scmp.eq.s32.totalorder %s25, 0
    %p241 = por %p239, %p240
    %s243 = sadd.s32 %s242, 1
    %p246 = scmp.eq.s32.totalorder %s19, 1
    %p247 = scmp.ne.s32.totalorder %s242, %s244
    %p248 = scmp.eq.s32.totalorder %s19, 0
    %p249 = por %p247, %p248
    %p250 = scmp.ne.s32.totalorder %s242, %s244
    %p251 = scmp.eq.s32.totalorder %s24, 1
    %p252 = por %p250, %p251
    %p253 = scmp.ne.s32.totalorder %s244, %s245
    %p254 = scmp.eq.s32.totalorder %s24, 0
    %p255 = por %p253, %p254
    %p256 = scmp.ne.s32.totalorder %s244, %s245
    %p257 = scmp.eq.s32.totalorder %s25, 1
    %p258 = por %p256, %p257
    %p260 = scmp.ne.s32.totalorder %s245, %s259
    %p261 = scmp.eq.s32.totalorder %s25, 0
    %p262 = por %p260, %p261
    %s264 = sadd.s32 %s263, 1
    %p267 = scmp.eq.s32.totalorder %s19, 1
    %p268 = scmp.ne.s32.totalorder %s263, %s265
    %p269 = scmp.eq.s32.totalorder %s19, 0
    %p270 = por %p268, %p269
    %p271 = scmp.ne.s32.totalorder %s263, %s265
    %p272 = scmp.eq.s32.totalorder %s24, 1
    %p273 = por %p271, %p272
    %p274 = scmp.ne.s32.totalorder %s265, %s266
    %p275 = scmp.eq.s32.totalorder %s24, 0
    %p276 = por %p274, %p275
    %p277 = scmp.ne.s32.totalorder %s265, %s266
    %p278 = scmp.eq.s32.totalorder %s25, 1
    %p279 = por %p277, %p278
    %p281 = scmp.ne.s32.totalorder %s266, %s280
    %p282 = scmp.eq.s32.totalorder %s25, 0
    %p283 = por %p281, %p282
    %s285 = sadd.s32 %s284, 1
    %p288 = scmp.eq.s32.totalorder %s19, 1
    %p289 = scmp.ne.s32.totalorder %s284, %s286
    %p290 = scmp.eq.s32.totalorder %s19, 0
    %p291 = por %p289, %p290
    %p292 = scmp.ne.s32.totalorder %s284, %s286
    %p293 = scmp.eq.s32.totalorder %s24, 1
    %p294 = por %p292, %p293
    %p295 = scmp.ne.s32.totalorder %s286, %s287
    %p296 = scmp.eq.s32.totalorder %s24, 0
    %p297 = por %p295, %p296
    %p298 = scmp.ne.s32.totalorder %s286, %s287
    %p299 = scmp.eq.s32.totalorder %s25, 1
    %p300 = por %p298, %p299
    %p302 = scmp.ne.s32.totalorder %s287, %s301
    %p303 = scmp.eq.s32.totalorder %s25, 0
    %p304 = por %p302, %p303
    %s305 = ssub.s32 %s19, %s26
    %p306 = scmp.eq.s32.totalorder %s305, 0
    %s308 = sadd.s32 %s307, 1
    %s309 = scalar_select %p306, %s307, %s308
    %p312 = pneg %p306
    %p313 = scmp.eq.s32.totalorder %s19, 1
    %p314 = por %p312, %p313
    %p315 = scmp.ne.s32.totalorder %s307, %s310
    %p316 = scmp.eq.s32.totalorder %s19, 0
    %p317 = por %p315, %p316
    %p318 = scmp.ne.s32.totalorder %s307, %s310
    %p319 = scmp.eq.s32.totalorder %s24, 1
    %p320 = por %p318, %p319
    %p321 = scmp.ne.s32.totalorder %s310, %s311
    %p322 = scmp.eq.s32.totalorder %s24, 0
    %p323 = por %p321, %p322
    %p324 = scmp.ne.s32.totalorder %s310, %s311
    %p325 = scmp.eq.s32.totalorder %s25, 1
    %p326 = por %p324, %p325
    %p328 = scmp.ne.s32.totalorder %s311, %s327
    %p329 = scmp.eq.s32.totalorder %s25, 0
    %p330 = por %p328, %p329
    %p331 = scmp.le.s32.totalorder 1, %s19
    %p332 = scmp.lt.s32.totalorder %s19, 3
    %p333 = pnand %p331, %p332
    %p334 = pneg %p333
    // Predicated region
    $region9: #{_lambda_.8} parent=5 // pred_check
      _
    $region10: #{_lambda_.8} parent=5 // pred_check_branch
      %336 = sbr.rel (%p333) target = $region12
    $region11: #{_lambda_.8} parent=5 // pred_region
      %s337 = ssub.s32 %s19, 1
      // Predicated region
      $region13: #{_lambda_.8} parent=11 // pred_check
        %p338 = pneg %p66
      $region14: #{_lambda_.8} parent=11 // pred_check_branch
        %340 = sbr.rel (%p338) target = $region16
      $region15: #{_lambda_.8} parent=11 // pred_region
        _
      $region16: #{_lambda_.8} parent=11 // pred_fallthru
        _
      // Predicated region
      $region17: #{_lambda_.8} parent=11 // pred_check
        %p341 = pneg %p87
      $region18: #{_lambda_.8} parent=11 // pred_check_branch
        %343 = sbr.rel (%p341) target = $region20
      $region19: #{_lambda_.8} parent=11 // pred_region
        _
      $region20: #{_lambda_.8} parent=11 // pred_fallthru
        _
      // Predicated region
      $region21: #{_lambda_.8} parent=11 // pred_check
        %p344 = pneg %p108
      $region22: #{_lambda_.8} parent=11 // pred_check_branch
        %346 = sbr.rel (%p344) target = $region24
      $region23: #{_lambda_.8} parent=11 // pred_region
        _
      $region24: #{_lambda_.8} parent=11 // pred_fallthru
        _
      // Predicated region
      $region25: #{_lambda_.8} parent=11 // pred_check
        %p347 = pneg %p129
      $region26: #{_lambda_.8} parent=11 // pred_check_branch
        %349 = sbr.rel (%p347) target = $region28
      $region27: #{_lambda_.8} parent=11 // pred_region
        _
      $region28: #{_lambda_.8} parent=11 // pred_fallthru
        _
      // Predicated region
      $region29: #{_lambda_.8} parent=11 // pred_check
        %p350 = pneg %p150
      $region30: #{_lambda_.8} parent=11 // pred_check_branch
        %352 = sbr.rel (%p350) target = $region32
      $region31: #{_lambda_.8} parent=11 // pred_region
        _
      $region32: #{_lambda_.8} parent=11 // pred_fallthru
        _
      // Predicated region
      $region33: #{_lambda_.8} parent=11 // pred_check
        %p353 = pneg %p171
      $region34: #{_lambda_.8} parent=11 // pred_check_branch
        %355 = sbr.rel (%p353) target = $region36
      $region35: #{_lambda_.8} parent=11 // pred_region
        _
      $region36: #{_lambda_.8} parent=11 // pred_fallthru
        _
      // Predicated region
      $region37: #{_lambda_.8} parent=11 // pred_check
        %p356 = pneg %p192
      $region38: #{_lambda_.8} parent=11 // pred_check_branch
        %358 = sbr.rel (%p356) target = $region40
      $region39: #{_lambda_.8} parent=11 // pred_region
        _
      $region40: #{_lambda_.8} parent=11 // pred_fallthru
        _
      // Predicated region
      $region41: #{_lambda_.8} parent=11 // pred_check
        %p359 = pneg %p213
      $region42: #{_lambda_.8} parent=11 // pred_check_branch
        %361 = sbr.rel (%p359) target = $region44
      $region43: #{_lambda_.8} parent=11 // pred_region
        _
      $region44: #{_lambda_.8} parent=11 // pred_fallthru
        _
      // Predicated region
      $region45: #{_lambda_.8} parent=11 // pred_check
        %p362 = pneg %p234
      $region46: #{_lambda_.8} parent=11 // pred_check_branch
        %364 = sbr.rel (%p362) target = $region48
      $region47: #{_lambda_.8} parent=11 // pred_region
        _
      $region48: #{_lambda_.8} parent=11 // pred_fallthru
        _
      // Predicated region
      $region49: #{_lambda_.8} parent=11 // pred_check
        %p365 = pneg %p255
      $region50: #{_lambda_.8} parent=11 // pred_check_branch
        %367 = sbr.rel (%p365) target = $region52
      $region51: #{_lambda_.8} parent=11 // pred_region
        _
      $region52: #{_lambda_.8} parent=11 // pred_fallthru
        _
      // Predicated region
      $region53: #{_lambda_.8} parent=11 // pred_check
        %p368 = pneg %p276
      $region54: #{_lambda_.8} parent=11 // pred_check_branch
        %370 = sbr.rel (%p368) target = $region56
      $region55: #{_lambda_.8} parent=11 // pred_region
        _
      $region56: #{_lambda_.8} parent=11 // pred_fallthru
        _
      // Predicated region
      $region57: #{_lambda_.8} parent=11 // pred_check
        %p371 = pneg %p297
      $region58: #{_lambda_.8} parent=11 // pred_check_branch
        %373 = sbr.rel (%p371) target = $region60
      $region59: #{_lambda_.8} parent=11 // pred_region
        _
      $region60: #{_lambda_.8} parent=11 // pred_fallthru
        _
    $region12: #{_lambda_.8} parent=5 // pred_fallthru
      _
    %p374 = scmp.lt.s32.totalorder %s19, 2
    // Predicated region
    $region61: #{_lambda_.8} parent=5 // pred_check
      %p375 = pneg %p374
    $region62: #{_lambda_.8} parent=5 // pred_check_branch
      %377 = sbr.rel (%p375) target = $region64
    $region63: #{_lambda_.8} parent=5 // pred_region
      // Predicated region
      $region65: #{_lambda_.8} parent=63 // pred_check
        %p378 = pneg %p39
      $region66: #{_lambda_.8} parent=63 // pred_check_branch
        %380 = sbr.rel (%p378) target = $region68
      $region67: #{_lambda_.8} parent=63 // pred_region
        %p381 = scmp.lt.s32.totalorder %s19, 1
        %s382 = scalar_select %p381, %s19, 1
        %s383 = smul.addr %s382, 8
        %s384 = scalar_lea.vmem %s0, %s383
      $region68: #{_lambda_.8} parent=63 // pred_fallthru
        _
    $region64: #{_lambda_.8} parent=5 // pred_fallthru
      _
    %p385 = scmp.le.s32.totalorder 1, %s19
    %p386 = scmp.lt.s32.totalorder %s19, 3
    %p387 = pnand %p385, %p386
    %p388 = pneg %p387
    // Predicated region
    $region69: #{_lambda_.8} parent=5 // pred_check
      _
    $region70: #{_lambda_.8} parent=5 // pred_check_branch
      %390 = sbr.rel (%p387) target = $region72
    $region71: #{_lambda_.8} parent=5 // pred_region
      %s391 = ssub.s32 %s19, 1
      %p392 = scmp.lt.s32.totalorder %s24, 1
      %s393 = scalar_select %p392, %s24, 1
      %s394 = smul.addr %s393, 8
      %s395 = scalar_lea.vmem %s0, %s394
      %p396 = pneg %p45
      %p397 = pneg %p42
      %p398 = pneg %p66
      %p399 = pneg %p63
      %p400 = pneg %p87
      %p401 = pneg %p84
      %p402 = pneg %p108
      %p403 = pneg %p105
      %p404 = pneg %p129
      %p405 = pneg %p126
      %p406 = pneg %p150
      %p407 = pneg %p147
      %p408 = pneg %p171
      %p409 = pneg %p168
      %p410 = pneg %p192
      %p411 = pneg %p189
      %p412 = pneg %p213
      %p413 = pneg %p210
      %p414 = pneg %p234
      %p415 = pneg %p231
      %p416 = pneg %p255
      %p417 = pneg %p252
      %p418 = pneg %p276
      %p419 = pneg %p273
      %p420 = pneg %p297
      %p421 = pneg %p294
      %p422 = pneg %p323
      %p423 = pneg %p320
      %p424 = scmp.lt.s32.totalorder %s24, 1
      %s425 = scalar_select %p424, %s24, 1
      %s426 = smul.addr %s425, 8
      %s427 = scalar_lea.vmem %s13, %s426
      %p428 = scmp.lt.s32.totalorder %s24, 1
      %s429 = scalar_select %p428, %s24, 1
      %s430 = smul.addr %s429, 8
      %s431 = scalar_lea.vmem %s0, %s430
      %p432 = scmp.lt.s32.totalorder %s24, 1
      %s433 = scalar_select %p432, %s24, 1
      %s434 = smul.addr %s433, 8
      %s435 = scalar_lea.vmem %s13, %s434
      %v436 = vld [vmem:[%s431] sm:$0x1f]
      %v437 = vld [vmem:[%s1] sm:$0x1]
      %v438 = vld [vmem:[%s2] sm:$0x1]
      %vm439 = vcmask 520192
      %v440 = vsel %vm439, %v436, 0.0
      %441 = vadd.xlane.f32.xlu0 %v440
      %v442 = vpop.xlane.xlu0 %441
      %v443 = vrcp.pop 64.0
      %v444 = vmul.f32 %v442, %v443
      %v445 = vsub.f32 %v436, %v444
      %v446 = vmul.f32 %v445, %v445
      %v447 = vsel %vm439, %v446, 0.0
      %448 = vadd.xlane.f32.xlu0 %v447
      %v449 = vpop.xlane.xlu0 %448
      %v450 = vmul.f32 %v449, %v443
      %v451 = vadd.f32 %v450, 1e-05
      %v452 = vrsqrt.pop %v451
      %v453 = vmul.f32 %v445, %v452
      %v455 = vlaneseq
      %v456 = vshrl.u32 %v455, 7
      %v457 = vsub.s32 0, %v456
      %v458 = vrot.slane %v437, %v457
      %v460 = vmul.f32 %v453, %v458
      %v462 = vlaneseq
      %v463 = vshrl.u32 %v462, 7
      %v464 = vsub.s32 0, %v463
      %v465 = vrot.slane %v438, %v464
      %v467 = vadd.f32 %v460, %v465
      %v468 = vld [vmem:[%s3] sm:$0xff]
      %v469 = vld [vmem:[%s3 + $0x8] sm:$0xff]
      %v470 = vld [vmem:[%s3 + $0x10] sm:$0xff]
      %v471 = vld [vmem:[%s3 + $0x18] sm:$0xff]
      %v472 = vld [vmem:[%s3 + $0x20] sm:$0xff]
      %v473 = vld [vmem:[%s3 + $0x28] sm:$0xff]
      %v474 = vld [vmem:[%s3 + $0x30] sm:$0xff]
      %v475 = vld [vmem:[%s3 + $0x38] sm:$0xff]
      %v476 = vld [vmem:[%s3 + $0x40] sm:$0xff]
      %v477 = vld [vmem:[%s3 + $0x48] sm:$0xff]
      %v478 = vld [vmem:[%s3 + $0x50] sm:$0xff]
      %v479 = vld [vmem:[%s3 + $0x58] sm:$0xff]
      %v480 = vld [vmem:[%s3 + $0x60] sm:$0xff]
      %v481 = vld [vmem:[%s3 + $0x68] sm:$0xff]
      %v482 = vld [vmem:[%s3 + $0x70] sm:$0xff]
      %v483 = vld [vmem:[%s3 + $0x78] sm:$0xff]
      %v484 = vld [vmem:[%s4] sm:$0x3]
      %v486 = vlaneseq
      %v487 = vshrl.u32 %v486, 7
      %v488 = vsub.s32 0, %v487
      %v489 = vrot.slane %v484, %v488
      %v490 = vlaneseq
      %v491 = vshrl.u32 %v490, 7
      %v492 = vsub.s32 1, %v491
      %v493 = vrot.slane %v484, %v492
      %vm496 = vcmask 523264
      %v498 = vsel %vm496, %v467, 0
      %500 = vmatprep.subr.mxu0 %v469
      %501 = vmatpush1.msra.mxu0 %v468
      %502 = vmatprep.subr.mxu0 %v471
      %503 = vmatpush1.msra.mxu0 %v470
      %504 = vmatprep.subr.mxu0 %v473
      %505 = vmatpush1.msra.mxu0 %v472
      %506 = vmatprep.subr.mxu0 %v475
      %507 = vmatpush1.msra.mxu0 %v474
      %508 = vmatprep.subr.mxu0 %v477
      %509 = vmatpush1.msra.mxu0 %v476
      %510 = vmatprep.subr.mxu0 %v479
      %511 = vmatpush1.msra.mxu0 %v478
      %512 = vmatprep.subr.mxu0 %v481
      %513 = vmatpush1.msra.mxu0 %v480
      %514 = vmatprep.subr.mxu0 %v483
      %515 = vmatpush1.msra.mxu0 %v482
      %516 = vmatprep.subr.mxu0 0.0
      %517 = vmatpush1.msra.mxu0 0.0
      %518 = vmatprep.subr.mxu0 0.0
      %519 = vmatpush1.msra.mxu0 0.0
      %520 = vmatprep.subr.mxu0 0.0
      %521 = vmatpush1.msra.mxu0 0.0
      %522 = vmatprep.subr.mxu0 0.0
      %523 = vmatpush1.msra.mxu0 0.0
      %524 = vmatprep.subr.mxu0 0.0
      %525 = vmatpush1.msra.mxu0 0.0
      %526 = vmatprep.subr.mxu0 0.0
      %527 = vmatpush1.msra.mxu0 0.0
      %528 = vmatprep.subr.mxu0 0.0
      %529 = vmatpush1.msra.mxu0 0.0
      %530 = vmatprep.subr.mxu0 0.0
      %531 = vmatpush1.msra.mxu0 0.0
      %532 = vmatprep.subr.mxu0 0.0
      %533 = vmatpush1.msra.mxu0 0.0
      %534 = vmatprep.subr.mxu0 0.0
      %535 = vmatpush1.msra.mxu0 0.0
      %536 = vmatprep.subr.mxu0 0.0
      %537 = vmatpush1.msra.mxu0 0.0
      %538 = vmatprep.subr.mxu0 0.0
      %539 = vmatpush1.msra.mxu0 0.0
      %540 = vmatprep.subr.mxu0 0.0
      %541 = vmatpush1.msra.mxu0 0.0
      %542 = vmatprep.subr.mxu0 0.0
      %543 = vmatpush1.msra.mxu0 0.0
      %544 = vmatprep.subr.mxu0 0.0
      %545 = vmatpush1.msra.mxu0 0.0
      %546 = vmatprep.subr.mxu0 0.0
      %547 = vmatpush1.msra.mxu0 0.0
      %548 = vmatprep.subr.mxu0 0.0
      %549 = vmatpush1.msra.mxu0 0.0
      %550 = vmatprep.subr.mxu0 0.0
      %551 = vmatpush1.msra.mxu0 0.0
      %552 = vmatprep.subr.mxu0 0.0
      %553 = vmatpush1.msra.mxu0 0.0
      %554 = vmatprep.subr.mxu0 0.0
      %555 = vmatpush1.msra.mxu0 0.0
      %556 = vmatprep.subr.mxu0 0.0
      %557 = vmatpush1.msra.mxu0 0.0
      %558 = vmatprep.subr.mxu0 0.0
      %559 = vmatpush1.msra.mxu0 0.0
      %560 = vmatprep.subr.mxu0 0.0
      %561 = vmatpush1.msra.mxu0 0.0
      %562 = vmatprep.subr.mxu0 0.0
      %563 = vmatpush1.msra.mxu0 0.0
      %564 = vmatprep.mubr.f32.mxu0 0.0
      %565 = vmatmul.mubr.f32.gmra.mrb[0].mxu0 %v498
      %v566 = vpop.f32.mrb[0].mxu0
      %v567 = vadd.f32 %v489, %v566
      %v568 = vpop.f32.mrb[0].mxu0
      %v569 = vadd.f32 %v493, %v568
      %570 = vdwg.mxu0
      %v571 = vld [vmem:[%s5] sm:$0xff]
      %v572 = vld [vmem:[%s5 + $0x8] sm:$0xff]
      %v573 = vld [vmem:[%s5 + $0x10] sm:$0xff]
      %v574 = vld [vmem:[%s5 + $0x18] sm:$0xff]
      %v575 = vld [vmem:[%s5 + $0x20] sm:$0xff]
      %v576 = vld [vmem:[%s5 + $0x28] sm:$0xff]
      %v577 = vld [vmem:[%s5 + $0x30] sm:$0xff]
      %v578 = vld [vmem:[%s5 + $0x38] sm:$0xff]
      %580 = vrot.lane.b32.xlu0 %v567, 64
      %v581 = vpop.permute.xlu0 %580
      %vm582 = vcmask 130048
      %v583 = vsel %vm582, %v567, 0
      %v585 = vsel %vm582, %v581, 0
      %587 = vmatprep.subr.mxu0 0.0
      %588 = vmatpush1.xpose.msra.mxu0 %v585
      %589 = vmatprep.subr.mxu0 0.0
      %590 = vmatpush1.xpose.msra.mxu0 0.0
      %591 = vmatprep.subr.mxu0 0.0
      %592 = vmatpush1.xpose.msra.mxu0 0.0
      %593 = vmatprep.subr.mxu0 0.0
      %594 = vmatpush1.xpose.msra.mxu0 0.0
      %595 = vmatprep.subr.mxu0 0.0
      %596 = vmatpush1.xpose.msra.mxu0 0.0
      %597 = vmatprep.subr.mxu0 0.0
      %598 = vmatpush1.xpose.msra.mxu0 0.0
      %599 = vmatprep.subr.mxu0 0.0
      %600 = vmatpush1.xpose.msra.mxu0 0.0
      %601 = vmatprep.subr.mxu0 0.0
      %602 = vmatpush1.xpose.msra.mxu0 0.0
      %603 = vmatprep.subr.mxu0 0.0
      %604 = vmatpush1.xpose.msra.mxu0 0.0
      %605 = vmatprep.subr.mxu0 0.0
      %606 = vmatpush1.xpose.msra.mxu0 0.0
      %607 = vmatprep.subr.mxu0 0.0
      %608 = vmatpush1.xpose.msra.mxu0 0.0
      %609 = vmatprep.subr.mxu0 0.0
      %610 = vmatpush1.xpose.msra.mxu0 0.0
      %611 = vmatprep.subr.mxu0 0.0
      %612 = vmatpush1.xpose.msra.mxu0 0.0
      %613 = vmatprep.subr.mxu0 0.0
      %614 = vmatpush1.xpose.msra.mxu0 0.0
      %615 = vmatprep.subr.mxu0 0.0
      %616 = vmatpush1.xpose.msra.mxu0 0.0
      %617 = vmatprep.subr.mxu0 0.0
      %618 = vmatpush1.xpose.msra.mxu0 0.0
      %619 = vmatprep.subr.mxu0 0.0
      %620 = vmatpush1.xpose.msra.mxu0 0.0
      %621 = vmatprep.subr.mxu0 0.0
      %622 = vmatpush1.xpose.msra.mxu0 0.0
      %623 = vmatprep.subr.mxu0 0.0
      %624 = vmatpush1.xpose.msra.mxu0 0.0
      %625 = vmatprep.subr.mxu0 0.0
      %626 = vmatpush1.xpose.msra.mxu0 0.0
      %627 = vmatprep.subr.mxu0 0.0
      %628 = vmatpush1.xpose.msra.mxu0 0.0
      %629 = vmatprep.subr.mxu0 0.0
      %630 = vmatpush1.xpose.msra.mxu0 0.0
      %631 = vmatprep.subr.mxu0 0.0
      %632 = vmatpush1.xpose.msra.mxu0 0.0
      %633 = vmatprep.subr.mxu0 0.0
      %634 = vmatpush1.xpose.msra.mxu0 0.0
      %635 = vmatprep.subr.mxu0 0.0
      %636 = vmatpush1.xpose.msra.mxu0 0.0
      %637 = vmatprep.subr.mxu0 0.0
      %638 = vmatpush1.xpose.msra.mxu0 0.0
      %639 = vmatprep.subr.mxu0 0.0
      %640 = vmatpush1.xpose.msra.mxu0 0.0
      %641 = vmatprep.subr.mxu0 0.0
      %642 = vmatpush1.xpose.msra.mxu0 0.0
      %643 = vmatprep.subr.mxu0 0.0
      %644 = vmatpush1.xpose.msra.mxu0 0.0
      %645 = vmatprep.subr.mxu0 0.0
      %646 = vmatpush1.xpose.msra.mxu0 0.0
      %647 = vmatprep.subr.mxu0 0.0
      %648 = vmatpush1.xpose.msra.mxu0 0.0
      %649 = vmatprep.subr.mxu0 0.0
      %650 = vmatpush1.xpose.msra.mxu0 0.0
      %651 = vmatprep.mubr.f32.mxu0 0.0
      %652 = vmatmul.mubr.f32.gmra.mrb[0].mxu0 %v583
      %v653 = vpop.f32.mrb[0].mxu0
      %v654 = vadd.f32 0.0, %v653
      %v655 = vpop.f32.mrb[0].mxu0
      %656 = vdwg.mxu0
      %v657 = vmul.f32 %v654, 0.25
      %vm658 = vcmask 36864
      %v659 = vsel %vm658, %v657, -inf
      %660 = vmax.xlane.f32.xlu0 %v659
      %v661 = vpop.xlane.xlu0 %660
      %v662 = vsub.f32 %v657, %v661
      %v663 = vmul.f32 %v662, 1.442695
      %v664 = vpow.pop %v663
      %v665 = vsel %vm658, %v664, 0.0
      %666 = vadd.xlane.f32.xlu0 %v665
      %v667 = vpop.xlane.xlu0 %666
      %v668 = vrcp.pop %v667
      %v669 = vmul.f32 %v664, %v668
      %vm670 = vcmask 39936
      %v672 = vsel %vm670, %v669, 0
      %vm674 = vcmask 1044480
      %v676 = vsel %vm674, %v569, 0
      %678 = vmatprep.subr.mxu0 0.0
      %679 = vmatpush1.msra.mxu0 %v676
      %680 = vmatprep.subr.mxu0 0.0
      %681 = vmatpush1.msra.mxu0 0.0
      %682 = vmatprep.subr.mxu0 0.0
      %683 = vmatpush1.msra.mxu0 0.0
      %684 = vmatprep.subr.mxu0 0.0
      %685 = vmatpush1.msra.mxu0 0.0
      %686 = vmatprep.subr.mxu0 0.0
      %687 = vmatpush1.msra.mxu0 0.0
      %688 = vmatprep.subr.mxu0 0.0
      %689 = vmatpush1.msra.mxu0 0.0
      %690 = vmatprep.subr.mxu0 0.0
      %691 = vmatpush1.msra.mxu0 0.0
      %692 = vmatprep.subr.mxu0 0.0
      %693 = vmatpush1.msra.mxu0 0.0
      %694 = vmatprep.subr.mxu0 0.0
      %695 = vmatpush1.msra.mxu0 0.0
      %696 = vmatprep.subr.mxu0 0.0
      %697 = vmatpush1.msra.mxu0 0.0
      %698 = vmatprep.subr.mxu0 0.0
      %699 = vmatpush1.msra.mxu0 0.0
      %700 = vmatprep.subr.mxu0 0.0
      %701 = vmatpush1.msra.mxu0 0.0
      %702 = vmatprep.subr.mxu0 0.0
      %703 = vmatpush1.msra.mxu0 0.0
      %704 = vmatprep.subr.mxu0 0.0
      %705 = vmatpush1.msra.mxu0 0.0
      %706 = vmatprep.subr.mxu0 0.0
      %707 = vmatpush1.msra.mxu0 0.0
      %708 = vmatprep.subr.mxu0 0.0
      %709 = vmatpush1.msra.mxu0 0.0
      %710 = vmatprep.subr.mxu0 0.0
      %711 = vmatpush1.msra.mxu0 0.0
      %712 = vmatprep.subr.mxu0 0.0
      %713 = vmatpush1.msra.mxu0 0.0
      %714 = vmatprep.subr.mxu0 0.0
      %715 = vmatpush1.msra.mxu0 0.0
      %716 = vmatprep.subr.mxu0 0.0
      %717 = vmatpush1.msra.mxu0 0.0
      %718 = vmatprep.subr.mxu0 0.0
      %719 = vmatpush1.msra.mxu0 0.0
      %720 = vmatprep.subr.mxu0 0.0
      %721 = vmatpush1.msra.mxu0 0.0
      %722 = vmatprep.subr.mxu0 0.0
      %723 = vmatpush1.msra.mxu0 0.0
      %724 = vmatprep.subr.mxu0 0.0
      %725 = vmatpush1.msra.mxu0 0.0
      %726 = vmatprep.subr.mxu0 0.0
      %727 = vmatpush1.msra.mxu0 0.0
      %728 = vmatprep.subr.mxu0 0.0
      %729 = vmatpush1.msra.mxu0 0.0
      %730 = vmatprep.subr.mxu0 0.0
      %731 = vmatpush1.msra.mxu0 0.0
      %732 = vmatprep.subr.mxu0 0.0
      %733 = vmatpush1.msra.mxu0 0.0
      %734 = vmatprep.subr.mxu0 0.0
      %735 = vmatpush1.msra.mxu0 0.0
      %736 = vmatprep.subr.mxu0 0.0
      %737 = vmatpush1.msra.mxu0 0.0
      %738 = vmatprep.subr.mxu0 0.0
      %739 = vmatpush1.msra.mxu0 0.0
      %740 = vmatprep.subr.mxu0 0.0
      %741 = vmatpush1.msra.mxu0 0.0
      %742 = vmatprep.mubr.f32.mxu0 0.0
      %743 = vmatmul.mubr.f32.gmra.mrb[0].mxu0 %v672
      %v744 = vpop.f32.mrb[0].mxu0
      %v745 = vadd.f32 0.0, %v744
      %v746 = vpop.f32.mrb[0].mxu0
      %747 = vdwg.mxu0
      %748 = vrot.lane.b32.xlu0 %v567, 112
      %v749 = vpop.permute.xlu0 %748
      %750 = vrot.lane.b32.xlu0 %v567, 48
      %v751 = vpop.permute.xlu0 %750
      %v752 = vsel %vm582, %v749, 0
      %v754 = vsel %vm582, %v751, 0
      %756 = vmatprep.subr.mxu0 0.0
      %757 = vmatpush1.xpose.msra.mxu0 %v754
      %758 = vmatprep.subr.mxu0 0.0
      %759 = vmatpush1.xpose.msra.mxu0 0.0
      %760 = vmatprep.subr.mxu0 0.0
      %761 = vmatpush1.xpose.msra.mxu0 0.0
      %762 = vmatprep.subr.mxu0 0.0
      %763 = vmatpush1.xpose.msra.mxu0 0.0
      %764 = vmatprep.subr.mxu0 0.0
      %765 = vmatpush1.xpose.msra.mxu0 0.0
      %766 = vmatprep.subr.mxu0 0.0
      %767 = vmatpush1.xpose.msra.mxu0 0.0
      %768 = vmatprep.subr.mxu0 0.0
      %769 = vmatpush1.xpose.msra.mxu0 0.0
      %770 = vmatprep.subr.mxu0 0.0
      %771 = vmatpush1.xpose.msra.mxu0 0.0
      %772 = vmatprep.subr.mxu0 0.0
      %773 = vmatpush1.xpose.msra.mxu0 0.0
      %774 = vmatprep.subr.mxu0 0.0
      %775 = vmatpush1.xpose.msra.mxu0 0.0
      %776 = vmatprep.subr.mxu0 0.0
      %777 = vmatpush1.xpose.msra.mxu0 0.0
      %778 = vmatprep.subr.mxu0 0.0
      %779 = vmatpush1.xpose.msra.mxu0 0.0
      %780 = vmatprep.subr.mxu0 0.0
      %781 = vmatpush1.xpose.msra.mxu0 0.0
      %782 = vmatprep.subr.mxu0 0.0
      %783 = vmatpush1.xpose.msra.mxu0 0.0
      %784 = vmatprep.subr.mxu0 0.0
      %785 = vmatpush1.xpose.msra.mxu0 0.0
      %786 = vmatprep.subr.mxu0 0.0
      %787 = vmatpush1.xpose.msra.mxu0 0.0
      %788 = vmatprep.subr.mxu0 0.0
      %789 = vmatpush1.xpose.msra.mxu0 0.0
      %790 = vmatprep.subr.mxu0 0.0
      %791 = vmatpush1.xpose.msra.mxu0 0.0
      %792 = vmatprep.subr.mxu0 0.0
      %793 = vmatpush1.xpose.msra.mxu0 0.0
      %794 = vmatprep.subr.mxu0 0.0
      %795 = vmatpush1.xpose.msra.mxu0 0.0
      %796 = vmatprep.subr.mxu0 0.0
      %797 = vmatpush1.xpose.msra.mxu0 0.0
      %798 = vmatprep.subr.mxu0 0.0
      %799 = vmatpush1.xpose.msra.mxu0 0.0
      %800 = vmatprep.subr.mxu0 0.0
      %801 = vmatpush1.xpose.msra.mxu0 0.0
      %802 = vmatprep.subr.mxu0 0.0
      %803 = vmatpush1.xpose.msra.mxu0 0.0
      %804 = vmatprep.subr.mxu0 0.0
      %805 = vmatpush1.xpose.msra.mxu0 0.0
      %806 = vmatprep.subr.mxu0 0.0
      %807 = vmatpush1.xpose.msra.mxu0 0.0
      %808 = vmatprep.subr.mxu0 0.0
      %809 = vmatpush1.xpose.msra.mxu0 0.0
      %810 = vmatprep.subr.mxu0 0.0
      %811 = vmatpush1.xpose.msra.mxu0 0.0
      %812 = vmatprep.subr.mxu0 0.0
      %813 = vmatpush1.xpose.msra.mxu0 0.0
      %814 = vmatprep.subr.mxu0 0.0
      %815 = vmatpush1.xpose.msra.mxu0 0.0
      %816 = vmatprep.subr.mxu0 0.0
      %817 = vmatpush1.xpose.msra.mxu0 0.0
      %818 = vmatprep.subr.mxu0 0.0
      %819 = vmatpush1.xpose.msra.mxu0 0.0
      %820 = vmatprep.mubr.f32.mxu0 0.0
      %821 = vmatmul.mubr.f32.gmra.mrb[0].mxu0 %v752
      %v822 = vpop.f32.mrb[0].mxu0
      %v823 = vadd.f32 0.0, %v822
      %v824 = vpop.f32.mrb[0].mxu0
      %825 = vdwg.mxu0
      %v826 = vmul.f32 %v823, 0.25
      %v827 = vsel %vm658, %v826, -inf
      %828 = vmax.xlane.f32.xlu0 %v827
      %v829 = vpop.xlane.xlu0 %828
      %v830 = vsub.f32 %v826, %v829
      %v831 = vmul.f32 %v830, 1.442695
      %v832 = vpow.pop %v831
      %v833 = vsel %vm658, %v832, 0.0
      %834 = vadd.xlane.f32.xlu0 %v833
      %v835 = vpop.xlane.xlu0 %834
      %v836 = vrcp.pop %v835
      %v837 = vmul.f32 %v832, %v836
      %838 = vrot.lane.b32.xlu0 %v569, 112
      %v839 = vpop.permute.xlu0 %838
      %v841 = vsel %vm670, %v837, 0
      %v843 = vsel %vm674, %v839, 0
      %845 = vmatprep.subr.mxu0 0.0
      %846 = vmatpush1.msra.mxu0 %v843
      %847 = vmatprep.subr.mxu0 0.0
      %848 = vmatpush1.msra.mxu0 0.0
      %849 = vmatprep.subr.mxu0 0.0
      %850 = vmatpush1.msra.mxu0 0.0
      %851 = vmatprep.subr.mxu0 0.0
      %852 = vmatpush1.msra.mxu0 0.0
      %853 = vmatprep.subr.mxu0 0.0
      %854 = vmatpush1.msra.mxu0 0.0
      %855 = vmatprep.subr.mxu0 0.0
      %856 = vmatpush1.msra.mxu0 0.0
      %857 = vmatprep.subr.mxu0 0.0
      %858 = vmatpush1.msra.mxu0 0.0
      %859 = vmatprep.subr.mxu0 0.0
      %860 = vmatpush1.msra.mxu0 0.0
      %861 = vmatprep.subr.mxu0 0.0
      %862 = vmatpush1.msra.mxu0 0.0
      %863 = vmatprep.subr.mxu0 0.0
      %864 = vmatpush1.msra.mxu0 0.0
      %865 = vmatprep.subr.mxu0 0.0
      %866 = vmatpush1.msra.mxu0 0.0
      %867 = vmatprep.subr.mxu0 0.0
      %868 = vmatpush1.msra.mxu0 0.0
      %869 = vmatprep.subr.mxu0 0.0
      %870 = vmatpush1.msra.mxu0 0.0
      %871 = vmatprep.subr.mxu0 0.0
      %872 = vmatpush1.msra.mxu0 0.0
      %873 = vmatprep.subr.mxu0 0.0
      %874 = vmatpush1.msra.mxu0 0.0
      %875 = vmatprep.subr.mxu0 0.0
      %876 = vmatpush1.msra.mxu0 0.0
      %877 = vmatprep.subr.mxu0 0.0
      %878 = vmatpush1.msra.mxu0 0.0
      %879 = vmatprep.subr.mxu0 0.0
      %880 = vmatpush1.msra.mxu0 0.0
      %881 = vmatprep.subr.mxu0 0.0
      %882 = vmatpush1.msra.mxu0 0.0
      %883 = vmatprep.subr.mxu0 0.0
      %884 = vmatpush1.msra.mxu0 0.0
      %885 = vmatprep.subr.mxu0 0.0
      %886 = vmatpush1.msra.mxu0 0.0
      %887 = vmatprep.subr.mxu0 0.0
      %888 = vmatpush1.msra.mxu0 0.0
      %889 = vmatprep.subr.mxu0 0.0
      %890 = vmatpush1.msra.mxu0 0.0
      %891 = vmatprep.subr.mxu0 0.0
      %892 = vmatpush1.msra.mxu0 0.0
      %893 = vmatprep.subr.mxu0 0.0
      %894 = vmatpush1.msra.mxu0 0.0
      %895 = vmatprep.subr.mxu0 0.0
      %896 = vmatpush1.msra.mxu0 0.0
      %897 = vmatprep.subr.mxu0 0.0
      %898 = vmatpush1.msra.mxu0 0.0
      %899 = vmatprep.subr.mxu0 0.0
      %900 = vmatpush1.msra.mxu0 0.0
      %901 = vmatprep.subr.mxu0 0.0
      %902 = vmatpush1.msra.mxu0 0.0
      %903 = vmatprep.subr.mxu0 0.0
      %904 = vmatpush1.msra.mxu0 0.0
      %905 = vmatprep.subr.mxu0 0.0
      %906 = vmatpush1.msra.mxu0 0.0
      %907 = vmatprep.subr.mxu0 0.0
      %908 = vmatpush1.msra.mxu0 0.0
      %909 = vmatprep.mubr.f32.mxu0 0.0
      %910 = vmatmul.mubr.f32.gmra.mrb[0].mxu0 %v841
      %v911 = vpop.f32.mrb[0].mxu0
      %v912 = vadd.f32 0.0, %v911
      %v913 = vpop.f32.mrb[0].mxu0
      %914 = vdwg.mxu0
      %v916 = vsel %vm582, %v912, 0
      %918 = vmatprep.subr.mxu0 0.0
      %919 = vmatpush1.msra.mxu0 %v573
      %920 = vmatprep.subr.mxu0 0.0
      %921 = vmatpush1.msra.mxu0 %v574
      %922 = vmatprep.subr.mxu0 0.0
      %923 = vmatpush1.msra.mxu0 0.0
      %924 = vmatprep.subr.mxu0 0.0
      %925 = vmatpush1.msra.mxu0 0.0
      %926 = vmatprep.subr.mxu0 0.0
      %927 = vmatpush1.msra.mxu0 0.0
      %928 = vmatprep.subr.mxu0 0.0
      %929 = vmatpush1.msra.mxu0 0.0
      %930 = vmatprep.subr.mxu0 0.0
      %931 = vmatpush1.msra.mxu0 0.0
      %932 = vmatprep.subr.mxu0 0.0
      %933 = vmatpush1.msra.mxu0 0.0
      %934 = vmatprep.subr.mxu0 0.0
      %935 = vmatpush1.msra.mxu0 0.0
      %936 = vmatprep.subr.mxu0 0.0
      %937 = vmatpush1.msra.mxu0 0.0
      %938 = vmatprep.subr.mxu0 0.0
      %939 = vmatpush1.msra.mxu0 0.0
      %940 = vmatprep.subr.mxu0 0.0
      %941 = vmatpush1.msra.mxu0 0.0
      %942 = vmatprep.subr.mxu0 0.0
      %943 = vmatpush1.msra.mxu0 0.0
      %944 = vmatprep.subr.mxu0 0.0
      %945 = vmatpush1.msra.mxu0 0.0
      %946 = vmatprep.subr.mxu0 0.0
      %947 = vmatpush1.msra.mxu0 0.0
      %948 = vmatprep.subr.mxu0 0.0
      %949 = vmatpush1.msra.mxu0 0.0
      %950 = vmatprep.subr.mxu0 0.0
      %951 = vmatpush1.msra.mxu0 0.0
      %952 = vmatprep.subr.mxu0 0.0
      %953 = vmatpush1.msra.mxu0 0.0
      %954 = vmatprep.subr.mxu0 0.0
      %955 = vmatpush1.msra.mxu0 0.0
      %956 = vmatprep.subr.mxu0 0.0
      %957 = vmatpush1.msra.mxu0 0.0
      %958 = vmatprep.subr.mxu0 0.0
      %959 = vmatpush1.msra.mxu0 0.0
      %960 = vmatprep.subr.mxu0 0.0
      %961 = vmatpush1.msra.mxu0 0.0
      %962 = vmatprep.subr.mxu0 0.0
      %963 = vmatpush1.msra.mxu0 0.0
      %964 = vmatprep.subr.mxu0 0.0
      %965 = vmatpush1.msra.mxu0 0.0
      %966 = vmatprep.subr.mxu0 0.0
      %967 = vmatpush1.msra.mxu0 0.0
      %968 = vmatprep.subr.mxu0 0.0
      %969 = vmatpush1.msra.mxu0 0.0
      %970 = vmatprep.subr.mxu0 0.0
      %971 = vmatpush1.msra.mxu0 0.0
      %972 = vmatprep.subr.mxu0 0.0
      %973 = vmatpush1.msra.mxu0 0.0
      %974 = vmatprep.subr.mxu0 0.0
      %975 = vmatpush1.msra.mxu0 0.0
      %976 = vmatprep.subr.mxu0 0.0
      %977 = vmatpush1.msra.mxu0 0.0
      %978 = vmatprep.subr.mxu0 0.0
      %979 = vmatpush1.msra.mxu0 0.0
      %980 = vmatprep.subr.mxu0 0.0
      %981 = vmatpush1.msra.mxu0 0.0
      %982 = vmatprep.mubr.f32.mxu0 0.0
      %983 = vmatmul.mubr.f32.gmra.mrb[0].mxu0 %v916
      %v984 = vpop.f32.mrb[0].mxu0
      %v985 = vadd.f32 0.0, %v984
      %v986 = vpop.f32.mrb[0].mxu0
      %987 = vdwg.mxu0
      %v989 = vsel %vm582, %v745, 0
      %991 = vmatprep.subr.mxu0 0.0
      %992 = vmatpush1.msra.mxu0 %v571
      %993 = vmatprep.subr.mxu0 0.0
      %994 = vmatpush1.msra.mxu0 %v572
      %995 = vmatprep.subr.mxu0 0.0
      %996 = vmatpush1.msra.mxu0 0.0
      %997 = vmatprep.subr.mxu0 0.0
      %998 = vmatpush1.msra.mxu0 0.0
      %999 = vmatprep.subr.mxu0 0.0
      %1000 = vmatpush1.msra.mxu0 0.0
      %1001 = vmatprep.subr.mxu0 0.0
      %1002 = vmatpush1.msra.mxu0 0.0
      %1003 = vmatprep.subr.mxu0 0.0
      %1004 = vmatpush1.msra.mxu0 0.0
      %1005 = vmatprep.subr.mxu0 0.0
      %1006 = vmatpush1.msra.mxu0 0.0
      %1007 = vmatprep.subr.mxu0 0.0
      %1008 = vmatpush1.msra.mxu0 0.0
      %1009 = vmatprep.subr.mxu0 0.0
      %1010 = vmatpush1.msra.mxu0 0.0
      %1011 = vmatprep.subr.mxu0 0.0
      %1012 = vmatpush1.msra.mxu0 0.0
      %1013 = vmatprep.subr.mxu0 0.0
      %1014 = vmatpush1.msra.mxu0 0.0
      %1015 = vmatprep.subr.mxu0 0.0
      %1016 = vmatpush1.msra.mxu0 0.0
      %1017 = vmatprep.subr.mxu0 0.0
      %1018 = vmatpush1.msra.mxu0 0.0
      %1019 = vmatprep.subr.mxu0 0.0
      %1020 = vmatpush1.msra.mxu0 0.0
      %1021 = vmatprep.subr.mxu0 0.0
      %1022 = vmatpush1.msra.mxu0 0.0
      %1023 = vmatprep.subr.mxu0 0.0
      %1024 = vmatpush1.msra.mxu0 0.0
      %1025 = vmatprep.subr.mxu0 0.0
      %1026 = vmatpush1.msra.mxu0 0.0
      %1027 = vmatprep.subr.mxu0 0.0
      %1028 = vmatpush1.msra.mxu0 0.0
      %1029 = vmatprep.subr.mxu0 0.0
      %1030 = vmatpush1.msra.mxu0 0.0
      %1031 = vmatprep.subr.mxu0 0.0
      %1032 = vmatpush1.msra.mxu0 0.0
      %1033 = vmatprep.subr.mxu0 0.0
      %1034 = vmatpush1.msra.mxu0 0.0
      %1035 = vmatprep.subr.mxu0 0.0
      %1036 = vmatpush1.msra.mxu0 0.0
      %1037 = vmatprep.subr.mxu0 0.0
      %1038 = vmatpush1.msra.mxu0 0.0
      %1039 = vmatprep.subr.mxu0 0.0
      %1040 = vmatpush1.msra.mxu0 0.0
      %1041 = vmatprep.subr.mxu0 0.0
      %1042 = vmatpush1.msra.mxu0 0.0
      %1043 = vmatprep.subr.mxu0 0.0
      %1044 = vmatpush1.msra.mxu0 0.0
      %1045 = vmatprep.subr.mxu0 0.0
      %1046 = vmatpush1.msra.mxu0 0.0
      %1047 = vmatprep.subr.mxu0 0.0
      %1048 = vmatpush1.msra.mxu0 0.0
      %1049 = vmatprep.subr.mxu0 0.0
      %1050 = vmatpush1.msra.mxu0 0.0
      %1051 = vmatprep.subr.mxu0 0.0
      %1052 = vmatpush1.msra.mxu0 0.0
      %1053 = vmatprep.subr.mxu0 0.0
      %1054 = vmatpush1.msra.mxu0 0.0
      %1055 = vmatprep.mubr.f32.mxu0 0.0
      %1056 = vmatmul.mubr.f32.gmra.mrb[0].mxu0 %v989
      %v1057 = vpop.f32.mrb[0].mxu0
      %v1058 = vadd.f32 %v985, %v1057
      %v1059 = vpop.f32.mrb[0].mxu0
      %1060 = vdwg.mxu0
      %1061 = vrot.lane.b32.xlu0 %v567, 96
      %v1062 = vpop.permute.xlu0 %1061
      %1063 = vrot.lane.b32.xlu0 %v567, 32
      %v1064 = vpop.permute.xlu0 %1063
      %v1065 = vsel %vm582, %v1062, 0
      %v1067 = vsel %vm582, %v1064, 0
      %1069 = vmatprep.subr.mxu0 0.0
      %1070 = vmatpush1.xpose.msra.mxu0 %v1067
      %1071 = vmatprep.subr.mxu0 0.0
      %1072 = vmatpush1.xpose.msra.mxu0 0.0
      %1073 = vmatprep.subr.mxu0 0.0
      %1074 = vmatpush1.xpose.msra.mxu0 0.0
      %1075 = vmatprep.subr.mxu0 0.0
      %1076 = vmatpush1.xpose.msra.mxu0 0.0
      %1077 = vmatprep.subr.mxu0 0.0
      %1078 = vmatpush1.xpose.msra.mxu0 0.0
      %1079 = vmatprep.subr.mxu0 0.0
      %1080 = vmatpush1.xpose.msra.mxu0 0.0
      %1081 = vmatprep.subr.mxu0 0.0
      %1082 = vmatpush1.xpose.msra.mxu0 0.0
      %1083 = vmatprep.subr.mxu0 0.0
      %1084 = vmatpush1.xpose.msra.mxu0 0.0
      %1085 = vmatprep.subr.mxu0 0.0
      %1086 = vmatpush1.xpose.msra.mxu0 0.0
      %1087 = vmatprep.subr.mxu0 0.0
      %1088 = vmatpush1.xpose.msra.mxu0 0.0
      %1089 = vmatprep.subr.mxu0 0.0
      %1090 = vmatpush1.xpose.msra.mxu0 0.0
      %1091 = vmatprep.subr.mxu0 0.0
      %1092 = vmatpush1.xpose.msra.mxu0 0.0
      %1093 = vmatprep.subr.mxu0 0.0
      %1094 = vmatpush1.xpose.msra.mxu0 0.0
      %1095 = vmatprep.subr.mxu0 0.0
      %1096 = vmatpush1.xpose.msra.mxu0 0.0
      %1097 = vmatprep.subr.mxu0 0.0
      %1098 = vmatpush1.xpose.msra.mxu0 0.0
      %1099 = vmatprep.subr.mxu0 0.0
      %1100 = vmatpush1.xpose.msra.mxu0 0.0
      %1101 = vmatprep.subr.mxu0 0.0
      %1102 = vmatpush1.xpose.msra.mxu0 0.0
      %1103 = vmatprep.subr.mxu0 0.0
      %1104 = vmatpush1.xpose.msra.mxu0 0.0
      %1105 = vmatprep.subr.mxu0 0.0
      %1106 = vmatpush1.xpose.msra.mxu0 0.0
      %1107 = vmatprep.subr.mxu0 0.0
      %1108 = vmatpush1.xpose.msra.mxu0 0.0
      %1109 = vmatprep.subr.mxu0 0.0
      %1110 = vmatpush1.xpose.msra.mxu0 0.0
      %1111 = vmatprep.subr.mxu0 0.0
      %1112 = vmatpush1.xpose.msra.mxu0 0.0
      %1113 = vmatprep.subr.mxu0 0.0
      %1114 = vmatpush1.xpose.msra.mxu0 0.0
      %1115 = vmatprep.subr.mxu0 0.0
      %1116 = vmatpush1.xpose.msra.mxu0 0.0
      %1117 = vmatprep.subr.mxu0 0.0
      %1118 = vmatpush1.xpose.msra.mxu0 0.0
      %1119 = vmatprep.subr.mxu0 0.0
      %1120 = vmatpush1.xpose.msra.mxu0 0.0
      %1121 = vmatprep.subr.mxu0 0.0
      %1122 = vmatpush1.xpose.msra.mxu0 0.0
      %1123 = vmatprep.subr.mxu0 0.0
      %1124 = vmatpush1.xpose.msra.mxu0 0.0
      %1125 = vmatprep.subr.mxu0 0.0
      %1126 = vmatpush1.xpose.msra.mxu0 0.0
      %1127 = vmatprep.subr.mxu0 0.0
      %1128 = vmatpush1.xpose.msra.mxu0 0.0
      %1129 = vmatprep.subr.mxu0 0.0
      %1130 = vmatpush1.xpose.msra.mxu0 0.0
      %1131 = vmatprep.subr.mxu0 0.0
      %1132 = vmatpush1.xpose.msra.mxu0 0.0
      %1133 = vmatprep.mubr.f32.mxu0 0.0
      %1134 = vmatmul.mubr.f32.gmra.mrb[0].mxu0 %v1065
      %v1135 = vpop.f32.mrb[0].mxu0
      %v1136 = vadd.f32 0.0, %v1135
      %v1137 = vpop.f32.mrb[0].mxu0
      %1138 = vdwg.mxu0
      %v1139 = vmul.f32 %v1136, 0.25
      %v1140 = vsel %vm658, %v1139, -inf
      %1141 = vmax.xlane.f32.xlu0 %v1140
      %v1142 = vpop.xlane.xlu0 %1141
      %v1143 = vsub.f32 %v1139, %v1142
      %v1144 = vmul.f32 %v1143, 1.442695
      %v1145 = vpow.pop %v1144
      %v1146 = vsel %vm658, %v1145, 0.0
      %1147 = vadd.xlane.f32.xlu0 %v1146
      %v1148 = vpop.xlane.xlu0 %1147
      %v1149 = vrcp.pop %v1148
      %v1150 = vmul.f32 %v1145, %v1149
      %1151 = vrot.lane.b32.xlu0 %v569, 96
      %v1152 = vpop.permute.xlu0 %1151
      %v1154 = vsel %vm670, %v1150, 0
      %v1156 = vsel %vm674, %v1152, 0
      %1158 = vmatprep.subr.mxu0 0.0
      %1159 = vmatpush1.msra.mxu0 %v1156
      %1160 = vmatprep.subr.mxu0 0.0
      %1161 = vmatpush1.msra.mxu0 0.0
      %1162 = vmatprep.subr.mxu0 0.0
      %1163 = vmatpush1.msra.mxu0 0.0
      %1164 = vmatprep.subr.mxu0 0.0
      %1165 = vmatpush1.msra.mxu0 0.0
      %1166 = vmatprep.subr.mxu0 0.0
      %1167 = vmatpush1.msra.mxu0 0.0
      %1168 = vmatprep.subr.mxu0 0.0
      %1169 = vmatpush1.msra.mxu0 0.0
      %1170 = vmatprep.subr.mxu0 0.0
      %1171 = vmatpush1.msra.mxu0 0.0
      %1172 = vmatprep.subr.mxu0 0.0
      %1173 = vmatpush1.msra.mxu0 0.0
      %1174 = vmatprep.subr.mxu0 0.0
      %1175 = vmatpush1.msra.mxu0 0.0
      %1176 = vmatprep.subr.mxu0 0.0
      %1177 = vmatpush1.msra.mxu0 0.0
      %1178 = vmatprep.subr.mxu0 0.0
      %1179 = vmatpush1.msra.mxu0 0.0
      %1180 = vmatprep.subr.mxu0 0.0
      %1181 = vmatpush1.msra.mxu0 0.0
      %1182 = vmatprep.subr.mxu0 0.0
      %1183 = vmatpush1.msra.mxu0 0.0
      %1184 = vmatprep.subr.mxu0 0.0
      %1185 = vmatpush1.msra.mxu0 0.0
      %1186 = vmatprep.subr.mxu0 0.0
      %1187 = vmatpush1.msra.mxu0 0.0
      %1188 = vmatprep.subr.mxu0 0.0
      %1189 = vmatpush1.msra.mxu0 0.0
      %1190 = vmatprep.subr.mxu0 0.0
      %1191 = vmatpush1.msra.mxu0 0.0
      %1192 = vmatprep.subr.mxu0 0.0
      %1193 = vmatpush1.msra.mxu0 0.0
      %1194 = vmatprep.subr.mxu0 0.0
      %1195 = vmatpush1.msra.mxu0 0.0
      %1196 = vmatprep.subr.mxu0 0.0
      %1197 = vmatpush1.msra.mxu0 0.0
      %1198 = vmatprep.subr.mxu0 0.0
      %1199 = vmatpush1.msra.mxu0 0.0
      %1200 = vmatprep.subr.mxu0 0.0
      %1201 = vmatpush1.msra.mxu0 0.0
      %1202 = vmatprep.subr.mxu0 0.0
      %1203 = vmatpush1.msra.mxu0 0.0
      %1204 = vmatprep.subr.mxu0 0.0
      %1205 = vmatpush1.msra.mxu0 0.0
      %1206 = vmatprep.subr.mxu0 0.0
      %1207 = vmatpush1.msra.mxu0 0.0
      %1208 = vmatprep.subr.mxu0 0.0
      %1209 = vmatpush1.msra.mxu0 0.0
      %1210 = vmatprep.subr.mxu0 0.0
      %1211 = vmatpush1.msra.mxu0 0.0
      %1212 = vmatprep.subr.mxu0 0.0
      %1213 = vmatpush1.msra.mxu0 0.0
      %1214 = vmatprep.subr.mxu0 0.0
      %1215 = vmatpush1.msra.mxu0 0.0
      %1216 = vmatprep.subr.mxu0 0.0
      %1217 = vmatpush1.msra.mxu0 0.0
      %1218 = vmatprep.subr.mxu0 0.0
      %1219 = vmatpush1.msra.mxu0 0.0
      %1220 = vmatprep.subr.mxu0 0.0
      %1221 = vmatpush1.msra.mxu0 0.0
      %1222 = vmatprep.mubr.f32.mxu0 0.0
      %1223 = vmatmul.mubr.f32.gmra.mrb[0].mxu0 %v1154
      %v1224 = vpop.f32.mrb[0].mxu0
      %v1225 = vadd.f32 0.0, %v1224
      %v1226 = vpop.f32.mrb[0].mxu0
      %1227 = vdwg.mxu0
      %v1229 = vsel %vm582, %v1225, 0
      %1231 = vmatprep.subr.mxu0 0.0
      %1232 = vmatpush1.msra.mxu0 %v575
      %1233 = vmatprep.subr.mxu0 0.0
      %1234 = vmatpush1.msra.mxu0 %v576
      %1235 = vmatprep.subr.mxu0 0.0
      %1236 = vmatpush1.msra.mxu0 0.0
      %1237 = vmatprep.subr.mxu0 0.0
      %1238 = vmatpush1.msra.mxu0 0.0
      %1239 = vmatprep.subr.mxu0 0.0
      %1240 = vmatpush1.msra.mxu0 0.0
      %1241 = vmatprep.subr.mxu0 0.0
      %1242 = vmatpush1.msra.mxu0 0.0
      %1243 = vmatprep.subr.mxu0 0.0
      %1244 = vmatpush1.msra.mxu0 0.0
      %1245 = vmatprep.subr.mxu0 0.0
      %1246 = vmatpush1.msra.mxu0 0.0
      %1247 = vmatprep.subr.mxu0 0.0
      %1248 = vmatpush1.msra.mxu0 0.0
      %1249 = vmatprep.subr.mxu0 0.0
      %1250 = vmatpush1.msra.mxu0 0.0
      %1251 = vmatprep.subr.mxu0 0.0
      %1252 = vmatpush1.msra.mxu0 0.0
      %1253 = vmatprep.subr.mxu0 0.0
      %1254 = vmatpush1.msra.mxu0 0.0
      %1255 = vmatprep.subr.mxu0 0.0
      %1256 = vmatpush1.msra.mxu0 0.0
      %1257 = vmatprep.subr.mxu0 0.0
      %1258 = vmatpush1.msra.mxu0 0.0
      %1259 = vmatprep.subr.mxu0 0.0
      %1260 = vmatpush1.msra.mxu0 0.0
      %1261 = vmatprep.subr.mxu0 0.0
      %1262 = vmatpush1.msra.mxu0 0.0
      %1263 = vmatprep.subr.mxu0 0.0
      %1264 = vmatpush1.msra.mxu0 0.0
      %1265 = vmatprep.subr.mxu0 0.0
      %1266 = vmatpush1.msra.mxu0 0.0
      %1267 = vmatprep.subr.mxu0 0.0
      %1268 = vmatpush1.msra.mxu0 0.0
      %1269 = vmatprep.subr.mxu0 0.0
      %1270 = vmatpush1.msra.mxu0 0.0
      %1271 = vmatprep.subr.mxu0 0.0
      %1272 = vmatpush1.msra.mxu0 0.0
      %1273 = vmatprep.subr.mxu0 0.0
      %1274 = vmatpush1.msra.mxu0 0.0
      %1275 = vmatprep.subr.mxu0 0.0
      %1276 = vmatpush1.msra.mxu0 0.0
      %1277 = vmatprep.subr.mxu0 0.0
      %1278 = vmatpush1.msra.mxu0 0.0
      %1279 = vmatprep.subr.mxu0 0.0
      %1280 = vmatpush1.msra.mxu0 0.0
      %1281 = vmatprep.subr.mxu0 0.0
      %1282 = vmatpush1.msra.mxu0 0.0
      %1283 = vmatprep.subr.mxu0 0.0
      %1284 = vmatpush1.msra.mxu0 0.0
      %1285 = vmatprep.subr.mxu0 0.0
      %1286 = vmatpush1.msra.mxu0 0.0
      %1287 = vmatprep.subr.mxu0 0.0
      %1288 = vmatpush1.msra.mxu0 0.0
      %1289 = vmatprep.subr.mxu0 0.0
      %1290 = vmatpush1.msra.mxu0 0.0
      %1291 = vmatprep.subr.mxu0 0.0
      %1292 = vmatpush1.msra.mxu0 0.0
      %1293 = vmatprep.subr.mxu0 0.0
      %1294 = vmatpush1.msra.mxu0 0.0
      %1295 = vmatprep.mubr.f32.mxu0 0.0
      %1296 = vmatmul.mubr.f32.gmra.mrb[0].mxu0 %v1229
      %v1297 = vpop.f32.mrb[0].mxu0
      %v1298 = vadd.f32 0.0, %v1297
      %v1299 = vpop.f32.mrb[0].mxu0
      %1300 = vdwg.mxu0
      %v1301 = vadd.f32 %v1058, %v1298
      %1302 = vrot.lane.b32.xlu0 %v567, 80
      %v1303 = vpop.permute.xlu0 %1302
      %1304 = vrot.lane.b32.xlu0 %v567, 16
      %v1305 = vpop.permute.xlu0 %1304
      %v1306 = vsel %vm582, %v1303, 0
      %v1308 = vsel %vm582, %v1305, 0
      %1310 = vmatprep.subr.mxu0 0.0
      %1311 = vmatpush1.xpose.msra.mxu0 %v1308
      %1312 = vmatprep.subr.mxu0 0.0
      %1313 = vmatpush1.xpose.msra.mxu0 0.0
      %1314 = vmatprep.subr.mxu0 0.0
      %1315 = vmatpush1.xpose.msra.mxu0 0.0
      %1316 = vmatprep.subr.mxu0 0.0
      %1317 = vmatpush1.xpose.msra.mxu0 0.0
      %1318 = vmatprep.subr.mxu0 0.0
      %1319 = vmatpush1.xpose.msra.mxu0 0.0
      %1320 = vmatprep.subr.mxu0 0.0
      %1321 = vmatpush1.xpose.msra.mxu0 0.0
      %1322 = vmatprep.subr.mxu0 0.0
      %1323 = vmatpush1.xpose.msra.mxu0 0.0
      %1324 = vmatprep.subr.mxu0 0.0
      %1325 = vmatpush1.xpose.msra.mxu0 0.0
      %1326 = vmatprep.subr.mxu0 0.0
      %1327 = vmatpush1.xpose.msra.mxu0 0.0
      %1328 = vmatprep.subr.mxu0 0.0
      %1329 = vmatpush1.xpose.msra.mxu0 0.0
      %1330 = vmatprep.subr.mxu0 0.0
      %1331 = vmatpush1.xpose.msra.mxu0 0.0
      %1332 = vmatprep.subr.mxu0 0.0
      %1333 = vmatpush1.xpose.msra.mxu0 0.0
      %1334 = vmatprep.subr.mxu0 0.0
      %1335 = vmatpush1.xpose.msra.mxu0 0.0
      %1336 = vmatprep.subr.mxu0 0.0
      %1337 = vmatpush1.xpose.msra.mxu0 0.0
      %1338 = vmatprep.subr.mxu0 0.0
      %1339 = vmatpush1.xpose.msra.mxu0 0.0
      %1340 = vmatprep.subr.mxu0 0.0
      %1341 = vmatpush1.xpose.msra.mxu0 0.0
      %1342 = vmatprep.subr.mxu0 0.0
      %1343 = vmatpush1.xpose.msra.mxu0 0.0
      %1344 = vmatprep.subr.mxu0 0.0
      %1345 = vmatpush1.xpose.msra.mxu0 0.0
      %1346 = vmatprep.subr.mxu0 0.0
      %1347 = vmatpush1.xpose.msra.mxu0 0.0
      %1348 = vmatprep.subr.mxu0 0.0
      %1349 = vmatpush1.xpose.msra.mxu0 0.0
      %1350 = vmatprep.subr.mxu0 0.0
      %1351 = vmatpush1.xpose.msra.mxu0 0.0
      %1352 = vmatprep.subr.mxu0 0.0
      %1353 = vmatpush1.xpose.msra.mxu0 0.0
      %1354 = vmatprep.subr.mxu0 0.0
      %1355 = vmatpush1.xpose.msra.mxu0 0.0
      %1356 = vmatprep.subr.mxu0 0.0
      %1357 = vmatpush1.xpose.msra.mxu0 0.0
      %1358 = vmatprep.subr.mxu0 0.0
      %1359 = vmatpush1.xpose.msra.mxu0 0.0
      %1360 = vmatprep.subr.mxu0 0.0
      %1361 = vmatpush1.xpose.msra.mxu0 0.0
      %1362 = vmatprep.subr.mxu0 0.0
      %1363 = vmatpush1.xpose.msra.mxu0 0.0
      %1364 = vmatprep.subr.mxu0 0.0
      %1365 = vmatpush1.xpose.msra.mxu0 0.0
      %1366 = vmatprep.subr.mxu0 0.0
      %1367 = vmatpush1.xpose.msra.mxu0 0.0
      %1368 = vmatprep.subr.mxu0 0.0
      %1369 = vmatpush1.xpose.msra.mxu0 0.0
      %1370 = vmatprep.subr.mxu0 0.0
      %1371 = vmatpush1.xpose.msra.mxu0 0.0
      %1372 = vmatprep.subr.mxu0 0.0
      %1373 = vmatpush1.xpose.msra.mxu0 0.0
      %1374 = vmatprep.mubr.f32.mxu0 0.0
      %1375 = vmatmul.mubr.f32.gmra.mrb[0].mxu0 %v1306
      %v1376 = vpop.f32.mrb[0].mxu0
      %v1377 = vadd.f32 0.0, %v1376
      %v1378 = vpop.f32.mrb[0].mxu0
      %1379 = vdwg.mxu0
      %v1380 = vmul.f32 %v1377, 0.25
      %v1381 = vsel %vm658, %v1380, -inf
      %1382 = vmax.xlane.f32.xlu0 %v1381
      %v1383 = vpop.xlane.xlu0 %1382
      %v1384 = vsub.f32 %v1380, %v1383
      %v1385 = vmul.f32 %v1384, 1.442695
      %v1386 = vpow.pop %v1385
      %v1387 = vsel %vm658, %v1386, 0.0
      %1388 = vadd.xlane.f32.xlu0 %v1387
      %v1389 = vpop.xlane.xlu0 %1388
      %v1390 = vrcp.pop %v1389
      %v1391 = vmul.f32 %v1386, %v1390
      %1392 = vrot.lane.b32.xlu0 %v569, 80
      %v1393 = vpop.permute.xlu0 %1392
      %v1395 = vsel %vm670, %v1391, 0
      %v1397 = vsel %vm674, %v1393, 0
      %1399 = vmatprep.subr.mxu0 0.0
      %1400 = vmatpush1.msra.mxu0 %v1397
      %1401 = vmatprep.subr.mxu0 0.0
      %1402 = vmatpush1.msra.mxu0 0.0
      %1403 = vmatprep.subr.mxu0 0.0
      %1404 = vmatpush1.msra.mxu0 0.0
      %1405 = vmatprep.subr.mxu0 0.0
      %1406 = vmatpush1.msra.mxu0 0.0
      %1407 = vmatprep.subr.mxu0 0.0
      %1408 = vmatpush1.msra.mxu0 0.0
      %1409 = vmatprep.subr.mxu0 0.0
      %1410 = vmatpush1.msra.mxu0 0.0
      %1411 = vmatprep.subr.mxu0 0.0
      %1412 = vmatpush1.msra.mxu0 0.0
      %1413 = vmatprep.subr.mxu0 0.0
      %1414 = vmatpush1.msra.mxu0 0.0
      %1415 = vmatprep.subr.mxu0 0.0
      %1416 = vmatpush1.msra.mxu0 0.0
      %1417 = vmatprep.subr.mxu0 0.0
      %1418 = vmatpush1.msra.mxu0 0.0
      %1419 = vmatprep.subr.mxu0 0.0
      %1420 = vmatpush1.msra.mxu0 0.0
      %1421 = vmatprep.subr.mxu0 0.0
      %1422 = vmatpush1.msra.mxu0 0.0
      %1423 = vmatprep.subr.mxu0 0.0
      %1424 = vmatpush1.msra.mxu0 0.0
      %1425 = vmatprep.subr.mxu0 0.0
      %1426 = vmatpush1.msra.mxu0 0.0
      %1427 = vmatprep.subr.mxu0 0.0
      %1428 = vmatpush1.msra.mxu0 0.0
      %1429 = vmatprep.subr.mxu0 0.0
      %1430 = vmatpush1.msra.mxu0 0.0
      %1431 = vmatprep.subr.mxu0 0.0
      %1432 = vmatpush1.msra.mxu0 0.0
      %1433 = vmatprep.subr.mxu0 0.0
      %1434 = vmatpush1.msra.mxu0 0.0
      %1435 = vmatprep.subr.mxu0 0.0
      %1436 = vmatpush1.msra.mxu0 0.0
      %1437 = vmatprep.subr.mxu0 0.0
      %1438 = vmatpush1.msra.mxu0 0.0
      %1439 = vmatprep.subr.mxu0 0.0
      %1440 = vmatpush1.msra.mxu0 0.0
      %1441 = vmatprep.subr.mxu0 0.0
      %1442 = vmatpush1.msra.mxu0 0.0
      %1443 = vmatprep.subr.mxu0 0.0
      %1444 = vmatpush1.msra.mxu0 0.0
      %1445 = vmatprep.subr.mxu0 0.0
      %1446 = vmatpush1.msra.mxu0 0.0
      %1447 = vmatprep.subr.mxu0 0.0
      %1448 = vmatpush1.msra.mxu0 0.0
      %1449 = vmatprep.subr.mxu0 0.0
      %1450 = vmatpush1.msra.mxu0 0.0
      %1451 = vmatprep.subr.mxu0 0.0
      %1452 = vmatpush1.msra.mxu0 0.0
      %1453 = vmatprep.subr.mxu0 0.0
      %1454 = vmatpush1.msra.mxu0 0.0
      %1455 = vmatprep.subr.mxu0 0.0
      %1456 = vmatpush1.msra.mxu0 0.0
      %1457 = vmatprep.subr.mxu0 0.0
      %1458 = vmatpush1.msra.mxu0 0.0
      %1459 = vmatprep.subr.mxu0 0.0
      %1460 = vmatpush1.msra.mxu0 0.0
      %1461 = vmatprep.subr.mxu0 0.0
      %1462 = vmatpush1.msra.mxu0 0.0
      %1463 = vmatprep.mubr.f32.mxu0 0.0
      %1464 = vmatmul.mubr.f32.gmra.mrb[0].mxu0 %v1395
      %v1465 = vpop.f32.mrb[0].mxu0
      %v1466 = vadd.f32 0.0, %v1465
      %v1467 = vpop.f32.mrb[0].mxu0
      %1468 = vdwg.mxu0
      %v1470 = vsel %vm582, %v1466, 0
      %1472 = vmatprep.subr.mxu0 0.0
      %1473 = vmatpush1.msra.mxu0 %v577
      %1474 = vmatprep.subr.mxu0 0.0
      %1475 = vmatpush1.msra.mxu0 %v578
      %1476 = vmatprep.subr.mxu0 0.0
      %1477 = vmatpush1.msra.mxu0 0.0
      %1478 = vmatprep.subr.mxu0 0.0
      %1479 = vmatpush1.msra.mxu0 0.0
      %1480 = vmatprep.subr.mxu0 0.0
      %1481 = vmatpush1.msra.mxu0 0.0
      %1482 = vmatprep.subr.mxu0 0.0
      %1483 = vmatpush1.msra.mxu0 0.0
      %1484 = vmatprep.subr.mxu0 0.0
      %1485 = vmatpush1.msra.mxu0 0.0
      %1486 = vmatprep.subr.mxu0 0.0
      %1487 = vmatpush1.msra.mxu0 0.0
      %1488 = vmatprep.subr.mxu0 0.0
      %1489 = vmatpush1.msra.mxu0 0.0
      %1490 = vmatprep.subr.mxu0 0.0
      %1491 = vmatpush1.msra.mxu0 0.0
      %1492 = vmatprep.subr.mxu0 0.0
      %1493 = vmatpush1.msra.mxu0 0.0
      %1494 = vmatprep.subr.mxu0 0.0
      %1495 = vmatpush1.msra.mxu0 0.0
      %1496 = vmatprep.subr.mxu0 0.0
      %1497 = vmatpush1.msra.mxu0 0.0
      %1498 = vmatprep.subr.mxu0 0.0
      %1499 = vmatpush1.msra.mxu0 0.0
      %1500 = vmatprep.subr.mxu0 0.0
      %1501 = vmatpush1.msra.mxu0 0.0
      %1502 = vmatprep.subr.mxu0 0.0
      %1503 = vmatpush1.msra.mxu0 0.0
      %1504 = vmatprep.subr.mxu0 0.0
      %1505 = vmatpush1.msra.mxu0 0.0
      %1506 = vmatprep.subr.mxu0 0.0
      %1507 = vmatpush1.msra.mxu0 0.0
      %1508 = vmatprep.subr.mxu0 0.0
      %1509 = vmatpush1.msra.mxu0 0.0
      %1510 = vmatprep.subr.mxu0 0.0
      %1511 = vmatpush1.msra.mxu0 0.0
      %1512 = vmatprep.subr.mxu0 0.0
      %1513 = vmatpush1.msra.mxu0 0.0
      %1514 = vmatprep.subr.mxu0 0.0
      %1515 = vmatpush1.msra.mxu0 0.0
      %1516 = vmatprep.subr.mxu0 0.0
      %1517 = vmatpush1.msra.mxu0 0.0
      %1518 = vmatprep.subr.mxu0 0.0
      %1519 = vmatpush1.msra.mxu0 0.0
      %1520 = vmatprep.subr.mxu0 0.0
      %1521 = vmatpush1.msra.mxu0 0.0
      %1522 = vmatprep.subr.mxu0 0.0
      %1523 = vmatpush1.msra.mxu0 0.0
      %1524 = vmatprep.subr.mxu0 0.0
      %1525 = vmatpush1.msra.mxu0 0.0
      %1526 = vmatprep.subr.mxu0 0.0
      %1527 = vmatpush1.msra.mxu0 0.0
      %1528 = vmatprep.subr.mxu0 0.0
      %1529 = vmatpush1.msra.mxu0 0.0
      %1530 = vmatprep.subr.mxu0 0.0
      %1531 = vmatpush1.msra.mxu0 0.0
      %1532 = vmatprep.subr.mxu0 0.0
      %1533 = vmatpush1.msra.mxu0 0.0
      %1534 = vmatprep.subr.mxu0 0.0
      %1535 = vmatpush1.msra.mxu0 0.0
      %1536 = vmatprep.mubr.f32.mxu0 0.0
      %1537 = vmatmul.mubr.f32.gmra.mrb[0].mxu0 %v1470
      %v1538 = vpop.f32.mrb[0].mxu0
      %v1539 = vadd.f32 0.0, %v1538
      %v1540 = vpop.f32.mrb[0].mxu0
      %1541 = vdwg.mxu0
      %v1542 = vadd.f32 %v1301, %v1539
      %v1543 = vadd.f32 %v436, %v1542
      %v1544 = vld [vmem:[%s6] sm:$0x1]
      %v1546 = vlaneseq
      %v1547 = vshrl.u32 %v1546, 7
      %v1548 = vsub.s32 0, %v1547
      %v1549 = vrot.slane %v1544, %v1548
      %v1551 = vadd.f32 %v1543, %v1549
      %v1552 = vld [vmem:[%s7] sm:$0x1]
      %v1553 = vld [vmem:[%s8] sm:$0x1]
      %v1554 = vsel %vm439, %v1551, 0.0
      %1555 = vadd.xlane.f32.xlu0 %v1554
      %v1556 = vpop.xlane.xlu0 %1555
      %v1557 = vmul.f32 %v1556, %v443
      %v1558 = vsub.f32 %v1551, %v1557
      %v1559 = vmul.f32 %v1558, %v1558
      %v1560 = vsel %vm439, %v1559, 0.0
      %1561 = vadd.xlane.f32.xlu0 %v1560
      %v1562 = vpop.xlane.xlu0 %1561
      %v1563 = vmul.f32 %v1562, %v443
      %v1564 = vadd.f32 %v1563, 1e-05
      %v1565 = vrsqrt.pop %v1564
      %v1566 = vmul.f32 %v1558, %v1565
      %v1568 = vlaneseq
      %v1569 = vshrl.u32 %v1568, 7
      %v1570 = vsub.s32 0, %v1569
      %v1571 = vrot.slane %v1552, %v1570
      %v1573 = vmul.f32 %v1566, %v1571
      %v1575 = vlaneseq
      %v1576 = vshrl.u32 %v1575, 7
      %v1577 = vsub.s32 0, %v1576
      %v1578 = vrot.slane %v1553, %v1577
      %v1580 = vadd.f32 %v1573, %v1578
      %v1581 = vld [vmem:[%s9] sm:$0xff]
      %v1582 = vld [vmem:[%s9 + $0x8] sm:$0xff]
      %v1583 = vld [vmem:[%s9 + $0x10] sm:$0xff]
      %v1584 = vld [vmem:[%s9 + $0x18] sm:$0xff]
      %v1585 = vld [vmem:[%s9 + $0x20] sm:$0xff]
      %v1586 = vld [vmem:[%s9 + $0x28] sm:$0xff]
      %v1587 = vld [vmem:[%s9 + $0x30] sm:$0xff]
      %v1588 = vld [vmem:[%s9 + $0x38] sm:$0xff]
      %v1589 = vld [vmem:[%s9 + $0x40] sm:$0xff]
      %v1590 = vld [vmem:[%s9 + $0x48] sm:$0xff]
      %v1591 = vld [vmem:[%s9 + $0x50] sm:$0xff]
      %v1592 = vld [vmem:[%s9 + $0x58] sm:$0xff]
      %v1593 = vld [vmem:[%s9 + $0x60] sm:$0xff]
      %v1594 = vld [vmem:[%s9 + $0x68] sm:$0xff]
      %v1595 = vld [vmem:[%s9 + $0x70] sm:$0xff]
      %v1596 = vld [vmem:[%s9 + $0x78] sm:$0xff]
      %v1597 = vld [vmem:[%s10] sm:$0x3]
      %v1599 = vlaneseq
      %v1600 = vshrl.u32 %v1599, 7
      %v1601 = vsub.s32 0, %v1600
      %v1602 = vrot.slane %v1597, %v1601
      %v1603 = vlaneseq
      %v1604 = vshrl.u32 %v1603, 7
      %v1605 = vsub.s32 1, %v1604
      %v1606 = vrot.slane %v1597, %v1605
      %v1610 = vsel %vm496, %v1580, 0
      %1612 = vmatprep.subr.mxu0 %v1582
      %1613 = vmatpush1.msra.mxu0 %v1581
      %1614 = vmatprep.subr.mxu0 %v1584
      %1615 = vmatpush1.msra.mxu0 %v1583
      %1616 = vmatprep.subr.mxu0 %v1586
      %1617 = vmatpush1.msra.mxu0 %v1585
      %1618 = vmatprep.subr.mxu0 %v1588
      %1619 = vmatpush1.msra.mxu0 %v1587
      %1620 = vmatprep.subr.mxu0 %v1590
      %1621 = vmatpush1.msra.mxu0 %v1589
      %1622 = vmatprep.subr.mxu0 %v1592
      %1623 = vmatpush1.msra.mxu0 %v1591
      %1624 = vmatprep.subr.mxu0 %v1594
      %1625 = vmatpush1.msra.mxu0 %v1593
      %1626 = vmatprep.subr.mxu0 %v1596
      %1627 = vmatpush1.msra.mxu0 %v1595
      %1628 = vmatprep.subr.mxu0 0.0
      %1629 = vmatpush1.msra.mxu0 0.0
      %1630 = vmatprep.subr.mxu0 0.0
      %1631 = vmatpush1.msra.mxu0 0.0
      %1632 = vmatprep.subr.mxu0 0.0
      %1633 = vmatpush1.msra.mxu0 0.0
      %1634 = vmatprep.subr.mxu0 0.0
      %1635 = vmatpush1.msra.mxu0 0.0
      %1636 = vmatprep.subr.mxu0 0.0
      %1637 = vmatpush1.msra.mxu0 0.0
      %1638 = vmatprep.subr.mxu0 0.0
      %1639 = vmatpush1.msra.mxu0 0.0
      %1640 = vmatprep.subr.mxu0 0.0
      %1641 = vmatpush1.msra.mxu0 0.0
      %1642 = vmatprep.subr.mxu0 0.0
      %1643 = vmatpush1.msra.mxu0 0.0
      %1644 = vmatprep.subr.mxu0 0.0
      %1645 = vmatpush1.msra.mxu0 0.0
      %1646 = vmatprep.subr.mxu0 0.0
      %1647 = vmatpush1.msra.mxu0 0.0
      %1648 = vmatprep.subr.mxu0 0.0
      %1649 = vmatpush1.msra.mxu0 0.0
      %1650 = vmatprep.subr.mxu0 0.0
      %1651 = vmatpush1.msra.mxu0 0.0
      %1652 = vmatprep.subr.mxu0 0.0
      %1653 = vmatpush1.msra.mxu0 0.0
      %1654 = vmatprep.subr.mxu0 0.0
      %1655 = vmatpush1.msra.mxu0 0.0
      %1656 = vmatprep.subr.mxu0 0.0
      %1657 = vmatpush1.msra.mxu0 0.0
      %1658 = vmatprep.subr.mxu0 0.0
      %1659 = vmatpush1.msra.mxu0 0.0
      %1660 = vmatprep.subr.mxu0 0.0
      %1661 = vmatpush1.msra.mxu0 0.0
      %1662 = vmatprep.subr.mxu0 0.0
      %1663 = vmatpush1.msra.mxu0 0.0
      %1664 = vmatprep.subr.mxu0 0.0
      %1665 = vmatpush1.msra.mxu0 0.0
      %1666 = vmatprep.subr.mxu0 0.0
      %1667 = vmatpush1.msra.mxu0 0.0
      %1668 = vmatprep.subr.mxu0 0.0
      %1669 = vmatpush1.msra.mxu0 0.0
      %1670 = vmatprep.subr.mxu0 0.0
      %1671 = vmatpush1.msra.mxu0 0.0
      %1672 = vmatprep.subr.mxu0 0.0
      %1673 = vmatpush1.msra.mxu0 0.0
      %1674 = vmatprep.subr.mxu0 0.0
      %1675 = vmatpush1.msra.mxu0 0.0
      %1676 = vmatprep.mubr.f32.mxu0 0.0
      %1677 = vmatmul.mubr.f32.gmra.mrb[0].mxu0 %v1610
      %v1678 = vpop.f32.mrb[0].mxu0
      %v1679 = vadd.f32 %v1602, %v1678
      %v1680 = vpop.f32.mrb[0].mxu0
      %v1681 = vadd.f32 %v1606, %v1680
      %1682 = vdwg.mxu0
      %v1683 = vmul.f32 %v1679, 0.5
      %v1684 = vmul.f32 %v1681, 0.5
      %v1685 = vmul.f32 %v1679, 0.70710677
      %v1686 = vmul.f32 %v1681, 0.70710677
      %v1687 = vand.u32 2147483647, %v1685
      %v1688 = vand.u32 2147483647, %v1686
      %v1689 = vmul.f32 %v1687, 0.3275911
      %v1690 = vmul.f32 %v1688, 0.3275911
      %v1691 = vadd.f32 %v1689, 1.0
      %v1692 = vadd.f32 %v1690, 1.0
      %v1693 = vrcp.pop %v1691
      %v1694 = vmul.f32 1.0, %v1693
      %v1695 = vrcp.pop %v1692
      %v1696 = vmul.f32 1.0, %v1695
      %v1697 = vmul.f32 %v1694, 1.0614054
      %v1698 = vmul.f32 %v1696, 1.0614054
      %v1699 = vadd.f32 %v1697, -1.4531521
      %v1700 = vadd.f32 %v1698, -1.4531521
      %v1701 = vmul.f32 %v1699, %v1694
      %v1702 = vmul.f32 %v1700, %v1696
      %v1703 = vadd.f32 %v1701, 1.4214138
      %v1704 = vadd.f32 %v1702, 1.4214138
      %v1705 = vmul.f32 %v1703, %v1694
      %v1706 = vmul.f32 %v1704, %v1696
      %v1707 = vadd.f32 %v1705, -0.28449672
      %v1708 = vadd.f32 %v1706, -0.28449672
      %v1709 = vmul.f32 %v1707, %v1694
      %v1710 = vmul.f32 %v1708, %v1696
      %v1711 = vadd.f32 %v1709, 0.2548296
      %v1712 = vadd.f32 %v1710, 0.2548296
      %v1713 = vmul.f32 %v1711, %v1694
      %v1714 = vmul.f32 %v1712, %v1696
      %v1715 = vsub.f32 0.0, %v1687
      %v1716 = vsub.f32 0.0, %v1688
      %v1717 = vmul.f32 %v1715, %v1687
      %v1718 = vmul.f32 %v1716, %v1688
      %v1719 = vmul.f32 %v1717, 1.442695
      %v1720 = vpow.pop %v1719
      %v1721 = vmul.f32 %v1718, 1.442695
      %v1722 = vpow.pop %v1721
      %v1723 = vmul.f32 %v1713, %v1720
      %v1724 = vmul.f32 %v1714, %v1722
      %v1725 = vsub.f32 1.0, %v1723
      %v1726 = vsub.f32 1.0, %v1724
      %vm1727 = vcmp.ge.f32.partialorder %v1685, 0.0
      %vm1728 = vcmp.ge.f32.partialorder %v1686, 0.0
      %v1729 = vsub.f32 0.0, %v1725
      %v1730 = vsub.f32 0.0, %v1726
      %v1731 = vsel %vm1727, %v1725, %v1729
      %v1732 = vsel %vm1728, %v1726, %v1730
      %v1733 = vadd.f32 %v1731, 1.0
      %v1734 = vadd.f32 %v1732, 1.0
      %v1735 = vmul.f32 %v1683, %v1733
      %v1736 = vmul.f32 %v1684, %v1734
      %v1737 = vld [vmem:[%s11] sm:$0xff]
      %v1738 = vld [vmem:[%s11 + $0x8] sm:$0xff]
      %v1739 = vld [vmem:[%s11 + $0x10] sm:$0xff]
      %v1740 = vld [vmem:[%s11 + $0x18] sm:$0xff]
      %v1741 = vld [vmem:[%s11 + $0x20] sm:$0xff]
      %v1742 = vld [vmem:[%s11 + $0x28] sm:$0xff]
      %v1743 = vld [vmem:[%s11 + $0x30] sm:$0xff]
      %v1744 = vld [vmem:[%s11 + $0x38] sm:$0xff]
      %v1745 = vld [vmem:[%s11 + $0x40] sm:$0xff]
      %v1746 = vld [vmem:[%s11 + $0x48] sm:$0xff]
      %v1747 = vld [vmem:[%s11 + $0x50] sm:$0xff]
      %v1748 = vld [vmem:[%s11 + $0x58] sm:$0xff]
      %v1749 = vld [vmem:[%s11 + $0x60] sm:$0xff]
      %v1750 = vld [vmem:[%s11 + $0x68] sm:$0xff]
      %v1751 = vld [vmem:[%s11 + $0x70] sm:$0xff]
      %v1752 = vld [vmem:[%s11 + $0x78] sm:$0xff]
      %v1753 = vld [vmem:[%s11 + $0x80] sm:$0xff]
      %v1754 = vld [vmem:[%s11 + $0x88] sm:$0xff]
      %v1755 = vld [vmem:[%s11 + $0x90] sm:$0xff]
      %v1756 = vld [vmem:[%s11 + $0x98] sm:$0xff]
      %v1757 = vld [vmem:[%s11 + $0xa0] sm:$0xff]
      %v1758 = vld [vmem:[%s11 + $0xa8] sm:$0xff]
      %v1759 = vld [vmem:[%s11 + $0xb0] sm:$0xff]
      %v1760 = vld [vmem:[%s11 + $0xb8] sm:$0xff]
      %v1761 = vld [vmem:[%s11 + $0xc0] sm:$0xff]
      %v1762 = vld [vmem:[%s11 + $0xc8] sm:$0xff]
      %v1763 = vld [vmem:[%s11 + $0xd0] sm:$0xff]
      %v1764 = vld [vmem:[%s11 + $0xd8] sm:$0xff]
      %v1765 = vld [vmem:[%s11 + $0xe0] sm:$0xff]
      %v1766 = vld [vmem:[%s11 + $0xe8] sm:$0xff]
      %v1767 = vld [vmem:[%s11 + $0xf0] sm:$0xff]
      %v1768 = vld [vmem:[%s11 + $0xf8] sm:$0xff]
      %1769 = vmatprep.subr.mxu0 0.0
      %1770 = vmatpush1.msra.mxu0 %v1737
      %1771 = vmatprep.subr.mxu0 0.0
      %1772 = vmatpush1.msra.mxu0 %v1738
      %1773 = vmatprep.subr.mxu0 0.0
      %1774 = vmatpush1.msra.mxu0 %v1739
      %1775 = vmatprep.subr.mxu0 0.0
      %1776 = vmatpush1.msra.mxu0 %v1740
      %1777 = vmatprep.subr.mxu0 0.0
      %1778 = vmatpush1.msra.mxu0 %v1741
      %1779 = vmatprep.subr.mxu0 0.0
      %1780 = vmatpush1.msra.mxu0 %v1742
      %1781 = vmatprep.subr.mxu0 0.0
      %1782 = vmatpush1.msra.mxu0 %v1743
      %1783 = vmatprep.subr.mxu0 0.0
      %1784 = vmatpush1.msra.mxu0 %v1744
      %1785 = vmatprep.subr.mxu0 0.0
      %1786 = vmatpush1.msra.mxu0 %v1745
      %1787 = vmatprep.subr.mxu0 0.0
      %1788 = vmatpush1.msra.mxu0 %v1746
      %1789 = vmatprep.subr.mxu0 0.0
      %1790 = vmatpush1.msra.mxu0 %v1747
      %1791 = vmatprep.subr.mxu0 0.0
      %1792 = vmatpush1.msra.mxu0 %v1748
      %1793 = vmatprep.subr.mxu0 0.0
      %1794 = vmatpush1.msra.mxu0 %v1749
      %1795 = vmatprep.subr.mxu0 0.0
      %1796 = vmatpush1.msra.mxu0 %v1750
      %1797 = vmatprep.subr.mxu0 0.0
      %1798 = vmatpush1.msra.mxu0 %v1751
      %1799 = vmatprep.subr.mxu0 0.0
      %1800 = vmatpush1.msra.mxu0 %v1752
      %1801 = vmatprep.subr.mxu0 0.0
      %1802 = vmatpush1.msra.mxu0 %v1753
      %1803 = vmatprep.subr.mxu0 0.0
      %1804 = vmatpush1.msra.mxu0 %v1754
      %1805 = vmatprep.subr.mxu0 0.0
      %1806 = vmatpush1.msra.mxu0 %v1755
      %1807 = vmatprep.subr.mxu0 0.0
      %1808 = vmatpush1.msra.mxu0 %v1756
      %1809 = vmatprep.subr.mxu0 0.0
      %1810 = vmatpush1.msra.mxu0 %v1757
      %1811 = vmatprep.subr.mxu0 0.0
      %1812 = vmatpush1.msra.mxu0 %v1758
      %1813 = vmatprep.subr.mxu0 0.0
      %1814 = vmatpush1.msra.mxu0 %v1759
      %1815 = vmatprep.subr.mxu0 0.0
      %1816 = vmatpush1.msra.mxu0 %v1760
      %1817 = vmatprep.subr.mxu0 0.0
      %1818 = vmatpush1.msra.mxu0 %v1761
      %1819 = vmatprep.subr.mxu0 0.0
      %1820 = vmatpush1.msra.mxu0 %v1762
      %1821 = vmatprep.subr.mxu0 0.0
      %1822 = vmatpush1.msra.mxu0 %v1763
      %1823 = vmatprep.subr.mxu0 0.0
      %1824 = vmatpush1.msra.mxu0 %v1764
      %1825 = vmatprep.subr.mxu0 0.0
      %1826 = vmatpush1.msra.mxu0 %v1765
      %1827 = vmatprep.subr.mxu0 0.0
      %1828 = vmatpush1.msra.mxu0 %v1766
      %1829 = vmatprep.subr.mxu0 0.0
      %1830 = vmatpush1.msra.mxu0 %v1767
      %1831 = vmatprep.subr.mxu0 0.0
      %1832 = vmatpush1.msra.mxu0 %v1768
      %1833 = vmatprep.mubr.f32.mxu0 %v1736
      %1834 = vmatmul.mubr.f32.gmra.mrb[0].mxu0 %v1735
      %v1835 = vpop.f32.mrb[0].mxu0
      %v1836 = vadd.f32 0.0, %v1835
      %v1837 = vpop.f32.mrb[0].mxu0
      %1838 = vdwg.mxu0
      %v1839 = vadd.f32 %v1551, %v1836
      %v1840 = vld [vmem:[%s12] sm:$0x1]
      %v1842 = vlaneseq
      %v1843 = vshrl.u32 %v1842, 7
      %v1844 = vsub.s32 0, %v1843
      %v1845 = vrot.slane %v1840, %v1844
      %v1847 = vadd.f32 %v1839, %v1845
      %1848 = vst.msk [vmem:[%s435] sm:$0x1f] %vm439, %v1847
      %p1849 = scmp.lt.s32.totalorder %s24, 1
      %s1850 = scalar_select %p1849, %s24, 1
      %s1851 = smul.addr %s1850, 8
      %s1852 = scalar_lea.vmem %s13, %s1851
      // Predicated region
      $region73: #{_lambda_.8} parent=71 // pred_check
        %p1853 = pneg %p320
      $region74: #{_lambda_.8} parent=71 // pred_check_branch
        %1855 = sbr.rel (%p1853) target = $region76
      $region75: #{_lambda_.8} parent=71 // pred_region
        _
      $region76: #{_lambda_.8} parent=71 // pred_fallthru
        _
    $region72: #{_lambda_.8} parent=5 // pred_fallthru
      _
    %p1856 = scmp.le.s32.totalorder 2, %s19
    // Predicated region
    $region77: #{_lambda_.8} parent=5 // pred_check
      %p1857 = pneg %p1856
    $region78: #{_lambda_.8} parent=5 // pred_check_branch
      %1859 = sbr.rel (%p1857) target = $region80
    $region79: #{_lambda_.8} parent=5 // pred_region
      %s1860 = ssub.s32 %s19, 2
      // Predicated region
      $region81: #{_lambda_.8} parent=79 // pred_check
        %p1861 = pneg %p326
      $region82: #{_lambda_.8} parent=79 // pred_check_branch
        %1863 = sbr.rel (%p1861) target = $region84
      $region83: #{_lambda_.8} parent=79 // pred_region
        %p1864 = scmp.lt.s32.totalorder %s25, 1
        %s1865 = scalar_select %p1864, %s25, 1
        %s1866 = smul.addr %s1865, 8
        %s1867 = scalar_lea.vmem %s13, %s1866
      $region84: #{_lambda_.8} parent=79 // pred_fallthru
        _
    $region80: #{_lambda_.8} parent=5 // pred_fallthru
      _
  $region6: #{_lambda_.8} parent=0 // loop_footer
    %s23 = sadd.s32 1, %s19
  $region7: #{_lambda_.8} parent=0 // loop_footer_branch
    %18 = sbr.rel target = $region3
  $region8: #{_lambda_.8} parent=0 // loop_exit
    _

// kernel: _lambda_.13
$region0: #{_lambda_.13}
  #allocation0 [shape = 'u32[]', space=smem, size = 0x4, offset = 0x4, fixed_abs, tag = 'smem constant byte address 0x4 - core index']
  #allocation1 [shape = 'u32[144,128]{1,0:T(1,128)}', space=vmem, size = 0x12000, scoped, tag = 'internal scratch']
  #allocation2 [shape = 'f32[16,128]{1,0:T(8,128)}', space=vmem, size = 0x2000, scoped, tag = 'scratch operand']
  %s0 = inlined_call_operand.vmem [shape: f32[16,64], index: 0, kind: input, shape index: {}]
  %s1 = inlined_call_operand.vmem [shape: f32[128,64], index: 1, kind: input, shape index: {}]
  %s2 = inlined_call_operand.hbm [shape: f32[16,128], index: 2, kind: output, shape index: {}]
  %s3 = sld [smem:[#allocation0]]
  $region26: #{_lambda_.13} parent=0
    _
  %s5 = ssub.s32 1, %s3
  %s6 = scalar_select 0, %s5, %s3
  $region1: #{_lambda_.13} parent=0
    #allocation3 [shape = 'u8[8192]{0}', space=vmem, size = 0x2000, scoped, tag = 'output window, operand 0, single buffered']
    #allocation4 [shape = 's32[1]{0}', space=sflag, size = 0x4, scoped, tag = 'scoped memory for _lambda_.13']
    %7 = vsyncpa [#allocation4], 0
    // Predicated region
    $region2: #{_lambda_.13} parent=1 // pred_check
      _
    $region3: #{_lambda_.13} parent=1 // pred_check_branch
      %9 = sbr.rel (0) target = $region5
    $region4: #{_lambda_.13} parent=1 // pred_region
      _
    $region5: #{_lambda_.13} parent=1 // pred_fallthru
      _
    // Predicated region
    $region6: #{_lambda_.13} parent=1 // pred_check
      _
    $region7: #{_lambda_.13} parent=1 // pred_check_branch
      %11 = sbr.rel (0) target = $region9
    $region8: #{_lambda_.13} parent=1 // pred_region
      _
    $region9: #{_lambda_.13} parent=1 // pred_fallthru
      _
    %p12 = scmp.eq.s32.totalorder 0, 0
    // Predicated region
    $region10: #{_lambda_.13} parent=1 // pred_check
      %p13 = pneg %p12
    $region11: #{_lambda_.13} parent=1 // pred_check_branch
      %15 = sbr.rel (%p13) target = $region13
    $region12: #{_lambda_.13} parent=1 // pred_region
      %16 = vst [vmem:[#allocation2] sm:$0xff] 0.0
      %17 = vst [vmem:[#allocation2 + $0x8] sm:$0xff] 0.0
    $region13: #{_lambda_.13} parent=1 // pred_fallthru
      _
    %v18 = vld [vmem:[#allocation2] sm:$0xff]
    %v19 = vld [vmem:[#allocation2 + $0x8] sm:$0xff]
    %v20 = vld [vmem:[%s0] sm:$0xff]
    %v21 = vld [vmem:[%s0 + $0x8] sm:$0xff]
    %v22 = vld [vmem:[%s1] sm:$0xff]
    %v23 = vld [vmem:[%s1 + $0x8] sm:$0xff]
    %v24 = vld [vmem:[%s1 + $0x10] sm:$0xff]
    %v25 = vld [vmem:[%s1 + $0x18] sm:$0xff]
    %v26 = vld [vmem:[%s1 + $0x20] sm:$0xff]
    %v27 = vld [vmem:[%s1 + $0x28] sm:$0xff]
    %v28 = vld [vmem:[%s1 + $0x30] sm:$0xff]
    %v29 = vld [vmem:[%s1 + $0x38] sm:$0xff]
    %v30 = vld [vmem:[%s1 + $0x40] sm:$0xff]
    %v31 = vld [vmem:[%s1 + $0x48] sm:$0xff]
    %v32 = vld [vmem:[%s1 + $0x50] sm:$0xff]
    %v33 = vld [vmem:[%s1 + $0x58] sm:$0xff]
    %v34 = vld [vmem:[%s1 + $0x60] sm:$0xff]
    %v35 = vld [vmem:[%s1 + $0x68] sm:$0xff]
    %v36 = vld [vmem:[%s1 + $0x70] sm:$0xff]
    %v37 = vld [vmem:[%s1 + $0x78] sm:$0xff]
    %vm38 = vcmask 523264
    %v40 = vsel %vm38, %v20, 0
    %v43 = vsel %vm38, %v21, 0
    %v46 = vsel %vm38, %v22, 0
    %v49 = vsel %vm38, %v23, 0
    %v52 = vsel %vm38, %v24, 0
    %v55 = vsel %vm38, %v25, 0
    %v58 = vsel %vm38, %v26, 0
    %v61 = vsel %vm38, %v27, 0
    %v64 = vsel %vm38, %v28, 0
    %v67 = vsel %vm38, %v29, 0
    %v70 = vsel %vm38, %v30, 0
    %v73 = vsel %vm38, %v31, 0
    %v76 = vsel %vm38, %v32, 0
    %v79 = vsel %vm38, %v33, 0
    %v82 = vsel %vm38, %v34, 0
    %v85 = vsel %vm38, %v35, 0
    %v88 = vsel %vm38, %v36, 0
    %v91 = vsel %vm38, %v37, 0
    %93 = vmatprep.subr.mxu0 0.0
    %94 = vmatpush1.xpose.msra.mxu0 %v46
    %95 = vmatprep.subr.mxu0 0.0
    %96 = vmatpush1.xpose.msra.mxu0 %v49
    %97 = vmatprep.subr.mxu0 0.0
    %98 = vmatpush1.xpose.msra.mxu0 %v52
    %99 = vmatprep.subr.mxu0 0.0
    %100 = vmatpush1.xpose.msra.mxu0 %v55
    %101 = vmatprep.subr.mxu0 0.0
    %102 = vmatpush1.xpose.msra.mxu0 %v58
    %103 = vmatprep.subr.mxu0 0.0
    %104 = vmatpush1.xpose.msra.mxu0 %v61
    %105 = vmatprep.subr.mxu0 0.0
    %106 = vmatpush1.xpose.msra.mxu0 %v64
    %107 = vmatprep.subr.mxu0 0.0
    %108 = vmatpush1.xpose.msra.mxu0 %v67
    %109 = vmatprep.subr.mxu0 0.0
    %110 = vmatpush1.xpose.msra.mxu0 %v70
    %111 = vmatprep.subr.mxu0 0.0
    %112 = vmatpush1.xpose.msra.mxu0 %v73
    %113 = vmatprep.subr.mxu0 0.0
    %114 = vmatpush1.xpose.msra.mxu0 %v76
    %115 = vmatprep.subr.mxu0 0.0
    %116 = vmatpush1.xpose.msra.mxu0 %v79
    %117 = vmatprep.subr.mxu0 0.0
    %118 = vmatpush1.xpose.msra.mxu0 %v82
    %119 = vmatprep.subr.mxu0 0.0
    %120 = vmatpush1.xpose.msra.mxu0 %v85
    %121 = vmatprep.subr.mxu0 0.0
    %122 = vmatpush1.xpose.msra.mxu0 %v88
    %123 = vmatprep.subr.mxu0 0.0
    %124 = vmatpush1.xpose.msra.mxu0 %v91
    %125 = vmatprep.subr.mxu0 0.0
    %126 = vmatpush1.xpose.msra.mxu0 0.0
    %127 = vmatprep.subr.mxu0 0.0
    %128 = vmatpush1.xpose.msra.mxu0 0.0
    %129 = vmatprep.subr.mxu0 0.0
    %130 = vmatpush1.xpose.msra.mxu0 0.0
    %131 = vmatprep.subr.mxu0 0.0
    %132 = vmatpush1.xpose.msra.mxu0 0.0
    %133 = vmatprep.subr.mxu0 0.0
    %134 = vmatpush1.xpose.msra.mxu0 0.0
    %135 = vmatprep.subr.mxu0 0.0
    %136 = vmatpush1.xpose.msra.mxu0 0.0
    %137 = vmatprep.subr.mxu0 0.0
    %138 = vmatpush1.xpose.msra.mxu0 0.0
    %139 = vmatprep.subr.mxu0 0.0
    %140 = vmatpush1.xpose.msra.mxu0 0.0
    %141 = vmatprep.subr.mxu0 0.0
    %142 = vmatpush1.xpose.msra.mxu0 0.0
    %143 = vmatprep.subr.mxu0 0.0
    %144 = vmatpush1.xpose.msra.mxu0 0.0
    %145 = vmatprep.subr.mxu0 0.0
    %146 = vmatpush1.xpose.msra.mxu0 0.0
    %147 = vmatprep.subr.mxu0 0.0
    %148 = vmatpush1.xpose.msra.mxu0 0.0
    %149 = vmatprep.subr.mxu0 0.0
    %150 = vmatpush1.xpose.msra.mxu0 0.0
    %151 = vmatprep.subr.mxu0 0.0
    %152 = vmatpush1.xpose.msra.mxu0 0.0
    %153 = vmatprep.subr.mxu0 0.0
    %154 = vmatpush1.xpose.msra.mxu0 0.0
    %155 = vmatprep.subr.mxu0 0.0
    %156 = vmatpush1.xpose.msra.mxu0 0.0
    %157 = vmatprep.mubr.f32.mxu0 0.0
    %158 = vmatmul.mubr.f32.gmra.mrb[0].mxu0 %v40
    %v159 = vpop.f32.mrb[0].mxu0
    %v160 = vadd.f32 0.0, %v159
    %v161 = vpop.f32.mrb[0].mxu0
    %162 = vmatprep.mubr.f32.mxu0 0.0
    %163 = vmatmul.mubr.f32.gmra.mrb[0].mxu0 %v43
    %v164 = vpop.f32.mrb[0].mxu0
    %v165 = vadd.f32 0.0, %v164
    %v166 = vpop.f32.mrb[0].mxu0
    %167 = vdwg.mxu0
    %v168 = vadd.f32 %v18, %v160
    %v169 = vadd.f32 %v19, %v165
    %170 = vst [vmem:[#allocation2] sm:$0xff] %v168
    %171 = vst [vmem:[#allocation2 + $0x8] sm:$0xff] %v169
    // Predicated region
    $region14: #{_lambda_.13} parent=1 // pred_check
      %p172 = pneg %p12
    $region15: #{_lambda_.13} parent=1 // pred_check_branch
      %174 = sbr.rel (%p172) target = $region17
    $region16: #{_lambda_.13} parent=1 // pred_region
      %v175 = vld [vmem:[#allocation2] sm:$0xff]
      %v176 = vld [vmem:[#allocation2 + $0x8] sm:$0xff]
      %177 = vst [vmem:[#allocation3] sm:$0xff] %v175
      %178 = vst [vmem:[#allocation3 + $0x8] sm:$0xff] %v176
    $region17: #{_lambda_.13} parent=1 // pred_fallthru
      _
    // Predicated region
    $region18: #{_lambda_.13} parent=1 // pred_check
      _
    $region19: #{_lambda_.13} parent=1 // pred_check_branch
      %180 = sbr.rel (0) target = $region21
    $region20: #{_lambda_.13} parent=1 // pred_region
      %s182 = ssub.s32 256, 256
      %183 = vsyncadd [#allocation4], %s182
      %s184 = sshll.u32 [#allocation3], 4
      %s185 = int_to_ptr.vmem [resolvable:$true] %s184
      %190 = dma.vmem_to_hbm [thread:$0]  %s185, 256, %s2, [#allocation4], 128, 128, 8
    $region21: #{_lambda_.13} parent=1 // pred_fallthru
      _
    // Predicated region
    $region22: #{_lambda_.13} parent=1 // pred_check
      _
    $region23: #{_lambda_.13} parent=1 // pred_check_branch
      %192 = sbr.rel (0) target = $region25
    $region24: #{_lambda_.13} parent=1 // pred_region
      %193 = dma.done [#allocation4], 256
    $region25: #{_lambda_.13} parent=1 // pred_fallthru
      _
    %194 = vsyncpa [#allocation4], 1

// kernel: _lambda_.9
$region0: #{_lambda_.9}
  #allocation0 [shape = 'u32[]', space=smem, size = 0x4, offset = 0x4, fixed_abs, tag = 'smem constant byte address 0x4 - core index']
  #allocation1 [shape = 'u32[144,128]{1,0:T(1,128)}', space=vmem, size = 0x12000, scoped, tag = 'internal scratch']
  %s0 = inlined_call_operand.vmem [shape: f32[2,8,64], index: 0, kind: input, shape index: {}]
  %s1 = inlined_call_operand.vmem [shape: f32[2,5,64], index: 1, kind: input, shape index: {}]
  %s2 = inlined_call_operand.vmem [shape: f32[1,64], index: 2, kind: input, shape index: {}]
  %s3 = inlined_call_operand.vmem [shape: f32[1,64], index: 3, kind: input, shape index: {}]
  %s4 = inlined_call_operand.vmem [shape: f32[64,192], index: 4, kind: input, shape index: {}]
  %s5 = inlined_call_operand.vmem [shape: f32[1,192], index: 5, kind: input, shape index: {}]
  %s6 = inlined_call_operand.vmem [shape: f32[64,64], index: 6, kind: input, shape index: {}]
  %s7 = inlined_call_operand.vmem [shape: f32[1,64], index: 7, kind: input, shape index: {}]
  %s8 = inlined_call_operand.vmem [shape: f32[1,64], index: 8, kind: input, shape index: {}]
  %s9 = inlined_call_operand.vmem [shape: f32[1,64], index: 9, kind: input, shape index: {}]
  %s10 = inlined_call_operand.vmem [shape: f32[64,64], index: 10, kind: input, shape index: {}]
  %s11 = inlined_call_operand.vmem [shape: f32[1,64], index: 11, kind: input, shape index: {}]
  %s12 = inlined_call_operand.vmem [shape: f32[64,128], index: 12, kind: input, shape index: {}]
  %s13 = inlined_call_operand.vmem [shape: f32[1,128], index: 13, kind: input, shape index: {}]
  %s14 = inlined_call_operand.vmem [shape: f32[64,64], index: 14, kind: input, shape index: {}]
  %s15 = inlined_call_operand.vmem [shape: f32[1,64], index: 15, kind: input, shape index: {}]
  %s16 = inlined_call_operand.vmem [shape: f32[1,64], index: 16, kind: input, shape index: {}]
  %s17 = inlined_call_operand.vmem [shape: f32[1,64], index: 17, kind: input, shape index: {}]
  %s18 = inlined_call_operand.vmem [shape: f32[64,256], index: 18, kind: input, shape index: {}]
  %s19 = inlined_call_operand.vmem [shape: f32[1,256], index: 19, kind: input, shape index: {}]
  %s20 = inlined_call_operand.vmem [shape: f32[256,64], index: 20, kind: input, shape index: {}]
  %s21 = inlined_call_operand.vmem [shape: f32[1,64], index: 21, kind: input, shape index: {}]
  %s22 = inlined_call_operand.vmem [shape: f32[2,8,64], index: 22, kind: output, shape index: {}]
  %s23 = sld [smem:[#allocation0]]
  $region121: #{_lambda_.9} parent=0
    _
  %s25 = ssub.s32 1, %s23
  %s26 = scalar_select 0, %s25, %s23
  loop: start=0, step=1, limit=4
  $region2: #{_lambda_.9} parent=0 // loop_pre_header
    _
  $region3: #{_lambda_.9} parent=0 // loop_header
    %s28 = sphi 0, %s32
    %p29 = scmp.ge.s32.totalorder %s28, 4
    %s38 = sphi 0, %s40
    %s41 = sphi 0, %s38
    %s42 = sphi 0, %s41
    %s58 = sphi 0, %s42
    %s64 = sphi 0, %s66
    %s67 = sphi 0, %s64
    %s68 = sphi 0, %s67
    %s84 = sphi 0, %s68
    %s88 = sphi 0, %s88
    %s90 = sphi 0, %s88
    %s91 = sphi 0, %s90
    %s105 = sphi 0, %s91
    %s109 = sphi 0, %s109
    %s111 = sphi 0, %s109
    %s112 = sphi 0, %s111
    %s126 = sphi 0, %s112
    %s130 = sphi 0, %s130
    %s132 = sphi 0, %s130
    %s133 = sphi 0, %s132
    %s147 = sphi 0, %s133
    %s151 = sphi 0, %s151
    %s153 = sphi 0, %s151
    %s154 = sphi 0, %s153
    %s168 = sphi 0, %s154
    %s172 = sphi 0, %s172
    %s174 = sphi 0, %s172
    %s175 = sphi 0, %s174
    %s189 = sphi 0, %s175
    %s193 = sphi 0, %s193
    %s195 = sphi 0, %s193
    %s196 = sphi 0, %s195
    %s210 = sphi 0, %s196
    %s214 = sphi 0, %s214
    %s216 = sphi 0, %s214
    %s217 = sphi 0, %s216
    %s231 = sphi 0, %s217
    %s235 = sphi 0, %s235
    %s237 = sphi 0, %s235
    %s238 = sphi 0, %s237
    %s252 = sphi 0, %s238
    %s256 = sphi 0, %s256
    %s258 = sphi 0, %s256
    %s259 = sphi 0, %s258
    %s273 = sphi 0, %s259
    %s277 = sphi 0, %s277
    %s279 = sphi 0, %s277
    %s280 = sphi 0, %s279
    %s294 = sphi 0, %s280
    %s298 = sphi 0, %s298
    %s300 = sphi 0, %s298
    %s301 = sphi 0, %s300
    %s315 = sphi 0, %s301
    %s319 = sphi 0, %s319
    %s321 = sphi 0, %s319
    %s322 = sphi 0, %s321
    %s336 = sphi 0, %s322
    %s340 = sphi 0, %s340
    %s342 = sphi 0, %s340
    %s343 = sphi 0, %s342
    %s357 = sphi 0, %s343
    %s361 = sphi 0, %s361
    %s363 = sphi 0, %s361
    %s364 = sphi 0, %s363
    %s378 = sphi 0, %s364
    %s382 = sphi 0, %s382
    %s384 = sphi 0, %s382
    %s385 = sphi 0, %s384
    %s399 = sphi 0, %s385
    %s403 = sphi 0, %s403
    %s405 = sphi 0, %s403
    %s406 = sphi 0, %s405
    %s420 = sphi 0, %s406
    %s424 = sphi 0, %s424
    %s426 = sphi 0, %s424
    %s427 = sphi 0, %s426
    %s441 = sphi 0, %s427
    %s445 = sphi 0, %s445
    %s447 = sphi 0, %s445
    %s448 = sphi 0, %s447
    %s462 = sphi 0, %s448
    %s466 = sphi 0, %s466
    %s468 = sphi 0, %s466
    %s469 = sphi 0, %s468
    %s483 = sphi 0, %s469
    %s487 = sphi 0, %s487
    %s489 = sphi 0, %s487
    %s490 = sphi 0, %s489
    %s504 = sphi 0, %s490
    %s510 = sphi 0, %s512
    %s513 = sphi 0, %s510
    %s514 = sphi 0, %s513
    %s530 = sphi 0, %s514
  $region4: #{_lambda_.9} parent=0 // loop_header_branch
    %31 = sbr.rel (%p29) target = $region8
  $region5: #{_lambda_.9} parent=0 // loop_body
    %s33 = ssub.s32 %s28, 1
    %s34 = ssub.s32 %s28, 2
    %s35 = sadd.s32 %s28, 1
    %s36 = ssub.s32 %s28, %s35
    %p37 = scmp.eq.s32.totalorder %s36, 0
    %s39 = sadd.s32 %s38, 1
    %s40 = scalar_select %p37, %s38, %s39
    %p43 = pneg %p37
    %p44 = scmp.eq.s32.totalorder %s28, 1
    %p45 = por %p43, %p44
    %p46 = scmp.ne.s32.totalorder %s38, %s41
    %p47 = scmp.eq.s32.totalorder %s28, 0
    %p48 = por %p46, %p47
    %p49 = scmp.ne.s32.totalorder %s38, %s41
    %p50 = scmp.eq.s32.totalorder %s33, 1
    %p51 = por %p49, %p50
    %p52 = scmp.ne.s32.totalorder %s41, %s42
    %p53 = scmp.eq.s32.totalorder %s33, 0
    %p54 = por %p52, %p53
    %p55 = scmp.ne.s32.totalorder %s41, %s42
    %p56 = scmp.eq.s32.totalorder %s34, 1
    %p57 = por %p55, %p56
    %p59 = scmp.ne.s32.totalorder %s42, %s58
    %p60 = scmp.eq.s32.totalorder %s34, 0
    %p61 = por %p59, %p60
    %s62 = ssub.s32 %s28, %s35
    %p63 = scmp.eq.s32.totalorder %s62, 0
    %s65 = sadd.s32 %s64, 1
    %s66 = scalar_select %p63, %s64, %s65
    %p69 = pneg %p63
    %p70 = scmp.eq.s32.totalorder %s28, 1
    %p71 = por %p69, %p70
    %p72 = scmp.ne.s32.totalorder %s64, %s67
    %p73 = scmp.eq.s32.totalorder %s28, 0
    %p74 = por %p72, %p73
    %p75 = scmp.ne.s32.totalorder %s64, %s67
    %p76 = scmp.eq.s32.totalorder %s33, 1
    %p77 = por %p75, %p76
    %p78 = scmp.ne.s32.totalorder %s67, %s68
    %p79 = scmp.eq.s32.totalorder %s33, 0
    %p80 = por %p78, %p79
    %p81 = scmp.ne.s32.totalorder %s67, %s68
    %p82 = scmp.eq.s32.totalorder %s34, 1
    %p83 = por %p81, %p82
    %p85 = scmp.ne.s32.totalorder %s68, %s84
    %p86 = scmp.eq.s32.totalorder %s34, 0
    %p87 = por %p85, %p86
    %s89 = sadd.s32 %s88, 1
    %p92 = scmp.eq.s32.totalorder %s28, 1
    %p93 = scmp.ne.s32.totalorder %s88, %s90
    %p94 = scmp.eq.s32.totalorder %s28, 0
    %p95 = por %p93, %p94
    %p96 = scmp.ne.s32.totalorder %s88, %s90
    %p97 = scmp.eq.s32.totalorder %s33, 1
    %p98 = por %p96, %p97
    %p99 = scmp.ne.s32.totalorder %s90, %s91
    %p100 = scmp.eq.s32.totalorder %s33, 0
    %p101 = por %p99, %p100
    %p102 = scmp.ne.s32.totalorder %s90, %s91
    %p103 = scmp.eq.s32.totalorder %s34, 1
    %p104 = por %p102, %p103
    %p106 = scmp.ne.s32.totalorder %s91, %s105
    %p107 = scmp.eq.s32.totalorder %s34, 0
    %p108 = por %p106, %p107
    %s110 = sadd.s32 %s109, 1
    %p113 = scmp.eq.s32.totalorder %s28, 1
    %p114 = scmp.ne.s32.totalorder %s109, %s111
    %p115 = scmp.eq.s32.totalorder %s28, 0
    %p116 = por %p114, %p115
    %p117 = scmp.ne.s32.totalorder %s109, %s111
    %p118 = scmp.eq.s32.totalorder %s33, 1
    %p119 = por %p117, %p118
    %p120 = scmp.ne.s32.totalorder %s111, %s112
    %p121 = scmp.eq.s32.totalorder %s33, 0
    %p122 = por %p120, %p121
    %p123 = scmp.ne.s32.totalorder %s111, %s112
    %p124 = scmp.eq.s32.totalorder %s34, 1
    %p125 = por %p123, %p124
    %p127 = scmp.ne.s32.totalorder %s112, %s126
    %p128 = scmp.eq.s32.totalorder %s34, 0
    %p129 = por %p127, %p128
    %s131 = sadd.s32 %s130, 1
    %p134 = scmp.eq.s32.totalorder %s28, 1
    %p135 = scmp.ne.s32.totalorder %s130, %s132
    %p136 = scmp.eq.s32.totalorder %s28, 0
    %p137 = por %p135, %p136
    %p138 = scmp.ne.s32.totalorder %s130, %s132
    %p139 = scmp.eq.s32.totalorder %s33, 1
    %p140 = por %p138, %p139
    %p141 = scmp.ne.s32.totalorder %s132, %s133
    %p142 = scmp.eq.s32.totalorder %s33, 0
    %p143 = por %p141, %p142
    %p144 = scmp.ne.s32.totalorder %s132, %s133
    %p145 = scmp.eq.s32.totalorder %s34, 1
    %p146 = por %p144, %p145
    %p148 = scmp.ne.s32.totalorder %s133, %s147
    %p149 = scmp.eq.s32.totalorder %s34, 0
    %p150 = por %p148, %p149
    %s152 = sadd.s32 %s151, 1
    %p155 = scmp.eq.s32.totalorder %s28, 1
    %p156 = scmp.ne.s32.totalorder %s151, %s153
    %p157 = scmp.eq.s32.totalorder %s28, 0
    %p158 = por %p156, %p157
    %p159 = scmp.ne.s32.totalorder %s151, %s153
    %p160 = scmp.eq.s32.totalorder %s33, 1
    %p161 = por %p159, %p160
    %p162 = scmp.ne.s32.totalorder %s153, %s154
    %p163 = scmp.eq.s32.totalorder %s33, 0
    %p164 = por %p162, %p163
    %p165 = scmp.ne.s32.totalorder %s153, %s154
    %p166 = scmp.eq.s32.totalorder %s34, 1
    %p167 = por %p165, %p166
    %p169 = scmp.ne.s32.totalorder %s154, %s168
    %p170 = scmp.eq.s32.totalorder %s34, 0
    %p171 = por %p169, %p170
    %s173 = sadd.s32 %s172, 1
    %p176 = scmp.eq.s32.totalorder %s28, 1
    %p177 = scmp.ne.s32.totalorder %s172, %s174
    %p178 = scmp.eq.s32.totalorder %s28, 0
    %p179 = por %p177, %p178
    %p180 = scmp.ne.s32.totalorder %s172, %s174
    %p181 = scmp.eq.s32.totalorder %s33, 1
    %p182 = por %p180, %p181
    %p183 = scmp.ne.s32.totalorder %s174, %s175
    %p184 = scmp.eq.s32.totalorder %s33, 0
    %p185 = por %p183, %p184
    %p186 = scmp.ne.s32.totalorder %s174, %s175
    %p187 = scmp.eq.s32.totalorder %s34, 1
    %p188 = por %p186, %p187
    %p190 = scmp.ne.s32.totalorder %s175, %s189
    %p191 = scmp.eq.s32.totalorder %s34, 0
    %p192 = por %p190, %p191
    %s194 = sadd.s32 %s193, 1
    %p197 = scmp.eq.s32.totalorder %s28, 1
    %p198 = scmp.ne.s32.totalorder %s193, %s195
    %p199 = scmp.eq.s32.totalorder %s28, 0
    %p200 = por %p198, %p199
    %p201 = scmp.ne.s32.totalorder %s193, %s195
    %p202 = scmp.eq.s32.totalorder %s33, 1
    %p203 = por %p201, %p202
    %p204 = scmp.ne.s32.totalorder %s195, %s196
    %p205 = scmp.eq.s32.totalorder %s33, 0
    %p206 = por %p204, %p205
    %p207 = scmp.ne.s32.totalorder %s195, %s196
    %p208 = scmp.eq.s32.totalorder %s34, 1
    %p209 = por %p207, %p208
    %p211 = scmp.ne.s32.totalorder %s196, %s210
    %p212 = scmp.eq.s32.totalorder %s34, 0
    %p213 = por %p211, %p212
    %s215 = sadd.s32 %s214, 1
    %p218 = scmp.eq.s32.totalorder %s28, 1
    %p219 = scmp.ne.s32.totalorder %s214, %s216
    %p220 = scmp.eq.s32.totalorder %s28, 0
    %p221 = por %p219, %p220
    %p222 = scmp.ne.s32.totalorder %s214, %s216
    %p223 = scmp.eq.s32.totalorder %s33, 1
    %p224 = por %p222, %p223
    %p225 = scmp.ne.s32.totalorder %s216, %s217
    %p226 = scmp.eq.s32.totalorder %s33, 0
    %p227 = por %p225, %p226
    %p228 = scmp.ne.s32.totalorder %s216, %s217
    %p229 = scmp.eq.s32.totalorder %s34, 1
    %p230 = por %p228, %p229
    %p232 = scmp.ne.s32.totalorder %s217, %s231
    %p233 = scmp.eq.s32.totalorder %s34, 0
    %p234 = por %p232, %p233
    %s236 = sadd.s32 %s235, 1
    %p239 = scmp.eq.s32.totalorder %s28, 1
    %p240 = scmp.ne.s32.totalorder %s235, %s237
    %p241 = scmp.eq.s32.totalorder %s28, 0
    %p242 = por %p240, %p241
    %p243 = scmp.ne.s32.totalorder %s235, %s237
    %p244 = scmp.eq.s32.totalorder %s33, 1
    %p245 = por %p243, %p244
    %p246 = scmp.ne.s32.totalorder %s237, %s238
    %p247 = scmp.eq.s32.totalorder %s33, 0
    %p248 = por %p246, %p247
    %p249 = scmp.ne.s32.totalorder %s237, %s238
    %p250 = scmp.eq.s32.totalorder %s34, 1
    %p251 = por %p249, %p250
    %p253 = scmp.ne.s32.totalorder %s238, %s252
    %p254 = scmp.eq.s32.totalorder %s34, 0
    %p255 = por %p253, %p254
    %s257 = sadd.s32 %s256, 1
    %p260 = scmp.eq.s32.totalorder %s28, 1
    %p261 = scmp.ne.s32.totalorder %s256, %s258
    %p262 = scmp.eq.s32.totalorder %s28, 0
    %p263 = por %p261, %p262
    %p264 = scmp.ne.s32.totalorder %s256, %s258
    %p265 = scmp.eq.s32.totalorder %s33, 1
    %p266 = por %p264, %p265
    %p267 = scmp.ne.s32.totalorder %s258, %s259
    %p268 = scmp.eq.s32.totalorder %s33, 0
    %p269 = por %p267, %p268
    %p270 = scmp.ne.s32.totalorder %s258, %s259
    %p271 = scmp.eq.s32.totalorder %s34, 1
    %p272 = por %p270, %p271
    %p274 = scmp.ne.s32.totalorder %s259, %s273
    %p275 = scmp.eq.s32.totalorder %s34, 0
    %p276 = por %p274, %p275
    %s278 = sadd.s32 %s277, 1
    %p281 = scmp.eq.s32.totalorder %s28, 1
    %p282 = scmp.ne.s32.totalorder %s277, %s279
    %p283 = scmp.eq.s32.totalorder %s28, 0
    %p284 = por %p282, %p283
    %p285 = scmp.ne.s32.totalorder %s277, %s279
    %p286 = scmp.eq.s32.totalorder %s33, 1
    %p287 = por %p285, %p286
    %p288 = scmp.ne.s32.totalorder %s279, %s280
    %p289 = scmp.eq.s32.totalorder %s33, 0
    %p290 = por %p288, %p289
    %p291 = scmp.ne.s32.totalorder %s279, %s280
    %p292 = scmp.eq.s32.totalorder %s34, 1
    %p293 = por %p291, %p292
    %p295 = scmp.ne.s32.totalorder %s280, %s294
    %p296 = scmp.eq.s32.totalorder %s34, 0
    %p297 = por %p295, %p296
    %s299 = sadd.s32 %s298, 1
    %p302 = scmp.eq.s32.totalorder %s28, 1
    %p303 = scmp.ne.s32.totalorder %s298, %s300
    %p304 = scmp.eq.s32.totalorder %s28, 0
    %p305 = por %p303, %p304
    %p306 = scmp.ne.s32.totalorder %s298, %s300
    %p307 = scmp.eq.s32.totalorder %s33, 1
    %p308 = por %p306, %p307
    %p309 = scmp.ne.s32.totalorder %s300, %s301
    %p310 = scmp.eq.s32.totalorder %s33, 0
    %p311 = por %p309, %p310
    %p312 = scmp.ne.s32.totalorder %s300, %s301
    %p313 = scmp.eq.s32.totalorder %s34, 1
    %p314 = por %p312, %p313
    %p316 = scmp.ne.s32.totalorder %s301, %s315
    %p317 = scmp.eq.s32.totalorder %s34, 0
    %p318 = por %p316, %p317
    %s320 = sadd.s32 %s319, 1
    %p323 = scmp.eq.s32.totalorder %s28, 1
    %p324 = scmp.ne.s32.totalorder %s319, %s321
    %p325 = scmp.eq.s32.totalorder %s28, 0
    %p326 = por %p324, %p325
    %p327 = scmp.ne.s32.totalorder %s319, %s321
    %p328 = scmp.eq.s32.totalorder %s33, 1
    %p329 = por %p327, %p328
    %p330 = scmp.ne.s32.totalorder %s321, %s322
    %p331 = scmp.eq.s32.totalorder %s33, 0
    %p332 = por %p330, %p331
    %p333 = scmp.ne.s32.totalorder %s321, %s322
    %p334 = scmp.eq.s32.totalorder %s34, 1
    %p335 = por %p333, %p334
    %p337 = scmp.ne.s32.totalorder %s322, %s336
    %p338 = scmp.eq.s32.totalorder %s34, 0
    %p339 = por %p337, %p338
    %s341 = sadd.s32 %s340, 1
    %p344 = scmp.eq.s32.totalorder %s28, 1
    %p345 = scmp.ne.s32.totalorder %s340, %s342
    %p346 = scmp.eq.s32.totalorder %s28, 0
    %p347 = por %p345, %p346
    %p348 = scmp.ne.s32.totalorder %s340, %s342
    %p349 = scmp.eq.s32.totalorder %s33, 1
    %p350 = por %p348, %p349
    %p351 = scmp.ne.s32.totalorder %s342, %s343
    %p352 = scmp.eq.s32.totalorder %s33, 0
    %p353 = por %p351, %p352
    %p354 = scmp.ne.s32.totalorder %s342, %s343
    %p355 = scmp.eq.s32.totalorder %s34, 1
    %p356 = por %p354, %p355
    %p358 = scmp.ne.s32.totalorder %s343, %s357
    %p359 = scmp.eq.s32.totalorder %s34, 0
    %p360 = por %p358, %p359
    %s362 = sadd.s32 %s361, 1
    %p365 = scmp.eq.s32.totalorder %s28, 1
    %p366 = scmp.ne.s32.totalorder %s361, %s363
    %p367 = scmp.eq.s32.totalorder %s28, 0
    %p368 = por %p366, %p367
    %p369 = scmp.ne.s32.totalorder %s361, %s363
    %p370 = scmp.eq.s32.totalorder %s33, 1
    %p371 = por %p369, %p370
    %p372 = scmp.ne.s32.totalorder %s363, %s364
    %p373 = scmp.eq.s32.totalorder %s33, 0
    %p374 = por %p372, %p373
    %p375 = scmp.ne.s32.totalorder %s363, %s364
    %p376 = scmp.eq.s32.totalorder %s34, 1
    %p377 = por %p375, %p376
    %p379 = scmp.ne.s32.totalorder %s364, %s378
    %p380 = scmp.eq.s32.totalorder %s34, 0
    %p381 = por %p379, %p380
    %s383 = sadd.s32 %s382, 1
    %p386 = scmp.eq.s32.totalorder %s28, 1
    %p387 = scmp.ne.s32.totalorder %s382, %s384
    %p388 = scmp.eq.s32.totalorder %s28, 0
    %p389 = por %p387, %p388
    %p390 = scmp.ne.s32.totalorder %s382, %s384
    %p391 = scmp.eq.s32.totalorder %s33, 1
    %p392 = por %p390, %p391
    %p393 = scmp.ne.s32.totalorder %s384, %s385
    %p394 = scmp.eq.s32.totalorder %s33, 0
    %p395 = por %p393, %p394
    %p396 = scmp.ne.s32.totalorder %s384, %s385
    %p397 = scmp.eq.s32.totalorder %s34, 1
    %p398 = por %p396, %p397
    %p400 = scmp.ne.s32.totalorder %s385, %s399
    %p401 = scmp.eq.s32.totalorder %s34, 0
    %p402 = por %p400, %p401
    %s404 = sadd.s32 %s403, 1
    %p407 = scmp.eq.s32.totalorder %s28, 1
    %p408 = scmp.ne.s32.totalorder %s403, %s405
    %p409 = scmp.eq.s32.totalorder %s28, 0
    %p410 = por %p408, %p409
    %p411 = scmp.ne.s32.totalorder %s403, %s405
    %p412 = scmp.eq.s32.totalorder %s33, 1
    %p413 = por %p411, %p412
    %p414 = scmp.ne.s32.totalorder %s405, %s406
    %p415 = scmp.eq.s32.totalorder %s33, 0
    %p416 = por %p414, %p415
    %p417 = scmp.ne.s32.totalorder %s405, %s406
    %p418 = scmp.eq.s32.totalorder %s34, 1
    %p419 = por %p417, %p418
    %p421 = scmp.ne.s32.totalorder %s406, %s420
    %p422 = scmp.eq.s32.totalorder %s34, 0
    %p423 = por %p421, %p422
    %s425 = sadd.s32 %s424, 1
    %p428 = scmp.eq.s32.totalorder %s28, 1
    %p429 = scmp.ne.s32.totalorder %s424, %s426
    %p430 = scmp.eq.s32.totalorder %s28, 0
    %p431 = por %p429, %p430
    %p432 = scmp.ne.s32.totalorder %s424, %s426
    %p433 = scmp.eq.s32.totalorder %s33, 1
    %p434 = por %p432, %p433
    %p435 = scmp.ne.s32.totalorder %s426, %s427
    %p436 = scmp.eq.s32.totalorder %s33, 0
    %p437 = por %p435, %p436
    %p438 = scmp.ne.s32.totalorder %s426, %s427
    %p439 = scmp.eq.s32.totalorder %s34, 1
    %p440 = por %p438, %p439
    %p442 = scmp.ne.s32.totalorder %s427, %s441
    %p443 = scmp.eq.s32.totalorder %s34, 0
    %p444 = por %p442, %p443
    %s446 = sadd.s32 %s445, 1
    %p449 = scmp.eq.s32.totalorder %s28, 1
    %p450 = scmp.ne.s32.totalorder %s445, %s447
    %p451 = scmp.eq.s32.totalorder %s28, 0
    %p452 = por %p450, %p451
    %p453 = scmp.ne.s32.totalorder %s445, %s447
    %p454 = scmp.eq.s32.totalorder %s33, 1
    %p455 = por %p453, %p454
    %p456 = scmp.ne.s32.totalorder %s447, %s448
    %p457 = scmp.eq.s32.totalorder %s33, 0
    %p458 = por %p456, %p457
    %p459 = scmp.ne.s32.totalorder %s447, %s448
    %p460 = scmp.eq.s32.totalorder %s34, 1
    %p461 = por %p459, %p460
    %p463 = scmp.ne.s32.totalorder %s448, %s462
    %p464 = scmp.eq.s32.totalorder %s34, 0
    %p465 = por %p463, %p464
    %s467 = sadd.s32 %s466, 1
    %p470 = scmp.eq.s32.totalorder %s28, 1
    %p471 = scmp.ne.s32.totalorder %s466, %s468
    %p472 = scmp.eq.s32.totalorder %s28, 0
    %p473 = por %p471, %p472
    %p474 = scmp.ne.s32.totalorder %s466, %s468
    %p475 = scmp.eq.s32.totalorder %s33, 1
    %p476 = por %p474, %p475
    %p477 = scmp.ne.s32.totalorder %s468, %s469
    %p478 = scmp.eq.s32.totalorder %s33, 0
    %p479 = por %p477, %p478
    %p480 = scmp.ne.s32.totalorder %s468, %s469
    %p481 = scmp.eq.s32.totalorder %s34, 1
    %p482 = por %p480, %p481
    %p484 = scmp.ne.s32.totalorder %s469, %s483
    %p485 = scmp.eq.s32.totalorder %s34, 0
    %p486 = por %p484, %p485
    %s488 = sadd.s32 %s487, 1
    %p491 = scmp.eq.s32.totalorder %s28, 1
    %p492 = scmp.ne.s32.totalorder %s487, %s489
    %p493 = scmp.eq.s32.totalorder %s28, 0
    %p494 = por %p492, %p493
    %p495 = scmp.ne.s32.totalorder %s487, %s489
    %p496 = scmp.eq.s32.totalorder %s33, 1
    %p497 = por %p495, %p496
    %p498 = scmp.ne.s32.totalorder %s489, %s490
    %p499 = scmp.eq.s32.totalorder %s33, 0
    %p500 = por %p498, %p499
    %p501 = scmp.ne.s32.totalorder %s489, %s490
    %p502 = scmp.eq.s32.totalorder %s34, 1
    %p503 = por %p501, %p502
    %p505 = scmp.ne.s32.totalorder %s490, %s504
    %p506 = scmp.eq.s32.totalorder %s34, 0
    %p507 = por %p505, %p506
    %s508 = ssub.s32 %s28, %s35
    %p509 = scmp.eq.s32.totalorder %s508, 0
    %s511 = sadd.s32 %s510, 1
    %s512 = scalar_select %p509, %s510, %s511
    %p515 = pneg %p509
    %p516 = scmp.eq.s32.totalorder %s28, 1
    %p517 = por %p515, %p516
    %p518 = scmp.ne.s32.totalorder %s510, %s513
    %p519 = scmp.eq.s32.totalorder %s28, 0
    %p520 = por %p518, %p519
    %p521 = scmp.ne.s32.totalorder %s510, %s513
    %p522 = scmp.eq.s32.totalorder %s33, 1
    %p523 = por %p521, %p522
    %p524 = scmp.ne.s32.totalorder %s513, %s514
    %p525 = scmp.eq.s32.totalorder %s33, 0
    %p526 = por %p524, %p525
    %p527 = scmp.ne.s32.totalorder %s513, %s514
    %p528 = scmp.eq.s32.totalorder %s34, 1
    %p529 = por %p527, %p528
    %p531 = scmp.ne.s32.totalorder %s514, %s530
    %p532 = scmp.eq.s32.totalorder %s34, 0
    %p533 = por %p531, %p532
    %p534 = scmp.le.s32.totalorder 1, %s28
    %p535 = scmp.lt.s32.totalorder %s28, 3
    %p536 = pnand %p534, %p535
    %p537 = pneg %p536
    // Predicated region
    $region9: #{_lambda_.9} parent=5 // pred_check
      _
    $region10: #{_lambda_.9} parent=5 // pred_check_branch
      %539 = sbr.rel (%p536) target = $region12
    $region11: #{_lambda_.9} parent=5 // pred_region
      %s540 = ssub.s32 %s28, 1
      // Predicated region
      $region13: #{_lambda_.9} parent=11 // pred_check
        %p541 = pneg %p101
      $region14: #{_lambda_.9} parent=11 // pred_check_branch
        %543 = sbr.rel (%p541) target = $region16
      $region15: #{_lambda_.9} parent=11 // pred_region
        _
      $region16: #{_lambda_.9} parent=11 // pred_fallthru
        _
      // Predicated region
      $region17: #{_lambda_.9} parent=11 // pred_check
        %p544 = pneg %p122
      $region18: #{_lambda_.9} parent=11 // pred_check_branch
        %546 = sbr.rel (%p544) target = $region20
      $region19: #{_lambda_.9} parent=11 // pred_region
        _
      $region20: #{_lambda_.9} parent=11 // pred_fallthru
        _
      // Predicated region
      $region21: #{_lambda_.9} parent=11 // pred_check
        %p547 = pneg %p143
      $region22: #{_lambda_.9} parent=11 // pred_check_branch
        %549 = sbr.rel (%p547) target = $region24
      $region23: #{_lambda_.9} parent=11 // pred_region
        _
      $region24: #{_lambda_.9} parent=11 // pred_fallthru
        _
      // Predicated region
      $region25: #{_lambda_.9} parent=11 // pred_check
        %p550 = pneg %p164
      $region26: #{_lambda_.9} parent=11 // pred_check_branch
        %552 = sbr.rel (%p550) target = $region28
      $region27: #{_lambda_.9} parent=11 // pred_region
        _
      $region28: #{_lambda_.9} parent=11 // pred_fallthru
        _
      // Predicated region
      $region29: #{_lambda_.9} parent=11 // pred_check
        %p553 = pneg %p185
      $region30: #{_lambda_.9} parent=11 // pred_check_branch
        %555 = sbr.rel (%p553) target = $region32
      $region31: #{_lambda_.9} parent=11 // pred_region
        _
      $region32: #{_lambda_.9} parent=11 // pred_fallthru
        _
      // Predicated region
      $region33: #{_lambda_.9} parent=11 // pred_check
        %p556 = pneg %p206
      $region34: #{_lambda_.9} parent=11 // pred_check_branch
        %558 = sbr.rel (%p556) target = $region36
      $region35: #{_lambda_.9} parent=11 // pred_region
        _
      $region36: #{_lambda_.9} parent=11 // pred_fallthru
        _
      // Predicated region
      $region37: #{_lambda_.9} parent=11 // pred_check
        %p559 = pneg %p227
      $region38: #{_lambda_.9} parent=11 // pred_check_branch
        %561 = sbr.rel (%p559) target = $region40
      $region39: #{_lambda_.9} parent=11 // pred_region
        _
      $region40: #{_lambda_.9} parent=11 // pred_fallthru
        _
      // Predicated region
      $region41: #{_lambda_.9} parent=11 // pred_check
        %p562 = pneg %p248
      $region42: #{_lambda_.9} parent=11 // pred_check_branch
        %564 = sbr.rel (%p562) target = $region44
      $region43: #{_lambda_.9} parent=11 // pred_region
        _
      $region44: #{_lambda_.9} parent=11 // pred_fallthru
        _
      // Predicated region
      $region45: #{_lambda_.9} parent=11 // pred_check
        %p565 = pneg %p269
      $region46: #{_lambda_.9} parent=11 // pred_check_branch
        %567 = sbr.rel (%p565) target = $region48
      $region47: #{_lambda_.9} parent=11 // pred_region
        _
      $region48: #{_lambda_.9} parent=11 // pred_fallthru
        _
      // Predicated region
      $region49: #{_lambda_.9} parent=11 // pred_check
        %p568 = pneg %p290
      $region50: #{_lambda_.9} parent=11 // pred_check_branch
        %570 = sbr.rel (%p568) target = $region52
      $region51: #{_lambda_.9} parent=11 // pred_region
        _
      $region52: #{_lambda_.9} parent=11 // pred_fallthru
        _
      // Predicated region
      $region53: #{_lambda_.9} parent=11 // pred_check
        %p571 = pneg %p311
      $region54: #{_lambda_.9} parent=11 // pred_check_branch
        %573 = sbr.rel (%p571) target = $region56
      $region55: #{_lambda_.9} parent=11 // pred_region
        _
      $region56: #{_lambda_.9} parent=11 // pred_fallthru
        _
      // Predicated region
      $region57: #{_lambda_.9} parent=11 // pred_check
        %p574 = pneg %p332
      $region58: #{_lambda_.9} parent=11 // pred_check_branch
        %576 = sbr.rel (%p574) target = $region60
      $region59: #{_lambda_.9} parent=11 // pred_region
        _
      $region60: #{_lambda_.9} parent=11 // pred_fallthru
        _
      // Predicated region
      $region61: #{_lambda_.9} parent=11 // pred_check
        %p577 = pneg %p353
      $region62: #{_lambda_.9} parent=11 // pred_check_branch
        %579 = sbr.rel (%p577) target = $region64
      $region63: #{_lambda_.9} parent=11 // pred_region
        _
      $region64: #{_lambda_.9} parent=11 // pred_fallthru
        _
      // Predicated region
      $region65: #{_lambda_.9} parent=11 // pred_check
        %p580 = pneg %p374
      $region66: #{_lambda_.9} parent=11 // pred_check_branch
        %582 = sbr.rel (%p580) target = $region68
      $region67: #{_lambda_.9} parent=11 // pred_region
        _
      $region68: #{_lambda_.9} parent=11 // pred_fallthru
        _
      // Predicated region
      $region69: #{_lambda_.9} parent=11 // pred_check
        %p583 = pneg %p395
      $region70: #{_lambda_.9} parent=11 // pred_check_branch
        %585 = sbr.rel (%p583) target = $region72
      $region71: #{_lambda_.9} parent=11 // pred_region
        _
      $region72: #{_lambda_.9} parent=11 // pred_fallthru
        _
      // Predicated region
      $region73: #{_lambda_.9} parent=11 // pred_check
        %p586 = pneg %p416
      $region74: #{_lambda_.9} parent=11 // pred_check_branch
        %588 = sbr.rel (%p586) target = $region76
      $region75: #{_lambda_.9} parent=11 // pred_region
        _
      $region76: #{_lambda_.9} parent=11 // pred_fallthru
        _
      // Predicated region
      $region77: #{_lambda_.9} parent=11 // pred_check
        %p589 = pneg %p437
      $region78: #{_lambda_.9} parent=11 // pred_check_branch
        %591 = sbr.rel (%p589) target = $region80
      $region79: #{_lambda_.9} parent=11 // pred_region
        _
      $region80: #{_lambda_.9} parent=11 // pred_fallthru
        _
      // Predicated region
      $region81: #{_lambda_.9} parent=11 // pred_check
        %p592 = pneg %p458
      $region82: #{_lambda_.9} parent=11 // pred_check_branch
        %594 = sbr.rel (%p592) target = $region84
      $region83: #{_lambda_.9} parent=11 // pred_region
        _
      $region84: #{_lambda_.9} parent=11 // pred_fallthru
        _
      // Predicated region
      $region85: #{_lambda_.9} parent=11 // pred_check
        %p595 = pneg %p479
      $region86: #{_lambda_.9} parent=11 // pred_check_branch
        %597 = sbr.rel (%p595) target = $region88
      $region87: #{_lambda_.9} parent=11 // pred_region
        _
      $region88: #{_lambda_.9} parent=11 // pred_fallthru
        _
      // Predicated region
      $region89: #{_lambda_.9} parent=11 // pred_check
        %p598 = pneg %p500
      $region90: #{_lambda_.9} parent=11 // pred_check_branch
        %600 = sbr.rel (%p598) target = $region92
      $region91: #{_lambda_.9} parent=11 // pred_region
        _
      $region92: #{_lambda_.9} parent=11 // pred_fallthru
        _
    $region12: #{_lambda_.9} parent=5 // pred_fallthru
      _
    %p601 = scmp.lt.s32.totalorder %s28, 2
    // Predicated region
    $region93: #{_lambda_.9} parent=5 // pred_check
      %p602 = pneg %p601
    $region94: #{_lambda_.9} parent=5 // pred_check_branch
      %604 = sbr.rel (%p602) target = $region96
    $region95: #{_lambda_.9} parent=5 // pred_region
      // Predicated region
      $region97: #{_lambda_.9} parent=95 // pred_check
        %p605 = pneg %p48
      $region98: #{_lambda_.9} parent=95 // pred_check_branch
        %607 = sbr.rel (%p605) target = $region100
      $region99: #{_lambda_.9} parent=95 // pred_region
        %p608 = scmp.lt.s32.totalorder %s28, 1
        %s609 = scalar_select %p608, %s28, 1
        %s610 = smul.addr %s609, 8
        %s611 = scalar_lea.vmem %s0, %s610
      $region100: #{_lambda_.9} parent=95 // pred_fallthru
        _
      // Predicated region
      $region101: #{_lambda_.9} parent=95 // pred_check
        %p612 = pneg %p74
      $region102: #{_lambda_.9} parent=95 // pred_check_branch
        %614 = sbr.rel (%p612) target = $region104
      $region103: #{_lambda_.9} parent=95 // pred_region
        %p615 = scmp.lt.s32.totalorder %s28, 1
        %s616 = scalar_select %p615, %s28, 1
        %s617 = smul.addr %s616, 8
        %s618 = scalar_lea.vmem %s1, %s617
      $region104: #{_lambda_.9} parent=95 // pred_fallthru
        _
    $region96: #{_lambda_.9} parent=5 // pred_fallthru
      _
    %p619 = scmp.le.s32.totalorder 1, %s28
    %p620 = scmp.lt.s32.totalorder %s28, 3
    %p621 = pnand %p619, %p620
    %p622 = pneg %p621
    // Predicated region
    $region105: #{_lambda_.9} parent=5 // pred_check
      _
    $region106: #{_lambda_.9} parent=5 // pred_check_branch
      %624 = sbr.rel (%p621) target = $region108
    $region107: #{_lambda_.9} parent=5 // pred_region
      %s625 = ssub.s32 %s28, 1
      %p626 = scmp.lt.s32.totalorder %s33, 1
      %s627 = scalar_select %p626, %s33, 1
      %s628 = smul.addr %s627, 8
      %s629 = scalar_lea.vmem %s0, %s628
      %p630 = pneg %p54
      %p631 = pneg %p51
      %p632 = scmp.lt.s32.totalorder %s33, 1
      %s633 = scalar_select %p632, %s33, 1
      %s634 = smul.addr %s633, 8
      %s635 = scalar_lea.vmem %s1, %s634
      %p636 = pneg %p80
      %p637 = pneg %p77
      %p638 = pneg %p101
      %p639 = pneg %p98
      %p640 = pneg %p122
      %p641 = pneg %p119
      %p642 = pneg %p143
      %p643 = pneg %p140
      %p644 = pneg %p164
      %p645 = pneg %p161
      %p646 = pneg %p185
      %p647 = pneg %p182
      %p648 = pneg %p206
      %p649 = pneg %p203
      %p650 = pneg %p227
      %p651 = pneg %p224
      %p652 = pneg %p248
      %p653 = pneg %p245
      %p654 = pneg %p269
      %p655 = pneg %p266
      %p656 = pneg %p290
      %p657 = pneg %p287
      %p658 = pneg %p311
      %p659 = pneg %p308
      %p660 = pneg %p332
      %p661 = pneg %p329
      %p662 = pneg %p353
      %p663 = pneg %p350
      %p664 = pneg %p374
      %p665 = pneg %p371
      %p666 = pneg %p395
      %p667 = pneg %p392
      %p668 = pneg %p416
      %p669 = pneg %p413
      %p670 = pneg %p437
      %p671 = pneg %p434
      %p672 = pneg %p458
      %p673 = pneg %p455
      %p674 = pneg %p479
      %p675 = pneg %p476
      %p676 = pneg %p500
      %p677 = pneg %p497
      %p678 = pneg %p526
      %p679 = pneg %p523
      %p680 = scmp.lt.s32.totalorder %s33, 1
      %s681 = scalar_select %p680, %s33, 1
      %s682 = smul.addr %s681, 8
      %s683 = scalar_lea.vmem %s22, %s682
      %p684 = scmp.lt.s32.totalorder %s33, 1
      %s685 = scalar_select %p684, %s33, 1
      %s686 = smul.addr %s685, 8
      %s687 = scalar_lea.vmem %s0, %s686
      %p688 = scmp.lt.s32.totalorder %s33, 1
      %s689 = scalar_select %p688, %s33, 1
      %s690 = smul.addr %s689, 8
      %s691 = scalar_lea.vmem %s1, %s690
      %p692 = scmp.lt.s32.totalorder %s33, 1
      %s693 = scalar_select %p692, %s33, 1
      %s694 = smul.addr %s693, 8
      %s695 = scalar_lea.vmem %s22, %s694
      %v696 = vld [vmem:[%s687] sm:$0xff]
      %v697 = vld [vmem:[%s691] sm:$0x1f]
      %v698 = vld [vmem:[%s2] sm:$0x1]
      %v699 = vld [vmem:[%s3] sm:$0x1]
      %vm700 = vcmask 523264
      %v701 = vsel %vm700, %v696, 0.0
      %702 = vadd.xlane.f32.xlu0 %v701
      %v703 = vpop.xlane.xlu0 %702
      %v704 = vrcp.pop 64.0
      %v705 = vmul.f32 %v703, %v704
      %v706 = vsub.f32 %v696, %v705
      %v707 = vmul.f32 %v706, %v706
      %v708 = vsel %vm700, %v707, 0.0
      %709 = vadd.xlane.f32.xlu0 %v708
      %v710 = vpop.xlane.xlu0 %709
      %v711 = vmul.f32 %v710, %v704
      %v712 = vadd.f32 %v711, 1e-05
      %v713 = vrsqrt.pop %v712
      %v714 = vmul.f32 %v706, %v713
      %v716 = vlaneseq
      %v717 = vshrl.u32 %v716, 7
      %v718 = vsub.s32 0, %v717
      %v719 = vrot.slane %v698, %v718
      %v721 = vmul.f32 %v714, %v719
      %v723 = vlaneseq
      %v724 = vshrl.u32 %v723, 7
      %v725 = vsub.s32 0, %v724
      %v726 = vrot.slane %v699, %v725
      %v728 = vadd.f32 %v721, %v726
      %v729 = vld [vmem:[%s4] sm:$0xff]
      %v730 = vld [vmem:[%s4 + $0x8] sm:$0xff]
      %v731 = vld [vmem:[%s4 + $0x10] sm:$0xff]
      %v732 = vld [vmem:[%s4 + $0x18] sm:$0xff]
      %v733 = vld [vmem:[%s4 + $0x20] sm:$0xff]
      %v734 = vld [vmem:[%s4 + $0x28] sm:$0xff]
      %v735 = vld [vmem:[%s4 + $0x30] sm:$0xff]
      %v736 = vld [vmem:[%s4 + $0x38] sm:$0xff]
      %v737 = vld [vmem:[%s4 + $0x40] sm:$0xff]
      %v738 = vld [vmem:[%s4 + $0x48] sm:$0xff]
      %v739 = vld [vmem:[%s4 + $0x50] sm:$0xff]
      %v740 = vld [vmem:[%s4 + $0x58] sm:$0xff]
      %v741 = vld [vmem:[%s4 + $0x60] sm:$0xff]
      %v742 = vld [vmem:[%s4 + $0x68] sm:$0xff]
      %v743 = vld [vmem:[%s4 + $0x70] sm:$0xff]
      %v744 = vld [vmem:[%s4 + $0x78] sm:$0xff]
      %v745 = vld [vmem:[%s5] sm:$0x3]
      %v747 = vlaneseq
      %v748 = vshrl.u32 %v747, 7
      %v749 = vsub.s32 0, %v748
      %v750 = vrot.slane %v745, %v749
      %v751 = vlaneseq
      %v752 = vshrl.u32 %v751, 7
      %v753 = vsub.s32 1, %v752
      %v754 = vrot.slane %v745, %v753
      %v758 = vsel %vm700, %v728, 0
      %760 = vmatprep.subr.mxu0 %v730
      %761 = vmatpush1.msra.mxu0 %v729
      %762 = vmatprep.subr.mxu0 %v732
      %763 = vmatpush1.msra.mxu0 %v731
      %764 = vmatprep.subr.mxu0 %v734
      %765 = vmatpush1.msra.mxu0 %v733
      %766 = vmatprep.subr.mxu0 %v736
      %767 = vmatpush1.msra.mxu0 %v735
      %768 = vmatprep.subr.mxu0 %v738
      %769 = vmatpush1.msra.mxu0 %v737
      %770 = vmatprep.subr.mxu0 %v740
      %771 = vmatpush1.msra.mxu0 %v739
      %772 = vmatprep.subr.mxu0 %v742
      %773 = vmatpush1.msra.mxu0 %v741
      %774 = vmatprep.subr.mxu0 %v744
      %775 = vmatpush1.msra.mxu0 %v743
      %776 = vmatprep.subr.mxu0 0.0
      %777 = vmatpush1.msra.mxu0 0.0
      %778 = vmatprep.subr.mxu0 0.0
      %779 = vmatpush1.msra.mxu0 0.0
      %780 = vmatprep.subr.mxu0 0.0
      %781 = vmatpush1.msra.mxu0 0.0
      %782 = vmatprep.subr.mxu0 0.0
      %783 = vmatpush1.msra.mxu0 0.0
      %784 = vmatprep.subr.mxu0 0.0
      %785 = vmatpush1.msra.mxu0 0.0
      %786 = vmatprep.subr.mxu0 0.0
      %787 = vmatpush1.msra.mxu0 0.0
      %788 = vmatprep.subr.mxu0 0.0
      %789 = vmatpush1.msra.mxu0 0.0
      %790 = vmatprep.subr.mxu0 0.0
      %791 = vmatpush1.msra.mxu0 0.0
      %792 = vmatprep.subr.mxu0 0.0
      %793 = vmatpush1.msra.mxu0 0.0
      %794 = vmatprep.subr.mxu0 0.0
      %795 = vmatpush1.msra.mxu0 0.0
      %796 = vmatprep.subr.mxu0 0.0
      %797 = vmatpush1.msra.mxu0 0.0
      %798 = vmatprep.subr.mxu0 0.0
      %799 = vmatpush1.msra.mxu0 0.0
      %800 = vmatprep.subr.mxu0 0.0
      %801 = vmatpush1.msra.mxu0 0.0
      %802 = vmatprep.subr.mxu0 0.0
      %803 = vmatpush1.msra.mxu0 0.0
      %804 = vmatprep.subr.mxu0 0.0
      %805 = vmatpush1.msra.mxu0 0.0
      %806 = vmatprep.subr.mxu0 0.0
      %807 = vmatpush1.msra.mxu0 0.0
      %808 = vmatprep.subr.mxu0 0.0
      %809 = vmatpush1.msra.mxu0 0.0
      %810 = vmatprep.subr.mxu0 0.0
      %811 = vmatpush1.msra.mxu0 0.0
      %812 = vmatprep.subr.mxu0 0.0
      %813 = vmatpush1.msra.mxu0 0.0
      %814 = vmatprep.subr.mxu0 0.0
      %815 = vmatpush1.msra.mxu0 0.0
      %816 = vmatprep.subr.mxu0 0.0
      %817 = vmatpush1.msra.mxu0 0.0
      %818 = vmatprep.subr.mxu0 0.0
      %819 = vmatpush1.msra.mxu0 0.0
      %820 = vmatprep.subr.mxu0 0.0
      %821 = vmatpush1.msra.mxu0 0.0
      %822 = vmatprep.subr.mxu0 0.0
      %823 = vmatpush1.msra.mxu0 0.0
      %824 = vmatprep.mubr.f32.mxu0 0.0
      %825 = vmatmul.mubr.f32.gmra.mrb[0].mxu0 %v758
      %v826 = vpop.f32.mrb[0].mxu0
      %v827 = vadd.f32 %v750, %v826
      %v828 = vpop.f32.mrb[0].mxu0
      %v829 = vadd.f32 %v754, %v828
      %830 = vdwg.mxu0
      %v831 = vld [vmem:[%s6] sm:$0xff]
      %v832 = vld [vmem:[%s6 + $0x8] sm:$0xff]
      %v833 = vld [vmem:[%s6 + $0x10] sm:$0xff]
      %v834 = vld [vmem:[%s6 + $0x18] sm:$0xff]
      %v835 = vld [vmem:[%s6 + $0x20] sm:$0xff]
      %v836 = vld [vmem:[%s6 + $0x28] sm:$0xff]
      %v837 = vld [vmem:[%s6 + $0x30] sm:$0xff]
      %v838 = vld [vmem:[%s6 + $0x38] sm:$0xff]
      %v839 = vlaneseq
      %v840 = vshrl.u32 %v839, 7
      %v841 = vlaneseq
      %v842 = vand.u32 %v841, 127
      %vm843 = vcmp.ge.s32.totalorder %v840, %v842
      %845 = vrot.lane.b32.xlu0 %v827, 64
      %v846 = vpop.permute.xlu0 %845
      %vm847 = vcmask 130048
      %v848 = vsel %vm847, %v827, 0
      %v850 = vsel %vm847, %v846, 0
      %852 = vmatprep.subr.mxu0 0.0
      %853 = vmatpush1.xpose.msra.mxu0 %v850
      %854 = vmatprep.subr.mxu0 0.0
      %855 = vmatpush1.xpose.msra.mxu0 0.0
      %856 = vmatprep.subr.mxu0 0.0
      %857 = vmatpush1.xpose.msra.mxu0 0.0
      %858 = vmatprep.subr.mxu0 0.0
      %859 = vmatpush1.xpose.msra.mxu0 0.0
      %860 = vmatprep.subr.mxu0 0.0
      %861 = vmatpush1.xpose.msra.mxu0 0.0
      %862 = vmatprep.subr.mxu0 0.0
      %863 = vmatpush1.xpose.msra.mxu0 0.0
      %864 = vmatprep.subr.mxu0 0.0
      %865 = vmatpush1.xpose.msra.mxu0 0.0
      %866 = vmatprep.subr.mxu0 0.0
      %867 = vmatpush1.xpose.msra.mxu0 0.0
      %868 = vmatprep.subr.mxu0 0.0
      %869 = vmatpush1.xpose.msra.mxu0 0.0
      %870 = vmatprep.subr.mxu0 0.0
      %871 = vmatpush1.xpose.msra.mxu0 0.0
      %872 = vmatprep.subr.mxu0 0.0
      %873 = vmatpush1.xpose.msra.mxu0 0.0
      %874 = vmatprep.subr.mxu0 0.0
      %875 = vmatpush1.xpose.msra.mxu0 0.0
      %876 = vmatprep.subr.mxu0 0.0
      %877 = vmatpush1.xpose.msra.mxu0 0.0
      %878 = vmatprep.subr.mxu0 0.0
      %879 = vmatpush1.xpose.msra.mxu0 0.0
      %880 = vmatprep.subr.mxu0 0.0
      %881 = vmatpush1.xpose.msra.mxu0 0.0
      %882 = vmatprep.subr.mxu0 0.0
      %883 = vmatpush1.xpose.msra.mxu0 0.0
      %884 = vmatprep.subr.mxu0 0.0
      %885 = vmatpush1.xpose.msra.mxu0 0.0
      %886 = vmatprep.subr.mxu0 0.0
      %887 = vmatpush1.xpose.msra.mxu0 0.0
      %888 = vmatprep.subr.mxu0 0.0
      %889 = vmatpush1.xpose.msra.mxu0 0.0
      %890 = vmatprep.subr.mxu0 0.0
      %891 = vmatpush1.xpose.msra.mxu0 0.0
      %892 = vmatprep.subr.mxu0 0.0
      %893 = vmatpush1.xpose.msra.mxu0 0.0
      %894 = vmatprep.subr.mxu0 0.0
      %895 = vmatpush1.xpose.msra.mxu0 0.0
      %896 = vmatprep.subr.mxu0 0.0
      %897 = vmatpush1.xpose.msra.mxu0 0.0
      %898 = vmatprep.subr.mxu0 0.0
      %899 = vmatpush1.xpose.msra.mxu0 0.0
      %900 = vmatprep.subr.mxu0 0.0
      %901 = vmatpush1.xpose.msra.mxu0 0.0
      %902 = vmatprep.subr.mxu0 0.0
      %903 = vmatpush1.xpose.msra.mxu0 0.0
      %904 = vmatprep.subr.mxu0 0.0
      %905 = vmatpush1.xpose.msra.mxu0 0.0
      %906 = vmatprep.subr.mxu0 0.0
      %907 = vmatpush1.xpose.msra.mxu0 0.0
      %908 = vmatprep.subr.mxu0 0.0
      %909 = vmatpush1.xpose.msra.mxu0 0.0
      %910 = vmatprep.subr.mxu0 0.0
      %911 = vmatpush1.xpose.msra.mxu0 0.0
      %912 = vmatprep.subr.mxu0 0.0
      %913 = vmatpush1.xpose.msra.mxu0 0.0
      %914 = vmatprep.subr.mxu0 0.0
      %915 = vmatpush1.xpose.msra.mxu0 0.0
      %916 = vmatprep.mubr.f32.mxu0 0.0
      %917 = vmatmul.mubr.f32.gmra.mrb[0].mxu0 %v848
      %v918 = vpop.f32.mrb[0].mxu0
      %v919 = vadd.f32 0.0, %v918
      %v920 = vpop.f32.mrb[0].mxu0
      %921 = vdwg.mxu0
      %v922 = vmul.f32 %v919, 0.25
      %v923 = vsel %vm843, %v922, -inf
      %vm924 = vcmask 64512
      %v925 = vsel %vm924, %v923, -inf
      %926 = vmax.xlane.f32.xlu0 %v925
      %v927 = vpop.xlane.xlu0 %926
      %v928 = vsub.f32 %v923, %v927
      %v929 = vmul.f32 %v928, 1.442695
      %v930 = vpow.pop %v929
      %v931 = vsel %vm924, %v930, 0.0
      %932 = vadd.xlane.f32.xlu0 %v931
      %v933 = vpop.xlane.xlu0 %932
      %v934 = vrcp.pop %v933
      %v935 = vmul.f32 %v930, %v934
      %v937 = vsel %vm924, %v935, 0
      %939 = vmatprep.subr.mxu0 0.0
      %940 = vmatpush1.msra.mxu0 %v829
      %941 = vmatprep.subr.mxu0 0.0
      %942 = vmatpush1.msra.mxu0 0.0
      %943 = vmatprep.subr.mxu0 0.0
      %944 = vmatpush1.msra.mxu0 0.0
      %945 = vmatprep.subr.mxu0 0.0
      %946 = vmatpush1.msra.mxu0 0.0
      %947 = vmatprep.subr.mxu0 0.0
      %948 = vmatpush1.msra.mxu0 0.0
      %949 = vmatprep.subr.mxu0 0.0
      %950 = vmatpush1.msra.mxu0 0.0
      %951 = vmatprep.subr.mxu0 0.0
      %952 = vmatpush1.msra.mxu0 0.0
      %953 = vmatprep.subr.mxu0 0.0
      %954 = vmatpush1.msra.mxu0 0.0
      %955 = vmatprep.subr.mxu0 0.0
      %956 = vmatpush1.msra.mxu0 0.0
      %957 = vmatprep.subr.mxu0 0.0
      %958 = vmatpush1.msra.mxu0 0.0
      %959 = vmatprep.subr.mxu0 0.0
      %960 = vmatpush1.msra.mxu0 0.0
      %961 = vmatprep.subr.mxu0 0.0
      %962 = vmatpush1.msra.mxu0 0.0
      %963 = vmatprep.subr.mxu0 0.0
      %964 = vmatpush1.msra.mxu0 0.0
      %965 = vmatprep.subr.mxu0 0.0
      %966 = vmatpush1.msra.mxu0 0.0
      %967 = vmatprep.subr.mxu0 0.0
      %968 = vmatpush1.msra.mxu0 0.0
      %969 = vmatprep.subr.mxu0 0.0
      %970 = vmatpush1.msra.mxu0 0.0
      %971 = vmatprep.subr.mxu0 0.0
      %972 = vmatpush1.msra.mxu0 0.0
      %973 = vmatprep.subr.mxu0 0.0
      %974 = vmatpush1.msra.mxu0 0.0
      %975 = vmatprep.subr.mxu0 0.0
      %976 = vmatpush1.msra.mxu0 0.0
      %977 = vmatprep.subr.mxu0 0.0
      %978 = vmatpush1.msra.mxu0 0.0
      %979 = vmatprep.subr.mxu0 0.0
      %980 = vmatpush1.msra.mxu0 0.0
      %981 = vmatprep.subr.mxu0 0.0
      %982 = vmatpush1.msra.mxu0 0.0
      %983 = vmatprep.subr.mxu0 0.0
      %984 = vmatpush1.msra.mxu0 0.0
      %985 = vmatprep.subr.mxu0 0.0
      %986 = vmatpush1.msra.mxu0 0.0
      %987 = vmatprep.subr.mxu0 0.0
      %988 = vmatpush1.msra.mxu0 0.0
      %989 = vmatprep.subr.mxu0 0.0
      %990 = vmatpush1.msra.mxu0 0.0
      %991 = vmatprep.subr.mxu0 0.0
      %992 = vmatpush1.msra.mxu0 0.0
      %993 = vmatprep.subr.mxu0 0.0
      %994 = vmatpush1.msra.mxu0 0.0
      %995 = vmatprep.subr.mxu0 0.0
      %996 = vmatpush1.msra.mxu0 0.0
      %997 = vmatprep.subr.mxu0 0.0
      %998 = vmatpush1.msra.mxu0 0.0
      %999 = vmatprep.subr.mxu0 0.0
      %1000 = vmatpush1.msra.mxu0 0.0
      %1001 = vmatprep.subr.mxu0 0.0
      %1002 = vmatpush1.msra.mxu0 0.0
      %1003 = vmatprep.mubr.f32.mxu0 0.0
      %1004 = vmatmul.mubr.f32.gmra.mrb[0].mxu0 %v937
      %v1005 = vpop.f32.mrb[0].mxu0
      %v1006 = vadd.f32 0.0, %v1005
      %v1007 = vpop.f32.mrb[0].mxu0
      %1008 = vdwg.mxu0
      %1009 = vrot.lane.b32.xlu0 %v827, 112
      %v1010 = vpop.permute.xlu0 %1009
      %1011 = vrot.lane.b32.xlu0 %v827, 48
      %v1012 = vpop.permute.xlu0 %1011
      %v1013 = vsel %vm847, %v1010, 0
      %v1015 = vsel %vm847, %v1012, 0
      %1017 = vmatprep.subr.mxu0 0.0
      %1018 = vmatpush1.xpose.msra.mxu0 %v1015
      %1019 = vmatprep.subr.mxu0 0.0
      %1020 = vmatpush1.xpose.msra.mxu0 0.0
      %1021 = vmatprep.subr.mxu0 0.0
      %1022 = vmatpush1.xpose.msra.mxu0 0.0
      %1023 = vmatprep.subr.mxu0 0.0
      %1024 = vmatpush1.xpose.msra.mxu0 0.0
      %1025 = vmatprep.subr.mxu0 0.0
      %1026 = vmatpush1.xpose.msra.mxu0 0.0
      %1027 = vmatprep.subr.mxu0 0.0
      %1028 = vmatpush1.xpose.msra.mxu0 0.0
      %1029 = vmatprep.subr.mxu0 0.0
      %1030 = vmatpush1.xpose.msra.mxu0 0.0
      %1031 = vmatprep.subr.mxu0 0.0
      %1032 = vmatpush1.xpose.msra.mxu0 0.0
      %1033 = vmatprep.subr.mxu0 0.0
      %1034 = vmatpush1.xpose.msra.mxu0 0.0
      %1035 = vmatprep.subr.mxu0 0.0
      %1036 = vmatpush1.xpose.msra.mxu0 0.0
      %1037 = vmatprep.subr.mxu0 0.0
      %1038 = vmatpush1.xpose.msra.mxu0 0.0
      %1039 = vmatprep.subr.mxu0 0.0
      %1040 = vmatpush1.xpose.msra.mxu0 0.0
      %1041 = vmatprep.subr.mxu0 0.0
      %1042 = vmatpush1.xpose.msra.mxu0 0.0
      %1043 = vmatprep.subr.mxu0 0.0
      %1044 = vmatpush1.xpose.msra.mxu0 0.0
      %1045 = vmatprep.subr.mxu0 0.0
      %1046 = vmatpush1.xpose.msra.mxu0 0.0
      %1047 = vmatprep.subr.mxu0 0.0
      %1048 = vmatpush1.xpose.msra.mxu0 0.0
      %1049 = vmatprep.subr.mxu0 0.0
      %1050 = vmatpush1.xpose.msra.mxu0 0.0
      %1051 = vmatprep.subr.mxu0 0.0
      %1052 = vmatpush1.xpose.msra.mxu0 0.0
      %1053 = vmatprep.subr.mxu0 0.0
      %1054 = vmatpush1.xpose.msra.mxu0 0.0
      %1055 = vmatprep.subr.mxu0 0.0
      %1056 = vmatpush1.xpose.msra.mxu0 0.0
      %1057 = vmatprep.subr.mxu0 0.0
      %1058 = vmatpush1.xpose.msra.mxu0 0.0
      %1059 = vmatprep.subr.mxu0 0.0
      %1060 = vmatpush1.xpose.msra.mxu0 0.0
      %1061 = vmatprep.subr.mxu0 0.0
      %1062 = vmatpush1.xpose.msra.mxu0 0.0
      %1063 = vmatprep.subr.mxu0 0.0
      %1064 = vmatpush1.xpose.msra.mxu0 0.0
      %1065 = vmatprep.subr.mxu0 0.0
      %1066 = vmatpush1.xpose.msra.mxu0 0.0
      %1067 = vmatprep.subr.mxu0 0.0
      %1068 = vmatpush1.xpose.msra.mxu0 0.0
      %1069 = vmatprep.subr.mxu0 0.0
      %1070 = vmatpush1.xpose.msra.mxu0 0.0
      %1071 = vmatprep.subr.mxu0 0.0
      %1072 = vmatpush1.xpose.msra.mxu0 0.0
      %1073 = vmatprep.subr.mxu0 0.0
      %1074 = vmatpush1.xpose.msra.mxu0 0.0
      %1075 = vmatprep.subr.mxu0 0.0
      %1076 = vmatpush1.xpose.msra.mxu0 0.0
      %1077 = vmatprep.subr.mxu0 0.0
      %1078 = vmatpush1.xpose.msra.mxu0 0.0
      %1079 = vmatprep.subr.mxu0 0.0
      %1080 = vmatpush1.xpose.msra.mxu0 0.0
      %1081 = vmatprep.mubr.f32.mxu0 0.0
      %1082 = vmatmul.mubr.f32.gmra.mrb[0].mxu0 %v1013
      %v1083 = vpop.f32.mrb[0].mxu0
      %v1084 = vadd.f32 0.0, %v1083
      %v1085 = vpop.f32.mrb[0].mxu0
      %1086 = vdwg.mxu0
      %v1087 = vmul.f32 %v1084, 0.25
      %v1088 = vsel %vm843, %v1087, -inf
      %v1089 = vsel %vm924, %v1088, -inf
      %1090 = vmax.xlane.f32.xlu0 %v1089
      %v1091 = vpop.xlane.xlu0 %1090
      %v1092 = vsub.f32 %v1088, %v1091
      %v1093 = vmul.f32 %v1092, 1.442695
      %v1094 = vpow.pop %v1093
      %v1095 = vsel %vm924, %v1094, 0.0
      %1096 = vadd.xlane.f32.xlu0 %v1095
      %v1097 = vpop.xlane.xlu0 %1096
      %v1098 = vrcp.pop %v1097
      %v1099 = vmul.f32 %v1094, %v1098
      %1101 = vrot.lane.b32.xlu0 %v829, 112
      %v1102 = vpop.permute.xlu0 %1101
      %v1105 = vsel %vm924, %v1099, 0
      %1107 = vmatprep.subr.mxu0 0.0
      %1108 = vmatpush1.msra.mxu0 %v1102
      %1109 = vmatprep.subr.mxu0 0.0
      %1110 = vmatpush1.msra.mxu0 0.0
      %1111 = vmatprep.subr.mxu0 0.0
      %1112 = vmatpush1.msra.mxu0 0.0
      %1113 = vmatprep.subr.mxu0 0.0
      %1114 = vmatpush1.msra.mxu0 0.0
      %1115 = vmatprep.subr.mxu0 0.0
      %1116 = vmatpush1.msra.mxu0 0.0
      %1117 = vmatprep.subr.mxu0 0.0
      %1118 = vmatpush1.msra.mxu0 0.0
      %1119 = vmatprep.subr.mxu0 0.0
      %1120 = vmatpush1.msra.mxu0 0.0
      %1121 = vmatprep.subr.mxu0 0.0
      %1122 = vmatpush1.msra.mxu0 0.0
      %1123 = vmatprep.subr.mxu0 0.0
      %1124 = vmatpush1.msra.mxu0 0.0
      %1125 = vmatprep.subr.mxu0 0.0
      %1126 = vmatpush1.msra.mxu0 0.0
      %1127 = vmatprep.subr.mxu0 0.0
      %1128 = vmatpush1.msra.mxu0 0.0
      %1129 = vmatprep.subr.mxu0 0.0
      %1130 = vmatpush1.msra.mxu0 0.0
      %1131 = vmatprep.subr.mxu0 0.0
      %1132 = vmatpush1.msra.mxu0 0.0
      %1133 = vmatprep.subr.mxu0 0.0
      %1134 = vmatpush1.msra.mxu0 0.0
      %1135 = vmatprep.subr.mxu0 0.0
      %1136 = vmatpush1.msra.mxu0 0.0
      %1137 = vmatprep.subr.mxu0 0.0
      %1138 = vmatpush1.msra.mxu0 0.0
      %1139 = vmatprep.subr.mxu0 0.0
      %1140 = vmatpush1.msra.mxu0 0.0
      %1141 = vmatprep.subr.mxu0 0.0
      %1142 = vmatpush1.msra.mxu0 0.0
      %1143 = vmatprep.subr.mxu0 0.0
      %1144 = vmatpush1.msra.mxu0 0.0
      %1145 = vmatprep.subr.mxu0 0.0
      %1146 = vmatpush1.msra.mxu0 0.0
      %1147 = vmatprep.subr.mxu0 0.0
      %1148 = vmatpush1.msra.mxu0 0.0
      %1149 = vmatprep.subr.mxu0 0.0
      %1150 = vmatpush1.msra.mxu0 0.0
      %1151 = vmatprep.subr.mxu0 0.0
      %1152 = vmatpush1.msra.mxu0 0.0
      %1153 = vmatprep.subr.mxu0 0.0
      %1154 = vmatpush1.msra.mxu0 0.0
      %1155 = vmatprep.subr.mxu0 0.0
      %1156 = vmatpush1.msra.mxu0 0.0
      %1157 = vmatprep.subr.mxu0 0.0
      %1158 = vmatpush1.msra.mxu0 0.0
      %1159 = vmatprep.subr.mxu0 0.0
      %1160 = vmatpush1.msra.mxu0 0.0
      %1161 = vmatprep.subr.mxu0 0.0
      %1162 = vmatpush1.msra.mxu0 0.0
      %1163 = vmatprep.subr.mxu0 0.0
      %1164 = vmatpush1.msra.mxu0 0.0
      %1165 = vmatprep.subr.mxu0 0.0
      %1166 = vmatpush1.msra.mxu0 0.0
      %1167 = vmatprep.subr.mxu0 0.0
      %1168 = vmatpush1.msra.mxu0 0.0
      %1169 = vmatprep.subr.mxu0 0.0
      %1170 = vmatpush1.msra.mxu0 0.0
      %1171 = vmatprep.mubr.f32.mxu0 0.0
      %1172 = vmatmul.mubr.f32.gmra.mrb[0].mxu0 %v1105
      %v1173 = vpop.f32.mrb[0].mxu0
      %v1174 = vadd.f32 0.0, %v1173
      %v1175 = vpop.f32.mrb[0].mxu0
      %1176 = vdwg.mxu0
      %v1178 = vsel %vm847, %v1174, 0
      %1180 = vmatprep.subr.mxu0 0.0
      %1181 = vmatpush1.msra.mxu0 %v833
      %1182 = vmatprep.subr.mxu0 0.0
      %1183 = vmatpush1.msra.mxu0 %v834
      %1184 = vmatprep.subr.mxu0 0.0
      %1185 = vmatpush1.msra.mxu0 0.0
      %1186 = vmatprep.subr.mxu0 0.0
      %1187 = vmatpush1.msra.mxu0 0.0
      %1188 = vmatprep.subr.mxu0 0.0
      %1189 = vmatpush1.msra.mxu0 0.0
      %1190 = vmatprep.subr.mxu0 0.0
      %1191 = vmatpush1.msra.mxu0 0.0
      %1192 = vmatprep.subr.mxu0 0.0
      %1193 = vmatpush1.msra.mxu0 0.0
      %1194 = vmatprep.subr.mxu0 0.0
      %1195 = vmatpush1.msra.mxu0 0.0
      %1196 = vmatprep.subr.mxu0 0.0
      %1197 = vmatpush1.msra.mxu0 0.0
      %1198 = vmatprep.subr.mxu0 0.0
      %1199 = vmatpush1.msra.mxu0 0.0
      %1200 = vmatprep.subr.mxu0 0.0
      %1201 = vmatpush1.msra.mxu0 0.0
      %1202 = vmatprep.subr.mxu0 0.0
      %1203 = vmatpush1.msra.mxu0 0.0
      %1204 = vmatprep.subr.mxu0 0.0
      %1205 = vmatpush1.msra.mxu0 0.0
      %1206 = vmatprep.subr.mxu0 0.0
      %1207 = vmatpush1.msra.mxu0 0.0
      %1208 = vmatprep.subr.mxu0 0.0
      %1209 = vmatpush1.msra.mxu0 0.0
      %1210 = vmatprep.subr.mxu0 0.0
      %1211 = vmatpush1.msra.mxu0 0.0
      %1212 = vmatprep.subr.mxu0 0.0
      %1213 = vmatpush1.msra.mxu0 0.0
      %1214 = vmatprep.subr.mxu0 0.0
      %1215 = vmatpush1.msra.mxu0 0.0
      %1216 = vmatprep.subr.mxu0 0.0
      %1217 = vmatpush1.msra.mxu0 0.0
      %1218 = vmatprep.subr.mxu0 0.0
      %1219 = vmatpush1.msra.mxu0 0.0
      %1220 = vmatprep.subr.mxu0 0.0
      %1221 = vmatpush1.msra.mxu0 0.0
      %1222 = vmatprep.subr.mxu0 0.0
      %1223 = vmatpush1.msra.mxu0 0.0
      %1224 = vmatprep.subr.mxu0 0.0
      %1225 = vmatpush1.msra.mxu0 0.0
      %1226 = vmatprep.subr.mxu0 0.0
      %1227 = vmatpush1.msra.mxu0 0.0
      %1228 = vmatprep.subr.mxu0 0.0
      %1229 = vmatpush1.msra.mxu0 0.0
      %1230 = vmatprep.subr.mxu0 0.0
      %1231 = vmatpush1.msra.mxu0 0.0
      %1232 = vmatprep.subr.mxu0 0.0
      %1233 = vmatpush1.msra.mxu0 0.0
      %1234 = vmatprep.subr.mxu0 0.0
      %1235 = vmatpush1.msra.mxu0 0.0
      %1236 = vmatprep.subr.mxu0 0.0
      %1237 = vmatpush1.msra.mxu0 0.0
      %1238 = vmatprep.subr.mxu0 0.0
      %1239 = vmatpush1.msra.mxu0 0.0
      %1240 = vmatprep.subr.mxu0 0.0
      %1241 = vmatpush1.msra.mxu0 0.0
      %1242 = vmatprep.subr.mxu0 0.0
      %1243 = vmatpush1.msra.mxu0 0.0
      %1244 = vmatprep.mubr.f32.mxu0 0.0
      %1245 = vmatmul.mubr.f32.gmra.mrb[0].mxu0 %v1178
      %v1246 = vpop.f32.mrb[0].mxu0
      %v1247 = vadd.f32 0.0, %v1246
      %v1248 = vpop.f32.mrb[0].mxu0
      %1249 = vdwg.mxu0
      %v1251 = vsel %vm847, %v1006, 0
      %1253 = vmatprep.subr.mxu0 0.0
      %1254 = vmatpush1.msra.mxu0 %v831
      %1255 = vmatprep.subr.mxu0 0.0
      %1256 = vmatpush1.msra.mxu0 %v832
      %1257 = vmatprep.subr.mxu0 0.0
      %1258 = vmatpush1.msra.mxu0 0.0
      %1259 = vmatprep.subr.mxu0 0.0
      %1260 = vmatpush1.msra.mxu0 0.0
      %1261 = vmatprep.subr.mxu0 0.0
      %1262 = vmatpush1.msra.mxu0 0.0
      %1263 = vmatprep.subr.mxu0 0.0
      %1264 = vmatpush1.msra.mxu0 0.0
      %1265 = vmatprep.subr.mxu0 0.0
      %1266 = vmatpush1.msra.mxu0 0.0
      %1267 = vmatprep.subr.mxu0 0.0
      %1268 = vmatpush1.msra.mxu0 0.0
      %1269 = vmatprep.subr.mxu0 0.0
      %1270 = vmatpush1.msra.mxu0 0.0
      %1271 = vmatprep.subr.mxu0 0.0
      %1272 = vmatpush1.msra.mxu0 0.0
      %1273 = vmatprep.subr.mxu0 0.0
      %1274 = vmatpush1.msra.mxu0 0.0
      %1275 = vmatprep.subr.mxu0 0.0
      %1276 = vmatpush1.msra.mxu0 0.0
      %1277 = vmatprep.subr.mxu0 0.0
      %1278 = vmatpush1.msra.mxu0 0.0
      %1279 = vmatprep.subr.mxu0 0.0
      %1280 = vmatpush1.msra.mxu0 0.0
      %1281 = vmatprep.subr.mxu0 0.0
      %1282 = vmatpush1.msra.mxu0 0.0
      %1283 = vmatprep.subr.mxu0 0.0
      %1284 = vmatpush1.msra.mxu0 0.0
      %1285 = vmatprep.subr.mxu0 0.0
      %1286 = vmatpush1.msra.mxu0 0.0
      %1287 = vmatprep.subr.mxu0 0.0
      %1288 = vmatpush1.msra.mxu0 0.0
      %1289 = vmatprep.subr.mxu0 0.0
      %1290 = vmatpush1.msra.mxu0 0.0
      %1291 = vmatprep.subr.mxu0 0.0
      %1292 = vmatpush1.msra.mxu0 0.0
      %1293 = vmatprep.subr.mxu0 0.0
      %1294 = vmatpush1.msra.mxu0 0.0
      %1295 = vmatprep.subr.mxu0 0.0
      %1296 = vmatpush1.msra.mxu0 0.0
      %1297 = vmatprep.subr.mxu0 0.0
      %1298 = vmatpush1.msra.mxu0 0.0
      %1299 = vmatprep.subr.mxu0 0.0
      %1300 = vmatpush1.msra.mxu0 0.0
      %1301 = vmatprep.subr.mxu0 0.0
      %1302 = vmatpush1.msra.mxu0 0.0
      %1303 = vmatprep.subr.mxu0 0.0
      %1304 = vmatpush1.msra.mxu0 0.0
      %1305 = vmatprep.subr.mxu0 0.0
      %1306 = vmatpush1.msra.mxu0 0.0
      %1307 = vmatprep.subr.mxu0 0.0
      %1308 = vmatpush1.msra.mxu0 0.0
      %1309 = vmatprep.subr.mxu0 0.0
      %1310 = vmatpush1.msra.mxu0 0.0
      %1311 = vmatprep.subr.mxu0 0.0
      %1312 = vmatpush1.msra.mxu0 0.0
      %1313 = vmatprep.subr.mxu0 0.0
      %1314 = vmatpush1.msra.mxu0 0.0
      %1315 = vmatprep.subr.mxu0 0.0
      %1316 = vmatpush1.msra.mxu0 0.0
      %1317 = vmatprep.mubr.f32.mxu0 0.0
      %1318 = vmatmul.mubr.f32.gmra.mrb[0].mxu0 %v1251
      %v1319 = vpop.f32.mrb[0].mxu0
      %v1320 = vadd.f32 %v1247, %v1319
      %v1321 = vpop.f32.mrb[0].mxu0
      %1322 = vdwg.mxu0
      %1323 = vrot.lane.b32.xlu0 %v827, 96
      %v1324 = vpop.permute.xlu0 %1323
      %1325 = vrot.lane.b32.xlu0 %v827, 32
      %v1326 = vpop.permute.xlu0 %1325
      %v1327 = vsel %vm847, %v1324, 0
      %v1329 = vsel %vm847, %v1326, 0
      %1331 = vmatprep.subr.mxu0 0.0
      %1332 = vmatpush1.xpose.msra.mxu0 %v1329
      %1333 = vmatprep.subr.mxu0 0.0
      %1334 = vmatpush1.xpose.msra.mxu0 0.0
      %1335 = vmatprep.subr.mxu0 0.0
      %1336 = vmatpush1.xpose.msra.mxu0 0.0
      %1337 = vmatprep.subr.mxu0 0.0
      %1338 = vmatpush1.xpose.msra.mxu0 0.0
      %1339 = vmatprep.subr.mxu0 0.0
      %1340 = vmatpush1.xpose.msra.mxu0 0.0
      %1341 = vmatprep.subr.mxu0 0.0
      %1342 = vmatpush1.xpose.msra.mxu0 0.0
      %1343 = vmatprep.subr.mxu0 0.0
      %1344 = vmatpush1.xpose.msra.mxu0 0.0
      %1345 = vmatprep.subr.mxu0 0.0
      %1346 = vmatpush1.xpose.msra.mxu0 0.0
      %1347 = vmatprep.subr.mxu0 0.0
      %1348 = vmatpush1.xpose.msra.mxu0 0.0
      %1349 = vmatprep.subr.mxu0 0.0
      %1350 = vmatpush1.xpose.msra.mxu0 0.0
      %1351 = vmatprep.subr.mxu0 0.0
      %1352 = vmatpush1.xpose.msra.mxu0 0.0
      %1353 = vmatprep.subr.mxu0 0.0
      %1354 = vmatpush1.xpose.msra.mxu0 0.0
      %1355 = vmatprep.subr.mxu0 0.0
      %1356 = vmatpush1.xpose.msra.mxu0 0.0
      %1357 = vmatprep.subr.mxu0 0.0
      %1358 = vmatpush1.xpose.msra.mxu0 0.0
      %1359 = vmatprep.subr.mxu0 0.0
      %1360 = vmatpush1.xpose.msra.mxu0 0.0
      %1361 = vmatprep.subr.mxu0 0.0
      %1362 = vmatpush1.xpose.msra.mxu0 0.0
      %1363 = vmatprep.subr.mxu0 0.0
      %1364 = vmatpush1.xpose.msra.mxu0 0.0
      %1365 = vmatprep.subr.mxu0 0.0
      %1366 = vmatpush1.xpose.msra.mxu0 0.0
      %1367 = vmatprep.subr.mxu0 0.0
      %1368 = vmatpush1.xpose.msra.mxu0 0.0
      %1369 = vmatprep.subr.mxu0 0.0
      %1370 = vmatpush1.xpose.msra.mxu0 0.0
      %1371 = vmatprep.subr.mxu0 0.0
      %1372 = vmatpush1.xpose.msra.mxu0 0.0
      %1373 = vmatprep.subr.mxu0 0.0
      %1374 = vmatpush1.xpose.msra.mxu0 0.0
      %1375 = vmatprep.subr.mxu0 0.0
      %1376 = vmatpush1.xpose.msra.mxu0 0.0
      %1377 = vmatprep.subr.mxu0 0.0
      %1378 = vmatpush1.xpose.msra.mxu0 0.0
      %1379 = vmatprep.subr.mxu0 0.0
      %1380 = vmatpush1.xpose.msra.mxu0 0.0
      %1381 = vmatprep.subr.mxu0 0.0
      %1382 = vmatpush1.xpose.msra.mxu0 0.0
      %1383 = vmatprep.subr.mxu0 0.0
      %1384 = vmatpush1.xpose.msra.mxu0 0.0
      %1385 = vmatprep.subr.mxu0 0.0
      %1386 = vmatpush1.xpose.msra.mxu0 0.0
      %1387 = vmatprep.subr.mxu0 0.0
      %1388 = vmatpush1.xpose.msra.mxu0 0.0
      %1389 = vmatprep.subr.mxu0 0.0
      %1390 = vmatpush1.xpose.msra.mxu0 0.0
      %1391 = vmatprep.subr.mxu0 0.0
      %1392 = vmatpush1.xpose.msra.mxu0 0.0
      %1393 = vmatprep.subr.mxu0 0.0
      %1394 = vmatpush1.xpose.msra.mxu0 0.0
      %1395 = vmatprep.mubr.f32.mxu0 0.0
      %1396 = vmatmul.mubr.f32.gmra.mrb[0].mxu0 %v1327
      %v1397 = vpop.f32.mrb[0].mxu0
      %v1398 = vadd.f32 0.0, %v1397
      %v1399 = vpop.f32.mrb[0].mxu0
      %1400 = vdwg.mxu0
      %v1401 = vmul.f32 %v1398, 0.25
      %v1402 = vsel %vm843, %v1401, -inf
      %v1403 = vsel %vm924, %v1402, -inf
      %1404 = vmax.xlane.f32.xlu0 %v1403
      %v1405 = vpop.xlane.xlu0 %1404
      %v1406 = vsub.f32 %v1402, %v1405
      %v1407 = vmul.f32 %v1406, 1.442695
      %v1408 = vpow.pop %v1407
      %v1409 = vsel %vm924, %v1408, 0.0
      %1410 = vadd.xlane.f32.xlu0 %v1409
      %v1411 = vpop.xlane.xlu0 %1410
      %v1412 = vrcp.pop %v1411
      %v1413 = vmul.f32 %v1408, %v1412
      %1414 = vrot.lane.b32.xlu0 %v829, 96
      %v1415 = vpop.permute.xlu0 %1414
      %v1418 = vsel %vm924, %v1413, 0
      %1420 = vmatprep.subr.mxu0 0.0
      %1421 = vmatpush1.msra.mxu0 %v1415
      %1422 = vmatprep.subr.mxu0 0.0
      %1423 = vmatpush1.msra.mxu0 0.0
      %1424 = vmatprep.subr.mxu0 0.0
      %1425 = vmatpush1.msra.mxu0 0.0
      %1426 = vmatprep.subr.mxu0 0.0
      %1427 = vmatpush1.msra.mxu0 0.0
      %1428 = vmatprep.subr.mxu0 0.0
      %1429 = vmatpush1.msra.mxu0 0.0
      %1430 = vmatprep.subr.mxu0 0.0
      %1431 = vmatpush1.msra.mxu0 0.0
      %1432 = vmatprep.subr.mxu0 0.0
      %1433 = vmatpush1.msra.mxu0 0.0
      %1434 = vmatprep.subr.mxu0 0.0
      %1435 = vmatpush1.msra.mxu0 0.0
      %1436 = vmatprep.subr.mxu0 0.0
      %1437 = vmatpush1.msra.mxu0 0.0
      %1438 = vmatprep.subr.mxu0 0.0
      %1439 = vmatpush1.msra.mxu0 0.0
      %1440 = vmatprep.subr.mxu0 0.0
      %1441 = vmatpush1.msra.mxu0 0.0
      %1442 = vmatprep.subr.mxu0 0.0
      %1443 = vmatpush1.msra.mxu0 0.0
      %1444 = vmatprep.subr.mxu0 0.0
      %1445 = vmatpush1.msra.mxu0 0.0
      %1446 = vmatprep.subr.mxu0 0.0
      %1447 = vmatpush1.msra.mxu0 0.0
      %1448 = vmatprep.subr.mxu0 0.0
      %1449 = vmatpush1.msra.mxu0 0.0
      %1450 = vmatprep.subr.mxu0 0.0
      %1451 = vmatpush1.msra.mxu0 0.0
      %1452 = vmatprep.subr.mxu0 0.0
      %1453 = vmatpush1.msra.mxu0 0.0
      %1454 = vmatprep.subr.mxu0 0.0
      %1455 = vmatpush1.msra.mxu0 0.0
      %1456 = vmatprep.subr.mxu0 0.0
      %1457 = vmatpush1.msra.mxu0 0.0
      %1458 = vmatprep.subr.mxu0 0.0
      %1459 = vmatpush1.msra.mxu0 0.0
      %1460 = vmatprep.subr.mxu0 0.0
      %1461 = vmatpush1.msra.mxu0 0.0
      %1462 = vmatprep.subr.mxu0 0.0
      %1463 = vmatpush1.msra.mxu0 0.0
      %1464 = vmatprep.subr.mxu0 0.0
      %1465 = vmatpush1.msra.mxu0 0.0
      %1466 = vmatprep.subr.mxu0 0.0
      %1467 = vmatpush1.msra.mxu0 0.0
      %1468 = vmatprep.subr.mxu0 0.0
      %1469 = vmatpush1.msra.mxu0 0.0
      %1470 = vmatprep.subr.mxu0 0.0
      %1471 = vmatpush1.msra.mxu0 0.0
      %1472 = vmatprep.subr.mxu0 0.0
      %1473 = vmatpush1.msra.mxu0 0.0
      %1474 = vmatprep.subr.mxu0 0.0
      %1475 = vmatpush1.msra.mxu0 0.0
      %1476 = vmatprep.subr.mxu0 0.0
      %1477 = vmatpush1.msra.mxu0 0.0
      %1478 = vmatprep.subr.mxu0 0.0
      %1479 = vmatpush1.msra.mxu0 0.0
      %1480 = vmatprep.subr.mxu0 0.0
      %1481 = vmatpush1.msra.mxu0 0.0
      %1482 = vmatprep.subr.mxu0 0.0
      %1483 = vmatpush1.msra.mxu0 0.0
      %1484 = vmatprep.mubr.f32.mxu0 0.0
      %1485 = vmatmul.mubr.f32.gmra.mrb[0].mxu0 %v1418
      %v1486 = vpop.f32.mrb[0].mxu0
      %v1487 = vadd.f32 0.0, %v1486
      %v1488 = vpop.f32.mrb[0].mxu0
      %1489 = vdwg.mxu0
      %v1491 = vsel %vm847, %v1487, 0
      %1493 = vmatprep.subr.mxu0 0.0
      %1494 = vmatpush1.msra.mxu0 %v835
      %1495 = vmatprep.subr.mxu0 0.0
      %1496 = vmatpush1.msra.mxu0 %v836
      %1497 = vmatprep.subr.mxu0 0.0
      %1498 = vmatpush1.msra.mxu0 0.0
      %1499 = vmatprep.subr.mxu0 0.0
      %1500 = vmatpush1.msra.mxu0 0.0
      %1501 = vmatprep.subr.mxu0 0.0
      %1502 = vmatpush1.msra.mxu0 0.0
      %1503 = vmatprep.subr.mxu0 0.0
      %1504 = vmatpush1.msra.mxu0 0.0
      %1505 = vmatprep.subr.mxu0 0.0
      %1506 = vmatpush1.msra.mxu0 0.0
      %1507 = vmatprep.subr.mxu0 0.0
      %1508 = vmatpush1.msra.mxu0 0.0
      %1509 = vmatprep.subr.mxu0 0.0
      %1510 = vmatpush1.msra.mxu0 0.0
      %1511 = vmatprep.subr.mxu0 0.0
      %1512 = vmatpush1.msra.mxu0 0.0
      %1513 = vmatprep.subr.mxu0 0.0
      %1514 = vmatpush1.msra.mxu0 0.0
      %1515 = vmatprep.subr.mxu0 0.0
      %1516 = vmatpush1.msra.mxu0 0.0
      %1517 = vmatprep.subr.mxu0 0.0
      %1518 = vmatpush1.msra.mxu0 0.0
      %1519 = vmatprep.subr.mxu0 0.0
      %1520 = vmatpush1.msra.mxu0 0.0
      %1521 = vmatprep.subr.mxu0 0.0
      %1522 = vmatpush1.msra.mxu0 0.0
      %1523 = vmatprep.subr.mxu0 0.0
      %1524 = vmatpush1.msra.mxu0 0.0
      %1525 = vmatprep.subr.mxu0 0.0
      %1526 = vmatpush1.msra.mxu0 0.0
      %1527 = vmatprep.subr.mxu0 0.0
      %1528 = vmatpush1.msra.mxu0 0.0
      %1529 = vmatprep.subr.mxu0 0.0
      %1530 = vmatpush1.msra.mxu0 0.0
      %1531 = vmatprep.subr.mxu0 0.0
      %1532 = vmatpush1.msra.mxu0 0.0
      %1533 = vmatprep.subr.mxu0 0.0
      %1534 = vmatpush1.msra.mxu0 0.0
      %1535 = vmatprep.subr.mxu0 0.0
      %1536 = vmatpush1.msra.mxu0 0.0
      %1537 = vmatprep.subr.mxu0 0.0
      %1538 = vmatpush1.msra.mxu0 0.0
      %1539 = vmatprep.subr.mxu0 0.0
      %1540 = vmatpush1.msra.mxu0 0.0
      %1541 = vmatprep.subr.mxu0 0.0
      %1542 = vmatpush1.msra.mxu0 0.0
      %1543 = vmatprep.subr.mxu0 0.0
      %1544 = vmatpush1.msra.mxu0 0.0
      %1545 = vmatprep.subr.mxu0 0.0
      %1546 = vmatpush1.msra.mxu0 0.0
      %1547 = vmatprep.subr.mxu0 0.0
      %1548 = vmatpush1.msra.mxu0 0.0
      %1549 = vmatprep.subr.mxu0 0.0
      %1550 = vmatpush1.msra.mxu0 0.0
      %1551 = vmatprep.subr.mxu0 0.0
      %1552 = vmatpush1.msra.mxu0 0.0
      %1553 = vmatprep.subr.mxu0 0.0
      %1554 = vmatpush1.msra.mxu0 0.0
      %1555 = vmatprep.subr.mxu0 0.0
      %1556 = vmatpush1.msra.mxu0 0.0
      %1557 = vmatprep.mubr.f32.mxu0 0.0
      %1558 = vmatmul.mubr.f32.gmra.mrb[0].mxu0 %v1491
      %v1559 = vpop.f32.mrb[0].mxu0
      %v1560 = vadd.f32 0.0, %v1559
      %v1561 = vpop.f32.mrb[0].mxu0
      %1562 = vdwg.mxu0
      %v1563 = vadd.f32 %v1320, %v1560
      %1564 = vrot.lane.b32.xlu0 %v827, 80
      %v1565 = vpop.permute.xlu0 %1564
      %1566 = vrot.lane.b32.xlu0 %v827, 16
      %v1567 = vpop.permute.xlu0 %1566
      %v1568 = vsel %vm847, %v1565, 0
      %v1570 = vsel %vm847, %v1567, 0
      %1572 = vmatprep.subr.mxu0 0.0
      %1573 = vmatpush1.xpose.msra.mxu0 %v1570
      %1574 = vmatprep.subr.mxu0 0.0
      %1575 = vmatpush1.xpose.msra.mxu0 0.0
      %1576 = vmatprep.subr.mxu0 0.0
      %1577 = vmatpush1.xpose.msra.mxu0 0.0
      %1578 = vmatprep.subr.mxu0 0.0
      %1579 = vmatpush1.xpose.msra.mxu0 0.0
      %1580 = vmatprep.subr.mxu0 0.0
      %1581 = vmatpush1.xpose.msra.mxu0 0.0
      %1582 = vmatprep.subr.mxu0 0.0
      %1583 = vmatpush1.xpose.msra.mxu0 0.0
      %1584 = vmatprep.subr.mxu0 0.0
      %1585 = vmatpush1.xpose.msra.mxu0 0.0
      %1586 = vmatprep.subr.mxu0 0.0
      %1587 = vmatpush1.xpose.msra.mxu0 0.0
      %1588 = vmatprep.subr.mxu0 0.0
      %1589 = vmatpush1.xpose.msra.mxu0 0.0
      %1590 = vmatprep.subr.mxu0 0.0
      %1591 = vmatpush1.xpose.msra.mxu0 0.0
      %1592 = vmatprep.subr.mxu0 0.0
      %1593 = vmatpush1.xpose.msra.mxu0 0.0
      %1594 = vmatprep.subr.mxu0 0.0
      %1595 = vmatpush1.xpose.msra.mxu0 0.0
      %1596 = vmatprep.subr.mxu0 0.0
      %1597 = vmatpush1.xpose.msra.mxu0 0.0
      %1598 = vmatprep.subr.mxu0 0.0
      %1599 = vmatpush1.xpose.msra.mxu0 0.0
      %1600 = vmatprep.subr.mxu0 0.0
      %1601 = vmatpush1.xpose.msra.mxu0 0.0
      %1602 = vmatprep.subr.mxu0 0.0
      %1603 = vmatpush1.xpose.msra.mxu0 0.0
      %1604 = vmatprep.subr.mxu0 0.0
      %1605 = vmatpush1.xpose.msra.mxu0 0.0
      %1606 = vmatprep.subr.mxu0 0.0
      %1607 = vmatpush1.xpose.msra.mxu0 0.0
      %1608 = vmatprep.subr.mxu0 0.0
      %1609 = vmatpush1.xpose.msra.mxu0 0.0
      %1610 = vmatprep.subr.mxu0 0.0
      %1611 = vmatpush1.xpose.msra.mxu0 0.0
      %1612 = vmatprep.subr.mxu0 0.0
      %1613 = vmatpush1.xpose.msra.mxu0 0.0
      %1614 = vmatprep.subr.mxu0 0.0
      %1615 = vmatpush1.xpose.msra.mxu0 0.0
      %1616 = vmatprep.subr.mxu0 0.0
      %1617 = vmatpush1.xpose.msra.mxu0 0.0
      %1618 = vmatprep.subr.mxu0 0.0
      %1619 = vmatpush1.xpose.msra.mxu0 0.0
      %1620 = vmatprep.subr.mxu0 0.0
      %1621 = vmatpush1.xpose.msra.mxu0 0.0
      %1622 = vmatprep.subr.mxu0 0.0
      %1623 = vmatpush1.xpose.msra.mxu0 0.0
      %1624 = vmatprep.subr.mxu0 0.0
      %1625 = vmatpush1.xpose.msra.mxu0 0.0
      %1626 = vmatprep.subr.mxu0 0.0
      %1627 = vmatpush1.xpose.msra.mxu0 0.0
      %1628 = vmatprep.subr.mxu0 0.0
      %1629 = vmatpush1.xpose.msra.mxu0 0.0
      %1630 = vmatprep.subr.mxu0 0.0
      %1631 = vmatpush1.xpose.msra.mxu0 0.0
      %1632 = vmatprep.subr.mxu0 0.0
      %1633 = vmatpush1.xpose.msra.mxu0 0.0
      %1634 = vmatprep.subr.mxu0 0.0
      %1635 = vmatpush1.xpose.msra.mxu0 0.0
      %1636 = vmatprep.mubr.f32.mxu0 0.0
      %1637 = vmatmul.mubr.f32.gmra.mrb[0].mxu0 %v1568
      %v1638 = vpop.f32.mrb[0].mxu0
      %v1639 = vadd.f32 0.0, %v1638
      %v1640 = vpop.f32.mrb[0].mxu0
      %1641 = vdwg.mxu0
      %v1642 = vmul.f32 %v1639, 0.25
      %v1643 = vsel %vm843, %v1642, -inf
      %v1644 = vsel %vm924, %v1643, -inf
      %1645 = vmax.xlane.f32.xlu0 %v1644
      %v1646 = vpop.xlane.xlu0 %1645
      %v1647 = vsub.f32 %v1643, %v1646
      %v1648 = vmul.f32 %v1647, 1.442695
      %v1649 = vpow.pop %v1648
      %v1650 = vsel %vm924, %v1649, 0.0
      %1651 = vadd.xlane.f32.xlu0 %v1650
      %v1652 = vpop.xlane.xlu0 %1651
      %v1653 = vrcp.pop %v1652
      %v1654 = vmul.f32 %v1649, %v1653
      %1655 = vrot.lane.b32.xlu0 %v829, 80
      %v1656 = vpop.permute.xlu0 %1655
      %v1659 = vsel %vm924, %v1654, 0
      %1661 = vmatprep.subr.mxu0 0.0
      %1662 = vmatpush1.msra.mxu0 %v1656
      %1663 = vmatprep.subr.mxu0 0.0
      %1664 = vmatpush1.msra.mxu0 0.0
      %1665 = vmatprep.subr.mxu0 0.0
      %1666 = vmatpush1.msra.mxu0 0.0
      %1667 = vmatprep.subr.mxu0 0.0
      %1668 = vmatpush1.msra.mxu0 0.0
      %1669 = vmatprep.subr.mxu0 0.0
      %1670 = vmatpush1.msra.mxu0 0.0
      %1671 = vmatprep.subr.mxu0 0.0
      %1672 = vmatpush1.msra.mxu0 0.0
      %1673 = vmatprep.subr.mxu0 0.0
      %1674 = vmatpush1.msra.mxu0 0.0
      %1675 = vmatprep.subr.mxu0 0.0
      %1676 = vmatpush1.msra.mxu0 0.0
      %1677 = vmatprep.subr.mxu0 0.0
      %1678 = vmatpush1.msra.mxu0 0.0
      %1679 = vmatprep.subr.mxu0 0.0
      %1680 = vmatpush1.msra.mxu0 0.0
      %1681 = vmatprep.subr.mxu0 0.0
      %1682 = vmatpush1.msra.mxu0 0.0
      %1683 = vmatprep.subr.mxu0 0.0
      %1684 = vmatpush1.msra.mxu0 0.0
      %1685 = vmatprep.subr.mxu0 0.0
      %1686 = vmatpush1.msra.mxu0 0.0
      %1687 = vmatprep.subr.mxu0 0.0
      %1688 = vmatpush1.msra.mxu0 0.0
      %1689 = vmatprep.subr.mxu0 0.0
      %1690 = vmatpush1.msra.mxu0 0.0
      %1691 = vmatprep.subr.mxu0 0.0
      %1692 = vmatpush1.msra.mxu0 0.0
      %1693 = vmatprep.subr.mxu0 0.0
      %1694 = vmatpush1.msra.mxu0 0.0
      %1695 = vmatprep.subr.mxu0 0.0
      %1696 = vmatpush1.msra.mxu0 0.0
      %1697 = vmatprep.subr.mxu0 0.0
      %1698 = vmatpush1.msra.mxu0 0.0
      %1699 = vmatprep.subr.mxu0 0.0
      %1700 = vmatpush1.msra.mxu0 0.0
      %1701 = vmatprep.subr.mxu0 0.0
      %1702 = vmatpush1.msra.mxu0 0.0
      %1703 = vmatprep.subr.mxu0 0.0
      %1704 = vmatpush1.msra.mxu0 0.0
      %1705 = vmatprep.subr.mxu0 0.0
      %1706 = vmatpush1.msra.mxu0 0.0
      %1707 = vmatprep.subr.mxu0 0.0
      %1708 = vmatpush1.msra.mxu0 0.0
      %1709 = vmatprep.subr.mxu0 0.0
      %1710 = vmatpush1.msra.mxu0 0.0
      %1711 = vmatprep.subr.mxu0 0.0
      %1712 = vmatpush1.msra.mxu0 0.0
      %1713 = vmatprep.subr.mxu0 0.0
      %1714 = vmatpush1.msra.mxu0 0.0
      %1715 = vmatprep.subr.mxu0 0.0
      %1716 = vmatpush1.msra.mxu0 0.0
      %1717 = vmatprep.subr.mxu0 0.0
      %1718 = vmatpush1.msra.mxu0 0.0
      %1719 = vmatprep.subr.mxu0 0.0
      %1720 = vmatpush1.msra.mxu0 0.0
      %1721 = vmatprep.subr.mxu0 0.0
      %1722 = vmatpush1.msra.mxu0 0.0
      %1723 = vmatprep.subr.mxu0 0.0
      %1724 = vmatpush1.msra.mxu0 0.0
      %1725 = vmatprep.mubr.f32.mxu0 0.0
      %1726 = vmatmul.mubr.f32.gmra.mrb[0].mxu0 %v1659
      %v1727 = vpop.f32.mrb[0].mxu0
      %v1728 = vadd.f32 0.0, %v1727
      %v1729 = vpop.f32.mrb[0].mxu0
      %1730 = vdwg.mxu0
      %v1732 = vsel %vm847, %v1728, 0
      %1734 = vmatprep.subr.mxu0 0.0
      %1735 = vmatpush1.msra.mxu0 %v837
      %1736 = vmatprep.subr.mxu0 0.0
      %1737 = vmatpush1.msra.mxu0 %v838
      %1738 = vmatprep.subr.mxu0 0.0
      %1739 = vmatpush1.msra.mxu0 0.0
      %1740 = vmatprep.subr.mxu0 0.0
      %1741 = vmatpush1.msra.mxu0 0.0
      %1742 = vmatprep.subr.mxu0 0.0
      %1743 = vmatpush1.msra.mxu0 0.0
      %1744 = vmatprep.subr.mxu0 0.0
      %1745 = vmatpush1.msra.mxu0 0.0
      %1746 = vmatprep.subr.mxu0 0.0
      %1747 = vmatpush1.msra.mxu0 0.0
      %1748 = vmatprep.subr.mxu0 0.0
      %1749 = vmatpush1.msra.mxu0 0.0
      %1750 = vmatprep.subr.mxu0 0.0
      %1751 = vmatpush1.msra.mxu0 0.0
      %1752 = vmatprep.subr.mxu0 0.0
      %1753 = vmatpush1.msra.mxu0 0.0
      %1754 = vmatprep.subr.mxu0 0.0
      %1755 = vmatpush1.msra.mxu0 0.0
      %1756 = vmatprep.subr.mxu0 0.0
      %1757 = vmatpush1.msra.mxu0 0.0
      %1758 = vmatprep.subr.mxu0 0.0
      %1759 = vmatpush1.msra.mxu0 0.0
      %1760 = vmatprep.subr.mxu0 0.0
      %1761 = vmatpush1.msra.mxu0 0.0
      %1762 = vmatprep.subr.mxu0 0.0
      %1763 = vmatpush1.msra.mxu0 0.0
      %1764 = vmatprep.subr.mxu0 0.0
      %1765 = vmatpush1.msra.mxu0 0.0
      %1766 = vmatprep.subr.mxu0 0.0
      %1767 = vmatpush1.msra.mxu0 0.0
      %1768 = vmatprep.subr.mxu0 0.0
      %1769 = vmatpush1.msra.mxu0 0.0
      %1770 = vmatprep.subr.mxu0 0.0
      %1771 = vmatpush1.msra.mxu0 0.0
      %1772 = vmatprep.subr.mxu0 0.0
      %1773 = vmatpush1.msra.mxu0 0.0
      %1774 = vmatprep.subr.mxu0 0.0
      %1775 = vmatpush1.msra.mxu0 0.0
      %1776 = vmatprep.subr.mxu0 0.0
      %1777 = vmatpush1.msra.mxu0 0.0
      %1778 = vmatprep.subr.mxu0 0.0
      %1779 = vmatpush1.msra.mxu0 0.0
      %1780 = vmatprep.subr.mxu0 0.0
      %1781 = vmatpush1.msra.mxu0 0.0
      %1782 = vmatprep.subr.mxu0 0.0
      %1783 = vmatpush1.msra.mxu0 0.0
      %1784 = vmatprep.subr.mxu0 0.0
      %1785 = vmatpush1.msra.mxu0 0.0
      %1786 = vmatprep.subr.mxu0 0.0
      %1787 = vmatpush1.msra.mxu0 0.0
      %1788 = vmatprep.subr.mxu0 0.0
      %1789 = vmatpush1.msra.mxu0 0.0
      %1790 = vmatprep.subr.mxu0 0.0
      %1791 = vmatpush1.msra.mxu0 0.0
      %1792 = vmatprep.subr.mxu0 0.0
      %1793 = vmatpush1.msra.mxu0 0.0
      %1794 = vmatprep.subr.mxu0 0.0
      %1795 = vmatpush1.msra.mxu0 0.0
      %1796 = vmatprep.subr.mxu0 0.0
      %1797 = vmatpush1.msra.mxu0 0.0
      %1798 = vmatprep.mubr.f32.mxu0 0.0
      %1799 = vmatmul.mubr.f32.gmra.mrb[0].mxu0 %v1732
      %v1800 = vpop.f32.mrb[0].mxu0
      %v1801 = vadd.f32 0.0, %v1800
      %v1802 = vpop.f32.mrb[0].mxu0
      %1803 = vdwg.mxu0
      %v1804 = vadd.f32 %v1563, %v1801
      %v1805 = vadd.f32 %v696, %v1804
      %v1806 = vld [vmem:[%s7] sm:$0x1]
      %v1808 = vlaneseq
      %v1809 = vshrl.u32 %v1808, 7
      %v1810 = vsub.s32 0, %v1809
      %v1811 = vrot.slane %v1806, %v1810
      %v1813 = vadd.f32 %v1805, %v1811
      %v1814 = vld [vmem:[%s8] sm:$0x1]
      %v1815 = vld [vmem:[%s9] sm:$0x1]
      %v1816 = vsel %vm700, %v1813, 0.0
      %1817 = vadd.xlane.f32.xlu0 %v1816
      %v1818 = vpop.xlane.xlu0 %1817
      %v1819 = vmul.f32 %v1818, %v704
      %v1820 = vsub.f32 %v1813, %v1819
      %v1821 = vmul.f32 %v1820, %v1820
      %v1822 = vsel %vm700, %v1821, 0.0
      %1823 = vadd.xlane.f32.xlu0 %v1822
      %v1824 = vpop.xlane.xlu0 %1823
      %v1825 = vmul.f32 %v1824, %v704
      %v1826 = vadd.f32 %v1825, 1e-05
      %v1827 = vrsqrt.pop %v1826
      %v1828 = vmul.f32 %v1820, %v1827
      %v1830 = vlaneseq
      %v1831 = vshrl.u32 %v1830, 7
      %v1832 = vsub.s32 0, %v1831
      %v1833 = vrot.slane %v1814, %v1832
      %v1835 = vmul.f32 %v1828, %v1833
      %v1837 = vlaneseq
      %v1838 = vshrl.u32 %v1837, 7
      %v1839 = vsub.s32 0, %v1838
      %v1840 = vrot.slane %v1815, %v1839
      %v1842 = vadd.f32 %v1835, %v1840
      %v1843 = vld [vmem:[%s10] sm:$0xff]
      %v1844 = vld [vmem:[%s10 + $0x8] sm:$0xff]
      %v1845 = vld [vmem:[%s10 + $0x10] sm:$0xff]
      %v1846 = vld [vmem:[%s10 + $0x18] sm:$0xff]
      %v1847 = vld [vmem:[%s10 + $0x20] sm:$0xff]
      %v1848 = vld [vmem:[%s10 + $0x28] sm:$0xff]
      %v1849 = vld [vmem:[%s10 + $0x30] sm:$0xff]
      %v1850 = vld [vmem:[%s10 + $0x38] sm:$0xff]
      %v1851 = vld [vmem:[%s11] sm:$0x1]
      %v1853 = vlaneseq
      %v1854 = vshrl.u32 %v1853, 7
      %v1855 = vsub.s32 0, %v1854
      %v1856 = vrot.slane %v1851, %v1855
      %v1859 = vsel %vm700, %v1842, 0
      %1861 = vmatprep.subr.mxu0 0.0
      %1862 = vmatpush1.msra.mxu0 %v1843
      %1863 = vmatprep.subr.mxu0 0.0
      %1864 = vmatpush1.msra.mxu0 %v1844
      %1865 = vmatprep.subr.mxu0 0.0
      %1866 = vmatpush1.msra.mxu0 %v1845
      %1867 = vmatprep.subr.mxu0 0.0
      %1868 = vmatpush1.msra.mxu0 %v1846
      %1869 = vmatprep.subr.mxu0 0.0
      %1870 = vmatpush1.msra.mxu0 %v1847
      %1871 = vmatprep.subr.mxu0 0.0
      %1872 = vmatpush1.msra.mxu0 %v1848
      %1873 = vmatprep.subr.mxu0 0.0
      %1874 = vmatpush1.msra.mxu0 %v1849
      %1875 = vmatprep.subr.mxu0 0.0
      %1876 = vmatpush1.msra.mxu0 %v1850
      %1877 = vmatprep.subr.mxu0 0.0
      %1878 = vmatpush1.msra.mxu0 0.0
      %1879 = vmatprep.subr.mxu0 0.0
      %1880 = vmatpush1.msra.mxu0 0.0
      %1881 = vmatprep.subr.mxu0 0.0
      %1882 = vmatpush1.msra.mxu0 0.0
      %1883 = vmatprep.subr.mxu0 0.0
      %1884 = vmatpush1.msra.mxu0 0.0
      %1885 = vmatprep.subr.mxu0 0.0
      %1886 = vmatpush1.msra.mxu0 0.0
      %1887 = vmatprep.subr.mxu0 0.0
      %1888 = vmatpush1.msra.mxu0 0.0
      %1889 = vmatprep.subr.mxu0 0.0
      %1890 = vmatpush1.msra.mxu0 0.0
      %1891 = vmatprep.subr.mxu0 0.0
      %1892 = vmatpush1.msra.mxu0 0.0
      %1893 = vmatprep.subr.mxu0 0.0
      %1894 = vmatpush1.msra.mxu0 0.0
      %1895 = vmatprep.subr.mxu0 0.0
      %1896 = vmatpush1.msra.mxu0 0.0
      %1897 = vmatprep.subr.mxu0 0.0
      %1898 = vmatpush1.msra.mxu0 0.0
      %1899 = vmatprep.subr.mxu0 0.0
      %1900 = vmatpush1.msra.mxu0 0.0
      %1901 = vmatprep.subr.mxu0 0.0
      %1902 = vmatpush1.msra.mxu0 0.0
      %1903 = vmatprep.subr.mxu0 0.0
      %1904 = vmatpush1.msra.mxu0 0.0
      %1905 = vmatprep.subr.mxu0 0.0
      %1906 = vmatpush1.msra.mxu0 0.0
      %1907 = vmatprep.subr.mxu0 0.0
      %1908 = vmatpush1.msra.mxu0 0.0
      %1909 = vmatprep.subr.mxu0 0.0
      %1910 = vmatpush1.msra.mxu0 0.0
      %1911 = vmatprep.subr.mxu0 0.0
      %1912 = vmatpush1.msra.mxu0 0.0
      %1913 = vmatprep.subr.mxu0 0.0
      %1914 = vmatpush1.msra.mxu0 0.0
      %1915 = vmatprep.subr.mxu0 0.0
      %1916 = vmatpush1.msra.mxu0 0.0
      %1917 = vmatprep.subr.mxu0 0.0
      %1918 = vmatpush1.msra.mxu0 0.0
      %1919 = vmatprep.subr.mxu0 0.0
      %1920 = vmatpush1.msra.mxu0 0.0
      %1921 = vmatprep.subr.mxu0 0.0
      %1922 = vmatpush1.msra.mxu0 0.0
      %1923 = vmatprep.subr.mxu0 0.0
      %1924 = vmatpush1.msra.mxu0 0.0
      %1925 = vmatprep.mubr.f32.mxu0 0.0
      %1926 = vmatmul.mubr.f32.gmra.mrb[0].mxu0 %v1859
      %v1927 = vpop.f32.mrb[0].mxu0
      %v1928 = vadd.f32 %v1856, %v1927
      %v1929 = vpop.f32.mrb[0].mxu0
      %1930 = vdwg.mxu0
      %v1931 = vld [vmem:[%s12] sm:$0xff]
      %v1932 = vld [vmem:[%s12 + $0x8] sm:$0xff]
      %v1933 = vld [vmem:[%s12 + $0x10] sm:$0xff]
      %v1934 = vld [vmem:[%s12 + $0x18] sm:$0xff]
      %v1935 = vld [vmem:[%s12 + $0x20] sm:$0xff]
      %v1936 = vld [vmem:[%s12 + $0x28] sm:$0xff]
      %v1937 = vld [vmem:[%s12 + $0x30] sm:$0xff]
      %v1938 = vld [vmem:[%s12 + $0x38] sm:$0xff]
      %v1939 = vld [vmem:[%s13] sm:$0x1]
      %v1941 = vlaneseq
      %v1942 = vshrl.u32 %v1941, 7
      %v1943 = vsub.s32 0, %v1942
      %v1944 = vrot.slane %v1939, %v1943
      %v1947 = vsel %vm700, %v697, 0
      %1949 = vmatprep.subr.mxu0 0.0
      %1950 = vmatpush1.msra.mxu0 %v1931
      %1951 = vmatprep.subr.mxu0 0.0
      %1952 = vmatpush1.msra.mxu0 %v1932
      %1953 = vmatprep.subr.mxu0 0.0
      %1954 = vmatpush1.msra.mxu0 %v1933
      %1955 = vmatprep.subr.mxu0 0.0
      %1956 = vmatpush1.msra.mxu0 %v1934
      %1957 = vmatprep.subr.mxu0 0.0
      %1958 = vmatpush1.msra.mxu0 %v1935
      %1959 = vmatprep.subr.mxu0 0.0
      %1960 = vmatpush1.msra.mxu0 %v1936
      %1961 = vmatprep.subr.mxu0 0.0
      %1962 = vmatpush1.msra.mxu0 %v1937
      %1963 = vmatprep.subr.mxu0 0.0
      %1964 = vmatpush1.msra.mxu0 %v1938
      %1965 = vmatprep.subr.mxu0 0.0
      %1966 = vmatpush1.msra.mxu0 0.0
      %1967 = vmatprep.subr.mxu0 0.0
      %1968 = vmatpush1.msra.mxu0 0.0
      %1969 = vmatprep.subr.mxu0 0.0
      %1970 = vmatpush1.msra.mxu0 0.0
      %1971 = vmatprep.subr.mxu0 0.0
      %1972 = vmatpush1.msra.mxu0 0.0
      %1973 = vmatprep.subr.mxu0 0.0
      %1974 = vmatpush1.msra.mxu0 0.0
      %1975 = vmatprep.subr.mxu0 0.0
      %1976 = vmatpush1.msra.mxu0 0.0
      %1977 = vmatprep.subr.mxu0 0.0
      %1978 = vmatpush1.msra.mxu0 0.0
      %1979 = vmatprep.subr.mxu0 0.0
      %1980 = vmatpush1.msra.mxu0 0.0
      %1981 = vmatprep.subr.mxu0 0.0
      %1982 = vmatpush1.msra.mxu0 0.0
      %1983 = vmatprep.subr.mxu0 0.0
      %1984 = vmatpush1.msra.mxu0 0.0
      %1985 = vmatprep.subr.mxu0 0.0
      %1986 = vmatpush1.msra.mxu0 0.0
      %1987 = vmatprep.subr.mxu0 0.0
      %1988 = vmatpush1.msra.mxu0 0.0
      %1989 = vmatprep.subr.mxu0 0.0
      %1990 = vmatpush1.msra.mxu0 0.0
      %1991 = vmatprep.subr.mxu0 0.0
      %1992 = vmatpush1.msra.mxu0 0.0
      %1993 = vmatprep.subr.mxu0 0.0
      %1994 = vmatpush1.msra.mxu0 0.0
      %1995 = vmatprep.subr.mxu0 0.0
      %1996 = vmatpush1.msra.mxu0 0.0
      %1997 = vmatprep.subr.mxu0 0.0
      %1998 = vmatpush1.msra.mxu0 0.0
      %1999 = vmatprep.subr.mxu0 0.0
      %2000 = vmatpush1.msra.mxu0 0.0
      %2001 = vmatprep.subr.mxu0 0.0
      %2002 = vmatpush1.msra.mxu0 0.0
      %2003 = vmatprep.subr.mxu0 0.0
      %2004 = vmatpush1.msra.mxu0 0.0
      %2005 = vmatprep.subr.mxu0 0.0
      %2006 = vmatpush1.msra.mxu0 0.0
      %2007 = vmatprep.subr.mxu0 0.0
      %2008 = vmatpush1.msra.mxu0 0.0
      %2009 = vmatprep.subr.mxu0 0.0
      %2010 = vmatpush1.msra.mxu0 0.0
      %2011 = vmatprep.subr.mxu0 0.0
      %2012 = vmatpush1.msra.mxu0 0.0
      %2013 = vmatprep.mubr.f32.mxu0 0.0
      %2014 = vmatmul.mubr.f32.gmra.mrb[0].mxu0 %v1947
      %v2015 = vpop.f32.mrb[0].mxu0
      %v2016 = vadd.f32 %v1944, %v2015
      %v2017 = vpop.f32.mrb[0].mxu0
      %2018 = vdwg.mxu0
      %v2019 = vld [vmem:[%s14] sm:$0xff]
      %v2020 = vld [vmem:[%s14 + $0x8] sm:$0xff]
      %v2021 = vld [vmem:[%s14 + $0x10] sm:$0xff]
      %v2022 = vld [vmem:[%s14 + $0x18] sm:$0xff]
      %v2023 = vld [vmem:[%s14 + $0x20] sm:$0xff]
      %v2024 = vld [vmem:[%s14 + $0x28] sm:$0xff]
      %v2025 = vld [vmem:[%s14 + $0x30] sm:$0xff]
      %v2026 = vld [vmem:[%s14 + $0x38] sm:$0xff]
      %v2028 = vsel %vm847, %v1928, 0
      %v2031 = vsel %vm847, %v2016, 0
      %2033 = vmatprep.subr.mxu0 0.0
      %2034 = vmatpush1.xpose.msra.mxu0 %v2031
      %2035 = vmatprep.subr.mxu0 0.0
      %2036 = vmatpush1.xpose.msra.mxu0 0.0
      %2037 = vmatprep.subr.mxu0 0.0
      %2038 = vmatpush1.xpose.msra.mxu0 0.0
      %2039 = vmatprep.subr.mxu0 0.0
      %2040 = vmatpush1.xpose.msra.mxu0 0.0
      %2041 = vmatprep.subr.mxu0 0.0
      %2042 = vmatpush1.xpose.msra.mxu0 0.0
      %2043 = vmatprep.subr.mxu0 0.0
      %2044 = vmatpush1.xpose.msra.mxu0 0.0
      %2045 = vmatprep.subr.mxu0 0.0
      %2046 = vmatpush1.xpose.msra.mxu0 0.0
      %2047 = vmatprep.subr.mxu0 0.0
      %2048 = vmatpush1.xpose.msra.mxu0 0.0
      %2049 = vmatprep.subr.mxu0 0.0
      %2050 = vmatpush1.xpose.msra.mxu0 0.0
      %2051 = vmatprep.subr.mxu0 0.0
      %2052 = vmatpush1.xpose.msra.mxu0 0.0
      %2053 = vmatprep.subr.mxu0 0.0
      %2054 = vmatpush1.xpose.msra.mxu0 0.0
      %2055 = vmatprep.subr.mxu0 0.0
      %2056 = vmatpush1.xpose.msra.mxu0 0.0
      %2057 = vmatprep.subr.mxu0 0.0
      %2058 = vmatpush1.xpose.msra.mxu0 0.0
      %2059 = vmatprep.subr.mxu0 0.0
      %2060 = vmatpush1.xpose.msra.mxu0 0.0
      %2061 = vmatprep.subr.mxu0 0.0
      %2062 = vmatpush1.xpose.msra.mxu0 0.0
      %2063 = vmatprep.subr.mxu0 0.0
      %2064 = vmatpush1.xpose.msra.mxu0 0.0
      %2065 = vmatprep.subr.mxu0 0.0
      %2066 = vmatpush1.xpose.msra.mxu0 0.0
      %2067 = vmatprep.subr.mxu0 0.0
      %2068 = vmatpush1.xpose.msra.mxu0 0.0
      %2069 = vmatprep.subr.mxu0 0.0
      %2070 = vmatpush1.xpose.msra.mxu0 0.0
      %2071 = vmatprep.subr.mxu0 0.0
      %2072 = vmatpush1.xpose.msra.mxu0 0.0
      %2073 = vmatprep.subr.mxu0 0.0
      %2074 = vmatpush1.xpose.msra.mxu0 0.0
      %2075 = vmatprep.subr.mxu0 0.0
      %2076 = vmatpush1.xpose.msra.mxu0 0.0
      %2077 = vmatprep.subr.mxu0 0.0
      %2078 = vmatpush1.xpose.msra.mxu0 0.0
      %2079 = vmatprep.subr.mxu0 0.0
      %2080 = vmatpush1.xpose.msra.mxu0 0.0
      %2081 = vmatprep.subr.mxu0 0.0
      %2082 = vmatpush1.xpose.msra.mxu0 0.0
      %2083 = vmatprep.subr.mxu0 0.0
      %2084 = vmatpush1.xpose.msra.mxu0 0.0
      %2085 = vmatprep.subr.mxu0 0.0
      %2086 = vmatpush1.xpose.msra.mxu0 0.0
      %2087 = vmatprep.subr.mxu0 0.0
      %2088 = vmatpush1.xpose.msra.mxu0 0.0
      %2089 = vmatprep.subr.mxu0 0.0
      %2090 = vmatpush1.xpose.msra.mxu0 0.0
      %2091 = vmatprep.subr.mxu0 0.0
      %2092 = vmatpush1.xpose.msra.mxu0 0.0
      %2093 = vmatprep.subr.mxu0 0.0
      %2094 = vmatpush1.xpose.msra.mxu0 0.0
      %2095 = vmatprep.subr.mxu0 0.0
      %2096 = vmatpush1.xpose.msra.mxu0 0.0
      %2097 = vmatprep.mubr.f32.mxu0 0.0
      %2098 = vmatmul.mubr.f32.gmra.mrb[0].mxu0 %v2028
      %v2099 = vpop.f32.mrb[0].mxu0
      %v2100 = vadd.f32 0.0, %v2099
      %v2101 = vpop.f32.mrb[0].mxu0
      %2102 = vdwg.mxu0
      %v2103 = vmul.f32 %v2100, 0.25
      %vm2104 = vcmask 39936
      %v2105 = vsel %vm2104, %v2103, -inf
      %2106 = vmax.xlane.f32.xlu0 %v2105
      %v2107 = vpop.xlane.xlu0 %2106
      %v2108 = vsub.f32 %v2103, %v2107
      %v2109 = vmul.f32 %v2108, 1.442695
      %v2110 = vpow.pop %v2109
      %v2111 = vsel %vm2104, %v2110, 0.0
      %2112 = vadd.xlane.f32.xlu0 %v2111
      %v2113 = vpop.xlane.xlu0 %2112
      %v2114 = vrcp.pop %v2113
      %v2115 = vmul.f32 %v2110, %v2114
      %2116 = vrot.lane.b32.xlu0 %v2016, 64
      %v2117 = vpop.permute.xlu0 %2116
      %v2119 = vsel %vm2104, %v2115, 0
      %vm2121 = vcmask 1044480
      %v2122 = vsel %vm2121, %v2117, 0
      %2124 = vmatprep.subr.mxu0 0.0
      %2125 = vmatpush1.msra.mxu0 %v2122
      %2126 = vmatprep.subr.mxu0 0.0
      %2127 = vmatpush1.msra.mxu0 0.0
      %2128 = vmatprep.subr.mxu0 0.0
      %2129 = vmatpush1.msra.mxu0 0.0
      %2130 = vmatprep.subr.mxu0 0.0
      %2131 = vmatpush1.msra.mxu0 0.0
      %2132 = vmatprep.subr.mxu0 0.0
      %2133 = vmatpush1.msra.mxu0 0.0
      %2134 = vmatprep.subr.mxu0 0.0
      %2135 = vmatpush1.msra.mxu0 0.0
      %2136 = vmatprep.subr.mxu0 0.0
      %2137 = vmatpush1.msra.mxu0 0.0
      %2138 = vmatprep.subr.mxu0 0.0
      %2139 = vmatpush1.msra.mxu0 0.0
      %2140 = vmatprep.subr.mxu0 0.0
      %2141 = vmatpush1.msra.mxu0 0.0
      %2142 = vmatprep.subr.mxu0 0.0
      %2143 = vmatpush1.msra.mxu0 0.0
      %2144 = vmatprep.subr.mxu0 0.0
      %2145 = vmatpush1.msra.mxu0 0.0
      %2146 = vmatprep.subr.mxu0 0.0
      %2147 = vmatpush1.msra.mxu0 0.0
      %2148 = vmatprep.subr.mxu0 0.0
      %2149 = vmatpush1.msra.mxu0 0.0
      %2150 = vmatprep.subr.mxu0 0.0
      %2151 = vmatpush1.msra.mxu0 0.0
      %2152 = vmatprep.subr.mxu0 0.0
      %2153 = vmatpush1.msra.mxu0 0.0
      %2154 = vmatprep.subr.mxu0 0.0
      %2155 = vmatpush1.msra.mxu0 0.0
      %2156 = vmatprep.subr.mxu0 0.0
      %2157 = vmatpush1.msra.mxu0 0.0
      %2158 = vmatprep.subr.mxu0 0.0
      %2159 = vmatpush1.msra.mxu0 0.0
      %2160 = vmatprep.subr.mxu0 0.0
      %2161 = vmatpush1.msra.mxu0 0.0
      %2162 = vmatprep.subr.mxu0 0.0
      %2163 = vmatpush1.msra.mxu0 0.0
      %2164 = vmatprep.subr.mxu0 0.0
      %2165 = vmatpush1.msra.mxu0 0.0
      %2166 = vmatprep.subr.mxu0 0.0
      %2167 = vmatpush1.msra.mxu0 0.0
      %2168 = vmatprep.subr.mxu0 0.0
      %2169 = vmatpush1.msra.mxu0 0.0
      %2170 = vmatprep.subr.mxu0 0.0
      %2171 = vmatpush1.msra.mxu0 0.0
      %2172 = vmatprep.subr.mxu0 0.0
      %2173 = vmatpush1.msra.mxu0 0.0
      %2174 = vmatprep.subr.mxu0 0.0
      %2175 = vmatpush1.msra.mxu0 0.0
      %2176 = vmatprep.subr.mxu0 0.0
      %2177 = vmatpush1.msra.mxu0 0.0
      %2178 = vmatprep.subr.mxu0 0.0
      %2179 = vmatpush1.msra.mxu0 0.0
      %2180 = vmatprep.subr.mxu0 0.0
      %2181 = vmatpush1.msra.mxu0 0.0
      %2182 = vmatprep.subr.mxu0 0.0
      %2183 = vmatpush1.msra.mxu0 0.0
      %2184 = vmatprep.subr.mxu0 0.0
      %2185 = vmatpush1.msra.mxu0 0.0
      %2186 = vmatprep.subr.mxu0 0.0
      %2187 = vmatpush1.msra.mxu0 0.0
      %2188 = vmatprep.mubr.f32.mxu0 0.0
      %2189 = vmatmul.mubr.f32.gmra.mrb[0].mxu0 %v2119
      %v2190 = vpop.f32.mrb[0].mxu0
      %v2191 = vadd.f32 0.0, %v2190
      %v2192 = vpop.f32.mrb[0].mxu0
      %2193 = vdwg.mxu0
      %2194 = vrot.lane.b32.xlu0 %v1928, 112
      %v2195 = vpop.permute.xlu0 %2194
      %2196 = vrot.lane.b32.xlu0 %v2016, 112
      %v2197 = vpop.permute.xlu0 %2196
      %v2198 = vsel %vm847, %v2195, 0
      %v2200 = vsel %vm847, %v2197, 0
      %2202 = vmatprep.subr.mxu0 0.0
      %2203 = vmatpush1.xpose.msra.mxu0 %v2200
      %2204 = vmatprep.subr.mxu0 0.0
      %2205 = vmatpush1.xpose.msra.mxu0 0.0
      %2206 = vmatprep.subr.mxu0 0.0
      %2207 = vmatpush1.xpose.msra.mxu0 0.0
      %2208 = vmatprep.subr.mxu0 0.0
      %2209 = vmatpush1.xpose.msra.mxu0 0.0
      %2210 = vmatprep.subr.mxu0 0.0
      %2211 = vmatpush1.xpose.msra.mxu0 0.0
      %2212 = vmatprep.subr.mxu0 0.0
      %2213 = vmatpush1.xpose.msra.mxu0 0.0
      %2214 = vmatprep.subr.mxu0 0.0
      %2215 = vmatpush1.xpose.msra.mxu0 0.0
      %2216 = vmatprep.subr.mxu0 0.0
      %2217 = vmatpush1.xpose.msra.mxu0 0.0
      %2218 = vmatprep.subr.mxu0 0.0
      %2219 = vmatpush1.xpose.msra.mxu0 0.0
      %2220 = vmatprep.subr.mxu0 0.0
      %2221 = vmatpush1.xpose.msra.mxu0 0.0
      %2222 = vmatprep.subr.mxu0 0.0
      %2223 = vmatpush1.xpose.msra.mxu0 0.0
      %2224 = vmatprep.subr.mxu0 0.0
      %2225 = vmatpush1.xpose.msra.mxu0 0.0
      %2226 = vmatprep.subr.mxu0 0.0
      %2227 = vmatpush1.xpose.msra.mxu0 0.0
      %2228 = vmatprep.subr.mxu0 0.0
      %2229 = vmatpush1.xpose.msra.mxu0 0.0
      %2230 = vmatprep.subr.mxu0 0.0
      %2231 = vmatpush1.xpose.msra.mxu0 0.0
      %2232 = vmatprep.subr.mxu0 0.0
      %2233 = vmatpush1.xpose.msra.mxu0 0.0
      %2234 = vmatprep.subr.mxu0 0.0
      %2235 = vmatpush1.xpose.msra.mxu0 0.0
      %2236 = vmatprep.subr.mxu0 0.0
      %2237 = vmatpush1.xpose.msra.mxu0 0.0
      %2238 = vmatprep.subr.mxu0 0.0
      %2239 = vmatpush1.xpose.msra.mxu0 0.0
      %2240 = vmatprep.subr.mxu0 0.0
      %2241 = vmatpush1.xpose.msra.mxu0 0.0
      %2242 = vmatprep.subr.mxu0 0.0
      %2243 = vmatpush1.xpose.msra.mxu0 0.0
      %2244 = vmatprep.subr.mxu0 0.0
      %2245 = vmatpush1.xpose.msra.mxu0 0.0
      %2246 = vmatprep.subr.mxu0 0.0
      %2247 = vmatpush1.xpose.msra.mxu0 0.0
      %2248 = vmatprep.subr.mxu0 0.0
      %2249 = vmatpush1.xpose.msra.mxu0 0.0
      %2250 = vmatprep.subr.mxu0 0.0
      %2251 = vmatpush1.xpose.msra.mxu0 0.0
      %2252 = vmatprep.subr.mxu0 0.0
      %2253 = vmatpush1.xpose.msra.mxu0 0.0
      %2254 = vmatprep.subr.mxu0 0.0
      %2255 = vmatpush1.xpose.msra.mxu0 0.0
      %2256 = vmatprep.subr.mxu0 0.0
      %2257 = vmatpush1.xpose.msra.mxu0 0.0
      %2258 = vmatprep.subr.mxu0 0.0
      %2259 = vmatpush1.xpose.msra.mxu0 0.0
      %2260 = vmatprep.subr.mxu0 0.0
      %2261 = vmatpush1.xpose.msra.mxu0 0.0
      %2262 = vmatprep.subr.mxu0 0.0
      %2263 = vmatpush1.xpose.msra.mxu0 0.0
      %2264 = vmatprep.subr.mxu0 0.0
      %2265 = vmatpush1.xpose.msra.mxu0 0.0
      %2266 = vmatprep.mubr.f32.mxu0 0.0
      %2267 = vmatmul.mubr.f32.gmra.mrb[0].mxu0 %v2198
      %v2268 = vpop.f32.mrb[0].mxu0
      %v2269 = vadd.f32 0.0, %v2268
      %v2270 = vpop.f32.mrb[0].mxu0
      %2271 = vdwg.mxu0
      %v2272 = vmul.f32 %v2269, 0.25
      %v2273 = vsel %vm2104, %v2272, -inf
      %2274 = vmax.xlane.f32.xlu0 %v2273
      %v2275 = vpop.xlane.xlu0 %2274
      %v2276 = vsub.f32 %v2272, %v2275
      %v2277 = vmul.f32 %v2276, 1.442695
      %v2278 = vpow.pop %v2277
      %v2279 = vsel %vm2104, %v2278, 0.0
      %2280 = vadd.xlane.f32.xlu0 %v2279
      %v2281 = vpop.xlane.xlu0 %2280
      %v2282 = vrcp.pop %v2281
      %v2283 = vmul.f32 %v2278, %v2282
      %2284 = vrot.lane.b32.xlu0 %v2016, 48
      %v2285 = vpop.permute.xlu0 %2284
      %v2287 = vsel %vm2104, %v2283, 0
      %v2289 = vsel %vm2121, %v2285, 0
      %2291 = vmatprep.subr.mxu0 0.0
      %2292 = vmatpush1.msra.mxu0 %v2289
      %2293 = vmatprep.subr.mxu0 0.0
      %2294 = vmatpush1.msra.mxu0 0.0
      %2295 = vmatprep.subr.mxu0 0.0
      %2296 = vmatpush1.msra.mxu0 0.0
      %2297 = vmatprep.subr.mxu0 0.0
      %2298 = vmatpush1.msra.mxu0 0.0
      %2299 = vmatprep.subr.mxu0 0.0
      %2300 = vmatpush1.msra.mxu0 0.0
      %2301 = vmatprep.subr.mxu0 0.0
      %2302 = vmatpush1.msra.mxu0 0.0
      %2303 = vmatprep.subr.mxu0 0.0
      %2304 = vmatpush1.msra.mxu0 0.0
      %2305 = vmatprep.subr.mxu0 0.0
      %2306 = vmatpush1.msra.mxu0 0.0
      %2307 = vmatprep.subr.mxu0 0.0
      %2308 = vmatpush1.msra.mxu0 0.0
      %2309 = vmatprep.subr.mxu0 0.0
      %2310 = vmatpush1.msra.mxu0 0.0
      %2311 = vmatprep.subr.mxu0 0.0
      %2312 = vmatpush1.msra.mxu0 0.0
      %2313 = vmatprep.subr.mxu0 0.0
      %2314 = vmatpush1.msra.mxu0 0.0
      %2315 = vmatprep.subr.mxu0 0.0
      %2316 = vmatpush1.msra.mxu0 0.0
      %2317 = vmatprep.subr.mxu0 0.0
      %2318 = vmatpush1.msra.mxu0 0.0
      %2319 = vmatprep.subr.mxu0 0.0
      %2320 = vmatpush1.msra.mxu0 0.0
      %2321 = vmatprep.subr.mxu0 0.0
      %2322 = vmatpush1.msra.mxu0 0.0
      %2323 = vmatprep.subr.mxu0 0.0
      %2324 = vmatpush1.msra.mxu0 0.0
      %2325 = vmatprep.subr.mxu0 0.0
      %2326 = vmatpush1.msra.mxu0 0.0
      %2327 = vmatprep.subr.mxu0 0.0
      %2328 = vmatpush1.msra.mxu0 0.0
      %2329 = vmatprep.subr.mxu0 0.0
      %2330 = vmatpush1.msra.mxu0 0.0
      %2331 = vmatprep.subr.mxu0 0.0
      %2332 = vmatpush1.msra.mxu0 0.0
      %2333 = vmatprep.subr.mxu0 0.0
      %2334 = vmatpush1.msra.mxu0 0.0
      %2335 = vmatprep.subr.mxu0 0.0
      %2336 = vmatpush1.msra.mxu0 0.0
      %2337 = vmatprep.subr.mxu0 0.0
      %2338 = vmatpush1.msra.mxu0 0.0
      %2339 = vmatprep.subr.mxu0 0.0
      %2340 = vmatpush1.msra.mxu0 0.0
      %2341 = vmatprep.subr.mxu0 0.0
      %2342 = vmatpush1.msra.mxu0 0.0
      %2343 = vmatprep.subr.mxu0 0.0
      %2344 = vmatpush1.msra.mxu0 0.0
      %2345 = vmatprep.subr.mxu0 0.0
      %2346 = vmatpush1.msra.mxu0 0.0
      %2347 = vmatprep.subr.mxu0 0.0
      %2348 = vmatpush1.msra.mxu0 0.0
      %2349 = vmatprep.subr.mxu0 0.0
      %2350 = vmatpush1.msra.mxu0 0.0
      %2351 = vmatprep.subr.mxu0 0.0
      %2352 = vmatpush1.msra.mxu0 0.0
      %2353 = vmatprep.subr.mxu0 0.0
      %2354 = vmatpush1.msra.mxu0 0.0
      %2355 = vmatprep.mubr.f32.mxu0 0.0
      %2356 = vmatmul.mubr.f32.gmra.mrb[0].mxu0 %v2287
      %v2357 = vpop.f32.mrb[0].mxu0
      %v2358 = vadd.f32 0.0, %v2357
      %v2359 = vpop.f32.mrb[0].mxu0
      %2360 = vdwg.mxu0
      %v2362 = vsel %vm847, %v2358, 0
      %2364 = vmatprep.subr.mxu0 0.0
      %2365 = vmatpush1.msra.mxu0 %v2021
      %2366 = vmatprep.subr.mxu0 0.0
      %2367 = vmatpush1.msra.mxu0 %v2022
      %2368 = vmatprep.subr.mxu0 0.0
      %2369 = vmatpush1.msra.mxu0 0.0
      %2370 = vmatprep.subr.mxu0 0.0
      %2371 = vmatpush1.msra.mxu0 0.0
      %2372 = vmatprep.subr.mxu0 0.0
      %2373 = vmatpush1.msra.mxu0 0.0
      %2374 = vmatprep.subr.mxu0 0.0
      %2375 = vmatpush1.msra.mxu0 0.0
      %2376 = vmatprep.subr.mxu0 0.0
      %2377 = vmatpush1.msra.mxu0 0.0
      %2378 = vmatprep.subr.mxu0 0.0
      %2379 = vmatpush1.msra.mxu0 0.0
      %2380 = vmatprep.subr.mxu0 0.0
      %2381 = vmatpush1.msra.mxu0 0.0
      %2382 = vmatprep.subr.mxu0 0.0
      %2383 = vmatpush1.msra.mxu0 0.0
      %2384 = vmatprep.subr.mxu0 0.0
      %2385 = vmatpush1.msra.mxu0 0.0
      %2386 = vmatprep.subr.mxu0 0.0
      %2387 = vmatpush1.msra.mxu0 0.0
      %2388 = vmatprep.subr.mxu0 0.0
      %2389 = vmatpush1.msra.mxu0 0.0
      %2390 = vmatprep.subr.mxu0 0.0
      %2391 = vmatpush1.msra.mxu0 0.0
      %2392 = vmatprep.subr.mxu0 0.0
      %2393 = vmatpush1.msra.mxu0 0.0
      %2394 = vmatprep.subr.mxu0 0.0
      %2395 = vmatpush1.msra.mxu0 0.0
      %2396 = vmatprep.subr.mxu0 0.0
      %2397 = vmatpush1.msra.mxu0 0.0
      %2398 = vmatprep.subr.mxu0 0.0
      %2399 = vmatpush1.msra.mxu0 0.0
      %2400 = vmatprep.subr.mxu0 0.0
      %2401 = vmatpush1.msra.mxu0 0.0
      %2402 = vmatprep.subr.mxu0 0.0
      %2403 = vmatpush1.msra.mxu0 0.0
      %2404 = vmatprep.subr.mxu0 0.0
      %2405 = vmatpush1.msra.mxu0 0.0
      %2406 = vmatprep.subr.mxu0 0.0
      %2407 = vmatpush1.msra.mxu0 0.0
      %2408 = vmatprep.subr.mxu0 0.0
      %2409 = vmatpush1.msra.mxu0 0.0
      %2410 = vmatprep.subr.mxu0 0.0
      %2411 = vmatpush1.msra.mxu0 0.0
      %2412 = vmatprep.subr.mxu0 0.0
      %2413 = vmatpush1.msra.mxu0 0.0
      %2414 = vmatprep.subr.mxu0 0.0
      %2415 = vmatpush1.msra.mxu0 0.0
      %2416 = vmatprep.subr.mxu0 0.0
      %2417 = vmatpush1.msra.mxu0 0.0
      %2418 = vmatprep.subr.mxu0 0.0
      %2419 = vmatpush1.msra.mxu0 0.0
      %2420 = vmatprep.subr.mxu0 0.0
      %2421 = vmatpush1.msra.mxu0 0.0
      %2422 = vmatprep.subr.mxu0 0.0
      %2423 = vmatpush1.msra.mxu0 0.0
      %2424 = vmatprep.subr.mxu0 0.0
      %2425 = vmatpush1.msra.mxu0 0.0
      %2426 = vmatprep.subr.mxu0 0.0
      %2427 = vmatpush1.msra.mxu0 0.0
      %2428 = vmatprep.mubr.f32.mxu0 0.0
      %2429 = vmatmul.mubr.f32.gmra.mrb[0].mxu0 %v2362
      %v2430 = vpop.f32.mrb[0].mxu0
      %v2431 = vadd.f32 0.0, %v2430
      %v2432 = vpop.f32.mrb[0].mxu0
      %2433 = vdwg.mxu0
      %v2435 = vsel %vm847, %v2191, 0
      %2437 = vmatprep.subr.mxu0 0.0
      %2438 = vmatpush1.msra.mxu0 %v2019
      %2439 = vmatprep.subr.mxu0 0.0
      %2440 = vmatpush1.msra.mxu0 %v2020
      %2441 = vmatprep.subr.mxu0 0.0
      %2442 = vmatpush1.msra.mxu0 0.0
      %2443 = vmatprep.subr.mxu0 0.0
      %2444 = vmatpush1.msra.mxu0 0.0
      %2445 = vmatprep.subr.mxu0 0.0
      %2446 = vmatpush1.msra.mxu0 0.0
      %2447 = vmatprep.subr.mxu0 0.0
      %2448 = vmatpush1.msra.mxu0 0.0
      %2449 = vmatprep.subr.mxu0 0.0
      %2450 = vmatpush1.msra.mxu0 0.0
      %2451 = vmatprep.subr.mxu0 0.0
      %2452 = vmatpush1.msra.mxu0 0.0
      %2453 = vmatprep.subr.mxu0 0.0
      %2454 = vmatpush1.msra.mxu0 0.0
      %2455 = vmatprep.subr.mxu0 0.0
      %2456 = vmatpush1.msra.mxu0 0.0
      %2457 = vmatprep.subr.mxu0 0.0
      %2458 = vmatpush1.msra.mxu0 0.0
      %2459 = vmatprep.subr.mxu0 0.0
      %2460 = vmatpush1.msra.mxu0 0.0
      %2461 = vmatprep.subr.mxu0 0.0
      %2462 = vmatpush1.msra.mxu0 0.0
      %2463 = vmatprep.subr.mxu0 0.0
      %2464 = vmatpush1.msra.mxu0 0.0
      %2465 = vmatprep.subr.mxu0 0.0
      %2466 = vmatpush1.msra.mxu0 0.0
      %2467 = vmatprep.subr.mxu0 0.0
      %2468 = vmatpush1.msra.mxu0 0.0
      %2469 = vmatprep.subr.mxu0 0.0
      %2470 = vmatpush1.msra.mxu0 0.0
      %2471 = vmatprep.subr.mxu0 0.0
      %2472 = vmatpush1.msra.mxu0 0.0
      %2473 = vmatprep.subr.mxu0 0.0
      %2474 = vmatpush1.msra.mxu0 0.0
      %2475 = vmatprep.subr.mxu0 0.0
      %2476 = vmatpush1.msra.mxu0 0.0
      %2477 = vmatprep.subr.mxu0 0.0
      %2478 = vmatpush1.msra.mxu0 0.0
      %2479 = vmatprep.subr.mxu0 0.0
      %2480 = vmatpush1.msra.mxu0 0.0
      %2481 = vmatprep.subr.mxu0 0.0
      %2482 = vmatpush1.msra.mxu0 0.0
      %2483 = vmatprep.subr.mxu0 0.0
      %2484 = vmatpush1.msra.mxu0 0.0
      %2485 = vmatprep.subr.mxu0 0.0
      %2486 = vmatpush1.msra.mxu0 0.0
      %2487 = vmatprep.subr.mxu0 0.0
      %2488 = vmatpush1.msra.mxu0 0.0
      %2489 = vmatprep.subr.mxu0 0.0
      %2490 = vmatpush1.msra.mxu0 0.0
      %2491 = vmatprep.subr.mxu0 0.0
      %2492 = vmatpush1.msra.mxu0 0.0
      %2493 = vmatprep.subr.mxu0 0.0
      %2494 = vmatpush1.msra.mxu0 0.0
      %2495 = vmatprep.subr.mxu0 0.0
      %2496 = vmatpush1.msra.mxu0 0.0
      %2497 = vmatprep.subr.mxu0 0.0
      %2498 = vmatpush1.msra.mxu0 0.0
      %2499 = vmatprep.subr.mxu0 0.0
      %2500 = vmatpush1.msra.mxu0 0.0
      %2501 = vmatprep.mubr.f32.mxu0 0.0
      %2502 = vmatmul.mubr.f32.gmra.mrb[0].mxu0 %v2435
      %v2503 = vpop.f32.mrb[0].mxu0
      %v2504 = vadd.f32 %v2431, %v2503
      %v2505 = vpop.f32.mrb[0].mxu0
      %2506 = vdwg.mxu0
      %2507 = vrot.lane.b32.xlu0 %v1928, 96
      %v2508 = vpop.permute.xlu0 %2507
      %2509 = vrot.lane.b32.xlu0 %v2016, 96
      %v2510 = vpop.permute.xlu0 %2509
      %v2511 = vsel %vm847, %v2508, 0
      %v2513 = vsel %vm847, %v2510, 0
      %2515 = vmatprep.subr.mxu0 0.0
      %2516 = vmatpush1.xpose.msra.mxu0 %v2513
      %2517 = vmatprep.subr.mxu0 0.0
      %2518 = vmatpush1.xpose.msra.mxu0 0.0
      %2519 = vmatprep.subr.mxu0 0.0
      %2520 = vmatpush1.xpose.msra.mxu0 0.0
      %2521 = vmatprep.subr.mxu0 0.0
      %2522 = vmatpush1.xpose.msra.mxu0 0.0
      %2523 = vmatprep.subr.mxu0 0.0
      %2524 = vmatpush1.xpose.msra.mxu0 0.0
      %2525 = vmatprep.subr.mxu0 0.0
      %2526 = vmatpush1.xpose.msra.mxu0 0.0
      %2527 = vmatprep.subr.mxu0 0.0
      %2528 = vmatpush1.xpose.msra.mxu0 0.0
      %2529 = vmatprep.subr.mxu0 0.0
      %2530 = vmatpush1.xpose.msra.mxu0 0.0
      %2531 = vmatprep.subr.mxu0 0.0
      %2532 = vmatpush1.xpose.msra.mxu0 0.0
      %2533 = vmatprep.subr.mxu0 0.0
      %2534 = vmatpush1.xpose.msra.mxu0 0.0
      %2535 = vmatprep.subr.mxu0 0.0
      %2536 = vmatpush1.xpose.msra.mxu0 0.0
      %2537 = vmatprep.subr.mxu0 0.0
      %2538 = vmatpush1.xpose.msra.mxu0 0.0
      %2539 = vmatprep.subr.mxu0 0.0
      %2540 = vmatpush1.xpose.msra.mxu0 0.0
      %2541 = vmatprep.subr.mxu0 0.0
      %2542 = vmatpush1.xpose.msra.mxu0 0.0
      %2543 = vmatprep.subr.mxu0 0.0
      %2544 = vmatpush1.xpose.msra.mxu0 0.0
      %2545 = vmatprep.subr.mxu0 0.0
      %2546 = vmatpush1.xpose.msra.mxu0 0.0
      %2547 = vmatprep.subr.mxu0 0.0
      %2548 = vmatpush1.xpose.msra.mxu0 0.0
      %2549 = vmatprep.subr.mxu0 0.0
      %2550 = vmatpush1.xpose.msra.mxu0 0.0
      %2551 = vmatprep.subr.mxu0 0.0
      %2552 = vmatpush1.xpose.msra.mxu0 0.0
      %2553 = vmatprep.subr.mxu0 0.0
      %2554 = vmatpush1.xpose.msra.mxu0 0.0
      %2555 = vmatprep.subr.mxu0 0.0
      %2556 = vmatpush1.xpose.msra.mxu0 0.0
      %2557 = vmatprep.subr.mxu0 0.0
      %2558 = vmatpush1.xpose.msra.mxu0 0.0
      %2559 = vmatprep.subr.mxu0 0.0
      %2560 = vmatpush1.xpose.msra.mxu0 0.0
      %2561 = vmatprep.subr.mxu0 0.0
      %2562 = vmatpush1.xpose.msra.mxu0 0.0
      %2563 = vmatprep.subr.mxu0 0.0
      %2564 = vmatpush1.xpose.msra.mxu0 0.0
      %2565 = vmatprep.subr.mxu0 0.0
      %2566 = vmatpush1.xpose.msra.mxu0 0.0
      %2567 = vmatprep.subr.mxu0 0.0
      %2568 = vmatpush1.xpose.msra.mxu0 0.0
      %2569 = vmatprep.subr.mxu0 0.0
      %2570 = vmatpush1.xpose.msra.mxu0 0.0
      %2571 = vmatprep.subr.mxu0 0.0
      %2572 = vmatpush1.xpose.msra.mxu0 0.0
      %2573 = vmatprep.subr.mxu0 0.0
      %2574 = vmatpush1.xpose.msra.mxu0 0.0
      %2575 = vmatprep.subr.mxu0 0.0
      %2576 = vmatpush1.xpose.msra.mxu0 0.0
      %2577 = vmatprep.subr.mxu0 0.0
      %2578 = vmatpush1.xpose.msra.mxu0 0.0
      %2579 = vmatprep.mubr.f32.mxu0 0.0
      %2580 = vmatmul.mubr.f32.gmra.mrb[0].mxu0 %v2511
      %v2581 = vpop.f32.mrb[0].mxu0
      %v2582 = vadd.f32 0.0, %v2581
      %v2583 = vpop.f32.mrb[0].mxu0
      %2584 = vdwg.mxu0
      %v2585 = vmul.f32 %v2582, 0.25
      %v2586 = vsel %vm2104, %v2585, -inf
      %2587 = vmax.xlane.f32.xlu0 %v2586
      %v2588 = vpop.xlane.xlu0 %2587
      %v2589 = vsub.f32 %v2585, %v2588
      %v2590 = vmul.f32 %v2589, 1.442695
      %v2591 = vpow.pop %v2590
      %v2592 = vsel %vm2104, %v2591, 0.0
      %2593 = vadd.xlane.f32.xlu0 %v2592
      %v2594 = vpop.xlane.xlu0 %2593
      %v2595 = vrcp.pop %v2594
      %v2596 = vmul.f32 %v2591, %v2595
      %2597 = vrot.lane.b32.xlu0 %v2016, 32
      %v2598 = vpop.permute.xlu0 %2597
      %v2600 = vsel %vm2104, %v2596, 0
      %v2602 = vsel %vm2121, %v2598, 0
      %2604 = vmatprep.subr.mxu0 0.0
      %2605 = vmatpush1.msra.mxu0 %v2602
      %2606 = vmatprep.subr.mxu0 0.0
      %2607 = vmatpush1.msra.mxu0 0.0
      %2608 = vmatprep.subr.mxu0 0.0
      %2609 = vmatpush1.msra.mxu0 0.0
      %2610 = vmatprep.subr.mxu0 0.0
      %2611 = vmatpush1.msra.mxu0 0.0
      %2612 = vmatprep.subr.mxu0 0.0
      %2613 = vmatpush1.msra.mxu0 0.0
      %2614 = vmatprep.subr.mxu0 0.0
      %2615 = vmatpush1.msra.mxu0 0.0
      %2616 = vmatprep.subr.mxu0 0.0
      %2617 = vmatpush1.msra.mxu0 0.0
      %2618 = vmatprep.subr.mxu0 0.0
      %2619 = vmatpush1.msra.mxu0 0.0
      %2620 = vmatprep.subr.mxu0 0.0
      %2621 = vmatpush1.msra.mxu0 0.0
      %2622 = vmatprep.subr.mxu0 0.0
      %2623 = vmatpush1.msra.mxu0 0.0
      %2624 = vmatprep.subr.mxu0 0.0
      %2625 = vmatpush1.msra.mxu0 0.0
      %2626 = vmatprep.subr.mxu0 0.0
      %2627 = vmatpush1.msra.mxu0 0.0
      %2628 = vmatprep.subr.mxu0 0.0
      %2629 = vmatpush1.msra.mxu0 0.0
      %2630 = vmatprep.subr.mxu0 0.0
      %2631 = vmatpush1.msra.mxu0 0.0
      %2632 = vmatprep.subr.mxu0 0.0
      %2633 = vmatpush1.msra.mxu0 0.0
      %2634 = vmatprep.subr.mxu0 0.0
      %2635 = vmatpush1.msra.mxu0 0.0
      %2636 = vmatprep.subr.mxu0 0.0
      %2637 = vmatpush1.msra.mxu0 0.0
      %2638 = vmatprep.subr.mxu0 0.0
      %2639 = vmatpush1.msra.mxu0 0.0
      %2640 = vmatprep.subr.mxu0 0.0
      %2641 = vmatpush1.msra.mxu0 0.0
      %2642 = vmatprep.subr.mxu0 0.0
      %2643 = vmatpush1.msra.mxu0 0.0
      %2644 = vmatprep.subr.mxu0 0.0
      %2645 = vmatpush1.msra.mxu0 0.0
      %2646 = vmatprep.subr.mxu0 0.0
      %2647 = vmatpush1.msra.mxu0 0.0
      %2648 = vmatprep.subr.mxu0 0.0
      %2649 = vmatpush1.msra.mxu0 0.0
      %2650 = vmatprep.subr.mxu0 0.0
      %2651 = vmatpush1.msra.mxu0 0.0
      %2652 = vmatprep.subr.mxu0 0.0
      %2653 = vmatpush1.msra.mxu0 0.0
      %2654 = vmatprep.subr.mxu0 0.0
      %2655 = vmatpush1.msra.mxu0 0.0
      %2656 = vmatprep.subr.mxu0 0.0
      %2657 = vmatpush1.msra.mxu0 0.0
      %2658 = vmatprep.subr.mxu0 0.0
      %2659 = vmatpush1.msra.mxu0 0.0
      %2660 = vmatprep.subr.mxu0 0.0
      %2661 = vmatpush1.msra.mxu0 0.0
      %2662 = vmatprep.subr.mxu0 0.0
      %2663 = vmatpush1.msra.mxu0 0.0
      %2664 = vmatprep.subr.mxu0 0.0
      %2665 = vmatpush1.msra.mxu0 0.0
      %2666 = vmatprep.subr.mxu0 0.0
      %2667 = vmatpush1.msra.mxu0 0.0
      %2668 = vmatprep.mubr.f32.mxu0 0.0
      %2669 = vmatmul.mubr.f32.gmra.mrb[0].mxu0 %v2600
      %v2670 = vpop.f32.mrb[0].mxu0
      %v2671 = vadd.f32 0.0, %v2670
      %v2672 = vpop.f32.mrb[0].mxu0
      %2673 = vdwg.mxu0
      %v2675 = vsel %vm847, %v2671, 0
      %2677 = vmatprep.subr.mxu0 0.0
      %2678 = vmatpush1.msra.mxu0 %v2023
      %2679 = vmatprep.subr.mxu0 0.0
      %2680 = vmatpush1.msra.mxu0 %v2024
      %2681 = vmatprep.subr.mxu0 0.0
      %2682 = vmatpush1.msra.mxu0 0.0
      %2683 = vmatprep.subr.mxu0 0.0
      %2684 = vmatpush1.msra.mxu0 0.0
      %2685 = vmatprep.subr.mxu0 0.0
      %2686 = vmatpush1.msra.mxu0 0.0
      %2687 = vmatprep.subr.mxu0 0.0
      %2688 = vmatpush1.msra.mxu0 0.0
      %2689 = vmatprep.subr.mxu0 0.0
      %2690 = vmatpush1.msra.mxu0 0.0
      %2691 = vmatprep.subr.mxu0 0.0
      %2692 = vmatpush1.msra.mxu0 0.0
      %2693 = vmatprep.subr.mxu0 0.0
      %2694 = vmatpush1.msra.mxu0 0.0
      %2695 = vmatprep.subr.mxu0 0.0
      %2696 = vmatpush1.msra.mxu0 0.0
      %2697 = vmatprep.subr.mxu0 0.0
      %2698 = vmatpush1.msra.mxu0 0.0
      %2699 = vmatprep.subr.mxu0 0.0
      %2700 = vmatpush1.msra.mxu0 0.0
      %2701 = vmatprep.subr.mxu0 0.0
      %2702 = vmatpush1.msra.mxu0 0.0
      %2703 = vmatprep.subr.mxu0 0.0
      %2704 = vmatpush1.msra.mxu0 0.0
      %2705 = vmatprep.subr.mxu0 0.0
      %2706 = vmatpush1.msra.mxu0 0.0
      %2707 = vmatprep.subr.mxu0 0.0
      %2708 = vmatpush1.msra.mxu0 0.0
      %2709 = vmatprep.subr.mxu0 0.0
      %2710 = vmatpush1.msra.mxu0 0.0
      %2711 = vmatprep.subr.mxu0 0.0
      %2712 = vmatpush1.msra.mxu0 0.0
      %2713 = vmatprep.subr.mxu0 0.0
      %2714 = vmatpush1.msra.mxu0 0.0
      %2715 = vmatprep.subr.mxu0 0.0
      %2716 = vmatpush1.msra.mxu0 0.0
      %2717 = vmatprep.subr.mxu0 0.0
      %2718 = vmatpush1.msra.mxu0 0.0
      %2719 = vmatprep.subr.mxu0 0.0
      %2720 = vmatpush1.msra.mxu0 0.0
      %2721 = vmatprep.subr.mxu0 0.0
      %2722 = vmatpush1.msra.mxu0 0.0
      %2723 = vmatprep.subr.mxu0 0.0
      %2724 = vmatpush1.msra.mxu0 0.0
      %2725 = vmatprep.subr.mxu0 0.0
      %2726 = vmatpush1.msra.mxu0 0.0
      %2727 = vmatprep.subr.mxu0 0.0
      %2728 = vmatpush1.msra.mxu0 0.0
      %2729 = vmatprep.subr.mxu0 0.0
      %2730 = vmatpush1.msra.mxu0 0.0
      %2731 = vmatprep.subr.mxu0 0.0
      %2732 = vmatpush1.msra.mxu0 0.0
      %2733 = vmatprep.subr.mxu0 0.0
      %2734 = vmatpush1.msra.mxu0 0.0
      %2735 = vmatprep.subr.mxu0 0.0
      %2736 = vmatpush1.msra.mxu0 0.0
      %2737 = vmatprep.subr.mxu0 0.0
      %2738 = vmatpush1.msra.mxu0 0.0
      %2739 = vmatprep.subr.mxu0 0.0
      %2740 = vmatpush1.msra.mxu0 0.0
      %2741 = vmatprep.mubr.f32.mxu0 0.0
      %2742 = vmatmul.mubr.f32.gmra.mrb[0].mxu0 %v2675
      %v2743 = vpop.f32.mrb[0].mxu0
      %v2744 = vadd.f32 0.0, %v2743
      %v2745 = vpop.f32.mrb[0].mxu0
      %2746 = vdwg.mxu0
      %v2747 = vadd.f32 %v2504, %v2744
      %2748 = vrot.lane.b32.xlu0 %v1928, 80
      %v2749 = vpop.permute.xlu0 %2748
      %2750 = vrot.lane.b32.xlu0 %v2016, 80
      %v2751 = vpop.permute.xlu0 %2750
      %v2752 = vsel %vm847, %v2749, 0
      %v2754 = vsel %vm847, %v2751, 0
      %2756 = vmatprep.subr.mxu0 0.0
      %2757 = vmatpush1.xpose.msra.mxu0 %v2754
      %2758 = vmatprep.subr.mxu0 0.0
      %2759 = vmatpush1.xpose.msra.mxu0 0.0
      %2760 = vmatprep.subr.mxu0 0.0
      %2761 = vmatpush1.xpose.msra.mxu0 0.0
      %2762 = vmatprep.subr.mxu0 0.0
      %2763 = vmatpush1.xpose.msra.mxu0 0.0
      %2764 = vmatprep.subr.mxu0 0.0
      %2765 = vmatpush1.xpose.msra.mxu0 0.0
      %2766 = vmatprep.subr.mxu0 0.0
      %2767 = vmatpush1.xpose.msra.mxu0 0.0
      %2768 = vmatprep.subr.mxu0 0.0
      %2769 = vmatpush1.xpose.msra.mxu0 0.0
      %2770 = vmatprep.subr.mxu0 0.0
      %2771 = vmatpush1.xpose.msra.mxu0 0.0
      %2772 = vmatprep.subr.mxu0 0.0
      %2773 = vmatpush1.xpose.msra.mxu0 0.0
      %2774 = vmatprep.subr.mxu0 0.0
      %2775 = vmatpush1.xpose.msra.mxu0 0.0
      %2776 = vmatprep.subr.mxu0 0.0
      %2777 = vmatpush1.xpose.msra.mxu0 0.0
      %2778 = vmatprep.subr.mxu0 0.0
      %2779 = vmatpush1.xpose.msra.mxu0 0.0
      %2780 = vmatprep.subr.mxu0 0.0
      %2781 = vmatpush1.xpose.msra.mxu0 0.0
      %2782 = vmatprep.subr.mxu0 0.0
      %2783 = vmatpush1.xpose.msra.mxu0 0.0
      %2784 = vmatprep.subr.mxu0 0.0
      %2785 = vmatpush1.xpose.msra.mxu0 0.0
      %2786 = vmatprep.subr.mxu0 0.0
      %2787 = vmatpush1.xpose.msra.mxu0 0.0
      %2788 = vmatprep.subr.mxu0 0.0
      %2789 = vmatpush1.xpose.msra.mxu0 0.0
      %2790 = vmatprep.subr.mxu0 0.0
      %2791 = vmatpush1.xpose.msra.mxu0 0.0
      %2792 = vmatprep.subr.mxu0 0.0
      %2793 = vmatpush1.xpose.msra.mxu0 0.0
      %2794 = vmatprep.subr.mxu0 0.0
      %2795 = vmatpush1.xpose.msra.mxu0 0.0
      %2796 = vmatprep.subr.mxu0 0.0
      %2797 = vmatpush1.xpose.msra.mxu0 0.0
      %2798 = vmatprep.subr.mxu0 0.0
      %2799 = vmatpush1.xpose.msra.mxu0 0.0
      %2800 = vmatprep.subr.mxu0 0.0
      %2801 = vmatpush1.xpose.msra.mxu0 0.0
      %2802 = vmatprep.subr.mxu0 0.0
      %2803 = vmatpush1.xpose.msra.mxu0 0.0
      %2804 = vmatprep.subr.mxu0 0.0
      %2805 = vmatpush1.xpose.msra.mxu0 0.0
      %2806 = vmatprep.subr.mxu0 0.0
      %2807 = vmatpush1.xpose.msra.mxu0 0.0
      %2808 = vmatprep.subr.mxu0 0.0
      %2809 = vmatpush1.xpose.msra.mxu0 0.0
      %2810 = vmatprep.subr.mxu0 0.0
      %2811 = vmatpush1.xpose.msra.mxu0 0.0
      %2812 = vmatprep.subr.mxu0 0.0
      %2813 = vmatpush1.xpose.msra.mxu0 0.0
      %2814 = vmatprep.subr.mxu0 0.0
      %2815 = vmatpush1.xpose.msra.mxu0 0.0
      %2816 = vmatprep.subr.mxu0 0.0
      %2817 = vmatpush1.xpose.msra.mxu0 0.0
      %2818 = vmatprep.subr.mxu0 0.0
      %2819 = vmatpush1.xpose.msra.mxu0 0.0
      %2820 = vmatprep.mubr.f32.mxu0 0.0
      %2821 = vmatmul.mubr.f32.gmra.mrb[0].mxu0 %v2752
      %v2822 = vpop.f32.mrb[0].mxu0
      %v2823 = vadd.f32 0.0, %v2822
      %v2824 = vpop.f32.mrb[0].mxu0
      %2825 = vdwg.mxu0
      %v2826 = vmul.f32 %v2823, 0.25
      %v2827 = vsel %vm2104, %v2826, -inf
      %2828 = vmax.xlane.f32.xlu0 %v2827
      %v2829 = vpop.xlane.xlu0 %2828
      %v2830 = vsub.f32 %v2826, %v2829
      %v2831 = vmul.f32 %v2830, 1.442695
      %v2832 = vpow.pop %v2831
      %v2833 = vsel %vm2104, %v2832, 0.0
      %2834 = vadd.xlane.f32.xlu0 %v2833
      %v2835 = vpop.xlane.xlu0 %2834
      %v2836 = vrcp.pop %v2835
      %v2837 = vmul.f32 %v2832, %v2836
      %2838 = vrot.lane.b32.xlu0 %v2016, 16
      %v2839 = vpop.permute.xlu0 %2838
      %v2841 = vsel %vm2104, %v2837, 0
      %v2843 = vsel %vm2121, %v2839, 0
      %2845 = vmatprep.subr.mxu0 0.0
      %2846 = vmatpush1.msra.mxu0 %v2843
      %2847 = vmatprep.subr.mxu0 0.0
      %2848 = vmatpush1.msra.mxu0 0.0
      %2849 = vmatprep.subr.mxu0 0.0
      %2850 = vmatpush1.msra.mxu0 0.0
      %2851 = vmatprep.subr.mxu0 0.0
      %2852 = vmatpush1.msra.mxu0 0.0
      %2853 = vmatprep.subr.mxu0 0.0
      %2854 = vmatpush1.msra.mxu0 0.0
      %2855 = vmatprep.subr.mxu0 0.0
      %2856 = vmatpush1.msra.mxu0 0.0
      %2857 = vmatprep.subr.mxu0 0.0
      %2858 = vmatpush1.msra.mxu0 0.0
      %2859 = vmatprep.subr.mxu0 0.0
      %2860 = vmatpush1.msra.mxu0 0.0
      %2861 = vmatprep.subr.mxu0 0.0
      %2862 = vmatpush1.msra.mxu0 0.0
      %2863 = vmatprep.subr.mxu0 0.0
      %2864 = vmatpush1.msra.mxu0 0.0
      %2865 = vmatprep.subr.mxu0 0.0
      %2866 = vmatpush1.msra.mxu0 0.0
      %2867 = vmatprep.subr.mxu0 0.0
      %2868 = vmatpush1.msra.mxu0 0.0
      %2869 = vmatprep.subr.mxu0 0.0
      %2870 = vmatpush1.msra.mxu0 0.0
      %2871 = vmatprep.subr.mxu0 0.0
      %2872 = vmatpush1.msra.mxu0 0.0
      %2873 = vmatprep.subr.mxu0 0.0
      %2874 = vmatpush1.msra.mxu0 0.0
      %2875 = vmatprep.subr.mxu0 0.0
      %2876 = vmatpush1.msra.mxu0 0.0
      %2877 = vmatprep.subr.mxu0 0.0
      %2878 = vmatpush1.msra.mxu0 0.0
      %2879 = vmatprep.subr.mxu0 0.0
      %2880 = vmatpush1.msra.mxu0 0.0
      %2881 = vmatprep.subr.mxu0 0.0
      %2882 = vmatpush1.msra.mxu0 0.0
      %2883 = vmatprep.subr.mxu0 0.0
      %2884 = vmatpush1.msra.mxu0 0.0
      %2885 = vmatprep.subr.mxu0 0.0
      %2886 = vmatpush1.msra.mxu0 0.0
      %2887 = vmatprep.subr.mxu0 0.0
      %2888 = vmatpush1.msra.mxu0 0.0
      %2889 = vmatprep.subr.mxu0 0.0
      %2890 = vmatpush1.msra.mxu0 0.0
      %2891 = vmatprep.subr.mxu0 0.0
      %2892 = vmatpush1.msra.mxu0 0.0
      %2893 = vmatprep.subr.mxu0 0.0
      %2894 = vmatpush1.msra.mxu0 0.0
      %2895 = vmatprep.subr.mxu0 0.0
      %2896 = vmatpush1.msra.mxu0 0.0
      %2897 = vmatprep.subr.mxu0 0.0
      %2898 = vmatpush1.msra.mxu0 0.0
      %2899 = vmatprep.subr.mxu0 0.0
      %2900 = vmatpush1.msra.mxu0 0.0
      %2901 = vmatprep.subr.mxu0 0.0
      %2902 = vmatpush1.msra.mxu0 0.0
      %2903 = vmatprep.subr.mxu0 0.0
      %2904 = vmatpush1.msra.mxu0 0.0
      %2905 = vmatprep.subr.mxu0 0.0
      %2906 = vmatpush1.msra.mxu0 0.0
      %2907 = vmatprep.subr.mxu0 0.0
      %2908 = vmatpush1.msra.mxu0 0.0
      %2909 = vmatprep.mubr.f32.mxu0 0.0
      %2910 = vmatmul.mubr.f32.gmra.mrb[0].mxu0 %v2841
      %v2911 = vpop.f32.mrb[0].mxu0
      %v2912 = vadd.f32 0.0, %v2911
      %v2913 = vpop.f32.mrb[0].mxu0
      %2914 = vdwg.mxu0
      %v2916 = vsel %vm847, %v2912, 0
      %2918 = vmatprep.subr.mxu0 0.0
      %2919 = vmatpush1.msra.mxu0 %v2025
      %2920 = vmatprep.subr.mxu0 0.0
      %2921 = vmatpush1.msra.mxu0 %v2026
      %2922 = vmatprep.subr.mxu0 0.0
      %2923 = vmatpush1.msra.mxu0 0.0
      %2924 = vmatprep.subr.mxu0 0.0
      %2925 = vmatpush1.msra.mxu0 0.0
      %2926 = vmatprep.subr.mxu0 0.0
      %2927 = vmatpush1.msra.mxu0 0.0
      %2928 = vmatprep.subr.mxu0 0.0
      %2929 = vmatpush1.msra.mxu0 0.0
      %2930 = vmatprep.subr.mxu0 0.0
      %2931 = vmatpush1.msra.mxu0 0.0
      %2932 = vmatprep.subr.mxu0 0.0
      %2933 = vmatpush1.msra.mxu0 0.0
      %2934 = vmatprep.subr.mxu0 0.0
      %2935 = vmatpush1.msra.mxu0 0.0
      %2936 = vmatprep.subr.mxu0 0.0
      %2937 = vmatpush1.msra.mxu0 0.0
      %2938 = vmatprep.subr.mxu0 0.0
      %2939 = vmatpush1.msra.mxu0 0.0
      %2940 = vmatprep.subr.mxu0 0.0
      %2941 = vmatpush1.msra.mxu0 0.0
      %2942 = vmatprep.subr.mxu0 0.0
      %2943 = vmatpush1.msra.mxu0 0.0
      %2944 = vmatprep.subr.mxu0 0.0
      %2945 = vmatpush1.msra.mxu0 0.0
      %2946 = vmatprep.subr.mxu0 0.0
      %2947 = vmatpush1.msra.mxu0 0.0
      %2948 = vmatprep.subr.mxu0 0.0
      %2949 = vmatpush1.msra.mxu0 0.0
      %2950 = vmatprep.subr.mxu0 0.0
      %2951 = vmatpush1.msra.mxu0 0.0
      %2952 = vmatprep.subr.mxu0 0.0
      %2953 = vmatpush1.msra.mxu0 0.0
      %2954 = vmatprep.subr.mxu0 0.0
      %2955 = vmatpush1.msra.mxu0 0.0
      %2956 = vmatprep.subr.mxu0 0.0
      %2957 = vmatpush1.msra.mxu0 0.0
      %2958 = vmatprep.subr.mxu0 0.0
      %2959 = vmatpush1.msra.mxu0 0.0
      %2960 = vmatprep.subr.mxu0 0.0
      %2961 = vmatpush1.msra.mxu0 0.0
      %2962 = vmatprep.subr.mxu0 0.0
      %2963 = vmatpush1.msra.mxu0 0.0
      %2964 = vmatprep.subr.mxu0 0.0
      %2965 = vmatpush1.msra.mxu0 0.0
      %2966 = vmatprep.subr.mxu0 0.0
      %2967 = vmatpush1.msra.mxu0 0.0
      %2968 = vmatprep.subr.mxu0 0.0
      %2969 = vmatpush1.msra.mxu0 0.0
      %2970 = vmatprep.subr.mxu0 0.0
      %2971 = vmatpush1.msra.mxu0 0.0
      %2972 = vmatprep.subr.mxu0 0.0
      %2973 = vmatpush1.msra.mxu0 0.0
      %2974 = vmatprep.subr.mxu0 0.0
      %2975 = vmatpush1.msra.mxu0 0.0
      %2976 = vmatprep.subr.mxu0 0.0
      %2977 = vmatpush1.msra.mxu0 0.0
      %2978 = vmatprep.subr.mxu0 0.0
      %2979 = vmatpush1.msra.mxu0 0.0
      %2980 = vmatprep.subr.mxu0 0.0
      %2981 = vmatpush1.msra.mxu0 0.0
      %2982 = vmatprep.mubr.f32.mxu0 0.0
      %2983 = vmatmul.mubr.f32.gmra.mrb[0].mxu0 %v2916
      %v2984 = vpop.f32.mrb[0].mxu0
      %v2985 = vadd.f32 0.0, %v2984
      %v2986 = vpop.f32.mrb[0].mxu0
      %2987 = vdwg.mxu0
      %v2988 = vadd.f32 %v2747, %v2985
      %v2989 = vadd.f32 %v1813, %v2988
      %v2990 = vld [vmem:[%s15] sm:$0x1]
      %v2992 = vlaneseq
      %v2993 = vshrl.u32 %v2992, 7
      %v2994 = vsub.s32 0, %v2993
      %v2995 = vrot.slane %v2990, %v2994
      %v2997 = vadd.f32 %v2989, %v2995
      %v2998 = vld [vmem:[%s16] sm:$0x1]
      %v2999 = vld [vmem:[%s17] sm:$0x1]
      %v3000 = vsel %vm700, %v2997, 0.0
      %3001 = vadd.xlane.f32.xlu0 %v3000
      %v3002 = vpop.xlane.xlu0 %3001
      %v3003 = vmul.f32 %v3002, %v704
      %v3004 = vsub.f32 %v2997, %v3003
      %v3005 = vmul.f32 %v3004, %v3004
      %v3006 = vsel %vm700, %v3005, 0.0
      %3007 = vadd.xlane.f32.xlu0 %v3006
      %v3008 = vpop.xlane.xlu0 %3007
      %v3009 = vmul.f32 %v3008, %v704
      %v3010 = vadd.f32 %v3009, 1e-05
      %v3011 = vrsqrt.pop %v3010
      %v3012 = vmul.f32 %v3004, %v3011
      %v3014 = vlaneseq
      %v3015 = vshrl.u32 %v3014, 7
      %v3016 = vsub.s32 0, %v3015
      %v3017 = vrot.slane %v2998, %v3016
      %v3019 = vmul.f32 %v3012, %v3017
      %v3021 = vlaneseq
      %v3022 = vshrl.u32 %v3021, 7
      %v3023 = vsub.s32 0, %v3022
      %v3024 = vrot.slane %v2999, %v3023
      %v3026 = vadd.f32 %v3019, %v3024
      %v3027 = vld [vmem:[%s18] sm:$0xff]
      %v3028 = vld [vmem:[%s18 + $0x8] sm:$0xff]
      %v3029 = vld [vmem:[%s18 + $0x10] sm:$0xff]
      %v3030 = vld [vmem:[%s18 + $0x18] sm:$0xff]
      %v3031 = vld [vmem:[%s18 + $0x20] sm:$0xff]
      %v3032 = vld [vmem:[%s18 + $0x28] sm:$0xff]
      %v3033 = vld [vmem:[%s18 + $0x30] sm:$0xff]
      %v3034 = vld [vmem:[%s18 + $0x38] sm:$0xff]
      %v3035 = vld [vmem:[%s18 + $0x40] sm:$0xff]
      %v3036 = vld [vmem:[%s18 + $0x48] sm:$0xff]
      %v3037 = vld [vmem:[%s18 + $0x50] sm:$0xff]
      %v3038 = vld [vmem:[%s18 + $0x58] sm:$0xff]
      %v3039 = vld [vmem:[%s18 + $0x60] sm:$0xff]
      %v3040 = vld [vmem:[%s18 + $0x68] sm:$0xff]
      %v3041 = vld [vmem:[%s18 + $0x70] sm:$0xff]
      %v3042 = vld [vmem:[%s18 + $0x78] sm:$0xff]
      %v3043 = vld [vmem:[%s19] sm:$0x3]
      %v3045 = vlaneseq
      %v3046 = vshrl.u32 %v3045, 7
      %v3047 = vsub.s32 0, %v3046
      %v3048 = vrot.slane %v3043, %v3047
      %v3049 = vlaneseq
      %v3050 = vshrl.u32 %v3049, 7
      %v3051 = vsub.s32 1, %v3050
      %v3052 = vrot.slane %v3043, %v3051
      %v3056 = vsel %vm700, %v3026, 0
      %3058 = vmatprep.subr.mxu0 %v3028
      %3059 = vmatpush1.msra.mxu0 %v3027
      %3060 = vmatprep.subr.mxu0 %v3030
      %3061 = vmatpush1.msra.mxu0 %v3029
      %3062 = vmatprep.subr.mxu0 %v3032
      %3063 = vmatpush1.msra.mxu0 %v3031
      %3064 = vmatprep.subr.mxu0 %v3034
      %3065 = vmatpush1.msra.mxu0 %v3033
      %3066 = vmatprep.subr.mxu0 %v3036
      %3067 = vmatpush1.msra.mxu0 %v3035
      %3068 = vmatprep.subr.mxu0 %v3038
      %3069 = vmatpush1.msra.mxu0 %v3037
      %3070 = vmatprep.subr.mxu0 %v3040
      %3071 = vmatpush1.msra.mxu0 %v3039
      %3072 = vmatprep.subr.mxu0 %v3042
      %3073 = vmatpush1.msra.mxu0 %v3041
      %3074 = vmatprep.subr.mxu0 0.0
      %3075 = vmatpush1.msra.mxu0 0.0
      %3076 = vmatprep.subr.mxu0 0.0
      %3077 = vmatpush1.msra.mxu0 0.0
      %3078 = vmatprep.subr.mxu0 0.0
      %3079 = vmatpush1.msra.mxu0 0.0
      %3080 = vmatprep.subr.mxu0 0.0
      %3081 = vmatpush1.msra.mxu0 0.0
      %3082 = vmatprep.subr.mxu0 0.0
      %3083 = vmatpush1.msra.mxu0 0.0
      %3084 = vmatprep.subr.mxu0 0.0
      %3085 = vmatpush1.msra.mxu0 0.0
      %3086 = vmatprep.subr.mxu0 0.0
      %3087 = vmatpush1.msra.mxu0 0.0
      %3088 = vmatprep.subr.mxu0 0.0
      %3089 = vmatpush1.msra.mxu0 0.0
      %3090 = vmatprep.subr.mxu0 0.0
      %3091 = vmatpush1.msra.mxu0 0.0
      %3092 = vmatprep.subr.mxu0 0.0
      %3093 = vmatpush1.msra.mxu0 0.0
      %3094 = vmatprep.subr.mxu0 0.0
      %3095 = vmatpush1.msra.mxu0 0.0
      %3096 = vmatprep.subr.mxu0 0.0
      %3097 = vmatpush1.msra.mxu0 0.0
      %3098 = vmatprep.subr.mxu0 0.0
      %3099 = vmatpush1.msra.mxu0 0.0
      %3100 = vmatprep.subr.mxu0 0.0
      %3101 = vmatpush1.msra.mxu0 0.0
      %3102 = vmatprep.subr.mxu0 0.0
      %3103 = vmatpush1.msra.mxu0 0.0
      %3104 = vmatprep.subr.mxu0 0.0
      %3105 = vmatpush1.msra.mxu0 0.0
      %3106 = vmatprep.subr.mxu0 0.0
      %3107 = vmatpush1.msra.mxu0 0.0
      %3108 = vmatprep.subr.mxu0 0.0
      %3109 = vmatpush1.msra.mxu0 0.0
      %3110 = vmatprep.subr.mxu0 0.0
      %3111 = vmatpush1.msra.mxu0 0.0
      %3112 = vmatprep.subr.mxu0 0.0
      %3113 = vmatpush1.msra.mxu0 0.0
      %3114 = vmatprep.subr.mxu0 0.0
      %3115 = vmatpush1.msra.mxu0 0.0
      %3116 = vmatprep.subr.mxu0 0.0
      %3117 = vmatpush1.msra.mxu0 0.0
      %3118 = vmatprep.subr.mxu0 0.0
      %3119 = vmatpush1.msra.mxu0 0.0
      %3120 = vmatprep.subr.mxu0 0.0
      %3121 = vmatpush1.msra.mxu0 0.0
      %3122 = vmatprep.mubr.f32.mxu0 0.0
      %3123 = vmatmul.mubr.f32.gmra.mrb[0].mxu0 %v3056
      %v3124 = vpop.f32.mrb[0].mxu0
      %v3125 = vadd.f32 %v3048, %v3124
      %v3126 = vpop.f32.mrb[0].mxu0
      %v3127 = vadd.f32 %v3052, %v3126
      %3128 = vdwg.mxu0
      %v3129 = vmul.f32 %v3125, 0.5
      %v3130 = vmul.f32 %v3127, 0.5
      %v3131 = vmul.f32 %v3125, 0.70710677
      %v3132 = vmul.f32 %v3127, 0.70710677
      %v3133 = vand.u32 2147483647, %v3131
      %v3134 = vand.u32 2147483647, %v3132
      %v3135 = vmul.f32 %v3133, 0.3275911
      %v3136 = vmul.f32 %v3134, 0.3275911
      %v3137 = vadd.f32 %v3135, 1.0
      %v3138 = vadd.f32 %v3136, 1.0
      %v3139 = vrcp.pop %v3137
      %v3140 = vmul.f32 1.0, %v3139
      %v3141 = vrcp.pop %v3138
      %v3142 = vmul.f32 1.0, %v3141
      %v3143 = vmul.f32 %v3140, 1.0614054
      %v3144 = vmul.f32 %v3142, 1.0614054
      %v3145 = vadd.f32 %v3143, -1.4531521
      %v3146 = vadd.f32 %v3144, -1.4531521
      %v3147 = vmul.f32 %v3145, %v3140
      %v3148 = vmul.f32 %v3146, %v3142
      %v3149 = vadd.f32 %v3147, 1.4214138
      %v3150 = vadd.f32 %v3148, 1.4214138
      %v3151 = vmul.f32 %v3149, %v3140
      %v3152 = vmul.f32 %v3150, %v3142
      %v3153 = vadd.f32 %v3151, -0.28449672
      %v3154 = vadd.f32 %v3152, -0.28449672
      %v3155 = vmul.f32 %v3153, %v3140
      %v3156 = vmul.f32 %v3154, %v3142
      %v3157 = vadd.f32 %v3155, 0.2548296
      %v3158 = vadd.f32 %v3156, 0.2548296
      %v3159 = vmul.f32 %v3157, %v3140
      %v3160 = vmul.f32 %v3158, %v3142
      %v3161 = vsub.f32 0.0, %v3133
      %v3162 = vsub.f32 0.0, %v3134
      %v3163 = vmul.f32 %v3161, %v3133
      %v3164 = vmul.f32 %v3162, %v3134
      %v3165 = vmul.f32 %v3163, 1.442695
      %v3166 = vpow.pop %v3165
      %v3167 = vmul.f32 %v3164, 1.442695
      %v3168 = vpow.pop %v3167
      %v3169 = vmul.f32 %v3159, %v3166
      %v3170 = vmul.f32 %v3160, %v3168
      %v3171 = vsub.f32 1.0, %v3169
      %v3172 = vsub.f32 1.0, %v3170
      %vm3173 = vcmp.ge.f32.partialorder %v3131, 0.0
      %vm3174 = vcmp.ge.f32.partialorder %v3132, 0.0
      %v3175 = vsub.f32 0.0, %v3171
      %v3176 = vsub.f32 0.0, %v3172
      %v3177 = vsel %vm3173, %v3171, %v3175
      %v3178 = vsel %vm3174, %v3172, %v3176
      %v3179 = vadd.f32 %v3177, 1.0
      %v3180 = vadd.f32 %v3178, 1.0
      %v3181 = vmul.f32 %v3129, %v3179
      %v3182 = vmul.f32 %v3130, %v3180
      %v3183 = vld [vmem:[%s20] sm:$0xff]
      %v3184 = vld [vmem:[%s20 + $0x8] sm:$0xff]
      %v3185 = vld [vmem:[%s20 + $0x10] sm:$0xff]
      %v3186 = vld [vmem:[%s20 + $0x18] sm:$0xff]
      %v3187 = vld [vmem:[%s20 + $0x20] sm:$0xff]
      %v3188 = vld [vmem:[%s20 + $0x28] sm:$0xff]
      %v3189 = vld [vmem:[%s20 + $0x30] sm:$0xff]
      %v3190 = vld [vmem:[%s20 + $0x38] sm:$0xff]
      %v3191 = vld [vmem:[%s20 + $0x40] sm:$0xff]
      %v3192 = vld [vmem:[%s20 + $0x48] sm:$0xff]
      %v3193 = vld [vmem:[%s20 + $0x50] sm:$0xff]
      %v3194 = vld [vmem:[%s20 + $0x58] sm:$0xff]
      %v3195 = vld [vmem:[%s20 + $0x60] sm:$0xff]
      %v3196 = vld [vmem:[%s20 + $0x68] sm:$0xff]
      %v3197 = vld [vmem:[%s20 + $0x70] sm:$0xff]
      %v3198 = vld [vmem:[%s20 + $0x78] sm:$0xff]
      %v3199 = vld [vmem:[%s20 + $0x80] sm:$0xff]
      %v3200 = vld [vmem:[%s20 + $0x88] sm:$0xff]
      %v3201 = vld [vmem:[%s20 + $0x90] sm:$0xff]
      %v3202 = vld [vmem:[%s20 + $0x98] sm:$0xff]
      %v3203 = vld [vmem:[%s20 + $0xa0] sm:$0xff]
      %v3204 = vld [vmem:[%s20 + $0xa8] sm:$0xff]
      %v3205 = vld [vmem:[%s20 + $0xb0] sm:$0xff]
      %v3206 = vld [vmem:[%s20 + $0xb8] sm:$0xff]
      %v3207 = vld [vmem:[%s20 + $0xc0] sm:$0xff]
      %v3208 = vld [vmem:[%s20 + $0xc8] sm:$0xff]
      %v3209 = vld [vmem:[%s20 + $0xd0] sm:$0xff]
      %v3210 = vld [vmem:[%s20 + $0xd8] sm:$0xff]
      %v3211 = vld [vmem:[%s20 + $0xe0] sm:$0xff]
      %v3212 = vld [vmem:[%s20 + $0xe8] sm:$0xff]
      %v3213 = vld [vmem:[%s20 + $0xf0] sm:$0xff]
      %v3214 = vld [vmem:[%s20 + $0xf8] sm:$0xff]
      %3215 = vmatprep.subr.mxu0 0.0
      %3216 = vmatpush1.msra.mxu0 %v3183
      %3217 = vmatprep.subr.mxu0 0.0
      %3218 = vmatpush1.msra.mxu0 %v3184
      %3219 = vmatprep.subr.mxu0 0.0
      %3220 = vmatpush1.msra.mxu0 %v3185
      %3221 = vmatprep.subr.mxu0 0.0
      %3222 = vmatpush1.msra.mxu0 %v3186
      %3223 = vmatprep.subr.mxu0 0.0
      %3224 = vmatpush1.msra.mxu0 %v3187
      %3225 = vmatprep.subr.mxu0 0.0
      %3226 = vmatpush1.msra.mxu0 %v3188
      %3227 = vmatprep.subr.mxu0 0.0
      %3228 = vmatpush1.msra.mxu0 %v3189
      %3229 = vmatprep.subr.mxu0 0.0
      %3230 = vmatpush1.msra.mxu0 %v3190
      %3231 = vmatprep.subr.mxu0 0.0
      %3232 = vmatpush1.msra.mxu0 %v3191
      %3233 = vmatprep.subr.mxu0 0.0
      %3234 = vmatpush1.msra.mxu0 %v3192
      %3235 = vmatprep.subr.mxu0 0.0
      %3236 = vmatpush1.msra.mxu0 %v3193
      %3237 = vmatprep.subr.mxu0 0.0
      %3238 = vmatpush1.msra.mxu0 %v3194
      %3239 = vmatprep.subr.mxu0 0.0
      %3240 = vmatpush1.msra.mxu0 %v3195
      %3241 = vmatprep.subr.mxu0 0.0
      %3242 = vmatpush1.msra.mxu0 %v3196
      %3243 = vmatprep.subr.mxu0 0.0
      %3244 = vmatpush1.msra.mxu0 %v3197
      %3245 = vmatprep.subr.mxu0 0.0
      %3246 = vmatpush1.msra.mxu0 %v3198
      %3247 = vmatprep.subr.mxu0 0.0
      %3248 = vmatpush1.msra.mxu0 %v3199
      %3249 = vmatprep.subr.mxu0 0.0
      %3250 = vmatpush1.msra.mxu0 %v3200
      %3251 = vmatprep.subr.mxu0 0.0
      %3252 = vmatpush1.msra.mxu0 %v3201
      %3253 = vmatprep.subr.mxu0 0.0
      %3254 = vmatpush1.msra.mxu0 %v3202
      %3255 = vmatprep.subr.mxu0 0.0
      %3256 = vmatpush1.msra.mxu0 %v3203
      %3257 = vmatprep.subr.mxu0 0.0
      %3258 = vmatpush1.msra.mxu0 %v3204
      %3259 = vmatprep.subr.mxu0 0.0
      %3260 = vmatpush1.msra.mxu0 %v3205
      %3261 = vmatprep.subr.mxu0 0.0
      %3262 = vmatpush1.msra.mxu0 %v3206
      %3263 = vmatprep.subr.mxu0 0.0
      %3264 = vmatpush1.msra.mxu0 %v3207
      %3265 = vmatprep.subr.mxu0 0.0
      %3266 = vmatpush1.msra.mxu0 %v3208
      %3267 = vmatprep.subr.mxu0 0.0
      %3268 = vmatpush1.msra.mxu0 %v3209
      %3269 = vmatprep.subr.mxu0 0.0
      %3270 = vmatpush1.msra.mxu0 %v3210
      %3271 = vmatprep.subr.mxu0 0.0
      %3272 = vmatpush1.msra.mxu0 %v3211
      %3273 = vmatprep.subr.mxu0 0.0
      %3274 = vmatpush1.msra.mxu0 %v3212
      %3275 = vmatprep.subr.mxu0 0.0
      %3276 = vmatpush1.msra.mxu0 %v3213
      %3277 = vmatprep.subr.mxu0 0.0
      %3278 = vmatpush1.msra.mxu0 %v3214
      %3279 = vmatprep.mubr.f32.mxu0 %v3182
      %3280 = vmatmul.mubr.f32.gmra.mrb[0].mxu0 %v3181
      %v3281 = vpop.f32.mrb[0].mxu0
      %v3282 = vadd.f32 0.0, %v3281
      %v3283 = vpop.f32.mrb[0].mxu0
      %3284 = vdwg.mxu0
      %v3285 = vadd.f32 %v2997, %v3282
      %v3286 = vld [vmem:[%s21] sm:$0x1]
      %v3288 = vlaneseq
      %v3289 = vshrl.u32 %v3288, 7
      %v3290 = vsub.s32 0, %v3289
      %v3291 = vrot.slane %v3286, %v3290
      %v3293 = vadd.f32 %v3285, %v3291
      %3294 = vst.msk [vmem:[%s695] sm:$0xff] %vm700, %v3293
      %p3295 = scmp.lt.s32.totalorder %s33, 1
      %s3296 = scalar_select %p3295, %s33, 1
      %s3297 = smul.addr %s3296, 8
      %s3298 = scalar_lea.vmem %s22, %s3297
      // Predicated region
      $region109: #{_lambda_.9} parent=107 // pred_check
        %p3299 = pneg %p523
      $region110: #{_lambda_.9} parent=107 // pred_check_branch
        %3301 = sbr.rel (%p3299) target = $region112
      $region111: #{_lambda_.9} parent=107 // pred_region
        _
      $region112: #{_lambda_.9} parent=107 // pred_fallthru
        _
    $region108: #{_lambda_.9} parent=5 // pred_fallthru
      _
    %p3302 = scmp.le.s32.totalorder 2, %s28
    // Predicated region
    $region113: #{_lambda_.9} parent=5 // pred_check
      %p3303 = pneg %p3302
    $region114: #{_lambda_.9} parent=5 // pred_check_branch
      %3305 = sbr.rel (%p3303) target = $region116
    $region115: #{_lambda_.9} parent=5 // pred_region
      %s3306 = ssub.s32 %s28, 2
      // Predicated region
      $region117: #{_lambda_.9} parent=115 // pred_check
        %p3307 = pneg %p529
      $region118: #{_lambda_.9} parent=115 // pred_check_branch
        %3309 = sbr.rel (%p3307) target = $region120
      $region119: #{_lambda_.9} parent=115 // pred_region
        %p3310 = scmp.lt.s32.totalorder %s34, 1
        %s3311 = scalar_select %p3310, %s34, 1
        %s3312 = smul.addr %s3311, 8
        %s3313 = scalar_lea.vmem %s22, %s3312
      $region120: #{_lambda_.9} parent=115 // pred_fallthru
        _
    $region116: #{_lambda_.9} parent=5 // pred_fallthru
      _
  $region6: #{_lambda_.9} parent=0 // loop_footer
    %s32 = sadd.s32 1, %s28
  $region7: #{_lambda_.9} parent=0 // loop_footer_branch
    %27 = sbr.rel target = $region3
  $region8: #{_lambda_.9} parent=0 // loop_exit
    _

</llo_original>
